<compile_context>
chip_gen: v7x
topology: tpu7x:2x2x1
jax: 0.10.0
libtpu: 0.0.40
codegen_flags: <defaults>
</compile_context>

<pallas_src>
import functools

import jax
import jax.numpy as jnp
from jax import lax
from jax.experimental import pallas as pl
from jax.experimental.pallas import tpu as pltpu

# ----------------------------- config ---------------------------------------
BETA_START = 1e-4
BETA_END = 0.02
NUM_STEPS = 1000
C_IN = 4          # image channels
HIDDEN = 32       # hidden conv channels
EMB_DIM = 32      # sinusoidal time-embedding dim
NUM_CLASSES = 10


# ------------------------- variance scheduler --------------------------------
def make_scheduler():
    betas = jnp.linspace(BETA_START, BETA_END, NUM_STEPS, dtype=jnp.float32)
    alphas = 1.0 - betas
    alpha_bars = jnp.cumprod(alphas)
    return {"betas": betas, "alphas": alphas, "alpha_bars": alpha_bars}


# ----------------------------- fused Pallas kernel ----------------------------
def _ddpm_fused_kernel(sa_ref, sb_ref, x_ref, n_ref, temb_ref, lab_ref,
                       w1_ref, b1_ref, wt_ref, w2_ref, b2_ref,
                       loss_ref, *, W):
    # One grid step == one batch element.
    #   sa/sb:   (B,) f32 in SMEM            (sqrt(ab_t), sqrt(1-ab_t))
    #   x/n:     (1, HW, C) VMEM blocks      channel-last image / noise
    #   temb:    (B, EMB_DIM) VMEM (full)    sinusoidal time embedding
    #   lab:     (B, HIDDEN)  VMEM (full)    label embedding
    #   w1:      (9, C, HIDDEN), b1: (1, HIDDEN), wt: (EMB_DIM, HIDDEN)
    #   w2:      (9, HIDDEN, C), b2: (1, C)
    #   loss:    (1, 1, 128) VMEM block      per-batch sum(|est - noise|)
    b = pl.program_id(0)
    HW = x_ref.shape[1]

    # --- add_noise (fused, no HBM round trip) ---------------------------------
    noisy = sa_ref[b] * x_ref[0] + sb_ref[b] * n_ref[0]          # (HW, C)

    # --- conditioning row: temb @ wt + label_emb ------------------------------
    cond = (jnp.dot(temb_ref[pl.ds(b, 1), :], wt_ref[...],
                    preferred_element_type=jnp.float32)
            + lab_ref[pl.ds(b, 1), :])                            # (1, HIDDEN)

    # --- helpers for in-kernel 3x3 conv (zero padding) ------------------------
    # column index of each row of the (HW, C) slab
    rx = lax.broadcasted_iota(jnp.int32, (HW, 1), 0) % W
    m_left = rx > 0          # valid source column exists when dx == -1
    m_right = rx < (W - 1)   # valid source column exists when dx == +1

    def shift_rows(src, s):
        # out[r] = src[r + s] if 0 <= r + s < HW else 0   (static s)
        rows, ch = src.shape
        if s == 0:
            return src
        if s > 0:
            return jnp.concatenate(
                [src[s:, :], jnp.zeros((s, ch), src.dtype)], axis=0)
        return jnp.concatenate(
            [jnp.zeros((-s, ch), src.dtype), src[:rows + s, :]], axis=0)

    def conv3x3(src, w_ref):
        # 9 accumulated shifted matmuls; row zero-fill + column masks give the
        # same result as zero-padded 3x3 cross-correlation (PyTorch Conv2d,
        # padding=1).  Tap k corresponds to (dy, dx) row-major.
        out_ch = w_ref.shape[2]
        acc = jnp.zeros((HW, out_ch), jnp.float32)
        k = 0
        for dy in (-1, 0, 1):
            for dx in (-1, 0, 1):
                tap = shift_rows(src, dy * W + dx)
                if dx == -1:
                    tap = jnp.where(m_left, tap, 0.0)
                elif dx == 1:
                    tap = jnp.where(m_right, tap, 0.0)
                acc = acc + jnp.dot(tap, w_ref[k],
                                    preferred_element_type=jnp.float32)
                k += 1
        return acc

    # --- conv1 + conditioning + SiLU ------------------------------------------
    h = conv3x3(noisy, w1_ref) + b1_ref[...] + cond               # (HW, HIDDEN)
    h = h * jax.nn.sigmoid(h)                                     # SiLU

    # --- conv2 -> estimated noise ---------------------------------------------
    est = conv3x3(h, w2_ref) + b2_ref[...]                        # (HW, C)

    # --- fused L1 partial reduction (never store est to HBM) ------------------
    part = jnp.sum(jnp.abs(est - n_ref[0]))
    loss_ref[...] = jnp.broadcast_to(part, (1, 1, 128))


def ddpm_fused_pallas(sa, sb, x, noise, temb, lab_emb, params, W):
    B, HW, C = x.shape
    vmem = pltpu.MemorySpace.VMEM
    smem = pltpu.MemorySpace.SMEM
    kernel = functools.partial(_ddpm_fused_kernel, W=W)
    return pl.pallas_call(
        kernel,
        out_shape=jax.ShapeDtypeStruct((B, 1, 128), jnp.float32),
        grid=(B,),
        in_specs=[
            pl.BlockSpec(memory_space=smem),                    # sa (B,)
            pl.BlockSpec(memory_space=smem),                    # sb (B,)
            pl.BlockSpec((1, HW, C), lambda b: (b, 0, 0)),      # x
            pl.BlockSpec((1, HW, C), lambda b: (b, 0, 0)),      # noise
            pl.BlockSpec(memory_space=vmem),                    # temb (B, EMB_DIM)
            pl.BlockSpec(memory_space=vmem),                    # lab  (B, HIDDEN)
            pl.BlockSpec(memory_space=vmem),                    # w1   (9, C, HIDDEN)
            pl.BlockSpec(memory_space=vmem),                    # b1   (1, HIDDEN)
            pl.BlockSpec(memory_space=vmem),                    # wt   (EMB_DIM, HIDDEN)
            pl.BlockSpec(memory_space=vmem),                    # w2   (9, HIDDEN, C)
            pl.BlockSpec(memory_space=vmem),                    # b2   (1, C)
        ],
        out_specs=pl.BlockSpec((1, 1, 128), lambda b: (b, 0, 0)),
        compiler_params=pltpu.CompilerParams(
            dimension_semantics=("parallel",)),
    )(sa, sb, x, noise, temb, lab_emb,
      params["w1"], params["b1"], params["wt"], params["w2"], params["b2"])


# ------------------------------ glue (plain JAX) ------------------------------
def time_embedding(t, dim):
    half = dim // 2
    freqs = jnp.exp(-jnp.log(10000.0) * jnp.arange(half, dtype=jnp.float32) / half)
    args = t.astype(jnp.float32)[:, None] * freqs[None, :]
    return jnp.concatenate([jnp.sin(args), jnp.cos(args)], axis=-1)


def init_params(key):
    # TODO(synk): DDPM's `network` is an injected nn.Module (unspecified here);
    # we instantiate a small deterministic conv noise-predictor with time/label
    # conditioning as a stand-in.  conv weights are stored as (9, C_in, C_out)
    # with tap index k == 3*(dy+1) + (dx+1), matching zero-padded 3x3 Conv2d.
    ks = jax.random.split(key, 5)
    return {
        "w1": 0.1 * jax.random.normal(ks[0], (9, C_IN, HIDDEN), jnp.float32),
        "b1": jnp.zeros((1, HIDDEN), jnp.float32),
        "wt": 0.1 * jax.random.normal(ks[1], (EMB_DIM, HIDDEN), jnp.float32),
        "label_table": 0.1 * jax.random.normal(ks[2], (NUM_CLASSES, HIDDEN), jnp.float32),
        "w2": 0.1 * jax.random.normal(ks[3], (9, HIDDEN, C_IN), jnp.float32),
        "b2": jnp.zeros((1, C_IN), jnp.float32),
    }


@jax.jit
def ddpm_forward(params, sched, x_nchw, label, key):
    B, C, H, W = x_nchw.shape
    HW = H * W
    k_t, k_noise = jax.random.split(key)
    # t ~ Uniform{0, ..., num_steps-1}
    t = jax.random.randint(k_t, (B,), 0, NUM_STEPS)

    # channel-last layout end to end: single transpose of x, noise drawn
    # directly in (B, HW, C) (distributionally identical to randn_like(x)).
    x = jnp.transpose(x_nchw, (0, 2, 3, 1)).reshape(B, HW, C)
    noise = jax.random.normal(k_noise, (B, HW, C), dtype=jnp.float32)

    alpha_bar_t = sched["alpha_bars"][t]                     # (B,)
    sa = jnp.sqrt(alpha_bar_t)                               # (B,)
    sb = jnp.sqrt(1.0 - alpha_bar_t)                         # (B,)

    temb = time_embedding(t, EMB_DIM)                        # (B, EMB_DIM)
    lab_emb = params["label_table"][label]                   # (B, HIDDEN)

    partials = ddpm_fused_pallas(sa, sb, x, noise, temb, lab_emb, params, W)
    loss = jnp.sum(partials[:, 0, 0]) / (B * HW * C)         # mean |est - noise|
    return loss


# --------------------------------- main --------------------------------------
if __name__ == "__main__":
    key = jax.random.PRNGKey(0)
    k_params, k_x, k_label, k_fwd = jax.random.split(key, 4)

    B, H, W = 2, 16, 16
    x = jax.random.normal(k_x, (B, C_IN, H, W), dtype=jnp.float32)
    label = jax.random.randint(k_label, (B,), 0, NUM_CLASSES)

    params = init_params(k_params)
    sched = make_scheduler()

    loss = ddpm_forward(params, sched, x, label, k_fwd)
    loss = jax.block_until_ready(loss)
    assert loss.shape == () and bool(jnp.isfinite(loss))
    print("KERNEL_OK")
</pallas_src>

<mosaic_0001>
module attributes {stable_mosaic.version = 11 : i64} {
  func.func @_ddpm_fused_kernel(%arg0: i32, %arg1: memref<2xf32, #tpu.memory_space<smem>>, %arg2: memref<2xf32, #tpu.memory_space<smem>>, %arg3: memref<1x256x4xf32, #tpu.memory_space<vmem>>, %arg4: memref<1x256x4xf32, #tpu.memory_space<vmem>>, %arg5: memref<2x32xf32, #tpu.memory_space<vmem>>, %arg6: memref<2x32xf32, #tpu.memory_space<vmem>>, %arg7: memref<9x4x32xf32, #tpu.memory_space<vmem>>, %arg8: memref<1x32xf32, #tpu.memory_space<vmem>>, %arg9: memref<32x32xf32, #tpu.memory_space<vmem>>, %arg10: memref<9x32x4xf32, #tpu.memory_space<vmem>>, %arg11: memref<1x4xf32, #tpu.memory_space<vmem>>, %arg12: memref<1x1x128xf32, #tpu.memory_space<vmem>>) attributes {dimension_semantics = [#tpu.dimension_semantics<parallel>], iteration_bounds = array<i64: 2>, scalar_prefetch = 0 : i64, scratch_operands = 0 : i64, tpu.core_type = #tpu.core_type<tc>, window_params = [{transform_indices = @transform_0, window_bounds = array<i64: 2>}, {transform_indices = @transform_1, window_bounds = array<i64: 2>}, {transform_indices = @transform_2, window_bounds = array<i64: 1, 256, 4>}, {transform_indices = @transform_3, window_bounds = array<i64: 1, 256, 4>}, {pipeline_mode = #tpu.pipeline_mode<synchronous>, transform_indices = @transform_4, window_bounds = array<i64: 2, 32>}, {pipeline_mode = #tpu.pipeline_mode<synchronous>, transform_indices = @transform_5, window_bounds = array<i64: 2, 32>}, {pipeline_mode = #tpu.pipeline_mode<synchronous>, transform_indices = @transform_6, window_bounds = array<i64: 9, 4, 32>}, {pipeline_mode = #tpu.pipeline_mode<synchronous>, transform_indices = @transform_7, window_bounds = array<i64: 1, 32>}, {pipeline_mode = #tpu.pipeline_mode<synchronous>, transform_indices = @transform_8, window_bounds = array<i64: 32, 32>}, {pipeline_mode = #tpu.pipeline_mode<synchronous>, transform_indices = @transform_9, window_bounds = array<i64: 9, 32, 4>}, {pipeline_mode = #tpu.pipeline_mode<synchronous>, transform_indices = @transform_10, window_bounds = array<i64: 1, 4>}, {transform_indices = @transform_11, window_bounds = array<i64: 1, 1, 128>}]} {
    %0 = arith.index_cast %arg0 : i32 to index
    %1 = memref.load %arg1[%0] : memref<2xf32, #tpu.memory_space<smem>>
    %c0 = arith.constant 0 : index
    %c0_0 = arith.constant 0 : index
    %c0_1 = arith.constant 0 : index
    %2 = vector.load %arg3[%c0, %c0_0, %c0_1] : memref<1x256x4xf32, #tpu.memory_space<vmem>>, vector<1x256x4xf32>
    %3 = vector.shape_cast %2 : vector<1x256x4xf32> to vector<256x4xf32>
    %4 = vector.broadcast %1 : f32 to vector<256x4xf32>
    %5 = arith.mulf %4, %3 : vector<256x4xf32>
    %6 = arith.index_cast %arg0 : i32 to index
    %7 = memref.load %arg2[%6] : memref<2xf32, #tpu.memory_space<smem>>
    %c0_2 = arith.constant 0 : index
    %c0_3 = arith.constant 0 : index
    %c0_4 = arith.constant 0 : index
    %8 = vector.load %arg4[%c0_2, %c0_3, %c0_4] : memref<1x256x4xf32, #tpu.memory_space<vmem>>, vector<1x256x4xf32>
    %9 = vector.shape_cast %8 : vector<1x256x4xf32> to vector<256x4xf32>
    %10 = vector.broadcast %7 : f32 to vector<256x4xf32>
    %11 = arith.mulf %10, %9 : vector<256x4xf32>
    %12 = arith.addf %5, %11 : vector<256x4xf32>
    %13 = arith.index_cast %arg0 : i32 to index
    %c0_5 = arith.constant 0 : index
    %14 = vector.load %arg5[%13, %c0_5] : memref<2x32xf32, #tpu.memory_space<vmem>>, vector<1x32xf32>
    %c0_6 = arith.constant 0 : index
    %c0_7 = arith.constant 0 : index
    %15 = vector.load %arg9[%c0_6, %c0_7] : memref<32x32xf32, #tpu.memory_space<vmem>>, vector<32x32xf32>
    %cst = arith.constant dense<0.000000e+00> : vector<1x32xf32>
    %16 = tpu.matmul %14, %15, %cst {dimension_numbers = #tpu.dot_dimension_numbers<[1], [0], [0], [1], [0, 0, 1, 1], [], []>} : vector<1x32xf32>, vector<32x32xf32>, vector<1x32xf32> -> vector<1x32xf32>
    %17 = arith.index_cast %arg0 : i32 to index
    %c0_8 = arith.constant 0 : index
    %18 = vector.load %arg6[%17, %c0_8] : memref<2x32xf32, #tpu.memory_space<vmem>>, vector<1x32xf32>
    %19 = arith.addf %16, %18 : vector<1x32xf32>
    %20 = tpu.iota {dimensions = array<i32: 0>} : vector<256x1xi32>
    %c16_i32 = arith.constant 16 : i32
    %c0_i32 = arith.constant 0 : i32
    %21 = arith.cmpi eq, %c16_i32, %c0_i32 : i32
    %c1_i32 = arith.constant 1 : i32
    %22 = arith.select %21, %c1_i32, %c16_i32 : i32
    %23 = vector.broadcast %22 : i32 to vector<256x1xi32>
    %24 = arith.remsi %20, %23 : vector<256x1xi32>
    %c0_i32_9 = arith.constant 0 : i32
    %25 = vector.broadcast %c0_i32_9 : i32 to vector<256x1xi32>
    %26 = arith.cmpi ne, %24, %25 : vector<256x1xi32>
    %c0_i32_10 = arith.constant 0 : i32
    %27 = vector.broadcast %c0_i32_10 : i32 to vector<256x1xi32>
    %28 = arith.cmpi slt, %24, %27 : vector<256x1xi32>
    %c0_i32_11 = arith.constant 0 : i32
    %29 = arith.cmpi slt, %22, %c0_i32_11 : i32
    %30 = vector.broadcast %29 : i1 to vector<256x1xi1>
    %31 = vector.broadcast %30 : vector<256x1xi1> to vector<256x1xi1>
    %32 = arith.xori %28, %31 : vector<256x1xi1>
    %33 = arith.andi %32, %26 : vector<256x1xi1>
    %34 = vector.broadcast %22 : i32 to vector<256x1xi32>
    %35 = arith.addi %24, %34 : vector<256x1xi32>
    %36 = arith.select %33, %35, %24 : vector<256x1xi1>, vector<256x1xi32>
    %c0_i32_12 = arith.constant 0 : i32
    %37 = vector.broadcast %c0_i32_12 : i32 to vector<256x1xi32>
    %38 = arith.cmpi sgt, %36, %37 : vector<256x1xi32>
    %c15_i32 = arith.constant 15 : i32
    %39 = vector.broadcast %c15_i32 : i32 to vector<256x1xi32>
    %40 = arith.cmpi slt, %36, %39 : vector<256x1xi32>
    %cst_13 = arith.constant 0.000000e+00 : f32
    %41 = vector.broadcast %cst_13 : f32 to vector<256x32xf32>
    %cst_14 = arith.constant 0.000000e+00 : f32
    %42 = vector.broadcast %cst_14 : f32 to vector<17x4xf32>
    %43 = vector.extract_strided_slice %12 {offsets = [0, 0], sizes = [239, 4], strides = [1, 1]} : vector<256x4xf32> to vector<239x4xf32>
    %44 = tpu.concatenate %42, %43 in 0 : vector<17x4xf32>, vector<239x4xf32> -> vector<256x4xf32>
    %cst_15 = arith.constant 0.000000e+00 : f32
    %45 = vector.shape_cast %38 : vector<256x1xi1> to vector<256x1xi1>
    %46 = vector.broadcast %45 : vector<256x1xi1> to vector<256x4xi1>
    %47 = vector.broadcast %cst_15 : f32 to vector<256x4xf32>
    %48 = arith.select %46, %44, %47 : vector<256x4xi1>, vector<256x4xf32>
    %c0_16 = arith.constant 0 : index
    %c0_17 = arith.constant 0 : index
    %c0_18 = arith.constant 0 : index
    %49 = vector.load %arg7[%c0_16, %c0_17, %c0_18] : memref<9x4x32xf32, #tpu.memory_space<vmem>>, vector<1x4x32xf32>
    %50 = vector.shape_cast %49 : vector<1x4x32xf32> to vector<4x32xf32>
    %cst_19 = arith.constant dense<0.000000e+00> : vector<256x32xf32>
    %51 = tpu.matmul %48, %50, %cst_19 {dimension_numbers = #tpu.dot_dimension_numbers<[1], [0], [0], [1], [0, 0, 1, 1], [], []>} : vector<256x4xf32>, vector<4x32xf32>, vector<256x32xf32> -> vector<256x32xf32>
    %52 = arith.addf %41, %51 : vector<256x32xf32>
    %cst_20 = arith.constant 0.000000e+00 : f32
    %53 = vector.broadcast %cst_20 : f32 to vector<16x4xf32>
    %54 = vector.extract_strided_slice %12 {offsets = [0, 0], sizes = [240, 4], strides = [1, 1]} : vector<256x4xf32> to vector<240x4xf32>
    %55 = tpu.concatenate %53, %54 in 0 : vector<16x4xf32>, vector<240x4xf32> -> vector<256x4xf32>
    %c1 = arith.constant 1 : index
    %c0_21 = arith.constant 0 : index
    %c0_22 = arith.constant 0 : index
    %56 = vector.load %arg7[%c1, %c0_21, %c0_22] : memref<9x4x32xf32, #tpu.memory_space<vmem>>, vector<1x4x32xf32>
    %57 = vector.shape_cast %56 : vector<1x4x32xf32> to vector<4x32xf32>
    %cst_23 = arith.constant dense<0.000000e+00> : vector<256x32xf32>
    %58 = tpu.matmul %55, %57, %cst_23 {dimension_numbers = #tpu.dot_dimension_numbers<[1], [0], [0], [1], [0, 0, 1, 1], [], []>} : vector<256x4xf32>, vector<4x32xf32>, vector<256x32xf32> -> vector<256x32xf32>
    %59 = arith.addf %52, %58 : vector<256x32xf32>
    %cst_24 = arith.constant 0.000000e+00 : f32
    %60 = vector.broadcast %cst_24 : f32 to vector<15x4xf32>
    %61 = vector.extract_strided_slice %12 {offsets = [0, 0], sizes = [241, 4], strides = [1, 1]} : vector<256x4xf32> to vector<241x4xf32>
    %62 = tpu.concatenate %60, %61 in 0 : vector<15x4xf32>, vector<241x4xf32> -> vector<256x4xf32>
    %cst_25 = arith.constant 0.000000e+00 : f32
    %63 = vector.shape_cast %40 : vector<256x1xi1> to vector<256x1xi1>
    %64 = vector.broadcast %63 : vector<256x1xi1> to vector<256x4xi1>
    %65 = vector.broadcast %cst_25 : f32 to vector<256x4xf32>
    %66 = arith.select %64, %62, %65 : vector<256x4xi1>, vector<256x4xf32>
    %c2 = arith.constant 2 : index
    %c0_26 = arith.constant 0 : index
    %c0_27 = arith.constant 0 : index
    %67 = vector.load %arg7[%c2, %c0_26, %c0_27] : memref<9x4x32xf32, #tpu.memory_space<vmem>>, vector<1x4x32xf32>
    %68 = vector.shape_cast %67 : vector<1x4x32xf32> to vector<4x32xf32>
    %cst_28 = arith.constant dense<0.000000e+00> : vector<256x32xf32>
    %69 = tpu.matmul %66, %68, %cst_28 {dimension_numbers = #tpu.dot_dimension_numbers<[1], [0], [0], [1], [0, 0, 1, 1], [], []>} : vector<256x4xf32>, vector<4x32xf32>, vector<256x32xf32> -> vector<256x32xf32>
    %70 = arith.addf %59, %69 : vector<256x32xf32>
    %cst_29 = arith.constant 0.000000e+00 : f32
    %71 = vector.broadcast %cst_29 : f32 to vector<1x4xf32>
    %72 = vector.extract_strided_slice %12 {offsets = [0, 0], sizes = [255, 4], strides = [1, 1]} : vector<256x4xf32> to vector<255x4xf32>
    %73 = tpu.concatenate %71, %72 in 0 : vector<1x4xf32>, vector<255x4xf32> -> vector<256x4xf32>
    %cst_30 = arith.constant 0.000000e+00 : f32
    %74 = vector.shape_cast %38 : vector<256x1xi1> to vector<256x1xi1>
    %75 = vector.broadcast %74 : vector<256x1xi1> to vector<256x4xi1>
    %76 = vector.broadcast %cst_30 : f32 to vector<256x4xf32>
    %77 = arith.select %75, %73, %76 : vector<256x4xi1>, vector<256x4xf32>
    %c3 = arith.constant 3 : index
    %c0_31 = arith.constant 0 : index
    %c0_32 = arith.constant 0 : index
    %78 = vector.load %arg7[%c3, %c0_31, %c0_32] : memref<9x4x32xf32, #tpu.memory_space<vmem>>, vector<1x4x32xf32>
    %79 = vector.shape_cast %78 : vector<1x4x32xf32> to vector<4x32xf32>
    %cst_33 = arith.constant dense<0.000000e+00> : vector<256x32xf32>
    %80 = tpu.matmul %77, %79, %cst_33 {dimension_numbers = #tpu.dot_dimension_numbers<[1], [0], [0], [1], [0, 0, 1, 1], [], []>} : vector<256x4xf32>, vector<4x32xf32>, vector<256x32xf32> -> vector<256x32xf32>
    %81 = arith.addf %70, %80 : vector<256x32xf32>
    %c4 = arith.constant 4 : index
    %c0_34 = arith.constant 0 : index
    %c0_35 = arith.constant 0 : index
    %82 = vector.load %arg7[%c4, %c0_34, %c0_35] : memref<9x4x32xf32, #tpu.memory_space<vmem>>, vector<1x4x32xf32>
    %83 = vector.shape_cast %82 : vector<1x4x32xf32> to vector<4x32xf32>
    %cst_36 = arith.constant dense<0.000000e+00> : vector<256x32xf32>
    %84 = tpu.matmul %12, %83, %cst_36 {dimension_numbers = #tpu.dot_dimension_numbers<[1], [0], [0], [1], [0, 0, 1, 1], [], []>} : vector<256x4xf32>, vector<4x32xf32>, vector<256x32xf32> -> vector<256x32xf32>
    %85 = arith.addf %81, %84 : vector<256x32xf32>
    %86 = vector.extract_strided_slice %12 {offsets = [1, 0], sizes = [255, 4], strides = [1, 1]} : vector<256x4xf32> to vector<255x4xf32>
    %cst_37 = arith.constant 0.000000e+00 : f32
    %87 = vector.broadcast %cst_37 : f32 to vector<1x4xf32>
    %88 = tpu.concatenate %86, %87 in 0 : vector<255x4xf32>, vector<1x4xf32> -> vector<256x4xf32>
    %cst_38 = arith.constant 0.000000e+00 : f32
    %89 = vector.shape_cast %40 : vector<256x1xi1> to vector<256x1xi1>
    %90 = vector.broadcast %89 : vector<256x1xi1> to vector<256x4xi1>
    %91 = vector.broadcast %cst_38 : f32 to vector<256x4xf32>
    %92 = arith.select %90, %88, %91 : vector<256x4xi1>, vector<256x4xf32>
    %c5 = arith.constant 5 : index
    %c0_39 = arith.constant 0 : index
    %c0_40 = arith.constant 0 : index
    %93 = vector.load %arg7[%c5, %c0_39, %c0_40] : memref<9x4x32xf32, #tpu.memory_space<vmem>>, vector<1x4x32xf32>
    %94 = vector.shape_cast %93 : vector<1x4x32xf32> to vector<4x32xf32>
    %cst_41 = arith.constant dense<0.000000e+00> : vector<256x32xf32>
    %95 = tpu.matmul %92, %94, %cst_41 {dimension_numbers = #tpu.dot_dimension_numbers<[1], [0], [0], [1], [0, 0, 1, 1], [], []>} : vector<256x4xf32>, vector<4x32xf32>, vector<256x32xf32> -> vector<256x32xf32>
    %96 = arith.addf %85, %95 : vector<256x32xf32>
    %97 = vector.extract_strided_slice %12 {offsets = [15, 0], sizes = [241, 4], strides = [1, 1]} : vector<256x4xf32> to vector<241x4xf32>
    %cst_42 = arith.constant 0.000000e+00 : f32
    %98 = vector.broadcast %cst_42 : f32 to vector<15x4xf32>
    %99 = tpu.concatenate %97, %98 in 0 : vector<241x4xf32>, vector<15x4xf32> -> vector<256x4xf32>
    %cst_43 = arith.constant 0.000000e+00 : f32
    %100 = vector.shape_cast %38 : vector<256x1xi1> to vector<256x1xi1>
    %101 = vector.broadcast %100 : vector<256x1xi1> to vector<256x4xi1>
    %102 = vector.broadcast %cst_43 : f32 to vector<256x4xf32>
    %103 = arith.select %101, %99, %102 : vector<256x4xi1>, vector<256x4xf32>
    %c6 = arith.constant 6 : index
    %c0_44 = arith.constant 0 : index
    %c0_45 = arith.constant 0 : index
    %104 = vector.load %arg7[%c6, %c0_44, %c0_45] : memref<9x4x32xf32, #tpu.memory_space<vmem>>, vector<1x4x32xf32>
    %105 = vector.shape_cast %104 : vector<1x4x32xf32> to vector<4x32xf32>
    %cst_46 = arith.constant dense<0.000000e+00> : vector<256x32xf32>
    %106 = tpu.matmul %103, %105, %cst_46 {dimension_numbers = #tpu.dot_dimension_numbers<[1], [0], [0], [1], [0, 0, 1, 1], [], []>} : vector<256x4xf32>, vector<4x32xf32>, vector<256x32xf32> -> vector<256x32xf32>
    %107 = arith.addf %96, %106 : vector<256x32xf32>
    %108 = vector.extract_strided_slice %12 {offsets = [16, 0], sizes = [240, 4], strides = [1, 1]} : vector<256x4xf32> to vector<240x4xf32>
    %cst_47 = arith.constant 0.000000e+00 : f32
    %109 = vector.broadcast %cst_47 : f32 to vector<16x4xf32>
    %110 = tpu.concatenate %108, %109 in 0 : vector<240x4xf32>, vector<16x4xf32> -> vector<256x4xf32>
    %c7 = arith.constant 7 : index
    %c0_48 = arith.constant 0 : index
    %c0_49 = arith.constant 0 : index
    %111 = vector.load %arg7[%c7, %c0_48, %c0_49] : memref<9x4x32xf32, #tpu.memory_space<vmem>>, vector<1x4x32xf32>
    %112 = vector.shape_cast %111 : vector<1x4x32xf32> to vector<4x32xf32>
    %cst_50 = arith.constant dense<0.000000e+00> : vector<256x32xf32>
    %113 = tpu.matmul %110, %112, %cst_50 {dimension_numbers = #tpu.dot_dimension_numbers<[1], [0], [0], [1], [0, 0, 1, 1], [], []>} : vector<256x4xf32>, vector<4x32xf32>, vector<256x32xf32> -> vector<256x32xf32>
    %114 = arith.addf %107, %113 : vector<256x32xf32>
    %115 = vector.extract_strided_slice %12 {offsets = [17, 0], sizes = [239, 4], strides = [1, 1]} : vector<256x4xf32> to vector<239x4xf32>
    %cst_51 = arith.constant 0.000000e+00 : f32
    %116 = vector.broadcast %cst_51 : f32 to vector<17x4xf32>
    %117 = tpu.concatenate %115, %116 in 0 : vector<239x4xf32>, vector<17x4xf32> -> vector<256x4xf32>
    %cst_52 = arith.constant 0.000000e+00 : f32
    %118 = vector.shape_cast %40 : vector<256x1xi1> to vector<256x1xi1>
    %119 = vector.broadcast %118 : vector<256x1xi1> to vector<256x4xi1>
    %120 = vector.broadcast %cst_52 : f32 to vector<256x4xf32>
    %121 = arith.select %119, %117, %120 : vector<256x4xi1>, vector<256x4xf32>
    %c8 = arith.constant 8 : index
    %c0_53 = arith.constant 0 : index
    %c0_54 = arith.constant 0 : index
    %122 = vector.load %arg7[%c8, %c0_53, %c0_54] : memref<9x4x32xf32, #tpu.memory_space<vmem>>, vector<1x4x32xf32>
    %123 = vector.shape_cast %122 : vector<1x4x32xf32> to vector<4x32xf32>
    %cst_55 = arith.constant dense<0.000000e+00> : vector<256x32xf32>
    %124 = tpu.matmul %121, %123, %cst_55 {dimension_numbers = #tpu.dot_dimension_numbers<[1], [0], [0], [1], [0, 0, 1, 1], [], []>} : vector<256x4xf32>, vector<4x32xf32>, vector<256x32xf32> -> vector<256x32xf32>
    %125 = arith.addf %114, %124 : vector<256x32xf32>
    %c0_56 = arith.constant 0 : index
    %c0_57 = arith.constant 0 : index
    %126 = vector.load %arg8[%c0_56, %c0_57] : memref<1x32xf32, #tpu.memory_space<vmem>>, vector<1x32xf32>
    %127 = vector.broadcast %126 : vector<1x32xf32> to vector<256x32xf32>
    %128 = arith.addf %125, %127 : vector<256x32xf32>
    %129 = vector.broadcast %19 : vector<1x32xf32> to vector<256x32xf32>
    %130 = arith.addf %128, %129 : vector<256x32xf32>
    %131 = arith.negf %130 : vector<256x32xf32>
    %132 = math.exp %131 : vector<256x32xf32>
    %cst_58 = arith.constant 1.000000e+00 : f32
    %133 = vector.broadcast %cst_58 : f32 to vector<256x32xf32>
    %134 = arith.addf %133, %132 : vector<256x32xf32>
    %135 = arith.divf %133, %134 : vector<256x32xf32>
    %136 = arith.mulf %130, %135 : vector<256x32xf32>
    %cst_59 = arith.constant 0.000000e+00 : f32
    %137 = vector.broadcast %cst_59 : f32 to vector<256x4xf32>
    %cst_60 = arith.constant 0.000000e+00 : f32
    %138 = vector.broadcast %cst_60 : f32 to vector<17x32xf32>
    %139 = vector.extract_strided_slice %136 {offsets = [0, 0], sizes = [239, 32], strides = [1, 1]} : vector<256x32xf32> to vector<239x32xf32>
    %140 = tpu.concatenate %138, %139 in 0 : vector<17x32xf32>, vector<239x32xf32> -> vector<256x32xf32>
    %cst_61 = arith.constant 0.000000e+00 : f32
    %141 = vector.shape_cast %38 : vector<256x1xi1> to vector<256x1xi1>
    %142 = vector.broadcast %141 : vector<256x1xi1> to vector<256x32xi1>
    %143 = vector.broadcast %cst_61 : f32 to vector<256x32xf32>
    %144 = arith.select %142, %140, %143 : vector<256x32xi1>, vector<256x32xf32>
    %c0_62 = arith.constant 0 : index
    %c0_63 = arith.constant 0 : index
    %c0_64 = arith.constant 0 : index
    %145 = vector.load %arg10[%c0_62, %c0_63, %c0_64] : memref<9x32x4xf32, #tpu.memory_space<vmem>>, vector<1x32x4xf32>
    %146 = vector.shape_cast %145 : vector<1x32x4xf32> to vector<32x4xf32>
    %cst_65 = arith.constant dense<0.000000e+00> : vector<256x4xf32>
    %147 = tpu.matmul %144, %146, %cst_65 {dimension_numbers = #tpu.dot_dimension_numbers<[1], [0], [0], [1], [0, 0, 1, 1], [], []>} : vector<256x32xf32>, vector<32x4xf32>, vector<256x4xf32> -> vector<256x4xf32>
    %148 = arith.addf %137, %147 : vector<256x4xf32>
    %cst_66 = arith.constant 0.000000e+00 : f32
    %149 = vector.broadcast %cst_66 : f32 to vector<16x32xf32>
    %150 = vector.extract_strided_slice %136 {offsets = [0, 0], sizes = [240, 32], strides = [1, 1]} : vector<256x32xf32> to vector<240x32xf32>
    %151 = tpu.concatenate %149, %150 in 0 : vector<16x32xf32>, vector<240x32xf32> -> vector<256x32xf32>
    %c1_67 = arith.constant 1 : index
    %c0_68 = arith.constant 0 : index
    %c0_69 = arith.constant 0 : index
    %152 = vector.load %arg10[%c1_67, %c0_68, %c0_69] : memref<9x32x4xf32, #tpu.memory_space<vmem>>, vector<1x32x4xf32>
    %153 = vector.shape_cast %152 : vector<1x32x4xf32> to vector<32x4xf32>
    %cst_70 = arith.constant dense<0.000000e+00> : vector<256x4xf32>
    %154 = tpu.matmul %151, %153, %cst_70 {dimension_numbers = #tpu.dot_dimension_numbers<[1], [0], [0], [1], [0, 0, 1, 1], [], []>} : vector<256x32xf32>, vector<32x4xf32>, vector<256x4xf32> -> vector<256x4xf32>
    %155 = arith.addf %148, %154 : vector<256x4xf32>
    %cst_71 = arith.constant 0.000000e+00 : f32
    %156 = vector.broadcast %cst_71 : f32 to vector<15x32xf32>
    %157 = vector.extract_strided_slice %136 {offsets = [0, 0], sizes = [241, 32], strides = [1, 1]} : vector<256x32xf32> to vector<241x32xf32>
    %158 = tpu.concatenate %156, %157 in 0 : vector<15x32xf32>, vector<241x32xf32> -> vector<256x32xf32>
    %cst_72 = arith.constant 0.000000e+00 : f32
    %159 = vector.shape_cast %40 : vector<256x1xi1> to vector<256x1xi1>
    %160 = vector.broadcast %159 : vector<256x1xi1> to vector<256x32xi1>
    %161 = vector.broadcast %cst_72 : f32 to vector<256x32xf32>
    %162 = arith.select %160, %158, %161 : vector<256x32xi1>, vector<256x32xf32>
    %c2_73 = arith.constant 2 : index
    %c0_74 = arith.constant 0 : index
    %c0_75 = arith.constant 0 : index
    %163 = vector.load %arg10[%c2_73, %c0_74, %c0_75] : memref<9x32x4xf32, #tpu.memory_space<vmem>>, vector<1x32x4xf32>
    %164 = vector.shape_cast %163 : vector<1x32x4xf32> to vector<32x4xf32>
    %cst_76 = arith.constant dense<0.000000e+00> : vector<256x4xf32>
    %165 = tpu.matmul %162, %164, %cst_76 {dimension_numbers = #tpu.dot_dimension_numbers<[1], [0], [0], [1], [0, 0, 1, 1], [], []>} : vector<256x32xf32>, vector<32x4xf32>, vector<256x4xf32> -> vector<256x4xf32>
    %166 = arith.addf %155, %165 : vector<256x4xf32>
    %cst_77 = arith.constant 0.000000e+00 : f32
    %167 = vector.broadcast %cst_77 : f32 to vector<1x32xf32>
    %168 = vector.extract_strided_slice %136 {offsets = [0, 0], sizes = [255, 32], strides = [1, 1]} : vector<256x32xf32> to vector<255x32xf32>
    %169 = tpu.concatenate %167, %168 in 0 : vector<1x32xf32>, vector<255x32xf32> -> vector<256x32xf32>
    %cst_78 = arith.constant 0.000000e+00 : f32
    %170 = vector.shape_cast %38 : vector<256x1xi1> to vector<256x1xi1>
    %171 = vector.broadcast %170 : vector<256x1xi1> to vector<256x32xi1>
    %172 = vector.broadcast %cst_78 : f32 to vector<256x32xf32>
    %173 = arith.select %171, %169, %172 : vector<256x32xi1>, vector<256x32xf32>
    %c3_79 = arith.constant 3 : index
    %c0_80 = arith.constant 0 : index
    %c0_81 = arith.constant 0 : index
    %174 = vector.load %arg10[%c3_79, %c0_80, %c0_81] : memref<9x32x4xf32, #tpu.memory_space<vmem>>, vector<1x32x4xf32>
    %175 = vector.shape_cast %174 : vector<1x32x4xf32> to vector<32x4xf32>
    %cst_82 = arith.constant dense<0.000000e+00> : vector<256x4xf32>
    %176 = tpu.matmul %173, %175, %cst_82 {dimension_numbers = #tpu.dot_dimension_numbers<[1], [0], [0], [1], [0, 0, 1, 1], [], []>} : vector<256x32xf32>, vector<32x4xf32>, vector<256x4xf32> -> vector<256x4xf32>
    %177 = arith.addf %166, %176 : vector<256x4xf32>
    %c4_83 = arith.constant 4 : index
    %c0_84 = arith.constant 0 : index
    %c0_85 = arith.constant 0 : index
    %178 = vector.load %arg10[%c4_83, %c0_84, %c0_85] : memref<9x32x4xf32, #tpu.memory_space<vmem>>, vector<1x32x4xf32>
    %179 = vector.shape_cast %178 : vector<1x32x4xf32> to vector<32x4xf32>
    %cst_86 = arith.constant dense<0.000000e+00> : vector<256x4xf32>
    %180 = tpu.matmul %136, %179, %cst_86 {dimension_numbers = #tpu.dot_dimension_numbers<[1], [0], [0], [1], [0, 0, 1, 1], [], []>} : vector<256x32xf32>, vector<32x4xf32>, vector<256x4xf32> -> vector<256x4xf32>
    %181 = arith.addf %177, %180 : vector<256x4xf32>
    %182 = vector.extract_strided_slice %136 {offsets = [1, 0], sizes = [255, 32], strides = [1, 1]} : vector<256x32xf32> to vector<255x32xf32>
    %cst_87 = arith.constant 0.000000e+00 : f32
    %183 = vector.broadcast %cst_87 : f32 to vector<1x32xf32>
    %184 = tpu.concatenate %182, %183 in 0 : vector<255x32xf32>, vector<1x32xf32> -> vector<256x32xf32>
    %cst_88 = arith.constant 0.000000e+00 : f32
    %185 = vector.shape_cast %40 : vector<256x1xi1> to vector<256x1xi1>
    %186 = vector.broadcast %185 : vector<256x1xi1> to vector<256x32xi1>
    %187 = vector.broadcast %cst_88 : f32 to vector<256x32xf32>
    %188 = arith.select %186, %184, %187 : vector<256x32xi1>, vector<256x32xf32>
    %c5_89 = arith.constant 5 : index
    %c0_90 = arith.constant 0 : index
    %c0_91 = arith.constant 0 : index
    %189 = vector.load %arg10[%c5_89, %c0_90, %c0_91] : memref<9x32x4xf32, #tpu.memory_space<vmem>>, vector<1x32x4xf32>
    %190 = vector.shape_cast %189 : vector<1x32x4xf32> to vector<32x4xf32>
    %cst_92 = arith.constant dense<0.000000e+00> : vector<256x4xf32>
    %191 = tpu.matmul %188, %190, %cst_92 {dimension_numbers = #tpu.dot_dimension_numbers<[1], [0], [0], [1], [0, 0, 1, 1], [], []>} : vector<256x32xf32>, vector<32x4xf32>, vector<256x4xf32> -> vector<256x4xf32>
    %192 = arith.addf %181, %191 : vector<256x4xf32>
    %193 = vector.extract_strided_slice %136 {offsets = [15, 0], sizes = [241, 32], strides = [1, 1]} : vector<256x32xf32> to vector<241x32xf32>
    %cst_93 = arith.constant 0.000000e+00 : f32
    %194 = vector.broadcast %cst_93 : f32 to vector<15x32xf32>
    %195 = tpu.concatenate %193, %194 in 0 : vector<241x32xf32>, vector<15x32xf32> -> vector<256x32xf32>
    %cst_94 = arith.constant 0.000000e+00 : f32
    %196 = vector.shape_cast %38 : vector<256x1xi1> to vector<256x1xi1>
    %197 = vector.broadcast %196 : vector<256x1xi1> to vector<256x32xi1>
    %198 = vector.broadcast %cst_94 : f32 to vector<256x32xf32>
    %199 = arith.select %197, %195, %198 : vector<256x32xi1>, vector<256x32xf32>
    %c6_95 = arith.constant 6 : index
    %c0_96 = arith.constant 0 : index
    %c0_97 = arith.constant 0 : index
    %200 = vector.load %arg10[%c6_95, %c0_96, %c0_97] : memref<9x32x4xf32, #tpu.memory_space<vmem>>, vector<1x32x4xf32>
    %201 = vector.shape_cast %200 : vector<1x32x4xf32> to vector<32x4xf32>
    %cst_98 = arith.constant dense<0.000000e+00> : vector<256x4xf32>
    %202 = tpu.matmul %199, %201, %cst_98 {dimension_numbers = #tpu.dot_dimension_numbers<[1], [0], [0], [1], [0, 0, 1, 1], [], []>} : vector<256x32xf32>, vector<32x4xf32>, vector<256x4xf32> -> vector<256x4xf32>
    %203 = arith.addf %192, %202 : vector<256x4xf32>
    %204 = vector.extract_strided_slice %136 {offsets = [16, 0], sizes = [240, 32], strides = [1, 1]} : vector<256x32xf32> to vector<240x32xf32>
    %cst_99 = arith.constant 0.000000e+00 : f32
    %205 = vector.broadcast %cst_99 : f32 to vector<16x32xf32>
    %206 = tpu.concatenate %204, %205 in 0 : vector<240x32xf32>, vector<16x32xf32> -> vector<256x32xf32>
    %c7_100 = arith.constant 7 : index
    %c0_101 = arith.constant 0 : index
    %c0_102 = arith.constant 0 : index
    %207 = vector.load %arg10[%c7_100, %c0_101, %c0_102] : memref<9x32x4xf32, #tpu.memory_space<vmem>>, vector<1x32x4xf32>
    %208 = vector.shape_cast %207 : vector<1x32x4xf32> to vector<32x4xf32>
    %cst_103 = arith.constant dense<0.000000e+00> : vector<256x4xf32>
    %209 = tpu.matmul %206, %208, %cst_103 {dimension_numbers = #tpu.dot_dimension_numbers<[1], [0], [0], [1], [0, 0, 1, 1], [], []>} : vector<256x32xf32>, vector<32x4xf32>, vector<256x4xf32> -> vector<256x4xf32>
    %210 = arith.addf %203, %209 : vector<256x4xf32>
    %211 = vector.extract_strided_slice %136 {offsets = [17, 0], sizes = [239, 32], strides = [1, 1]} : vector<256x32xf32> to vector<239x32xf32>
    %cst_104 = arith.constant 0.000000e+00 : f32
    %212 = vector.broadcast %cst_104 : f32 to vector<17x32xf32>
    %213 = tpu.concatenate %211, %212 in 0 : vector<239x32xf32>, vector<17x32xf32> -> vector<256x32xf32>
    %cst_105 = arith.constant 0.000000e+00 : f32
    %214 = vector.shape_cast %40 : vector<256x1xi1> to vector<256x1xi1>
    %215 = vector.broadcast %214 : vector<256x1xi1> to vector<256x32xi1>
    %216 = vector.broadcast %cst_105 : f32 to vector<256x32xf32>
    %217 = arith.select %215, %213, %216 : vector<256x32xi1>, vector<256x32xf32>
    %c8_106 = arith.constant 8 : index
    %c0_107 = arith.constant 0 : index
    %c0_108 = arith.constant 0 : index
    %218 = vector.load %arg10[%c8_106, %c0_107, %c0_108] : memref<9x32x4xf32, #tpu.memory_space<vmem>>, vector<1x32x4xf32>
    %219 = vector.shape_cast %218 : vector<1x32x4xf32> to vector<32x4xf32>
    %cst_109 = arith.constant dense<0.000000e+00> : vector<256x4xf32>
    %220 = tpu.matmul %217, %219, %cst_109 {dimension_numbers = #tpu.dot_dimension_numbers<[1], [0], [0], [1], [0, 0, 1, 1], [], []>} : vector<256x32xf32>, vector<32x4xf32>, vector<256x4xf32> -> vector<256x4xf32>
    %221 = arith.addf %210, %220 : vector<256x4xf32>
    %c0_110 = arith.constant 0 : index
    %c0_111 = arith.constant 0 : index
    %222 = vector.load %arg11[%c0_110, %c0_111] : memref<1x4xf32, #tpu.memory_space<vmem>>, vector<1x4xf32>
    %223 = vector.broadcast %222 : vector<1x4xf32> to vector<256x4xf32>
    %224 = arith.addf %221, %223 : vector<256x4xf32>
    %c0_112 = arith.constant 0 : index
    %c0_113 = arith.constant 0 : index
    %c0_114 = arith.constant 0 : index
    %225 = vector.load %arg4[%c0_112, %c0_113, %c0_114] : memref<1x256x4xf32, #tpu.memory_space<vmem>>, vector<1x256x4xf32>
    %226 = vector.shape_cast %225 : vector<1x256x4xf32> to vector<256x4xf32>
    %227 = arith.subf %224, %226 : vector<256x4xf32>
    %228 = math.absf %227 : vector<256x4xf32>
    %229 = vector.shape_cast %228 : vector<256x4xf32> to vector<1x256x4xf32>
    %cst_115 = arith.constant dense<0.000000e+00> : vector<1xf32>
    %230 = vector.multi_reduction <add>, %229, %cst_115 [1, 2] : vector<1x256x4xf32> to vector<1xf32>
    %231 = vector.shape_cast %230 : vector<1xf32> to vector<1x1x1xf32>
    %232 = vector.extract %231[0, 0, 0] : f32 from vector<1x1x1xf32>
    %233 = vector.broadcast %232 : f32 to vector<1x1x128xf32>
    %c0_116 = arith.constant 0 : index
    %c0_117 = arith.constant 0 : index
    %c0_118 = arith.constant 0 : index
    %234 = vector.load %arg12[%c0_116, %c0_117, %c0_118] : memref<1x1x128xf32, #tpu.memory_space<vmem>>, vector<1x1x128xf32>
    tpu.vector_store %arg12[%c0_116, %c0_117, %c0_118], %233 {strides = array<i32>} : memref<1x1x128xf32, #tpu.memory_space<vmem>>, vector<1x1x128xf32>,
    return
  }
  func.func @transform_0(%arg0: i32) -> i32 {
    %c0_i32 = arith.constant 0 : i32
    %c0_i32_0 = arith.constant 0 : i32
    return %c0_i32 : i32
  }
  func.func @transform_1(%arg0: i32) -> i32 {
    %c0_i32 = arith.constant 0 : i32
    %c0_i32_0 = arith.constant 0 : i32
    return %c0_i32 : i32
  }
  func.func @transform_2(%arg0: i32) -> (i32, i32, i32) {
    %c0_i32 = arith.constant 0 : i32
    %c0_i32_0 = arith.constant 0 : i32
    %c0_i32_1 = arith.constant 0 : i32
    return %arg0, %c0_i32, %c0_i32_0 : i32, i32, i32
  }
  func.func @transform_3(%arg0: i32) -> (i32, i32, i32) {
    %c0_i32 = arith.constant 0 : i32
    %c0_i32_0 = arith.constant 0 : i32
    %c0_i32_1 = arith.constant 0 : i32
    return %arg0, %c0_i32, %c0_i32_0 : i32, i32, i32
  }
  func.func @transform_4(%arg0: i32) -> (i32, i32) {
    %c0_i32 = arith.constant 0 : i32
    %c0_i32_0 = arith.constant 0 : i32
    %c0_i32_1 = arith.constant 0 : i32
    return %c0_i32, %c0_i32_0 : i32, i32
  }
  func.func @transform_5(%arg0: i32) -> (i32, i32) {
    %c0_i32 = arith.constant 0 : i32
    %c0_i32_0 = arith.constant 0 : i32
    %c0_i32_1 = arith.constant 0 : i32
    return %c0_i32, %c0_i32_0 : i32, i32
  }
  func.func @transform_6(%arg0: i32) -> (i32, i32, i32) {
    %c0_i32 = arith.constant 0 : i32
    %c0_i32_0 = arith.constant 0 : i32
    %c0_i32_1 = arith.constant 0 : i32
    %c0_i32_2 = arith.constant 0 : i32
    return %c0_i32, %c0_i32_0, %c0_i32_1 : i32, i32, i32
  }
  func.func @transform_7(%arg0: i32) -> (i32, i32) {
    %c0_i32 = arith.constant 0 : i32
    %c0_i32_0 = arith.constant 0 : i32
    %c0_i32_1 = arith.constant 0 : i32
    return %c0_i32, %c0_i32_0 : i32, i32
  }
  func.func @transform_8(%arg0: i32) -> (i32, i32) {
    %c0_i32 = arith.constant 0 : i32
    %c0_i32_0 = arith.constant 0 : i32
    %c0_i32_1 = arith.constant 0 : i32
    return %c0_i32, %c0_i32_0 : i32, i32
  }
  func.func @transform_9(%arg0: i32) -> (i32, i32, i32) {
    %c0_i32 = arith.constant 0 : i32
    %c0_i32_0 = arith.constant 0 : i32
    %c0_i32_1 = arith.constant 0 : i32
    %c0_i32_2 = arith.constant 0 : i32
    return %c0_i32, %c0_i32_0, %c0_i32_1 : i32, i32, i32
  }
  func.func @transform_10(%arg0: i32) -> (i32, i32) {
    %c0_i32 = arith.constant 0 : i32
    %c0_i32_0 = arith.constant 0 : i32
    %c0_i32_1 = arith.constant 0 : i32
    return %c0_i32, %c0_i32_0 : i32, i32
  }
  func.func @transform_11(%arg0: i32) -> (i32, i32, i32) {
    %c0_i32 = arith.constant 0 : i32
    %c0_i32_0 = arith.constant 0 : i32
    %c0_i32_1 = arith.constant 0 : i32
    return %arg0, %c0_i32, %c0_i32_0 : i32, i32, i32
  }
}

</mosaic_0001>

<llo_original>
// kernel: ddpm_forward.1
$region0: #{ddpm_forward.1}
  #allocation0 [shape = 'u32[]', space=smem, size = 0x4, offset = 0x4, fixed_abs, tag = 'smem constant byte address 0x4 - core index']
  #allocation1 [shape = 'u32[144,128]{1,0:T(1,128)}', space=vmem, size = 0x12000, scoped, tag = 'internal scratch']
  %s0 = inlined_call_operand.vmem [shape: f32[2], index: 0, kind: input, shape index: {}]
  %s1 = inlined_call_operand.vmem [shape: f32[2], index: 1, kind: input, shape index: {}]
  %s2 = inlined_call_operand.vmem [shape: f32[2,256,4], index: 2, kind: input, shape index: {}]
  %s3 = inlined_call_operand.vmem [shape: f32[2,256,4], index: 3, kind: input, shape index: {}]
  %s4 = inlined_call_operand.vmem [shape: f32[2,32], index: 4, kind: input, shape index: {}]
  %s5 = inlined_call_operand.vmem [shape: f32[2,32], index: 5, kind: input, shape index: {}]
  %s6 = inlined_call_operand.vmem [shape: f32[9,4,32], index: 6, kind: input, shape index: {}]
  %s7 = inlined_call_operand.vmem [shape: f32[1,32], index: 7, kind: input, shape index: {}]
  %s8 = inlined_call_operand.vmem [shape: f32[32,32], index: 8, kind: input, shape index: {}]
  %s9 = inlined_call_operand.vmem [shape: f32[9,32,4], index: 9, kind: input, shape index: {}]
  %s10 = inlined_call_operand.vmem [shape: f32[1,4], index: 10, kind: input, shape index: {}]
  %s11 = inlined_call_operand.vmem [shape: f32[2,1,128], index: 11, kind: output, shape index: {}]
  %s12 = sld [smem:[#allocation0]]
  $region85: #{ddpm_forward.1} parent=0
    _
  %s14 = ssub.s32 1, %s12
  %s15 = scalar_select 0, %s14, %s12
  $region1: #{ddpm_forward.1} parent=0
    #allocation2 [shape = 'u8[512]{0}', space=smem, size = 0x200, scoped, tag = 'input window, operand 0, single buffered']
    #allocation3 [shape = 's32[2]{0}', space=sflag, size = 0x8, scoped, tag = 'scoped memory for ddpm_forward.1']
    #allocation4 [shape = 'u8[512]{0}', space=smem, size = 0x200, scoped, tag = 'input window, operand 1, single buffered']
    #allocation5 [shape = 's32[1]{0}', space=sflag, size = 0x4, scoped, tag = 'scoped memory for ddpm_forward.1']
    %16 = vsyncpa [#allocation3], 0
    %17 = vsyncpa [#allocation5], 0
    loop: start=0, step=1, limit=4
    $region2: #{ddpm_forward.1} parent=1 // loop_pre_header
      _
    $region3: #{ddpm_forward.1} parent=1 // loop_header
      %s19 = sphi 0, %s23
      %p20 = scmp.ge.s32.totalorder %s19, 4
      %s27 = sphi 0, %s27
      %s29 = sphi 0, %s27
      %s30 = sphi 0, %s29
      %s44 = sphi 0, %s30
      %s48 = sphi 0, %s48
      %s50 = sphi 0, %s48
      %s51 = sphi 0, %s50
      %s65 = sphi 0, %s51
      %s71 = sphi 0, %s73
      %s74 = sphi 0, %s71
      %s75 = sphi 0, %s74
      %s91 = sphi 0, %s75
      %s97 = sphi 0, %s99
      %s100 = sphi 0, %s97
      %s101 = sphi 0, %s100
      %s117 = sphi 0, %s101
      %s121 = sphi 0, %s121
      %s123 = sphi 0, %s121
      %s124 = sphi 0, %s123
      %s138 = sphi 0, %s124
      %s142 = sphi 0, %s142
      %s144 = sphi 0, %s142
      %s145 = sphi 0, %s144
      %s159 = sphi 0, %s145
      %s163 = sphi 0, %s163
      %s165 = sphi 0, %s163
      %s166 = sphi 0, %s165
      %s180 = sphi 0, %s166
      %s184 = sphi 0, %s184
      %s186 = sphi 0, %s184
      %s187 = sphi 0, %s186
      %s201 = sphi 0, %s187
      %s205 = sphi 0, %s205
      %s207 = sphi 0, %s205
      %s208 = sphi 0, %s207
      %s222 = sphi 0, %s208
      %s226 = sphi 0, %s226
      %s228 = sphi 0, %s226
      %s229 = sphi 0, %s228
      %s243 = sphi 0, %s229
      %s247 = sphi 0, %s247
      %s249 = sphi 0, %s247
      %s250 = sphi 0, %s249
      %s264 = sphi 0, %s250
      %s270 = sphi 0, %s272
      %s273 = sphi 0, %s270
      %s274 = sphi 0, %s273
      %s290 = sphi 0, %s274
    $region4: #{ddpm_forward.1} parent=1 // loop_header_branch
      %22 = sbr.rel (%p20) target = $region8
    $region5: #{ddpm_forward.1} parent=1 // loop_body
      %s24 = ssub.s32 %s19, 1
      %s25 = ssub.s32 %s19, 2
      %s26 = sadd.s32 %s19, 1
      %s28 = sadd.s32 %s27, 1
      %p31 = scmp.eq.s32.totalorder %s19, 1
      %p32 = scmp.ne.s32.totalorder %s27, %s29
      %p33 = scmp.eq.s32.totalorder %s19, 0
      %p34 = por %p32, %p33
      %p35 = scmp.ne.s32.totalorder %s27, %s29
      %p36 = scmp.eq.s32.totalorder %s24, 1
      %p37 = por %p35, %p36
      %p38 = scmp.ne.s32.totalorder %s29, %s30
      %p39 = scmp.eq.s32.totalorder %s24, 0
      %p40 = por %p38, %p39
      %p41 = scmp.ne.s32.totalorder %s29, %s30
      %p42 = scmp.eq.s32.totalorder %s25, 1
      %p43 = por %p41, %p42
      %p45 = scmp.ne.s32.totalorder %s30, %s44
      %p46 = scmp.eq.s32.totalorder %s25, 0
      %p47 = por %p45, %p46
      %s49 = sadd.s32 %s48, 1
      %p52 = scmp.eq.s32.totalorder %s19, 1
      %p53 = scmp.ne.s32.totalorder %s48, %s50
      %p54 = scmp.eq.s32.totalorder %s19, 0
      %p55 = por %p53, %p54
      %p56 = scmp.ne.s32.totalorder %s48, %s50
      %p57 = scmp.eq.s32.totalorder %s24, 1
      %p58 = por %p56, %p57
      %p59 = scmp.ne.s32.totalorder %s50, %s51
      %p60 = scmp.eq.s32.totalorder %s24, 0
      %p61 = por %p59, %p60
      %p62 = scmp.ne.s32.totalorder %s50, %s51
      %p63 = scmp.eq.s32.totalorder %s25, 1
      %p64 = por %p62, %p63
      %p66 = scmp.ne.s32.totalorder %s51, %s65
      %p67 = scmp.eq.s32.totalorder %s25, 0
      %p68 = por %p66, %p67
      %s69 = ssub.s32 %s19, %s26
      %p70 = scmp.eq.s32.totalorder %s69, 0
      %s72 = sadd.s32 %s71, 1
      %s73 = scalar_select %p70, %s71, %s72
      %p76 = pneg %p70
      %p77 = scmp.eq.s32.totalorder %s19, 1
      %p78 = por %p76, %p77
      %p79 = scmp.ne.s32.totalorder %s71, %s74
      %p80 = scmp.eq.s32.totalorder %s19, 0
      %p81 = por %p79, %p80
      %p82 = scmp.ne.s32.totalorder %s71, %s74
      %p83 = scmp.eq.s32.totalorder %s24, 1
      %p84 = por %p82, %p83
      %p85 = scmp.ne.s32.totalorder %s74, %s75
      %p86 = scmp.eq.s32.totalorder %s24, 0
      %p87 = por %p85, %p86
      %p88 = scmp.ne.s32.totalorder %s74, %s75
      %p89 = scmp.eq.s32.totalorder %s25, 1
      %p90 = por %p88, %p89
      %p92 = scmp.ne.s32.totalorder %s75, %s91
      %p93 = scmp.eq.s32.totalorder %s25, 0
      %p94 = por %p92, %p93
      %s95 = ssub.s32 %s19, %s26
      %p96 = scmp.eq.s32.totalorder %s95, 0
      %s98 = sadd.s32 %s97, 1
      %s99 = scalar_select %p96, %s97, %s98
      %p102 = pneg %p96
      %p103 = scmp.eq.s32.totalorder %s19, 1
      %p104 = por %p102, %p103
      %p105 = scmp.ne.s32.totalorder %s97, %s100
      %p106 = scmp.eq.s32.totalorder %s19, 0
      %p107 = por %p105, %p106
      %p108 = scmp.ne.s32.totalorder %s97, %s100
      %p109 = scmp.eq.s32.totalorder %s24, 1
      %p110 = por %p108, %p109
      %p111 = scmp.ne.s32.totalorder %s100, %s101
      %p112 = scmp.eq.s32.totalorder %s24, 0
      %p113 = por %p111, %p112
      %p114 = scmp.ne.s32.totalorder %s100, %s101
      %p115 = scmp.eq.s32.totalorder %s25, 1
      %p116 = por %p114, %p115
      %p118 = scmp.ne.s32.totalorder %s101, %s117
      %p119 = scmp.eq.s32.totalorder %s25, 0
      %p120 = por %p118, %p119
      %s122 = sadd.s32 %s121, 1
      %p125 = scmp.eq.s32.totalorder %s19, 1
      %p126 = scmp.ne.s32.totalorder %s121, %s123
      %p127 = scmp.eq.s32.totalorder %s19, 0
      %p128 = por %p126, %p127
      %p129 = scmp.ne.s32.totalorder %s121, %s123
      %p130 = scmp.eq.s32.totalorder %s24, 1
      %p131 = por %p129, %p130
      %p132 = scmp.ne.s32.totalorder %s123, %s124
      %p133 = scmp.eq.s32.totalorder %s24, 0
      %p134 = por %p132, %p133
      %p135 = scmp.ne.s32.totalorder %s123, %s124
      %p136 = scmp.eq.s32.totalorder %s25, 1
      %p137 = por %p135, %p136
      %p139 = scmp.ne.s32.totalorder %s124, %s138
      %p140 = scmp.eq.s32.totalorder %s25, 0
      %p141 = por %p139, %p140
      %s143 = sadd.s32 %s142, 1
      %p146 = scmp.eq.s32.totalorder %s19, 1
      %p147 = scmp.ne.s32.totalorder %s142, %s144
      %p148 = scmp.eq.s32.totalorder %s19, 0
      %p149 = por %p147, %p148
      %p150 = scmp.ne.s32.totalorder %s142, %s144
      %p151 = scmp.eq.s32.totalorder %s24, 1
      %p152 = por %p150, %p151
      %p153 = scmp.ne.s32.totalorder %s144, %s145
      %p154 = scmp.eq.s32.totalorder %s24, 0
      %p155 = por %p153, %p154
      %p156 = scmp.ne.s32.totalorder %s144, %s145
      %p157 = scmp.eq.s32.totalorder %s25, 1
      %p158 = por %p156, %p157
      %p160 = scmp.ne.s32.totalorder %s145, %s159
      %p161 = scmp.eq.s32.totalorder %s25, 0
      %p162 = por %p160, %p161
      %s164 = sadd.s32 %s163, 1
      %p167 = scmp.eq.s32.totalorder %s19, 1
      %p168 = scmp.ne.s32.totalorder %s163, %s165
      %p169 = scmp.eq.s32.totalorder %s19, 0
      %p170 = por %p168, %p169
      %p171 = scmp.ne.s32.totalorder %s163, %s165
      %p172 = scmp.eq.s32.totalorder %s24, 1
      %p173 = por %p171, %p172
      %p174 = scmp.ne.s32.totalorder %s165, %s166
      %p175 = scmp.eq.s32.totalorder %s24, 0
      %p176 = por %p174, %p175
      %p177 = scmp.ne.s32.totalorder %s165, %s166
      %p178 = scmp.eq.s32.totalorder %s25, 1
      %p179 = por %p177, %p178
      %p181 = scmp.ne.s32.totalorder %s166, %s180
      %p182 = scmp.eq.s32.totalorder %s25, 0
      %p183 = por %p181, %p182
      %s185 = sadd.s32 %s184, 1
      %p188 = scmp.eq.s32.totalorder %s19, 1
      %p189 = scmp.ne.s32.totalorder %s184, %s186
      %p190 = scmp.eq.s32.totalorder %s19, 0
      %p191 = por %p189, %p190
      %p192 = scmp.ne.s32.totalorder %s184, %s186
      %p193 = scmp.eq.s32.totalorder %s24, 1
      %p194 = por %p192, %p193
      %p195 = scmp.ne.s32.totalorder %s186, %s187
      %p196 = scmp.eq.s32.totalorder %s24, 0
      %p197 = por %p195, %p196
      %p198 = scmp.ne.s32.totalorder %s186, %s187
      %p199 = scmp.eq.s32.totalorder %s25, 1
      %p200 = por %p198, %p199
      %p202 = scmp.ne.s32.totalorder %s187, %s201
      %p203 = scmp.eq.s32.totalorder %s25, 0
      %p204 = por %p202, %p203
      %s206 = sadd.s32 %s205, 1
      %p209 = scmp.eq.s32.totalorder %s19, 1
      %p210 = scmp.ne.s32.totalorder %s205, %s207
      %p211 = scmp.eq.s32.totalorder %s19, 0
      %p212 = por %p210, %p211
      %p213 = scmp.ne.s32.totalorder %s205, %s207
      %p214 = scmp.eq.s32.totalorder %s24, 1
      %p215 = por %p213, %p214
      %p216 = scmp.ne.s32.totalorder %s207, %s208
      %p217 = scmp.eq.s32.totalorder %s24, 0
      %p218 = por %p216, %p217
      %p219 = scmp.ne.s32.totalorder %s207, %s208
      %p220 = scmp.eq.s32.totalorder %s25, 1
      %p221 = por %p219, %p220
      %p223 = scmp.ne.s32.totalorder %s208, %s222
      %p224 = scmp.eq.s32.totalorder %s25, 0
      %p225 = por %p223, %p224
      %s227 = sadd.s32 %s226, 1
      %p230 = scmp.eq.s32.totalorder %s19, 1
      %p231 = scmp.ne.s32.totalorder %s226, %s228
      %p232 = scmp.eq.s32.totalorder %s19, 0
      %p233 = por %p231, %p232
      %p234 = scmp.ne.s32.totalorder %s226, %s228
      %p235 = scmp.eq.s32.totalorder %s24, 1
      %p236 = por %p234, %p235
      %p237 = scmp.ne.s32.totalorder %s228, %s229
      %p238 = scmp.eq.s32.totalorder %s24, 0
      %p239 = por %p237, %p238
      %p240 = scmp.ne.s32.totalorder %s228, %s229
      %p241 = scmp.eq.s32.totalorder %s25, 1
      %p242 = por %p240, %p241
      %p244 = scmp.ne.s32.totalorder %s229, %s243
      %p245 = scmp.eq.s32.totalorder %s25, 0
      %p246 = por %p244, %p245
      %s248 = sadd.s32 %s247, 1
      %p251 = scmp.eq.s32.totalorder %s19, 1
      %p252 = scmp.ne.s32.totalorder %s247, %s249
      %p253 = scmp.eq.s32.totalorder %s19, 0
      %p254 = por %p252, %p253
      %p255 = scmp.ne.s32.totalorder %s247, %s249
      %p256 = scmp.eq.s32.totalorder %s24, 1
      %p257 = por %p255, %p256
      %p258 = scmp.ne.s32.totalorder %s249, %s250
      %p259 = scmp.eq.s32.totalorder %s24, 0
      %p260 = por %p258, %p259
      %p261 = scmp.ne.s32.totalorder %s249, %s250
      %p262 = scmp.eq.s32.totalorder %s25, 1
      %p263 = por %p261, %p262
      %p265 = scmp.ne.s32.totalorder %s250, %s264
      %p266 = scmp.eq.s32.totalorder %s25, 0
      %p267 = por %p265, %p266
      %s268 = ssub.s32 %s19, %s26
      %p269 = scmp.eq.s32.totalorder %s268, 0
      %s271 = sadd.s32 %s270, 1
      %s272 = scalar_select %p269, %s270, %s271
      %p275 = pneg %p269
      %p276 = scmp.eq.s32.totalorder %s19, 1
      %p277 = por %p275, %p276
      %p278 = scmp.ne.s32.totalorder %s270, %s273
      %p279 = scmp.eq.s32.totalorder %s19, 0
      %p280 = por %p278, %p279
      %p281 = scmp.ne.s32.totalorder %s270, %s273
      %p282 = scmp.eq.s32.totalorder %s24, 1
      %p283 = por %p281, %p282
      %p284 = scmp.ne.s32.totalorder %s273, %s274
      %p285 = scmp.eq.s32.totalorder %s24, 0
      %p286 = por %p284, %p285
      %p287 = scmp.ne.s32.totalorder %s273, %s274
      %p288 = scmp.eq.s32.totalorder %s25, 1
      %p289 = por %p287, %p288
      %p291 = scmp.ne.s32.totalorder %s274, %s290
      %p292 = scmp.eq.s32.totalorder %s25, 0
      %p293 = por %p291, %p292
      %p294 = scmp.le.s32.totalorder 1, %s19
      %p295 = scmp.lt.s32.totalorder %s19, 3
      %p296 = pnand %p294, %p295
      %p297 = pneg %p296
      // Predicated region
      $region9: #{ddpm_forward.1} parent=5 // pred_check
        _
      $region10: #{ddpm_forward.1} parent=5 // pred_check_branch
        %299 = sbr.rel (%p296) target = $region12
      $region11: #{ddpm_forward.1} parent=5 // pred_region
        %s300 = ssub.s32 %s19, 1
        // Predicated region
        $region13: #{ddpm_forward.1} parent=11 // pred_check
          %p301 = pneg %p40
        $region14: #{ddpm_forward.1} parent=11 // pred_check_branch
          %303 = sbr.rel (%p301) target = $region16
        $region15: #{ddpm_forward.1} parent=11 // pred_region
          %s305 = ssub.s32 16, 16
          %306 = vsyncadd [#allocation3], %s305
          %s308 = sshll.u32 %s0, 4
          %s309 = int_to_ptr.vmem [resolvable:$true] %s308
          %311 = dma.vmem_to_smem %s309, 16, [#allocation2], [#allocation3]
        $region16: #{ddpm_forward.1} parent=11 // pred_fallthru
          _
        // Predicated region
        $region17: #{ddpm_forward.1} parent=11 // pred_check
          %p312 = pneg %p61
        $region18: #{ddpm_forward.1} parent=11 // pred_check_branch
          %314 = sbr.rel (%p312) target = $region20
        $region19: #{ddpm_forward.1} parent=11 // pred_region
          %s316 = ssub.s32 16, 16
          %317 = vsyncadd [#allocation5], %s316
          %s319 = sshll.u32 %s1, 4
          %s320 = int_to_ptr.vmem [resolvable:$true] %s319
          %322 = dma.vmem_to_smem %s320, 16, [#allocation4], [#allocation5]
        $region20: #{ddpm_forward.1} parent=11 // pred_fallthru
          _
        // Predicated region
        $region21: #{ddpm_forward.1} parent=11 // pred_check
          %p323 = pneg %p134
        $region22: #{ddpm_forward.1} parent=11 // pred_check_branch
          %325 = sbr.rel (%p323) target = $region24
        $region23: #{ddpm_forward.1} parent=11 // pred_region
          _
        $region24: #{ddpm_forward.1} parent=11 // pred_fallthru
          _
        // Predicated region
        $region25: #{ddpm_forward.1} parent=11 // pred_check
          %p326 = pneg %p155
        $region26: #{ddpm_forward.1} parent=11 // pred_check_branch
          %328 = sbr.rel (%p326) target = $region28
        $region27: #{ddpm_forward.1} parent=11 // pred_region
          _
        $region28: #{ddpm_forward.1} parent=11 // pred_fallthru
          _
        // Predicated region
        $region29: #{ddpm_forward.1} parent=11 // pred_check
          %p329 = pneg %p176
        $region30: #{ddpm_forward.1} parent=11 // pred_check_branch
          %331 = sbr.rel (%p329) target = $region32
        $region31: #{ddpm_forward.1} parent=11 // pred_region
          _
        $region32: #{ddpm_forward.1} parent=11 // pred_fallthru
          _
        // Predicated region
        $region33: #{ddpm_forward.1} parent=11 // pred_check
          %p332 = pneg %p197
        $region34: #{ddpm_forward.1} parent=11 // pred_check_branch
          %334 = sbr.rel (%p332) target = $region36
        $region35: #{ddpm_forward.1} parent=11 // pred_region
          _
        $region36: #{ddpm_forward.1} parent=11 // pred_fallthru
          _
        // Predicated region
        $region37: #{ddpm_forward.1} parent=11 // pred_check
          %p335 = pneg %p218
        $region38: #{ddpm_forward.1} parent=11 // pred_check_branch
          %337 = sbr.rel (%p335) target = $region40
        $region39: #{ddpm_forward.1} parent=11 // pred_region
          _
        $region40: #{ddpm_forward.1} parent=11 // pred_fallthru
          _
        // Predicated region
        $region41: #{ddpm_forward.1} parent=11 // pred_check
          %p338 = pneg %p239
        $region42: #{ddpm_forward.1} parent=11 // pred_check_branch
          %340 = sbr.rel (%p338) target = $region44
        $region43: #{ddpm_forward.1} parent=11 // pred_region
          _
        $region44: #{ddpm_forward.1} parent=11 // pred_fallthru
          _
        // Predicated region
        $region45: #{ddpm_forward.1} parent=11 // pred_check
          %p341 = pneg %p260
        $region46: #{ddpm_forward.1} parent=11 // pred_check_branch
          %343 = sbr.rel (%p341) target = $region48
        $region47: #{ddpm_forward.1} parent=11 // pred_region
          _
        $region48: #{ddpm_forward.1} parent=11 // pred_fallthru
          _
      $region12: #{ddpm_forward.1} parent=5 // pred_fallthru
        _
      %p344 = scmp.lt.s32.totalorder %s19, 2
      // Predicated region
      $region49: #{ddpm_forward.1} parent=5 // pred_check
        %p345 = pneg %p344
      $region50: #{ddpm_forward.1} parent=5 // pred_check_branch
        %347 = sbr.rel (%p345) target = $region52
      $region51: #{ddpm_forward.1} parent=5 // pred_region
        // Predicated region
        $region53: #{ddpm_forward.1} parent=51 // pred_check
          %p348 = pneg %p81
        $region54: #{ddpm_forward.1} parent=51 // pred_check_branch
          %350 = sbr.rel (%p348) target = $region56
        $region55: #{ddpm_forward.1} parent=51 // pred_region
          %p351 = scmp.lt.s32.totalorder %s19, 1
          %s352 = scalar_select %p351, %s19, 1
          %s353 = smul.addr %s352, 32
          %s354 = smul.addr %s353, 8
          %s355 = scalar_lea.vmem %s2, %s354
        $region56: #{ddpm_forward.1} parent=51 // pred_fallthru
          _
        // Predicated region
        $region57: #{ddpm_forward.1} parent=51 // pred_check
          %p356 = pneg %p107
        $region58: #{ddpm_forward.1} parent=51 // pred_check_branch
          %358 = sbr.rel (%p356) target = $region60
        $region59: #{ddpm_forward.1} parent=51 // pred_region
          %p359 = scmp.lt.s32.totalorder %s19, 1
          %s360 = scalar_select %p359, %s19, 1
          %s361 = smul.addr %s360, 32
          %s362 = smul.addr %s361, 8
          %s363 = scalar_lea.vmem %s3, %s362
        $region60: #{ddpm_forward.1} parent=51 // pred_fallthru
          _
      $region52: #{ddpm_forward.1} parent=5 // pred_fallthru
        _
      %p364 = scmp.le.s32.totalorder 1, %s19
      %p365 = scmp.lt.s32.totalorder %s19, 3
      %p366 = pnand %p364, %p365
      %p367 = pneg %p366
      // Predicated region
      $region61: #{ddpm_forward.1} parent=5 // pred_check
        _
      $region62: #{ddpm_forward.1} parent=5 // pred_check_branch
        %369 = sbr.rel (%p366) target = $region64
      $region63: #{ddpm_forward.1} parent=5 // pred_region
        %s370 = ssub.s32 %s19, 1
        // Predicated region
        $region65: #{ddpm_forward.1} parent=63 // pred_check
          %p371 = pneg %p40
        $region66: #{ddpm_forward.1} parent=63 // pred_check_branch
          %373 = sbr.rel (%p371) target = $region68
        $region67: #{ddpm_forward.1} parent=63 // pred_region
          %374 = dma.done [#allocation3], 16
        $region68: #{ddpm_forward.1} parent=63 // pred_fallthru
          _
        // Predicated region
        $region69: #{ddpm_forward.1} parent=63 // pred_check
          %p375 = pneg %p61
        $region70: #{ddpm_forward.1} parent=63 // pred_check_branch
          %377 = sbr.rel (%p375) target = $region72
        $region71: #{ddpm_forward.1} parent=63 // pred_region
          %378 = dma.done [#allocation5], 16
        $region72: #{ddpm_forward.1} parent=63 // pred_fallthru
          _
        %379 = sfence
        %p380 = pneg %p40
        %p381 = pneg %p37
        %p382 = pneg %p61
        %p383 = pneg %p58
        %p384 = scmp.lt.s32.totalorder %s24, 1
        %s385 = scalar_select %p384, %s24, 1
        %s386 = smul.addr %s385, 32
        %s387 = smul.addr %s386, 8
        %s388 = scalar_lea.vmem %s2, %s387
        %p389 = pneg %p87
        %p390 = pneg %p84
        %p391 = scmp.lt.s32.totalorder %s24, 1
        %s392 = scalar_select %p391, %s24, 1
        %s393 = smul.addr %s392, 32
        %s394 = smul.addr %s393, 8
        %s395 = scalar_lea.vmem %s3, %s394
        %p396 = pneg %p113
        %p397 = pneg %p110
        %p398 = pneg %p134
        %p399 = pneg %p131
        %p400 = pneg %p155
        %p401 = pneg %p152
        %p402 = pneg %p176
        %p403 = pneg %p173
        %p404 = pneg %p197
        %p405 = pneg %p194
        %p406 = pneg %p218
        %p407 = pneg %p215
        %p408 = pneg %p239
        %p409 = pneg %p236
        %p410 = pneg %p260
        %p411 = pneg %p257
        %p412 = pneg %p286
        %p413 = pneg %p283
        %p414 = scmp.lt.s32.totalorder %s24, 1
        %s415 = scalar_select %p414, %s24, 1
        %s416 = scalar_lea.vmem %s11, %s415
        %p417 = scmp.lt.s32.totalorder %s24, 1
        %s418 = scalar_select %p417, %s24, 1
        %s419 = smul.addr %s418, 32
        %s420 = smul.addr %s419, 8
        %s421 = scalar_lea.vmem %s2, %s420
        %p422 = scmp.lt.s32.totalorder %s24, 1
        %s423 = scalar_select %p422, %s24, 1
        %s424 = smul.addr %s423, 32
        %s425 = smul.addr %s424, 8
        %s426 = scalar_lea.vmem %s3, %s425
        %p427 = scmp.lt.s32.totalorder %s24, 1
        %s428 = scalar_select %p427, %s24, 1
        %s429 = scalar_lea.vmem %s11, %s428
        %s430 = sld [smem:[#allocation2 + %s24]]
        %v431 = vld [vmem:[%s421] sm:$0xff]
        %v432 = vld [vmem:[%s421 + $0x8] sm:$0xff]
        %v433 = vld [vmem:[%s421 + $0x10] sm:$0xff]
        %v434 = vld [vmem:[%s421 + $0x18] sm:$0xff]
        %v435 = vld [vmem:[%s421 + $0x20] sm:$0xff]
        %v436 = vld [vmem:[%s421 + $0x28] sm:$0xff]
        %v437 = vld [vmem:[%s421 + $0x30] sm:$0xff]
        %v438 = vld [vmem:[%s421 + $0x38] sm:$0xff]
        %v439 = vld [vmem:[%s421 + $0x40] sm:$0xff]
        %v440 = vld [vmem:[%s421 + $0x48] sm:$0xff]
        %v441 = vld [vmem:[%s421 + $0x50] sm:$0xff]
        %v442 = vld [vmem:[%s421 + $0x58] sm:$0xff]
        %v443 = vld [vmem:[%s421 + $0x60] sm:$0xff]
        %v444 = vld [vmem:[%s421 + $0x68] sm:$0xff]
        %v445 = vld [vmem:[%s421 + $0x70] sm:$0xff]
        %v446 = vld [vmem:[%s421 + $0x78] sm:$0xff]
        %v447 = vld [vmem:[%s421 + $0x80] sm:$0xff]
        %v448 = vld [vmem:[%s421 + $0x88] sm:$0xff]
        %v449 = vld [vmem:[%s421 + $0x90] sm:$0xff]
        %v450 = vld [vmem:[%s421 + $0x98] sm:$0xff]
        %v451 = vld [vmem:[%s421 + $0xa0] sm:$0xff]
        %v452 = vld [vmem:[%s421 + $0xa8] sm:$0xff]
        %v453 = vld [vmem:[%s421 + $0xb0] sm:$0xff]
        %v454 = vld [vmem:[%s421 + $0xb8] sm:$0xff]
        %v455 = vld [vmem:[%s421 + $0xc0] sm:$0xff]
        %v456 = vld [vmem:[%s421 + $0xc8] sm:$0xff]
        %v457 = vld [vmem:[%s421 + $0xd0] sm:$0xff]
        %v458 = vld [vmem:[%s421 + $0xd8] sm:$0xff]
        %v459 = vld [vmem:[%s421 + $0xe0] sm:$0xff]
        %v460 = vld [vmem:[%s421 + $0xe8] sm:$0xff]
        %v461 = vld [vmem:[%s421 + $0xf0] sm:$0xff]
        %v462 = vld [vmem:[%s421 + $0xf8] sm:$0xff]
        %v463 = vstv %s430
        %v464 = vmul.f32 %v463, %v431
        %v465 = vmul.f32 %v463, %v432
        %v466 = vmul.f32 %v463, %v433
        %v467 = vmul.f32 %v463, %v434
        %v468 = vmul.f32 %v463, %v435
        %v469 = vmul.f32 %v463, %v436
        %v470 = vmul.f32 %v463, %v437
        %v471 = vmul.f32 %v463, %v438
        %v472 = vmul.f32 %v463, %v439
        %v473 = vmul.f32 %v463, %v440
        %v474 = vmul.f32 %v463, %v441
        %v475 = vmul.f32 %v463, %v442
        %v476 = vmul.f32 %v463, %v443
        %v477 = vmul.f32 %v463, %v444
        %v478 = vmul.f32 %v463, %v445
        %v479 = vmul.f32 %v463, %v446
        %v480 = vmul.f32 %v463, %v447
        %v481 = vmul.f32 %v463, %v448
        %v482 = vmul.f32 %v463, %v449
        %v483 = vmul.f32 %v463, %v450
        %v484 = vmul.f32 %v463, %v451
        %v485 = vmul.f32 %v463, %v452
        %v486 = vmul.f32 %v463, %v453
        %v487 = vmul.f32 %v463, %v454
        %v488 = vmul.f32 %v463, %v455
        %v489 = vmul.f32 %v463, %v456
        %v490 = vmul.f32 %v463, %v457
        %v491 = vmul.f32 %v463, %v458
        %v492 = vmul.f32 %v463, %v459
        %v493 = vmul.f32 %v463, %v460
        %v494 = vmul.f32 %v463, %v461
        %v495 = vmul.f32 %v463, %v462
        %s496 = sld [smem:[#allocation4 + %s24]]
        %v497 = vld [vmem:[%s426] sm:$0xff]
        %v498 = vld [vmem:[%s426 + $0x8] sm:$0xff]
        %v499 = vld [vmem:[%s426 + $0x10] sm:$0xff]
        %v500 = vld [vmem:[%s426 + $0x18] sm:$0xff]
        %v501 = vld [vmem:[%s426 + $0x20] sm:$0xff]
        %v502 = vld [vmem:[%s426 + $0x28] sm:$0xff]
        %v503 = vld [vmem:[%s426 + $0x30] sm:$0xff]
        %v504 = vld [vmem:[%s426 + $0x38] sm:$0xff]
        %v505 = vld [vmem:[%s426 + $0x40] sm:$0xff]
        %v506 = vld [vmem:[%s426 + $0x48] sm:$0xff]
        %v507 = vld [vmem:[%s426 + $0x50] sm:$0xff]
        %v508 = vld [vmem:[%s426 + $0x58] sm:$0xff]
        %v509 = vld [vmem:[%s426 + $0x60] sm:$0xff]
        %v510 = vld [vmem:[%s426 + $0x68] sm:$0xff]
        %v511 = vld [vmem:[%s426 + $0x70] sm:$0xff]
        %v512 = vld [vmem:[%s426 + $0x78] sm:$0xff]
        %v513 = vld [vmem:[%s426 + $0x80] sm:$0xff]
        %v514 = vld [vmem:[%s426 + $0x88] sm:$0xff]
        %v515 = vld [vmem:[%s426 + $0x90] sm:$0xff]
        %v516 = vld [vmem:[%s426 + $0x98] sm:$0xff]
        %v517 = vld [vmem:[%s426 + $0xa0] sm:$0xff]
        %v518 = vld [vmem:[%s426 + $0xa8] sm:$0xff]
        %v519 = vld [vmem:[%s426 + $0xb0] sm:$0xff]
        %v520 = vld [vmem:[%s426 + $0xb8] sm:$0xff]
        %v521 = vld [vmem:[%s426 + $0xc0] sm:$0xff]
        %v522 = vld [vmem:[%s426 + $0xc8] sm:$0xff]
        %v523 = vld [vmem:[%s426 + $0xd0] sm:$0xff]
        %v524 = vld [vmem:[%s426 + $0xd8] sm:$0xff]
        %v525 = vld [vmem:[%s426 + $0xe0] sm:$0xff]
        %v526 = vld [vmem:[%s426 + $0xe8] sm:$0xff]
        %v527 = vld [vmem:[%s426 + $0xf0] sm:$0xff]
        %v528 = vld [vmem:[%s426 + $0xf8] sm:$0xff]
        %v529 = vstv %s496
        %v530 = vmul.f32 %v529, %v497
        %v531 = vmul.f32 %v529, %v498
        %v532 = vmul.f32 %v529, %v499
        %v533 = vmul.f32 %v529, %v500
        %v534 = vmul.f32 %v529, %v501
        %v535 = vmul.f32 %v529, %v502
        %v536 = vmul.f32 %v529, %v503
        %v537 = vmul.f32 %v529, %v504
        %v538 = vmul.f32 %v529, %v505
        %v539 = vmul.f32 %v529, %v506
        %v540 = vmul.f32 %v529, %v507
        %v541 = vmul.f32 %v529, %v508
        %v542 = vmul.f32 %v529, %v509
        %v543 = vmul.f32 %v529, %v510
        %v544 = vmul.f32 %v529, %v511
        %v545 = vmul.f32 %v529, %v512
        %v546 = vmul.f32 %v529, %v513
        %v547 = vmul.f32 %v529, %v514
        %v548 = vmul.f32 %v529, %v515
        %v549 = vmul.f32 %v529, %v516
        %v550 = vmul.f32 %v529, %v517
        %v551 = vmul.f32 %v529, %v518
        %v552 = vmul.f32 %v529, %v519
        %v553 = vmul.f32 %v529, %v520
        %v554 = vmul.f32 %v529, %v521
        %v555 = vmul.f32 %v529, %v522
        %v556 = vmul.f32 %v529, %v523
        %v557 = vmul.f32 %v529, %v524
        %v558 = vmul.f32 %v529, %v525
        %v559 = vmul.f32 %v529, %v526
        %v560 = vmul.f32 %v529, %v527
        %v561 = vmul.f32 %v529, %v528
        %v562 = vadd.f32 %v464, %v530
        %v563 = vadd.f32 %v465, %v531
        %v564 = vadd.f32 %v466, %v532
        %v565 = vadd.f32 %v467, %v533
        %v566 = vadd.f32 %v468, %v534
        %v567 = vadd.f32 %v469, %v535
        %v568 = vadd.f32 %v470, %v536
        %v569 = vadd.f32 %v471, %v537
        %v570 = vadd.f32 %v472, %v538
        %v571 = vadd.f32 %v473, %v539
        %v572 = vadd.f32 %v474, %v540
        %v573 = vadd.f32 %v475, %v541
        %v574 = vadd.f32 %v476, %v542
        %v575 = vadd.f32 %v477, %v543
        %v576 = vadd.f32 %v478, %v544
        %v577 = vadd.f32 %v479, %v545
        %v578 = vadd.f32 %v480, %v546
        %v579 = vadd.f32 %v481, %v547
        %v580 = vadd.f32 %v482, %v548
        %v581 = vadd.f32 %v483, %v549
        %v582 = vadd.f32 %v484, %v550
        %v583 = vadd.f32 %v485, %v551
        %v584 = vadd.f32 %v486, %v552
        %v585 = vadd.f32 %v487, %v553
        %v586 = vadd.f32 %v488, %v554
        %v587 = vadd.f32 %v489, %v555
        %v588 = vadd.f32 %v490, %v556
        %v589 = vadd.f32 %v491, %v557
        %v590 = vadd.f32 %v492, %v558
        %v591 = vadd.f32 %v493, %v559
        %v592 = vadd.f32 %v494, %v560
        %v593 = vadd.f32 %v495, %v561
        %s594 = scalar_lea.vmem %s4, %s24
        %v595 = vld [vmem:[%s594] sm:$0x1]
        %v596 = vld [vmem:[%s8] sm:$0xff]
        %v597 = vld [vmem:[%s8 + $0x8] sm:$0xff]
        %v598 = vld [vmem:[%s8 + $0x10] sm:$0xff]
        %v599 = vld [vmem:[%s8 + $0x18] sm:$0xff]
        %s600 = scalar_lea.vmem %s5, %s24
        %v601 = vld [vmem:[%s600] sm:$0x1]
        %vm602 = vcmask 261120
        %v604 = vsel %vm602, %v595, 0
        %606 = vmatprep.subr.mxu0 0.0
        %607 = vmatpush1.msra.mxu0 %v596
        %608 = vmatprep.subr.mxu0 0.0
        %609 = vmatpush1.msra.mxu0 %v597
        %610 = vmatprep.subr.mxu0 0.0
        %611 = vmatpush1.msra.mxu0 %v598
        %612 = vmatprep.subr.mxu0 0.0
        %613 = vmatpush1.msra.mxu0 %v599
        %614 = vmatprep.subr.mxu0 0.0
        %615 = vmatpush1.msra.mxu0 0.0
        %616 = vmatprep.subr.mxu0 0.0
        %617 = vmatpush1.msra.mxu0 0.0
        %618 = vmatprep.subr.mxu0 0.0
        %619 = vmatpush1.msra.mxu0 0.0
        %620 = vmatprep.subr.mxu0 0.0
        %621 = vmatpush1.msra.mxu0 0.0
        %622 = vmatprep.subr.mxu0 0.0
        %623 = vmatpush1.msra.mxu0 0.0
        %624 = vmatprep.subr.mxu0 0.0
        %625 = vmatpush1.msra.mxu0 0.0
        %626 = vmatprep.subr.mxu0 0.0
        %627 = vmatpush1.msra.mxu0 0.0
        %628 = vmatprep.subr.mxu0 0.0
        %629 = vmatpush1.msra.mxu0 0.0
        %630 = vmatprep.subr.mxu0 0.0
        %631 = vmatpush1.msra.mxu0 0.0
        %632 = vmatprep.subr.mxu0 0.0
        %633 = vmatpush1.msra.mxu0 0.0
        %634 = vmatprep.subr.mxu0 0.0
        %635 = vmatpush1.msra.mxu0 0.0
        %636 = vmatprep.subr.mxu0 0.0
        %637 = vmatpush1.msra.mxu0 0.0
        %638 = vmatprep.subr.mxu0 0.0
        %639 = vmatpush1.msra.mxu0 0.0
        %640 = vmatprep.subr.mxu0 0.0
        %641 = vmatpush1.msra.mxu0 0.0
        %642 = vmatprep.subr.mxu0 0.0
        %643 = vmatpush1.msra.mxu0 0.0
        %644 = vmatprep.subr.mxu0 0.0
        %645 = vmatpush1.msra.mxu0 0.0
        %646 = vmatprep.subr.mxu0 0.0
        %647 = vmatpush1.msra.mxu0 0.0
        %648 = vmatprep.subr.mxu0 0.0
        %649 = vmatpush1.msra.mxu0 0.0
        %650 = vmatprep.subr.mxu0 0.0
        %651 = vmatpush1.msra.mxu0 0.0
        %652 = vmatprep.subr.mxu0 0.0
        %653 = vmatpush1.msra.mxu0 0.0
        %654 = vmatprep.subr.mxu0 0.0
        %655 = vmatpush1.msra.mxu0 0.0
        %656 = vmatprep.subr.mxu0 0.0
        %657 = vmatpush1.msra.mxu0 0.0
        %658 = vmatprep.subr.mxu0 0.0
        %659 = vmatpush1.msra.mxu0 0.0
        %660 = vmatprep.subr.mxu0 0.0
        %661 = vmatpush1.msra.mxu0 0.0
        %662 = vmatprep.subr.mxu0 0.0
        %663 = vmatpush1.msra.mxu0 0.0
        %664 = vmatprep.subr.mxu0 0.0
        %665 = vmatpush1.msra.mxu0 0.0
        %666 = vmatprep.subr.mxu0 0.0
        %667 = vmatpush1.msra.mxu0 0.0
        %668 = vmatprep.subr.mxu0 0.0
        %669 = vmatpush1.msra.mxu0 0.0
        %670 = vmatprep.mubr.f32.mxu0 0.0
        %671 = vmatmul.mubr.f32.gmra.mrb[0].mxu0 %v604
        %v672 = vpop.f32.mrb[0].mxu0
        %v673 = vadd.f32 %v601, %v672
        %v674 = vpop.f32.mrb[0].mxu0
        %675 = vdwg.mxu0
        %v676 = vlaneseq
        %v677 = vshrl.u32 %v676, 7
        %v678 = vadd.s32 %v677, 8
        %v679 = vadd.s32 %v677, 16
        %v680 = vadd.s32 %v677, 24
        %v681 = vadd.s32 %v677, 32
        %v682 = vadd.s32 %v677, 40
        %v683 = vadd.s32 %v677, 48
        %v684 = vadd.s32 %v677, 56
        %v685 = vadd.s32 %v677, 64
        %v686 = vadd.s32 %v677, 72
        %v687 = vadd.s32 %v677, 80
        %v688 = vadd.s32 %v677, 88
        %v689 = vadd.s32 %v677, 96
        %v690 = vadd.s32 %v677, 104
        %v691 = vadd.s32 %v677, 112
        %v692 = vadd.s32 %v677, 120
        %v693 = vadd.s32 %v677, 128
        %v694 = vadd.s32 %v677, 136
        %v695 = vadd.s32 %v677, 144
        %v696 = vadd.s32 %v677, 152
        %v697 = vadd.s32 %v677, 160
        %v698 = vadd.s32 %v677, 168
        %v699 = vadd.s32 %v677, 176
        %v700 = vadd.s32 %v677, 184
        %v701 = vadd.s32 %v677, 192
        %v702 = vadd.s32 %v677, 200
        %v703 = vadd.s32 %v677, 208
        %v704 = vadd.s32 %v677, 216
        %v705 = vadd.s32 %v677, 224
        %v706 = vadd.s32 %v677, 232
        %v707 = vadd.s32 %v677, 240
        %v708 = vadd.s32 %v677, 248
        %vm709 = vcmp.lt.s32.totalorder %v677, 0
        %v710 = vsub.s32 0, %v677
        %v711 = vsel %vm709, %v710, %v677
        %v712 = vshrl.u32 %v711, 4
        %v713 = vand.u32 %v711, 15
        %v714 = vsub.s32 0, %v713
        %v715 = vsel %vm709, %v714, %v713
        %vm716 = vcmp.lt.s32.totalorder %v678, 0
        %v717 = vsub.s32 0, %v678
        %v718 = vsel %vm716, %v717, %v678
        %v719 = vshrl.u32 %v718, 4
        %v720 = vand.u32 %v718, 15
        %v721 = vsub.s32 0, %v720
        %v722 = vsel %vm716, %v721, %v720
        %vm723 = vcmp.lt.s32.totalorder %v679, 0
        %v724 = vsub.s32 0, %v679
        %v725 = vsel %vm723, %v724, %v679
        %v726 = vshrl.u32 %v725, 4
        %v727 = vand.u32 %v725, 15
        %v728 = vsub.s32 0, %v727
        %v729 = vsel %vm723, %v728, %v727
        %vm730 = vcmp.lt.s32.totalorder %v680, 0
        %v731 = vsub.s32 0, %v680
        %v732 = vsel %vm730, %v731, %v680
        %v733 = vshrl.u32 %v732, 4
        %v734 = vand.u32 %v732, 15
        %v735 = vsub.s32 0, %v734
        %v736 = vsel %vm730, %v735, %v734
        %vm737 = vcmp.lt.s32.totalorder %v681, 0
        %v738 = vsub.s32 0, %v681
        %v739 = vsel %vm737, %v738, %v681
        %v740 = vshrl.u32 %v739, 4
        %v741 = vand.u32 %v739, 15
        %v742 = vsub.s32 0, %v741
        %v743 = vsel %vm737, %v742, %v741
        %vm744 = vcmp.lt.s32.totalorder %v682, 0
        %v745 = vsub.s32 0, %v682
        %v746 = vsel %vm744, %v745, %v682
        %v747 = vshrl.u32 %v746, 4
        %v748 = vand.u32 %v746, 15
        %v749 = vsub.s32 0, %v748
        %v750 = vsel %vm744, %v749, %v748
        %vm751 = vcmp.lt.s32.totalorder %v683, 0
        %v752 = vsub.s32 0, %v683
        %v753 = vsel %vm751, %v752, %v683
        %v754 = vshrl.u32 %v753, 4
        %v755 = vand.u32 %v753, 15
        %v756 = vsub.s32 0, %v755
        %v757 = vsel %vm751, %v756, %v755
        %vm758 = vcmp.lt.s32.totalorder %v684, 0
        %v759 = vsub.s32 0, %v684
        %v760 = vsel %vm758, %v759, %v684
        %v761 = vshrl.u32 %v760, 4
        %v762 = vand.u32 %v760, 15
        %v763 = vsub.s32 0, %v762
        %v764 = vsel %vm758, %v763, %v762
        %vm765 = vcmp.lt.s32.totalorder %v685, 0
        %v766 = vsub.s32 0, %v685
        %v767 = vsel %vm765, %v766, %v685
        %v768 = vshrl.u32 %v767, 4
        %v769 = vand.u32 %v767, 15
        %v770 = vsub.s32 0, %v769
        %v771 = vsel %vm765, %v770, %v769
        %vm772 = vcmp.lt.s32.totalorder %v686, 0
        %v773 = vsub.s32 0, %v686
        %v774 = vsel %vm772, %v773, %v686
        %v775 = vshrl.u32 %v774, 4
        %v776 = vand.u32 %v774, 15
        %v777 = vsub.s32 0, %v776
        %v778 = vsel %vm772, %v777, %v776
        %vm779 = vcmp.lt.s32.totalorder %v687, 0
        %v780 = vsub.s32 0, %v687
        %v781 = vsel %vm779, %v780, %v687
        %v782 = vshrl.u32 %v781, 4
        %v783 = vand.u32 %v781, 15
        %v784 = vsub.s32 0, %v783
        %v785 = vsel %vm779, %v784, %v783
        %vm786 = vcmp.lt.s32.totalorder %v688, 0
        %v787 = vsub.s32 0, %v688
        %v788 = vsel %vm786, %v787, %v688
        %v789 = vshrl.u32 %v788, 4
        %v790 = vand.u32 %v788, 15
        %v791 = vsub.s32 0, %v790
        %v792 = vsel %vm786, %v791, %v790
        %vm793 = vcmp.lt.s32.totalorder %v689, 0
        %v794 = vsub.s32 0, %v689
        %v795 = vsel %vm793, %v794, %v689
        %v796 = vshrl.u32 %v795, 4
        %v797 = vand.u32 %v795, 15
        %v798 = vsub.s32 0, %v797
        %v799 = vsel %vm793, %v798, %v797
        %vm800 = vcmp.lt.s32.totalorder %v690, 0
        %v801 = vsub.s32 0, %v690
        %v802 = vsel %vm800, %v801, %v690
        %v803 = vshrl.u32 %v802, 4
        %v804 = vand.u32 %v802, 15
        %v805 = vsub.s32 0, %v804
        %v806 = vsel %vm800, %v805, %v804
        %vm807 = vcmp.lt.s32.totalorder %v691, 0
        %v808 = vsub.s32 0, %v691
        %v809 = vsel %vm807, %v808, %v691
        %v810 = vshrl.u32 %v809, 4
        %v811 = vand.u32 %v809, 15
        %v812 = vsub.s32 0, %v811
        %v813 = vsel %vm807, %v812, %v811
        %vm814 = vcmp.lt.s32.totalorder %v692, 0
        %v815 = vsub.s32 0, %v692
        %v816 = vsel %vm814, %v815, %v692
        %v817 = vshrl.u32 %v816, 4
        %v818 = vand.u32 %v816, 15
        %v819 = vsub.s32 0, %v818
        %v820 = vsel %vm814, %v819, %v818
        %vm821 = vcmp.lt.s32.totalorder %v693, 0
        %v822 = vsub.s32 0, %v693
        %v823 = vsel %vm821, %v822, %v693
        %v824 = vshrl.u32 %v823, 4
        %v825 = vand.u32 %v823, 15
        %v826 = vsub.s32 0, %v825
        %v827 = vsel %vm821, %v826, %v825
        %vm828 = vcmp.lt.s32.totalorder %v694, 0
        %v829 = vsub.s32 0, %v694
        %v830 = vsel %vm828, %v829, %v694
        %v831 = vshrl.u32 %v830, 4
        %v832 = vand.u32 %v830, 15
        %v833 = vsub.s32 0, %v832
        %v834 = vsel %vm828, %v833, %v832
        %vm835 = vcmp.lt.s32.totalorder %v695, 0
        %v836 = vsub.s32 0, %v695
        %v837 = vsel %vm835, %v836, %v695
        %v838 = vshrl.u32 %v837, 4
        %v839 = vand.u32 %v837, 15
        %v840 = vsub.s32 0, %v839
        %v841 = vsel %vm835, %v840, %v839
        %vm842 = vcmp.lt.s32.totalorder %v696, 0
        %v843 = vsub.s32 0, %v696
        %v844 = vsel %vm842, %v843, %v696
        %v845 = vshrl.u32 %v844, 4
        %v846 = vand.u32 %v844, 15
        %v847 = vsub.s32 0, %v846
        %v848 = vsel %vm842, %v847, %v846
        %vm849 = vcmp.lt.s32.totalorder %v697, 0
        %v850 = vsub.s32 0, %v697
        %v851 = vsel %vm849, %v850, %v697
        %v852 = vshrl.u32 %v851, 4
        %v853 = vand.u32 %v851, 15
        %v854 = vsub.s32 0, %v853
        %v855 = vsel %vm849, %v854, %v853
        %vm856 = vcmp.lt.s32.totalorder %v698, 0
        %v857 = vsub.s32 0, %v698
        %v858 = vsel %vm856, %v857, %v698
        %v859 = vshrl.u32 %v858, 4
        %v860 = vand.u32 %v858, 15
        %v861 = vsub.s32 0, %v860
        %v862 = vsel %vm856, %v861, %v860
        %vm863 = vcmp.lt.s32.totalorder %v699, 0
        %v864 = vsub.s32 0, %v699
        %v865 = vsel %vm863, %v864, %v699
        %v866 = vshrl.u32 %v865, 4
        %v867 = vand.u32 %v865, 15
        %v868 = vsub.s32 0, %v867
        %v869 = vsel %vm863, %v868, %v867
        %vm870 = vcmp.lt.s32.totalorder %v700, 0
        %v871 = vsub.s32 0, %v700
        %v872 = vsel %vm870, %v871, %v700
        %v873 = vshrl.u32 %v872, 4
        %v874 = vand.u32 %v872, 15
        %v875 = vsub.s32 0, %v874
        %v876 = vsel %vm870, %v875, %v874
        %vm877 = vcmp.lt.s32.totalorder %v701, 0
        %v878 = vsub.s32 0, %v701
        %v879 = vsel %vm877, %v878, %v701
        %v880 = vshrl.u32 %v879, 4
        %v881 = vand.u32 %v879, 15
        %v882 = vsub.s32 0, %v881
        %v883 = vsel %vm877, %v882, %v881
        %vm884 = vcmp.lt.s32.totalorder %v702, 0
        %v885 = vsub.s32 0, %v702
        %v886 = vsel %vm884, %v885, %v702
        %v887 = vshrl.u32 %v886, 4
        %v888 = vand.u32 %v886, 15
        %v889 = vsub.s32 0, %v888
        %v890 = vsel %vm884, %v889, %v888
        %vm891 = vcmp.lt.s32.totalorder %v703, 0
        %v892 = vsub.s32 0, %v703
        %v893 = vsel %vm891, %v892, %v703
        %v894 = vshrl.u32 %v893, 4
        %v895 = vand.u32 %v893, 15
        %v896 = vsub.s32 0, %v895
        %v897 = vsel %vm891, %v896, %v895
        %vm898 = vcmp.lt.s32.totalorder %v704, 0
        %v899 = vsub.s32 0, %v704
        %v900 = vsel %vm898, %v899, %v704
        %v901 = vshrl.u32 %v900, 4
        %v902 = vand.u32 %v900, 15
        %v903 = vsub.s32 0, %v902
        %v904 = vsel %vm898, %v903, %v902
        %vm905 = vcmp.lt.s32.totalorder %v705, 0
        %v906 = vsub.s32 0, %v705
        %v907 = vsel %vm905, %v906, %v705
        %v908 = vshrl.u32 %v907, 4
        %v909 = vand.u32 %v907, 15
        %v910 = vsub.s32 0, %v909
        %v911 = vsel %vm905, %v910, %v909
        %vm912 = vcmp.lt.s32.totalorder %v706, 0
        %v913 = vsub.s32 0, %v706
        %v914 = vsel %vm912, %v913, %v706
        %v915 = vshrl.u32 %v914, 4
        %v916 = vand.u32 %v914, 15
        %v917 = vsub.s32 0, %v916
        %v918 = vsel %vm912, %v917, %v916
        %vm919 = vcmp.lt.s32.totalorder %v707, 0
        %v920 = vsub.s32 0, %v707
        %v921 = vsel %vm919, %v920, %v707
        %v922 = vshrl.u32 %v921, 4
        %v923 = vand.u32 %v921, 15
        %v924 = vsub.s32 0, %v923
        %v925 = vsel %vm919, %v924, %v923
        %vm926 = vcmp.lt.s32.totalorder %v708, 0
        %v927 = vsub.s32 0, %v708
        %v928 = vsel %vm926, %v927, %v708
        %v929 = vshrl.u32 %v928, 4
        %v930 = vand.u32 %v928, 15
        %v931 = vsub.s32 0, %v930
        %v932 = vsel %vm926, %v931, %v930
        %vm933 = vcmp.ne.s32.totalorder %v715, 0
        %vm934 = vcmp.ne.s32.totalorder %v722, 0
        %vm935 = vcmp.ne.s32.totalorder %v729, 0
        %vm936 = vcmp.ne.s32.totalorder %v736, 0
        %vm937 = vcmp.ne.s32.totalorder %v743, 0
        %vm938 = vcmp.ne.s32.totalorder %v750, 0
        %vm939 = vcmp.ne.s32.totalorder %v757, 0
        %vm940 = vcmp.ne.s32.totalorder %v764, 0
        %vm941 = vcmp.ne.s32.totalorder %v771, 0
        %vm942 = vcmp.ne.s32.totalorder %v778, 0
        %vm943 = vcmp.ne.s32.totalorder %v785, 0
        %vm944 = vcmp.ne.s32.totalorder %v792, 0
        %vm945 = vcmp.ne.s32.totalorder %v799, 0
        %vm946 = vcmp.ne.s32.totalorder %v806, 0
        %vm947 = vcmp.ne.s32.totalorder %v813, 0
        %vm948 = vcmp.ne.s32.totalorder %v820, 0
        %vm949 = vcmp.ne.s32.totalorder %v827, 0
        %vm950 = vcmp.ne.s32.totalorder %v834, 0
        %vm951 = vcmp.ne.s32.totalorder %v841, 0
        %vm952 = vcmp.ne.s32.totalorder %v848, 0
        %vm953 = vcmp.ne.s32.totalorder %v855, 0
        %vm954 = vcmp.ne.s32.totalorder %v862, 0
        %vm955 = vcmp.ne.s32.totalorder %v869, 0
        %vm956 = vcmp.ne.s32.totalorder %v876, 0
        %vm957 = vcmp.ne.s32.totalorder %v883, 0
        %vm958 = vcmp.ne.s32.totalorder %v890, 0
        %vm959 = vcmp.ne.s32.totalorder %v897, 0
        %vm960 = vcmp.ne.s32.totalorder %v904, 0
        %vm961 = vcmp.ne.s32.totalorder %v911, 0
        %vm962 = vcmp.ne.s32.totalorder %v918, 0
        %vm963 = vcmp.ne.s32.totalorder %v925, 0
        %vm964 = vcmp.ne.s32.totalorder %v932, 0
        %vm965 = vcmp.lt.s32.totalorder %v715, 0
        %vm966 = vcmp.lt.s32.totalorder %v722, 0
        %vm967 = vcmp.lt.s32.totalorder %v729, 0
        %vm968 = vcmp.lt.s32.totalorder %v736, 0
        %vm969 = vcmp.lt.s32.totalorder %v743, 0
        %vm970 = vcmp.lt.s32.totalorder %v750, 0
        %vm971 = vcmp.lt.s32.totalorder %v757, 0
        %vm972 = vcmp.lt.s32.totalorder %v764, 0
        %vm973 = vcmp.lt.s32.totalorder %v771, 0
        %vm974 = vcmp.lt.s32.totalorder %v778, 0
        %vm975 = vcmp.lt.s32.totalorder %v785, 0
        %vm976 = vcmp.lt.s32.totalorder %v792, 0
        %vm977 = vcmp.lt.s32.totalorder %v799, 0
        %vm978 = vcmp.lt.s32.totalorder %v806, 0
        %vm979 = vcmp.lt.s32.totalorder %v813, 0
        %vm980 = vcmp.lt.s32.totalorder %v820, 0
        %vm981 = vcmp.lt.s32.totalorder %v827, 0
        %vm982 = vcmp.lt.s32.totalorder %v834, 0
        %vm983 = vcmp.lt.s32.totalorder %v841, 0
        %vm984 = vcmp.lt.s32.totalorder %v848, 0
        %vm985 = vcmp.lt.s32.totalorder %v855, 0
        %vm986 = vcmp.lt.s32.totalorder %v862, 0
        %vm987 = vcmp.lt.s32.totalorder %v869, 0
        %vm988 = vcmp.lt.s32.totalorder %v876, 0
        %vm989 = vcmp.lt.s32.totalorder %v883, 0
        %vm990 = vcmp.lt.s32.totalorder %v890, 0
        %vm991 = vcmp.lt.s32.totalorder %v897, 0
        %vm992 = vcmp.lt.s32.totalorder %v904, 0
        %vm993 = vcmp.lt.s32.totalorder %v911, 0
        %vm994 = vcmp.lt.s32.totalorder %v918, 0
        %vm995 = vcmp.lt.s32.totalorder %v925, 0
        %vm996 = vcmp.lt.s32.totalorder %v932, 0
        %vm997 = vmand %vm965, %vm933
        %vm998 = vmand %vm966, %vm934
        %vm999 = vmand %vm967, %vm935
        %vm1000 = vmand %vm968, %vm936
        %vm1001 = vmand %vm969, %vm937
        %vm1002 = vmand %vm970, %vm938
        %vm1003 = vmand %vm971, %vm939
        %vm1004 = vmand %vm972, %vm940
        %vm1005 = vmand %vm973, %vm941
        %vm1006 = vmand %vm974, %vm942
        %vm1007 = vmand %vm975, %vm943
        %vm1008 = vmand %vm976, %vm944
        %vm1009 = vmand %vm977, %vm945
        %vm1010 = vmand %vm978, %vm946
        %vm1011 = vmand %vm979, %vm947
        %vm1012 = vmand %vm980, %vm948
        %vm1013 = vmand %vm981, %vm949
        %vm1014 = vmand %vm982, %vm950
        %vm1015 = vmand %vm983, %vm951
        %vm1016 = vmand %vm984, %vm952
        %vm1017 = vmand %vm985, %vm953
        %vm1018 = vmand %vm986, %vm954
        %vm1019 = vmand %vm987, %vm955
        %vm1020 = vmand %vm988, %vm956
        %vm1021 = vmand %vm989, %vm957
        %vm1022 = vmand %vm990, %vm958
        %vm1023 = vmand %vm991, %vm959
        %vm1024 = vmand %vm992, %vm960
        %vm1025 = vmand %vm993, %vm961
        %vm1026 = vmand %vm994, %vm962
        %vm1027 = vmand %vm995, %vm963
        %vm1028 = vmand %vm996, %vm964
        %v1029 = vadd.s32 %v715, 16
        %v1030 = vadd.s32 %v722, 16
        %v1031 = vadd.s32 %v729, 16
        %v1032 = vadd.s32 %v736, 16
        %v1033 = vadd.s32 %v743, 16
        %v1034 = vadd.s32 %v750, 16
        %v1035 = vadd.s32 %v757, 16
        %v1036 = vadd.s32 %v764, 16
        %v1037 = vadd.s32 %v771, 16
        %v1038 = vadd.s32 %v778, 16
        %v1039 = vadd.s32 %v785, 16
        %v1040 = vadd.s32 %v792, 16
        %v1041 = vadd.s32 %v799, 16
        %v1042 = vadd.s32 %v806, 16
        %v1043 = vadd.s32 %v813, 16
        %v1044 = vadd.s32 %v820, 16
        %v1045 = vadd.s32 %v827, 16
        %v1046 = vadd.s32 %v834, 16
        %v1047 = vadd.s32 %v841, 16
        %v1048 = vadd.s32 %v848, 16
        %v1049 = vadd.s32 %v855, 16
        %v1050 = vadd.s32 %v862, 16
        %v1051 = vadd.s32 %v869, 16
        %v1052 = vadd.s32 %v876, 16
        %v1053 = vadd.s32 %v883, 16
        %v1054 = vadd.s32 %v890, 16
        %v1055 = vadd.s32 %v897, 16
        %v1056 = vadd.s32 %v904, 16
        %v1057 = vadd.s32 %v911, 16
        %v1058 = vadd.s32 %v918, 16
        %v1059 = vadd.s32 %v925, 16
        %v1060 = vadd.s32 %v932, 16
        %v1061 = vsel %vm997, %v1029, %v715
        %v1062 = vsel %vm998, %v1030, %v722
        %v1063 = vsel %vm999, %v1031, %v729
        %v1064 = vsel %vm1000, %v1032, %v736
        %v1065 = vsel %vm1001, %v1033, %v743
        %v1066 = vsel %vm1002, %v1034, %v750
        %v1067 = vsel %vm1003, %v1035, %v757
        %v1068 = vsel %vm1004, %v1036, %v764
        %v1069 = vsel %vm1005, %v1037, %v771
        %v1070 = vsel %vm1006, %v1038, %v778
        %v1071 = vsel %vm1007, %v1039, %v785
        %v1072 = vsel %vm1008, %v1040, %v792
        %v1073 = vsel %vm1009, %v1041, %v799
        %v1074 = vsel %vm1010, %v1042, %v806
        %v1075 = vsel %vm1011, %v1043, %v813
        %v1076 = vsel %vm1012, %v1044, %v820
        %v1077 = vsel %vm1013, %v1045, %v827
        %v1078 = vsel %vm1014, %v1046, %v834
        %v1079 = vsel %vm1015, %v1047, %v841
        %v1080 = vsel %vm1016, %v1048, %v848
        %v1081 = vsel %vm1017, %v1049, %v855
        %v1082 = vsel %vm1018, %v1050, %v862
        %v1083 = vsel %vm1019, %v1051, %v869
        %v1084 = vsel %vm1020, %v1052, %v876
        %v1085 = vsel %vm1021, %v1053, %v883
        %v1086 = vsel %vm1022, %v1054, %v890
        %v1087 = vsel %vm1023, %v1055, %v897
        %v1088 = vsel %vm1024, %v1056, %v904
        %v1089 = vsel %vm1025, %v1057, %v911
        %v1090 = vsel %vm1026, %v1058, %v918
        %v1091 = vsel %vm1027, %v1059, %v925
        %v1092 = vsel %vm1028, %v1060, %v932
        %vm1093 = vcmp.gt.s32.totalorder %v1061, 0
        %vm1094 = vcmp.gt.s32.totalorder %v1062, 0
        %vm1095 = vcmp.gt.s32.totalorder %v1063, 0
        %vm1096 = vcmp.gt.s32.totalorder %v1064, 0
        %vm1097 = vcmp.gt.s32.totalorder %v1065, 0
        %vm1098 = vcmp.gt.s32.totalorder %v1066, 0
        %vm1099 = vcmp.gt.s32.totalorder %v1067, 0
        %vm1100 = vcmp.gt.s32.totalorder %v1068, 0
        %vm1101 = vcmp.gt.s32.totalorder %v1069, 0
        %vm1102 = vcmp.gt.s32.totalorder %v1070, 0
        %vm1103 = vcmp.gt.s32.totalorder %v1071, 0
        %vm1104 = vcmp.gt.s32.totalorder %v1072, 0
        %vm1105 = vcmp.gt.s32.totalorder %v1073, 0
        %vm1106 = vcmp.gt.s32.totalorder %v1074, 0
        %vm1107 = vcmp.gt.s32.totalorder %v1075, 0
        %vm1108 = vcmp.gt.s32.totalorder %v1076, 0
        %vm1109 = vcmp.gt.s32.totalorder %v1077, 0
        %vm1110 = vcmp.gt.s32.totalorder %v1078, 0
        %vm1111 = vcmp.gt.s32.totalorder %v1079, 0
        %vm1112 = vcmp.gt.s32.totalorder %v1080, 0
        %vm1113 = vcmp.gt.s32.totalorder %v1081, 0
        %vm1114 = vcmp.gt.s32.totalorder %v1082, 0
        %vm1115 = vcmp.gt.s32.totalorder %v1083, 0
        %vm1116 = vcmp.gt.s32.totalorder %v1084, 0
        %vm1117 = vcmp.gt.s32.totalorder %v1085, 0
        %vm1118 = vcmp.gt.s32.totalorder %v1086, 0
        %vm1119 = vcmp.gt.s32.totalorder %v1087, 0
        %vm1120 = vcmp.gt.s32.totalorder %v1088, 0
        %vm1121 = vcmp.gt.s32.totalorder %v1089, 0
        %vm1122 = vcmp.gt.s32.totalorder %v1090, 0
        %vm1123 = vcmp.gt.s32.totalorder %v1091, 0
        %vm1124 = vcmp.gt.s32.totalorder %v1092, 0
        %vm1125 = vcmp.lt.s32.totalorder %v1061, 15
        %vm1126 = vcmp.lt.s32.totalorder %v1062, 15
        %vm1127 = vcmp.lt.s32.totalorder %v1063, 15
        %vm1128 = vcmp.lt.s32.totalorder %v1064, 15
        %vm1129 = vcmp.lt.s32.totalorder %v1065, 15
        %vm1130 = vcmp.lt.s32.totalorder %v1066, 15
        %vm1131 = vcmp.lt.s32.totalorder %v1067, 15
        %vm1132 = vcmp.lt.s32.totalorder %v1068, 15
        %vm1133 = vcmp.lt.s32.totalorder %v1069, 15
        %vm1134 = vcmp.lt.s32.totalorder %v1070, 15
        %vm1135 = vcmp.lt.s32.totalorder %v1071, 15
        %vm1136 = vcmp.lt.s32.totalorder %v1072, 15
        %vm1137 = vcmp.lt.s32.totalorder %v1073, 15
        %vm1138 = vcmp.lt.s32.totalorder %v1074, 15
        %vm1139 = vcmp.lt.s32.totalorder %v1075, 15
        %vm1140 = vcmp.lt.s32.totalorder %v1076, 15
        %vm1141 = vcmp.lt.s32.totalorder %v1077, 15
        %vm1142 = vcmp.lt.s32.totalorder %v1078, 15
        %vm1143 = vcmp.lt.s32.totalorder %v1079, 15
        %vm1144 = vcmp.lt.s32.totalorder %v1080, 15
        %vm1145 = vcmp.lt.s32.totalorder %v1081, 15
        %vm1146 = vcmp.lt.s32.totalorder %v1082, 15
        %vm1147 = vcmp.lt.s32.totalorder %v1083, 15
        %vm1148 = vcmp.lt.s32.totalorder %v1084, 15
        %vm1149 = vcmp.lt.s32.totalorder %v1085, 15
        %vm1150 = vcmp.lt.s32.totalorder %v1086, 15
        %vm1151 = vcmp.lt.s32.totalorder %v1087, 15
        %vm1152 = vcmp.lt.s32.totalorder %v1088, 15
        %vm1153 = vcmp.lt.s32.totalorder %v1089, 15
        %vm1154 = vcmp.lt.s32.totalorder %v1090, 15
        %vm1155 = vcmp.lt.s32.totalorder %v1091, 15
        %vm1156 = vcmp.lt.s32.totalorder %v1092, 15
        %vm1187 = vcmask 1040384
        %v1188 = vrot.slane %v562, 7
        %v1189 = vrot.slane %v563, 7
        %v1190 = vsel %vm1187, %v1188, %v1189
        %v1191 = vrot.slane %v564, 7
        %v1192 = vsel %vm1187, %v1189, %v1191
        %v1193 = vrot.slane %v565, 7
        %v1194 = vsel %vm1187, %v1191, %v1193
        %v1195 = vrot.slane %v566, 7
        %v1196 = vsel %vm1187, %v1193, %v1195
        %v1197 = vrot.slane %v567, 7
        %v1198 = vsel %vm1187, %v1195, %v1197
        %v1199 = vrot.slane %v568, 7
        %v1200 = vsel %vm1187, %v1197, %v1199
        %v1201 = vrot.slane %v569, 7
        %v1202 = vsel %vm1187, %v1199, %v1201
        %v1203 = vrot.slane %v570, 7
        %v1204 = vsel %vm1187, %v1201, %v1203
        %v1205 = vrot.slane %v571, 7
        %v1206 = vsel %vm1187, %v1203, %v1205
        %v1207 = vrot.slane %v572, 7
        %v1208 = vsel %vm1187, %v1205, %v1207
        %v1209 = vrot.slane %v573, 7
        %v1210 = vsel %vm1187, %v1207, %v1209
        %v1211 = vrot.slane %v574, 7
        %v1212 = vsel %vm1187, %v1209, %v1211
        %v1213 = vrot.slane %v575, 7
        %v1214 = vsel %vm1187, %v1211, %v1213
        %v1215 = vrot.slane %v576, 7
        %v1216 = vsel %vm1187, %v1213, %v1215
        %v1217 = vrot.slane %v577, 7
        %v1218 = vsel %vm1187, %v1215, %v1217
        %v1219 = vrot.slane %v578, 7
        %v1220 = vsel %vm1187, %v1217, %v1219
        %v1221 = vrot.slane %v579, 7
        %v1222 = vsel %vm1187, %v1219, %v1221
        %v1223 = vrot.slane %v580, 7
        %v1224 = vsel %vm1187, %v1221, %v1223
        %v1225 = vrot.slane %v581, 7
        %v1226 = vsel %vm1187, %v1223, %v1225
        %v1227 = vrot.slane %v582, 7
        %v1228 = vsel %vm1187, %v1225, %v1227
        %v1229 = vrot.slane %v583, 7
        %v1230 = vsel %vm1187, %v1227, %v1229
        %v1231 = vrot.slane %v584, 7
        %v1232 = vsel %vm1187, %v1229, %v1231
        %v1233 = vrot.slane %v585, 7
        %v1234 = vsel %vm1187, %v1231, %v1233
        %v1235 = vrot.slane %v586, 7
        %v1236 = vsel %vm1187, %v1233, %v1235
        %v1237 = vrot.slane %v587, 7
        %v1238 = vsel %vm1187, %v1235, %v1237
        %v1239 = vrot.slane %v588, 7
        %v1240 = vsel %vm1187, %v1237, %v1239
        %v1241 = vrot.slane %v589, 7
        %v1242 = vsel %vm1187, %v1239, %v1241
        %v1243 = vrot.slane %v590, 7
        %v1244 = vsel %vm1187, %v1241, %v1243
        %v1245 = vrot.slane %v591, 7
        %v1246 = vsel %vm1187, %v1243, %v1245
        %v1277 = vsel %vm1187, 0.0, %v1188
        %v1278 = vsel %vm1093, 1, 0
        %v1279 = vsel %vm1094, 1, 0
        %v1280 = vsel %vm1095, 1, 0
        %v1281 = vsel %vm1096, 1, 0
        %v1282 = vsel %vm1097, 1, 0
        %v1283 = vsel %vm1098, 1, 0
        %v1284 = vsel %vm1099, 1, 0
        %v1285 = vsel %vm1100, 1, 0
        %v1286 = vsel %vm1101, 1, 0
        %v1287 = vsel %vm1102, 1, 0
        %v1288 = vsel %vm1103, 1, 0
        %v1289 = vsel %vm1104, 1, 0
        %v1290 = vsel %vm1105, 1, 0
        %v1291 = vsel %vm1106, 1, 0
        %v1292 = vsel %vm1107, 1, 0
        %v1293 = vsel %vm1108, 1, 0
        %v1294 = vsel %vm1109, 1, 0
        %v1295 = vsel %vm1110, 1, 0
        %v1296 = vsel %vm1111, 1, 0
        %v1297 = vsel %vm1112, 1, 0
        %v1298 = vsel %vm1113, 1, 0
        %v1299 = vsel %vm1114, 1, 0
        %v1300 = vsel %vm1115, 1, 0
        %v1301 = vsel %vm1116, 1, 0
        %v1302 = vsel %vm1117, 1, 0
        %v1303 = vsel %vm1118, 1, 0
        %v1304 = vsel %vm1119, 1, 0
        %v1305 = vsel %vm1120, 1, 0
        %v1306 = vsel %vm1121, 1, 0
        %v1307 = vsel %vm1122, 1, 0
        %v1308 = vsel %vm1123, 1, 0
        %v1309 = vsel %vm1124, 1, 0
        %vm1310 = vcmp.eq.s32.totalorder %v1278, 1
        %vm1311 = vcmp.eq.s32.totalorder %v1279, 1
        %vm1312 = vcmp.eq.s32.totalorder %v1280, 1
        %vm1313 = vcmp.eq.s32.totalorder %v1281, 1
        %vm1314 = vcmp.eq.s32.totalorder %v1282, 1
        %vm1315 = vcmp.eq.s32.totalorder %v1283, 1
        %vm1316 = vcmp.eq.s32.totalorder %v1284, 1
        %vm1317 = vcmp.eq.s32.totalorder %v1285, 1
        %vm1318 = vcmp.eq.s32.totalorder %v1286, 1
        %vm1319 = vcmp.eq.s32.totalorder %v1287, 1
        %vm1320 = vcmp.eq.s32.totalorder %v1288, 1
        %vm1321 = vcmp.eq.s32.totalorder %v1289, 1
        %vm1322 = vcmp.eq.s32.totalorder %v1290, 1
        %vm1323 = vcmp.eq.s32.totalorder %v1291, 1
        %vm1324 = vcmp.eq.s32.totalorder %v1292, 1
        %vm1325 = vcmp.eq.s32.totalorder %v1293, 1
        %vm1326 = vcmp.eq.s32.totalorder %v1294, 1
        %vm1327 = vcmp.eq.s32.totalorder %v1295, 1
        %vm1328 = vcmp.eq.s32.totalorder %v1296, 1
        %vm1329 = vcmp.eq.s32.totalorder %v1297, 1
        %vm1330 = vcmp.eq.s32.totalorder %v1298, 1
        %vm1331 = vcmp.eq.s32.totalorder %v1299, 1
        %vm1332 = vcmp.eq.s32.totalorder %v1300, 1
        %vm1333 = vcmp.eq.s32.totalorder %v1301, 1
        %vm1334 = vcmp.eq.s32.totalorder %v1302, 1
        %vm1335 = vcmp.eq.s32.totalorder %v1303, 1
        %vm1336 = vcmp.eq.s32.totalorder %v1304, 1
        %vm1337 = vcmp.eq.s32.totalorder %v1305, 1
        %vm1338 = vcmp.eq.s32.totalorder %v1306, 1
        %vm1339 = vcmp.eq.s32.totalorder %v1307, 1
        %vm1340 = vcmp.eq.s32.totalorder %v1308, 1
        %vm1341 = vcmp.eq.s32.totalorder %v1309, 1
        %v1342 = vsel %vm1312, %v1277, 0.0
        %v1343 = vsel %vm1313, %v1190, 0.0
        %v1344 = vsel %vm1314, %v1192, 0.0
        %v1345 = vsel %vm1315, %v1194, 0.0
        %v1346 = vsel %vm1316, %v1196, 0.0
        %v1347 = vsel %vm1317, %v1198, 0.0
        %v1348 = vsel %vm1318, %v1200, 0.0
        %v1349 = vsel %vm1319, %v1202, 0.0
        %v1350 = vsel %vm1320, %v1204, 0.0
        %v1351 = vsel %vm1321, %v1206, 0.0
        %v1352 = vsel %vm1322, %v1208, 0.0
        %v1353 = vsel %vm1323, %v1210, 0.0
        %v1354 = vsel %vm1324, %v1212, 0.0
        %v1355 = vsel %vm1325, %v1214, 0.0
        %v1356 = vsel %vm1326, %v1216, 0.0
        %v1357 = vsel %vm1327, %v1218, 0.0
        %v1358 = vsel %vm1328, %v1220, 0.0
        %v1359 = vsel %vm1329, %v1222, 0.0
        %v1360 = vsel %vm1330, %v1224, 0.0
        %v1361 = vsel %vm1331, %v1226, 0.0
        %v1362 = vsel %vm1332, %v1228, 0.0
        %v1363 = vsel %vm1333, %v1230, 0.0
        %v1364 = vsel %vm1334, %v1232, 0.0
        %v1365 = vsel %vm1335, %v1234, 0.0
        %v1366 = vsel %vm1336, %v1236, 0.0
        %v1367 = vsel %vm1337, %v1238, 0.0
        %v1368 = vsel %vm1338, %v1240, 0.0
        %v1369 = vsel %vm1339, %v1242, 0.0
        %v1370 = vsel %vm1340, %v1244, 0.0
        %v1371 = vsel %vm1341, %v1246, 0.0
        %v1372 = vld [vmem:[%s6] sm:$0xf]
        %s1373 = scalar_lea.vmem %s6, 4
        %v1374 = vld [vmem:[%s1373] sm:$0xf]
        %vm1375 = vcmask 31744
        %v1377 = vsel %vm1375, 0.0, 0
        %v1379 = vsel %vm1375, %v562, 0
        %v1381 = vsel %vm1375, %v563, 0
        %v1383 = vsel %vm1375, %v564, 0
        %v1385 = vsel %vm1375, %v565, 0
        %v1387 = vsel %vm1375, %v566, 0
        %v1389 = vsel %vm1375, %v567, 0
        %v1391 = vsel %vm1375, %v568, 0
        %v1393 = vsel %vm1375, %v569, 0
        %v1395 = vsel %vm1375, %v570, 0
        %v1397 = vsel %vm1375, %v571, 0
        %v1399 = vsel %vm1375, %v572, 0
        %v1401 = vsel %vm1375, %v573, 0
        %v1403 = vsel %vm1375, %v574, 0
        %v1405 = vsel %vm1375, %v575, 0
        %v1407 = vsel %vm1375, %v576, 0
        %v1409 = vsel %vm1375, %v577, 0
        %v1411 = vsel %vm1375, %v578, 0
        %v1413 = vsel %vm1375, %v579, 0
        %v1415 = vsel %vm1375, %v580, 0
        %v1417 = vsel %vm1375, %v581, 0
        %v1419 = vsel %vm1375, %v582, 0
        %v1421 = vsel %vm1375, %v583, 0
        %v1423 = vsel %vm1375, %v584, 0
        %v1425 = vsel %vm1375, %v585, 0
        %v1427 = vsel %vm1375, %v586, 0
        %v1429 = vsel %vm1375, %v587, 0
        %v1431 = vsel %vm1375, %v588, 0
        %v1433 = vsel %vm1375, %v589, 0
        %v1435 = vsel %vm1375, %v590, 0
        %v1437 = vsel %vm1375, %v591, 0
        %vm1439 = vcmask 1043456
        %v1441 = vsel %vm1439, %v1374, 0
        %1443 = vmatprep.subr.mxu0 0.0
        %1444 = vmatpush1.msra.mxu0 %v1441
        %1445 = vmatprep.subr.mxu0 0.0
        %1446 = vmatpush1.msra.mxu0 0.0
        %1447 = vmatprep.subr.mxu0 0.0
        %1448 = vmatpush1.msra.mxu0 0.0
        %1449 = vmatprep.subr.mxu0 0.0
        %1450 = vmatpush1.msra.mxu0 0.0
        %1451 = vmatprep.subr.mxu0 0.0
        %1452 = vmatpush1.msra.mxu0 0.0
        %1453 = vmatprep.subr.mxu0 0.0
        %1454 = vmatpush1.msra.mxu0 0.0
        %1455 = vmatprep.subr.mxu0 0.0
        %1456 = vmatpush1.msra.mxu0 0.0
        %1457 = vmatprep.subr.mxu0 0.0
        %1458 = vmatpush1.msra.mxu0 0.0
        %1459 = vmatprep.subr.mxu0 0.0
        %1460 = vmatpush1.msra.mxu0 0.0
        %1461 = vmatprep.subr.mxu0 0.0
        %1462 = vmatpush1.msra.mxu0 0.0
        %1463 = vmatprep.subr.mxu0 0.0
        %1464 = vmatpush1.msra.mxu0 0.0
        %1465 = vmatprep.subr.mxu0 0.0
        %1466 = vmatpush1.msra.mxu0 0.0
        %1467 = vmatprep.subr.mxu0 0.0
        %1468 = vmatpush1.msra.mxu0 0.0
        %1469 = vmatprep.subr.mxu0 0.0
        %1470 = vmatpush1.msra.mxu0 0.0
        %1471 = vmatprep.subr.mxu0 0.0
        %1472 = vmatpush1.msra.mxu0 0.0
        %1473 = vmatprep.subr.mxu0 0.0
        %1474 = vmatpush1.msra.mxu0 0.0
        %1475 = vmatprep.subr.mxu0 0.0
        %1476 = vmatpush1.msra.mxu0 0.0
        %1477 = vmatprep.subr.mxu0 0.0
        %1478 = vmatpush1.msra.mxu0 0.0
        %1479 = vmatprep.subr.mxu0 0.0
        %1480 = vmatpush1.msra.mxu0 0.0
        %1481 = vmatprep.subr.mxu0 0.0
        %1482 = vmatpush1.msra.mxu0 0.0
        %1483 = vmatprep.subr.mxu0 0.0
        %1484 = vmatpush1.msra.mxu0 0.0
        %1485 = vmatprep.subr.mxu0 0.0
        %1486 = vmatpush1.msra.mxu0 0.0
        %1487 = vmatprep.subr.mxu0 0.0
        %1488 = vmatpush1.msra.mxu0 0.0
        %1489 = vmatprep.subr.mxu0 0.0
        %1490 = vmatpush1.msra.mxu0 0.0
        %1491 = vmatprep.subr.mxu0 0.0
        %1492 = vmatpush1.msra.mxu0 0.0
        %1493 = vmatprep.subr.mxu0 0.0
        %1494 = vmatpush1.msra.mxu0 0.0
        %1495 = vmatprep.subr.mxu0 0.0
        %1496 = vmatpush1.msra.mxu0 0.0
        %1497 = vmatprep.subr.mxu0 0.0
        %1498 = vmatpush1.msra.mxu0 0.0
        %1499 = vmatprep.subr.mxu0 0.0
        %1500 = vmatpush1.msra.mxu0 0.0
        %1501 = vmatprep.subr.mxu0 0.0
        %1502 = vmatpush1.msra.mxu0 0.0
        %1503 = vmatprep.subr.mxu0 0.0
        %1504 = vmatpush1.msra.mxu0 0.0
        %1505 = vmatprep.subr.mxu0 0.0
        %1506 = vmatpush1.msra.mxu0 0.0
        %1507 = vmatprep.mubr.f32.mxu0 0.0
        %1508 = vmatmul.mubr.f32.gmra.mrb[0].mxu0 %v1377
        %v1509 = vpop.f32.mrb[0].mxu0
        %v1510 = vadd.f32 0.0, %v1509
        %v1511 = vpop.f32.mrb[0].mxu0
        %1512 = vmatprep.mubr.f32.mxu0 0.0
        %1513 = vmatmul.mubr.f32.gmra.mrb[0].mxu0 %v1377
        %v1514 = vpop.f32.mrb[0].mxu0
        %v1515 = vadd.f32 0.0, %v1514
        %v1516 = vpop.f32.mrb[0].mxu0
        %1517 = vmatprep.mubr.f32.mxu0 0.0
        %1518 = vmatmul.mubr.f32.gmra.mrb[0].mxu0 %v1379
        %v1519 = vpop.f32.mrb[0].mxu0
        %v1520 = vadd.f32 0.0, %v1519
        %v1521 = vpop.f32.mrb[0].mxu0
        %1522 = vmatprep.mubr.f32.mxu0 0.0
        %1523 = vmatmul.mubr.f32.gmra.mrb[0].mxu0 %v1381
        %v1524 = vpop.f32.mrb[0].mxu0
        %v1525 = vadd.f32 0.0, %v1524
        %v1526 = vpop.f32.mrb[0].mxu0
        %1527 = vmatprep.mubr.f32.mxu0 0.0
        %1528 = vmatmul.mubr.f32.gmra.mrb[0].mxu0 %v1383
        %v1529 = vpop.f32.mrb[0].mxu0
        %v1530 = vadd.f32 0.0, %v1529
        %v1531 = vpop.f32.mrb[0].mxu0
        %1532 = vmatprep.mubr.f32.mxu0 0.0
        %1533 = vmatmul.mubr.f32.gmra.mrb[0].mxu0 %v1385
        %v1534 = vpop.f32.mrb[0].mxu0
        %v1535 = vadd.f32 0.0, %v1534
        %v1536 = vpop.f32.mrb[0].mxu0
        %1537 = vmatprep.mubr.f32.mxu0 0.0
        %1538 = vmatmul.mubr.f32.gmra.mrb[0].mxu0 %v1387
        %v1539 = vpop.f32.mrb[0].mxu0
        %v1540 = vadd.f32 0.0, %v1539
        %v1541 = vpop.f32.mrb[0].mxu0
        %1542 = vmatprep.mubr.f32.mxu0 0.0
        %1543 = vmatmul.mubr.f32.gmra.mrb[0].mxu0 %v1389
        %v1544 = vpop.f32.mrb[0].mxu0
        %v1545 = vadd.f32 0.0, %v1544
        %v1546 = vpop.f32.mrb[0].mxu0
        %1547 = vmatprep.mubr.f32.mxu0 0.0
        %1548 = vmatmul.mubr.f32.gmra.mrb[0].mxu0 %v1391
        %v1549 = vpop.f32.mrb[0].mxu0
        %v1550 = vadd.f32 0.0, %v1549
        %v1551 = vpop.f32.mrb[0].mxu0
        %1552 = vmatprep.mubr.f32.mxu0 0.0
        %1553 = vmatmul.mubr.f32.gmra.mrb[0].mxu0 %v1393
        %v1554 = vpop.f32.mrb[0].mxu0
        %v1555 = vadd.f32 0.0, %v1554
        %v1556 = vpop.f32.mrb[0].mxu0
        %1557 = vmatprep.mubr.f32.mxu0 0.0
        %1558 = vmatmul.mubr.f32.gmra.mrb[0].mxu0 %v1395
        %v1559 = vpop.f32.mrb[0].mxu0
        %v1560 = vadd.f32 0.0, %v1559
        %v1561 = vpop.f32.mrb[0].mxu0
        %1562 = vmatprep.mubr.f32.mxu0 0.0
        %1563 = vmatmul.mubr.f32.gmra.mrb[0].mxu0 %v1397
        %v1564 = vpop.f32.mrb[0].mxu0
        %v1565 = vadd.f32 0.0, %v1564
        %v1566 = vpop.f32.mrb[0].mxu0
        %1567 = vmatprep.mubr.f32.mxu0 0.0
        %1568 = vmatmul.mubr.f32.gmra.mrb[0].mxu0 %v1399
        %v1569 = vpop.f32.mrb[0].mxu0
        %v1570 = vadd.f32 0.0, %v1569
        %v1571 = vpop.f32.mrb[0].mxu0
        %1572 = vmatprep.mubr.f32.mxu0 0.0
        %1573 = vmatmul.mubr.f32.gmra.mrb[0].mxu0 %v1401
        %v1574 = vpop.f32.mrb[0].mxu0
        %v1575 = vadd.f32 0.0, %v1574
        %v1576 = vpop.f32.mrb[0].mxu0
        %1577 = vmatprep.mubr.f32.mxu0 0.0
        %1578 = vmatmul.mubr.f32.gmra.mrb[0].mxu0 %v1403
        %v1579 = vpop.f32.mrb[0].mxu0
        %v1580 = vadd.f32 0.0, %v1579
        %v1581 = vpop.f32.mrb[0].mxu0
        %1582 = vmatprep.mubr.f32.mxu0 0.0
        %1583 = vmatmul.mubr.f32.gmra.mrb[0].mxu0 %v1405
        %v1584 = vpop.f32.mrb[0].mxu0
        %v1585 = vadd.f32 0.0, %v1584
        %v1586 = vpop.f32.mrb[0].mxu0
        %1587 = vmatprep.mubr.f32.mxu0 0.0
        %1588 = vmatmul.mubr.f32.gmra.mrb[0].mxu0 %v1407
        %v1589 = vpop.f32.mrb[0].mxu0
        %v1590 = vadd.f32 0.0, %v1589
        %v1591 = vpop.f32.mrb[0].mxu0
        %1592 = vmatprep.mubr.f32.mxu0 0.0
        %1593 = vmatmul.mubr.f32.gmra.mrb[0].mxu0 %v1409
        %v1594 = vpop.f32.mrb[0].mxu0
        %v1595 = vadd.f32 0.0, %v1594
        %v1596 = vpop.f32.mrb[0].mxu0
        %1597 = vmatprep.mubr.f32.mxu0 0.0
        %1598 = vmatmul.mubr.f32.gmra.mrb[0].mxu0 %v1411
        %v1599 = vpop.f32.mrb[0].mxu0
        %v1600 = vadd.f32 0.0, %v1599
        %v1601 = vpop.f32.mrb[0].mxu0
        %1602 = vmatprep.mubr.f32.mxu0 0.0
        %1603 = vmatmul.mubr.f32.gmra.mrb[0].mxu0 %v1413
        %v1604 = vpop.f32.mrb[0].mxu0
        %v1605 = vadd.f32 0.0, %v1604
        %v1606 = vpop.f32.mrb[0].mxu0
        %1607 = vmatprep.mubr.f32.mxu0 0.0
        %1608 = vmatmul.mubr.f32.gmra.mrb[0].mxu0 %v1415
        %v1609 = vpop.f32.mrb[0].mxu0
        %v1610 = vadd.f32 0.0, %v1609
        %v1611 = vpop.f32.mrb[0].mxu0
        %1612 = vmatprep.mubr.f32.mxu0 0.0
        %1613 = vmatmul.mubr.f32.gmra.mrb[0].mxu0 %v1417
        %v1614 = vpop.f32.mrb[0].mxu0
        %v1615 = vadd.f32 0.0, %v1614
        %v1616 = vpop.f32.mrb[0].mxu0
        %1617 = vmatprep.mubr.f32.mxu0 0.0
        %1618 = vmatmul.mubr.f32.gmra.mrb[0].mxu0 %v1419
        %v1619 = vpop.f32.mrb[0].mxu0
        %v1620 = vadd.f32 0.0, %v1619
        %v1621 = vpop.f32.mrb[0].mxu0
        %1622 = vmatprep.mubr.f32.mxu0 0.0
        %1623 = vmatmul.mubr.f32.gmra.mrb[0].mxu0 %v1421
        %v1624 = vpop.f32.mrb[0].mxu0
        %v1625 = vadd.f32 0.0, %v1624
        %v1626 = vpop.f32.mrb[0].mxu0
        %1627 = vmatprep.mubr.f32.mxu0 0.0
        %1628 = vmatmul.mubr.f32.gmra.mrb[0].mxu0 %v1423
        %v1629 = vpop.f32.mrb[0].mxu0
        %v1630 = vadd.f32 0.0, %v1629
        %v1631 = vpop.f32.mrb[0].mxu0
        %1632 = vmatprep.mubr.f32.mxu0 0.0
        %1633 = vmatmul.mubr.f32.gmra.mrb[0].mxu0 %v1425
        %v1634 = vpop.f32.mrb[0].mxu0
        %v1635 = vadd.f32 0.0, %v1634
        %v1636 = vpop.f32.mrb[0].mxu0
        %1637 = vmatprep.mubr.f32.mxu0 0.0
        %1638 = vmatmul.mubr.f32.gmra.mrb[0].mxu0 %v1427
        %v1639 = vpop.f32.mrb[0].mxu0
        %v1640 = vadd.f32 0.0, %v1639
        %v1641 = vpop.f32.mrb[0].mxu0
        %1642 = vmatprep.mubr.f32.mxu0 0.0
        %1643 = vmatmul.mubr.f32.gmra.mrb[0].mxu0 %v1429
        %v1644 = vpop.f32.mrb[0].mxu0
        %v1645 = vadd.f32 0.0, %v1644
        %v1646 = vpop.f32.mrb[0].mxu0
        %1647 = vmatprep.mubr.f32.mxu0 0.0
        %1648 = vmatmul.mubr.f32.gmra.mrb[0].mxu0 %v1431
        %v1649 = vpop.f32.mrb[0].mxu0
        %v1650 = vadd.f32 0.0, %v1649
        %v1651 = vpop.f32.mrb[0].mxu0
        %1652 = vmatprep.mubr.f32.mxu0 0.0
        %1653 = vmatmul.mubr.f32.gmra.mrb[0].mxu0 %v1433
        %v1654 = vpop.f32.mrb[0].mxu0
        %v1655 = vadd.f32 0.0, %v1654
        %v1656 = vpop.f32.mrb[0].mxu0
        %1657 = vmatprep.mubr.f32.mxu0 0.0
        %1658 = vmatmul.mubr.f32.gmra.mrb[0].mxu0 %v1435
        %v1659 = vpop.f32.mrb[0].mxu0
        %v1660 = vadd.f32 0.0, %v1659
        %v1661 = vpop.f32.mrb[0].mxu0
        %1662 = vmatprep.mubr.f32.mxu0 0.0
        %1663 = vmatmul.mubr.f32.gmra.mrb[0].mxu0 %v1437
        %v1664 = vpop.f32.mrb[0].mxu0
        %v1665 = vadd.f32 0.0, %v1664
        %v1666 = vpop.f32.mrb[0].mxu0
        %1667 = vdwg.mxu0
        %v1669 = vsel %vm1375, %v1342, 0
        %v1672 = vsel %vm1375, %v1343, 0
        %v1675 = vsel %vm1375, %v1344, 0
        %v1678 = vsel %vm1375, %v1345, 0
        %v1681 = vsel %vm1375, %v1346, 0
        %v1684 = vsel %vm1375, %v1347, 0
        %v1687 = vsel %vm1375, %v1348, 0
        %v1690 = vsel %vm1375, %v1349, 0
        %v1693 = vsel %vm1375, %v1350, 0
        %v1696 = vsel %vm1375, %v1351, 0
        %v1699 = vsel %vm1375, %v1352, 0
        %v1702 = vsel %vm1375, %v1353, 0
        %v1705 = vsel %vm1375, %v1354, 0
        %v1708 = vsel %vm1375, %v1355, 0
        %v1711 = vsel %vm1375, %v1356, 0
        %v1714 = vsel %vm1375, %v1357, 0
        %v1717 = vsel %vm1375, %v1358, 0
        %v1720 = vsel %vm1375, %v1359, 0
        %v1723 = vsel %vm1375, %v1360, 0
        %v1726 = vsel %vm1375, %v1361, 0
        %v1729 = vsel %vm1375, %v1362, 0
        %v1732 = vsel %vm1375, %v1363, 0
        %v1735 = vsel %vm1375, %v1364, 0
        %v1738 = vsel %vm1375, %v1365, 0
        %v1741 = vsel %vm1375, %v1366, 0
        %v1744 = vsel %vm1375, %v1367, 0
        %v1747 = vsel %vm1375, %v1368, 0
        %v1750 = vsel %vm1375, %v1369, 0
        %v1753 = vsel %vm1375, %v1370, 0
        %v1756 = vsel %vm1375, %v1371, 0
        %v1759 = vsel %vm1439, %v1372, 0
        %1761 = vmatprep.subr.mxu0 0.0
        %1762 = vmatpush1.msra.mxu0 %v1759
        %1763 = vmatprep.subr.mxu0 0.0
        %1764 = vmatpush1.msra.mxu0 0.0
        %1765 = vmatprep.subr.mxu0 0.0
        %1766 = vmatpush1.msra.mxu0 0.0
        %1767 = vmatprep.subr.mxu0 0.0
        %1768 = vmatpush1.msra.mxu0 0.0
        %1769 = vmatprep.subr.mxu0 0.0
        %1770 = vmatpush1.msra.mxu0 0.0
        %1771 = vmatprep.subr.mxu0 0.0
        %1772 = vmatpush1.msra.mxu0 0.0
        %1773 = vmatprep.subr.mxu0 0.0
        %1774 = vmatpush1.msra.mxu0 0.0
        %1775 = vmatprep.subr.mxu0 0.0
        %1776 = vmatpush1.msra.mxu0 0.0
        %1777 = vmatprep.subr.mxu0 0.0
        %1778 = vmatpush1.msra.mxu0 0.0
        %1779 = vmatprep.subr.mxu0 0.0
        %1780 = vmatpush1.msra.mxu0 0.0
        %1781 = vmatprep.subr.mxu0 0.0
        %1782 = vmatpush1.msra.mxu0 0.0
        %1783 = vmatprep.subr.mxu0 0.0
        %1784 = vmatpush1.msra.mxu0 0.0
        %1785 = vmatprep.subr.mxu0 0.0
        %1786 = vmatpush1.msra.mxu0 0.0
        %1787 = vmatprep.subr.mxu0 0.0
        %1788 = vmatpush1.msra.mxu0 0.0
        %1789 = vmatprep.subr.mxu0 0.0
        %1790 = vmatpush1.msra.mxu0 0.0
        %1791 = vmatprep.subr.mxu0 0.0
        %1792 = vmatpush1.msra.mxu0 0.0
        %1793 = vmatprep.subr.mxu0 0.0
        %1794 = vmatpush1.msra.mxu0 0.0
        %1795 = vmatprep.subr.mxu0 0.0
        %1796 = vmatpush1.msra.mxu0 0.0
        %1797 = vmatprep.subr.mxu0 0.0
        %1798 = vmatpush1.msra.mxu0 0.0
        %1799 = vmatprep.subr.mxu0 0.0
        %1800 = vmatpush1.msra.mxu0 0.0
        %1801 = vmatprep.subr.mxu0 0.0
        %1802 = vmatpush1.msra.mxu0 0.0
        %1803 = vmatprep.subr.mxu0 0.0
        %1804 = vmatpush1.msra.mxu0 0.0
        %1805 = vmatprep.subr.mxu0 0.0
        %1806 = vmatpush1.msra.mxu0 0.0
        %1807 = vmatprep.subr.mxu0 0.0
        %1808 = vmatpush1.msra.mxu0 0.0
        %1809 = vmatprep.subr.mxu0 0.0
        %1810 = vmatpush1.msra.mxu0 0.0
        %1811 = vmatprep.subr.mxu0 0.0
        %1812 = vmatpush1.msra.mxu0 0.0
        %1813 = vmatprep.subr.mxu0 0.0
        %1814 = vmatpush1.msra.mxu0 0.0
        %1815 = vmatprep.subr.mxu0 0.0
        %1816 = vmatpush1.msra.mxu0 0.0
        %1817 = vmatprep.subr.mxu0 0.0
        %1818 = vmatpush1.msra.mxu0 0.0
        %1819 = vmatprep.subr.mxu0 0.0
        %1820 = vmatpush1.msra.mxu0 0.0
        %1821 = vmatprep.subr.mxu0 0.0
        %1822 = vmatpush1.msra.mxu0 0.0
        %1823 = vmatprep.subr.mxu0 0.0
        %1824 = vmatpush1.msra.mxu0 0.0
        %1825 = vmatprep.mubr.f32.mxu0 0.0
        %1826 = vmatmul.mubr.f32.gmra.mrb[0].mxu0 %v1377
        %v1827 = vpop.f32.mrb[0].mxu0
        %v1828 = vadd.f32 %v1510, %v1827
        %v1829 = vpop.f32.mrb[0].mxu0
        %1830 = vmatprep.mubr.f32.mxu0 0.0
        %1831 = vmatmul.mubr.f32.gmra.mrb[0].mxu0 %v1377
        %v1832 = vpop.f32.mrb[0].mxu0
        %v1833 = vadd.f32 %v1515, %v1832
        %v1834 = vpop.f32.mrb[0].mxu0
        %1835 = vmatprep.mubr.f32.mxu0 0.0
        %1836 = vmatmul.mubr.f32.gmra.mrb[0].mxu0 %v1669
        %v1837 = vpop.f32.mrb[0].mxu0
        %v1838 = vadd.f32 %v1520, %v1837
        %v1839 = vpop.f32.mrb[0].mxu0
        %1840 = vmatprep.mubr.f32.mxu0 0.0
        %1841 = vmatmul.mubr.f32.gmra.mrb[0].mxu0 %v1672
        %v1842 = vpop.f32.mrb[0].mxu0
        %v1843 = vadd.f32 %v1525, %v1842
        %v1844 = vpop.f32.mrb[0].mxu0
        %1845 = vmatprep.mubr.f32.mxu0 0.0
        %1846 = vmatmul.mubr.f32.gmra.mrb[0].mxu0 %v1675
        %v1847 = vpop.f32.mrb[0].mxu0
        %v1848 = vadd.f32 %v1530, %v1847
        %v1849 = vpop.f32.mrb[0].mxu0
        %1850 = vmatprep.mubr.f32.mxu0 0.0
        %1851 = vmatmul.mubr.f32.gmra.mrb[0].mxu0 %v1678
        %v1852 = vpop.f32.mrb[0].mxu0
        %v1853 = vadd.f32 %v1535, %v1852
        %v1854 = vpop.f32.mrb[0].mxu0
        %1855 = vmatprep.mubr.f32.mxu0 0.0
        %1856 = vmatmul.mubr.f32.gmra.mrb[0].mxu0 %v1681
        %v1857 = vpop.f32.mrb[0].mxu0
        %v1858 = vadd.f32 %v1540, %v1857
        %v1859 = vpop.f32.mrb[0].mxu0
        %1860 = vmatprep.mubr.f32.mxu0 0.0
        %1861 = vmatmul.mubr.f32.gmra.mrb[0].mxu0 %v1684
        %v1862 = vpop.f32.mrb[0].mxu0
        %v1863 = vadd.f32 %v1545, %v1862
        %v1864 = vpop.f32.mrb[0].mxu0
        %1865 = vmatprep.mubr.f32.mxu0 0.0
        %1866 = vmatmul.mubr.f32.gmra.mrb[0].mxu0 %v1687
        %v1867 = vpop.f32.mrb[0].mxu0
        %v1868 = vadd.f32 %v1550, %v1867
        %v1869 = vpop.f32.mrb[0].mxu0
        %1870 = vmatprep.mubr.f32.mxu0 0.0
        %1871 = vmatmul.mubr.f32.gmra.mrb[0].mxu0 %v1690
        %v1872 = vpop.f32.mrb[0].mxu0
        %v1873 = vadd.f32 %v1555, %v1872
        %v1874 = vpop.f32.mrb[0].mxu0
        %1875 = vmatprep.mubr.f32.mxu0 0.0
        %1876 = vmatmul.mubr.f32.gmra.mrb[0].mxu0 %v1693
        %v1877 = vpop.f32.mrb[0].mxu0
        %v1878 = vadd.f32 %v1560, %v1877
        %v1879 = vpop.f32.mrb[0].mxu0
        %1880 = vmatprep.mubr.f32.mxu0 0.0
        %1881 = vmatmul.mubr.f32.gmra.mrb[0].mxu0 %v1696
        %v1882 = vpop.f32.mrb[0].mxu0
        %v1883 = vadd.f32 %v1565, %v1882
        %v1884 = vpop.f32.mrb[0].mxu0
        %1885 = vmatprep.mubr.f32.mxu0 0.0
        %1886 = vmatmul.mubr.f32.gmra.mrb[0].mxu0 %v1699
        %v1887 = vpop.f32.mrb[0].mxu0
        %v1888 = vadd.f32 %v1570, %v1887
        %v1889 = vpop.f32.mrb[0].mxu0
        %1890 = vmatprep.mubr.f32.mxu0 0.0
        %1891 = vmatmul.mubr.f32.gmra.mrb[0].mxu0 %v1702
        %v1892 = vpop.f32.mrb[0].mxu0
        %v1893 = vadd.f32 %v1575, %v1892
        %v1894 = vpop.f32.mrb[0].mxu0
        %1895 = vmatprep.mubr.f32.mxu0 0.0
        %1896 = vmatmul.mubr.f32.gmra.mrb[0].mxu0 %v1705
        %v1897 = vpop.f32.mrb[0].mxu0
        %v1898 = vadd.f32 %v1580, %v1897
        %v1899 = vpop.f32.mrb[0].mxu0
        %1900 = vmatprep.mubr.f32.mxu0 0.0
        %1901 = vmatmul.mubr.f32.gmra.mrb[0].mxu0 %v1708
        %v1902 = vpop.f32.mrb[0].mxu0
        %v1903 = vadd.f32 %v1585, %v1902
        %v1904 = vpop.f32.mrb[0].mxu0
        %1905 = vmatprep.mubr.f32.mxu0 0.0
        %1906 = vmatmul.mubr.f32.gmra.mrb[0].mxu0 %v1711
        %v1907 = vpop.f32.mrb[0].mxu0
        %v1908 = vadd.f32 %v1590, %v1907
        %v1909 = vpop.f32.mrb[0].mxu0
        %1910 = vmatprep.mubr.f32.mxu0 0.0
        %1911 = vmatmul.mubr.f32.gmra.mrb[0].mxu0 %v1714
        %v1912 = vpop.f32.mrb[0].mxu0
        %v1913 = vadd.f32 %v1595, %v1912
        %v1914 = vpop.f32.mrb[0].mxu0
        %1915 = vmatprep.mubr.f32.mxu0 0.0
        %1916 = vmatmul.mubr.f32.gmra.mrb[0].mxu0 %v1717
        %v1917 = vpop.f32.mrb[0].mxu0
        %v1918 = vadd.f32 %v1600, %v1917
        %v1919 = vpop.f32.mrb[0].mxu0
        %1920 = vmatprep.mubr.f32.mxu0 0.0
        %1921 = vmatmul.mubr.f32.gmra.mrb[0].mxu0 %v1720
        %v1922 = vpop.f32.mrb[0].mxu0
        %v1923 = vadd.f32 %v1605, %v1922
        %v1924 = vpop.f32.mrb[0].mxu0
        %1925 = vmatprep.mubr.f32.mxu0 0.0
        %1926 = vmatmul.mubr.f32.gmra.mrb[0].mxu0 %v1723
        %v1927 = vpop.f32.mrb[0].mxu0
        %v1928 = vadd.f32 %v1610, %v1927
        %v1929 = vpop.f32.mrb[0].mxu0
        %1930 = vmatprep.mubr.f32.mxu0 0.0
        %1931 = vmatmul.mubr.f32.gmra.mrb[0].mxu0 %v1726
        %v1932 = vpop.f32.mrb[0].mxu0
        %v1933 = vadd.f32 %v1615, %v1932
        %v1934 = vpop.f32.mrb[0].mxu0
        %1935 = vmatprep.mubr.f32.mxu0 0.0
        %1936 = vmatmul.mubr.f32.gmra.mrb[0].mxu0 %v1729
        %v1937 = vpop.f32.mrb[0].mxu0
        %v1938 = vadd.f32 %v1620, %v1937
        %v1939 = vpop.f32.mrb[0].mxu0
        %1940 = vmatprep.mubr.f32.mxu0 0.0
        %1941 = vmatmul.mubr.f32.gmra.mrb[0].mxu0 %v1732
        %v1942 = vpop.f32.mrb[0].mxu0
        %v1943 = vadd.f32 %v1625, %v1942
        %v1944 = vpop.f32.mrb[0].mxu0
        %1945 = vmatprep.mubr.f32.mxu0 0.0
        %1946 = vmatmul.mubr.f32.gmra.mrb[0].mxu0 %v1735
        %v1947 = vpop.f32.mrb[0].mxu0
        %v1948 = vadd.f32 %v1630, %v1947
        %v1949 = vpop.f32.mrb[0].mxu0
        %1950 = vmatprep.mubr.f32.mxu0 0.0
        %1951 = vmatmul.mubr.f32.gmra.mrb[0].mxu0 %v1738
        %v1952 = vpop.f32.mrb[0].mxu0
        %v1953 = vadd.f32 %v1635, %v1952
        %v1954 = vpop.f32.mrb[0].mxu0
        %1955 = vmatprep.mubr.f32.mxu0 0.0
        %1956 = vmatmul.mubr.f32.gmra.mrb[0].mxu0 %v1741
        %v1957 = vpop.f32.mrb[0].mxu0
        %v1958 = vadd.f32 %v1640, %v1957
        %v1959 = vpop.f32.mrb[0].mxu0
        %1960 = vmatprep.mubr.f32.mxu0 0.0
        %1961 = vmatmul.mubr.f32.gmra.mrb[0].mxu0 %v1744
        %v1962 = vpop.f32.mrb[0].mxu0
        %v1963 = vadd.f32 %v1645, %v1962
        %v1964 = vpop.f32.mrb[0].mxu0
        %1965 = vmatprep.mubr.f32.mxu0 0.0
        %1966 = vmatmul.mubr.f32.gmra.mrb[0].mxu0 %v1747
        %v1967 = vpop.f32.mrb[0].mxu0
        %v1968 = vadd.f32 %v1650, %v1967
        %v1969 = vpop.f32.mrb[0].mxu0
        %1970 = vmatprep.mubr.f32.mxu0 0.0
        %1971 = vmatmul.mubr.f32.gmra.mrb[0].mxu0 %v1750
        %v1972 = vpop.f32.mrb[0].mxu0
        %v1973 = vadd.f32 %v1655, %v1972
        %v1974 = vpop.f32.mrb[0].mxu0
        %1975 = vmatprep.mubr.f32.mxu0 0.0
        %1976 = vmatmul.mubr.f32.gmra.mrb[0].mxu0 %v1753
        %v1977 = vpop.f32.mrb[0].mxu0
        %v1978 = vadd.f32 %v1660, %v1977
        %v1979 = vpop.f32.mrb[0].mxu0
        %1980 = vmatprep.mubr.f32.mxu0 0.0
        %1981 = vmatmul.mubr.f32.gmra.mrb[0].mxu0 %v1756
        %v1982 = vpop.f32.mrb[0].mxu0
        %v1983 = vadd.f32 %v1665, %v1982
        %v1984 = vpop.f32.mrb[0].mxu0
        %1985 = vdwg.mxu0
        %vm1987 = vcmask 1046528
        %v1988 = vrot.slane %v562, 1
        %v1989 = vrot.slane %v563, 1
        %v1990 = vsel %vm1987, %v1988, %v1989
        %v1991 = vrot.slane %v564, 1
        %v1992 = vsel %vm1987, %v1989, %v1991
        %v1993 = vrot.slane %v565, 1
        %v1994 = vsel %vm1987, %v1991, %v1993
        %v1995 = vrot.slane %v566, 1
        %v1996 = vsel %vm1987, %v1993, %v1995
        %v1997 = vrot.slane %v567, 1
        %v1998 = vsel %vm1987, %v1995, %v1997
        %v1999 = vrot.slane %v568, 1
        %v2000 = vsel %vm1987, %v1997, %v1999
        %v2001 = vrot.slane %v569, 1
        %v2002 = vsel %vm1987, %v1999, %v2001
        %v2003 = vrot.slane %v570, 1
        %v2004 = vsel %vm1987, %v2001, %v2003
        %v2005 = vrot.slane %v571, 1
        %v2006 = vsel %vm1987, %v2003, %v2005
        %v2007 = vrot.slane %v572, 1
        %v2008 = vsel %vm1987, %v2005, %v2007
        %v2009 = vrot.slane %v573, 1
        %v2010 = vsel %vm1987, %v2007, %v2009
        %v2011 = vrot.slane %v574, 1
        %v2012 = vsel %vm1987, %v2009, %v2011
        %v2013 = vrot.slane %v575, 1
        %v2014 = vsel %vm1987, %v2011, %v2013
        %v2015 = vrot.slane %v576, 1
        %v2016 = vsel %vm1987, %v2013, %v2015
        %v2017 = vrot.slane %v577, 1
        %v2018 = vsel %vm1987, %v2015, %v2017
        %v2019 = vrot.slane %v578, 1
        %v2020 = vsel %vm1987, %v2017, %v2019
        %v2021 = vrot.slane %v579, 1
        %v2022 = vsel %vm1987, %v2019, %v2021
        %v2023 = vrot.slane %v580, 1
        %v2024 = vsel %vm1987, %v2021, %v2023
        %v2025 = vrot.slane %v581, 1
        %v2026 = vsel %vm1987, %v2023, %v2025
        %v2027 = vrot.slane %v582, 1
        %v2028 = vsel %vm1987, %v2025, %v2027
        %v2029 = vrot.slane %v583, 1
        %v2030 = vsel %vm1987, %v2027, %v2029
        %v2031 = vrot.slane %v584, 1
        %v2032 = vsel %vm1987, %v2029, %v2031
        %v2033 = vrot.slane %v585, 1
        %v2034 = vsel %vm1987, %v2031, %v2033
        %v2035 = vrot.slane %v586, 1
        %v2036 = vsel %vm1987, %v2033, %v2035
        %v2037 = vrot.slane %v587, 1
        %v2038 = vsel %vm1987, %v2035, %v2037
        %v2039 = vrot.slane %v588, 1
        %v2040 = vsel %vm1987, %v2037, %v2039
        %v2041 = vrot.slane %v589, 1
        %v2042 = vsel %vm1987, %v2039, %v2041
        %v2043 = vrot.slane %v590, 1
        %v2044 = vsel %vm1987, %v2041, %v2043
        %v2045 = vrot.slane %v591, 1
        %v2046 = vsel %vm1987, %v2043, %v2045
        %v2047 = vrot.slane %v592, 1
        %v2048 = vsel %vm1987, %v2045, %v2047
        %v2080 = vsel %vm1987, 0.0, %v1988
        %v2081 = vsel %vm1125, 1, 0
        %v2082 = vsel %vm1126, 1, 0
        %v2083 = vsel %vm1127, 1, 0
        %v2084 = vsel %vm1128, 1, 0
        %v2085 = vsel %vm1129, 1, 0
        %v2086 = vsel %vm1130, 1, 0
        %v2087 = vsel %vm1131, 1, 0
        %v2088 = vsel %vm1132, 1, 0
        %v2089 = vsel %vm1133, 1, 0
        %v2090 = vsel %vm1134, 1, 0
        %v2091 = vsel %vm1135, 1, 0
        %v2092 = vsel %vm1136, 1, 0
        %v2093 = vsel %vm1137, 1, 0
        %v2094 = vsel %vm1138, 1, 0
        %v2095 = vsel %vm1139, 1, 0
        %v2096 = vsel %vm1140, 1, 0
        %v2097 = vsel %vm1141, 1, 0
        %v2098 = vsel %vm1142, 1, 0
        %v2099 = vsel %vm1143, 1, 0
        %v2100 = vsel %vm1144, 1, 0
        %v2101 = vsel %vm1145, 1, 0
        %v2102 = vsel %vm1146, 1, 0
        %v2103 = vsel %vm1147, 1, 0
        %v2104 = vsel %vm1148, 1, 0
        %v2105 = vsel %vm1149, 1, 0
        %v2106 = vsel %vm1150, 1, 0
        %v2107 = vsel %vm1151, 1, 0
        %v2108 = vsel %vm1152, 1, 0
        %v2109 = vsel %vm1153, 1, 0
        %v2110 = vsel %vm1154, 1, 0
        %v2111 = vsel %vm1155, 1, 0
        %v2112 = vsel %vm1156, 1, 0
        %vm2113 = vcmp.eq.s32.totalorder %v2081, 1
        %vm2114 = vcmp.eq.s32.totalorder %v2082, 1
        %vm2115 = vcmp.eq.s32.totalorder %v2083, 1
        %vm2116 = vcmp.eq.s32.totalorder %v2084, 1
        %vm2117 = vcmp.eq.s32.totalorder %v2085, 1
        %vm2118 = vcmp.eq.s32.totalorder %v2086, 1
        %vm2119 = vcmp.eq.s32.totalorder %v2087, 1
        %vm2120 = vcmp.eq.s32.totalorder %v2088, 1
        %vm2121 = vcmp.eq.s32.totalorder %v2089, 1
        %vm2122 = vcmp.eq.s32.totalorder %v2090, 1
        %vm2123 = vcmp.eq.s32.totalorder %v2091, 1
        %vm2124 = vcmp.eq.s32.totalorder %v2092, 1
        %vm2125 = vcmp.eq.s32.totalorder %v2093, 1
        %vm2126 = vcmp.eq.s32.totalorder %v2094, 1
        %vm2127 = vcmp.eq.s32.totalorder %v2095, 1
        %vm2128 = vcmp.eq.s32.totalorder %v2096, 1
        %vm2129 = vcmp.eq.s32.totalorder %v2097, 1
        %vm2130 = vcmp.eq.s32.totalorder %v2098, 1
        %vm2131 = vcmp.eq.s32.totalorder %v2099, 1
        %vm2132 = vcmp.eq.s32.totalorder %v2100, 1
        %vm2133 = vcmp.eq.s32.totalorder %v2101, 1
        %vm2134 = vcmp.eq.s32.totalorder %v2102, 1
        %vm2135 = vcmp.eq.s32.totalorder %v2103, 1
        %vm2136 = vcmp.eq.s32.totalorder %v2104, 1
        %vm2137 = vcmp.eq.s32.totalorder %v2105, 1
        %vm2138 = vcmp.eq.s32.totalorder %v2106, 1
        %vm2139 = vcmp.eq.s32.totalorder %v2107, 1
        %vm2140 = vcmp.eq.s32.totalorder %v2108, 1
        %vm2141 = vcmp.eq.s32.totalorder %v2109, 1
        %vm2142 = vcmp.eq.s32.totalorder %v2110, 1
        %vm2143 = vcmp.eq.s32.totalorder %v2111, 1
        %vm2144 = vcmp.eq.s32.totalorder %v2112, 1
        %v2145 = vsel %vm2114, %v2080, 0.0
        %v2146 = vsel %vm2115, %v1990, 0.0
        %v2147 = vsel %vm2116, %v1992, 0.0
        %v2148 = vsel %vm2117, %v1994, 0.0
        %v2149 = vsel %vm2118, %v1996, 0.0
        %v2150 = vsel %vm2119, %v1998, 0.0
        %v2151 = vsel %vm2120, %v2000, 0.0
        %v2152 = vsel %vm2121, %v2002, 0.0
        %v2153 = vsel %vm2122, %v2004, 0.0
        %v2154 = vsel %vm2123, %v2006, 0.0
        %v2155 = vsel %vm2124, %v2008, 0.0
        %v2156 = vsel %vm2125, %v2010, 0.0
        %v2157 = vsel %vm2126, %v2012, 0.0
        %v2158 = vsel %vm2127, %v2014, 0.0
        %v2159 = vsel %vm2128, %v2016, 0.0
        %v2160 = vsel %vm2129, %v2018, 0.0
        %v2161 = vsel %vm2130, %v2020, 0.0
        %v2162 = vsel %vm2131, %v2022, 0.0
        %v2163 = vsel %vm2132, %v2024, 0.0
        %v2164 = vsel %vm2133, %v2026, 0.0
        %v2165 = vsel %vm2134, %v2028, 0.0
        %v2166 = vsel %vm2135, %v2030, 0.0
        %v2167 = vsel %vm2136, %v2032, 0.0
        %v2168 = vsel %vm2137, %v2034, 0.0
        %v2169 = vsel %vm2138, %v2036, 0.0
        %v2170 = vsel %vm2139, %v2038, 0.0
        %v2171 = vsel %vm2140, %v2040, 0.0
        %v2172 = vsel %vm2141, %v2042, 0.0
        %v2173 = vsel %vm2142, %v2044, 0.0
        %v2174 = vsel %vm2143, %v2046, 0.0
        %v2175 = vsel %vm2144, %v2048, 0.0
        %s2176 = scalar_lea.vmem %s6, 8
        %v2177 = vld [vmem:[%s2176] sm:$0xf]
        %v2179 = vsel %vm1375, %v2145, 0
        %v2182 = vsel %vm1375, %v2146, 0
        %v2185 = vsel %vm1375, %v2147, 0
        %v2188 = vsel %vm1375, %v2148, 0
        %v2191 = vsel %vm1375, %v2149, 0
        %v2194 = vsel %vm1375, %v2150, 0
        %v2197 = vsel %vm1375, %v2151, 0
        %v2200 = vsel %vm1375, %v2152, 0
        %v2203 = vsel %vm1375, %v2153, 0
        %v2206 = vsel %vm1375, %v2154, 0
        %v2209 = vsel %vm1375, %v2155, 0
        %v2212 = vsel %vm1375, %v2156, 0
        %v2215 = vsel %vm1375, %v2157, 0
        %v2218 = vsel %vm1375, %v2158, 0
        %v2221 = vsel %vm1375, %v2159, 0
        %v2224 = vsel %vm1375, %v2160, 0
        %v2227 = vsel %vm1375, %v2161, 0
        %v2230 = vsel %vm1375, %v2162, 0
        %v2233 = vsel %vm1375, %v2163, 0
        %v2236 = vsel %vm1375, %v2164, 0
        %v2239 = vsel %vm1375, %v2165, 0
        %v2242 = vsel %vm1375, %v2166, 0
        %v2245 = vsel %vm1375, %v2167, 0
        %v2248 = vsel %vm1375, %v2168, 0
        %v2251 = vsel %vm1375, %v2169, 0
        %v2254 = vsel %vm1375, %v2170, 0
        %v2257 = vsel %vm1375, %v2171, 0
        %v2260 = vsel %vm1375, %v2172, 0
        %v2263 = vsel %vm1375, %v2173, 0
        %v2266 = vsel %vm1375, %v2174, 0
        %v2269 = vsel %vm1375, %v2175, 0
        %v2272 = vsel %vm1439, %v2177, 0
        %2274 = vmatprep.subr.mxu0 0.0
        %2275 = vmatpush1.msra.mxu0 %v2272
        %2276 = vmatprep.subr.mxu0 0.0
        %2277 = vmatpush1.msra.mxu0 0.0
        %2278 = vmatprep.subr.mxu0 0.0
        %2279 = vmatpush1.msra.mxu0 0.0
        %2280 = vmatprep.subr.mxu0 0.0
        %2281 = vmatpush1.msra.mxu0 0.0
        %2282 = vmatprep.subr.mxu0 0.0
        %2283 = vmatpush1.msra.mxu0 0.0
        %2284 = vmatprep.subr.mxu0 0.0
        %2285 = vmatpush1.msra.mxu0 0.0
        %2286 = vmatprep.subr.mxu0 0.0
        %2287 = vmatpush1.msra.mxu0 0.0
        %2288 = vmatprep.subr.mxu0 0.0
        %2289 = vmatpush1.msra.mxu0 0.0
        %2290 = vmatprep.subr.mxu0 0.0
        %2291 = vmatpush1.msra.mxu0 0.0
        %2292 = vmatprep.subr.mxu0 0.0
        %2293 = vmatpush1.msra.mxu0 0.0
        %2294 = vmatprep.subr.mxu0 0.0
        %2295 = vmatpush1.msra.mxu0 0.0
        %2296 = vmatprep.subr.mxu0 0.0
        %2297 = vmatpush1.msra.mxu0 0.0
        %2298 = vmatprep.subr.mxu0 0.0
        %2299 = vmatpush1.msra.mxu0 0.0
        %2300 = vmatprep.subr.mxu0 0.0
        %2301 = vmatpush1.msra.mxu0 0.0
        %2302 = vmatprep.subr.mxu0 0.0
        %2303 = vmatpush1.msra.mxu0 0.0
        %2304 = vmatprep.subr.mxu0 0.0
        %2305 = vmatpush1.msra.mxu0 0.0
        %2306 = vmatprep.subr.mxu0 0.0
        %2307 = vmatpush1.msra.mxu0 0.0
        %2308 = vmatprep.subr.mxu0 0.0
        %2309 = vmatpush1.msra.mxu0 0.0
        %2310 = vmatprep.subr.mxu0 0.0
        %2311 = vmatpush1.msra.mxu0 0.0
        %2312 = vmatprep.subr.mxu0 0.0
        %2313 = vmatpush1.msra.mxu0 0.0
        %2314 = vmatprep.subr.mxu0 0.0
        %2315 = vmatpush1.msra.mxu0 0.0
        %2316 = vmatprep.subr.mxu0 0.0
        %2317 = vmatpush1.msra.mxu0 0.0
        %2318 = vmatprep.subr.mxu0 0.0
        %2319 = vmatpush1.msra.mxu0 0.0
        %2320 = vmatprep.subr.mxu0 0.0
        %2321 = vmatpush1.msra.mxu0 0.0
        %2322 = vmatprep.subr.mxu0 0.0
        %2323 = vmatpush1.msra.mxu0 0.0
        %2324 = vmatprep.subr.mxu0 0.0
        %2325 = vmatpush1.msra.mxu0 0.0
        %2326 = vmatprep.subr.mxu0 0.0
        %2327 = vmatpush1.msra.mxu0 0.0
        %2328 = vmatprep.subr.mxu0 0.0
        %2329 = vmatpush1.msra.mxu0 0.0
        %2330 = vmatprep.subr.mxu0 0.0
        %2331 = vmatpush1.msra.mxu0 0.0
        %2332 = vmatprep.subr.mxu0 0.0
        %2333 = vmatpush1.msra.mxu0 0.0
        %2334 = vmatprep.subr.mxu0 0.0
        %2335 = vmatpush1.msra.mxu0 0.0
        %2336 = vmatprep.subr.mxu0 0.0
        %2337 = vmatpush1.msra.mxu0 0.0
        %2338 = vmatprep.mubr.f32.mxu0 0.0
        %2339 = vmatmul.mubr.f32.gmra.mrb[0].mxu0 %v1377
        %v2340 = vpop.f32.mrb[0].mxu0
        %v2341 = vadd.f32 0.0, %v2340
        %v2342 = vpop.f32.mrb[0].mxu0
        %2343 = vmatprep.mubr.f32.mxu0 0.0
        %2344 = vmatmul.mubr.f32.gmra.mrb[0].mxu0 %v2179
        %v2345 = vpop.f32.mrb[0].mxu0
        %v2346 = vadd.f32 0.0, %v2345
        %v2347 = vpop.f32.mrb[0].mxu0
        %2348 = vmatprep.mubr.f32.mxu0 0.0
        %2349 = vmatmul.mubr.f32.gmra.mrb[0].mxu0 %v2182
        %v2350 = vpop.f32.mrb[0].mxu0
        %v2351 = vadd.f32 0.0, %v2350
        %v2352 = vpop.f32.mrb[0].mxu0
        %2353 = vmatprep.mubr.f32.mxu0 0.0
        %2354 = vmatmul.mubr.f32.gmra.mrb[0].mxu0 %v2185
        %v2355 = vpop.f32.mrb[0].mxu0
        %v2356 = vadd.f32 0.0, %v2355
        %v2357 = vpop.f32.mrb[0].mxu0
        %2358 = vmatprep.mubr.f32.mxu0 0.0
        %2359 = vmatmul.mubr.f32.gmra.mrb[0].mxu0 %v2188
        %v2360 = vpop.f32.mrb[0].mxu0
        %v2361 = vadd.f32 0.0, %v2360
        %v2362 = vpop.f32.mrb[0].mxu0
        %2363 = vmatprep.mubr.f32.mxu0 0.0
        %2364 = vmatmul.mubr.f32.gmra.mrb[0].mxu0 %v2191
        %v2365 = vpop.f32.mrb[0].mxu0
        %v2366 = vadd.f32 0.0, %v2365
        %v2367 = vpop.f32.mrb[0].mxu0
        %2368 = vmatprep.mubr.f32.mxu0 0.0
        %2369 = vmatmul.mubr.f32.gmra.mrb[0].mxu0 %v2194
        %v2370 = vpop.f32.mrb[0].mxu0
        %v2371 = vadd.f32 0.0, %v2370
        %v2372 = vpop.f32.mrb[0].mxu0
        %2373 = vmatprep.mubr.f32.mxu0 0.0
        %2374 = vmatmul.mubr.f32.gmra.mrb[0].mxu0 %v2197
        %v2375 = vpop.f32.mrb[0].mxu0
        %v2376 = vadd.f32 0.0, %v2375
        %v2377 = vpop.f32.mrb[0].mxu0
        %2378 = vmatprep.mubr.f32.mxu0 0.0
        %2379 = vmatmul.mubr.f32.gmra.mrb[0].mxu0 %v2200
        %v2380 = vpop.f32.mrb[0].mxu0
        %v2381 = vadd.f32 0.0, %v2380
        %v2382 = vpop.f32.mrb[0].mxu0
        %2383 = vmatprep.mubr.f32.mxu0 0.0
        %2384 = vmatmul.mubr.f32.gmra.mrb[0].mxu0 %v2203
        %v2385 = vpop.f32.mrb[0].mxu0
        %v2386 = vadd.f32 0.0, %v2385
        %v2387 = vpop.f32.mrb[0].mxu0
        %2388 = vmatprep.mubr.f32.mxu0 0.0
        %2389 = vmatmul.mubr.f32.gmra.mrb[0].mxu0 %v2206
        %v2390 = vpop.f32.mrb[0].mxu0
        %v2391 = vadd.f32 0.0, %v2390
        %v2392 = vpop.f32.mrb[0].mxu0
        %2393 = vmatprep.mubr.f32.mxu0 0.0
        %2394 = vmatmul.mubr.f32.gmra.mrb[0].mxu0 %v2209
        %v2395 = vpop.f32.mrb[0].mxu0
        %v2396 = vadd.f32 0.0, %v2395
        %v2397 = vpop.f32.mrb[0].mxu0
        %2398 = vmatprep.mubr.f32.mxu0 0.0
        %2399 = vmatmul.mubr.f32.gmra.mrb[0].mxu0 %v2212
        %v2400 = vpop.f32.mrb[0].mxu0
        %v2401 = vadd.f32 0.0, %v2400
        %v2402 = vpop.f32.mrb[0].mxu0
        %2403 = vmatprep.mubr.f32.mxu0 0.0
        %2404 = vmatmul.mubr.f32.gmra.mrb[0].mxu0 %v2215
        %v2405 = vpop.f32.mrb[0].mxu0
        %v2406 = vadd.f32 0.0, %v2405
        %v2407 = vpop.f32.mrb[0].mxu0
        %2408 = vmatprep.mubr.f32.mxu0 0.0
        %2409 = vmatmul.mubr.f32.gmra.mrb[0].mxu0 %v2218
        %v2410 = vpop.f32.mrb[0].mxu0
        %v2411 = vadd.f32 0.0, %v2410
        %v2412 = vpop.f32.mrb[0].mxu0
        %2413 = vmatprep.mubr.f32.mxu0 0.0
        %2414 = vmatmul.mubr.f32.gmra.mrb[0].mxu0 %v2221
        %v2415 = vpop.f32.mrb[0].mxu0
        %v2416 = vadd.f32 0.0, %v2415
        %v2417 = vpop.f32.mrb[0].mxu0
        %2418 = vmatprep.mubr.f32.mxu0 0.0
        %2419 = vmatmul.mubr.f32.gmra.mrb[0].mxu0 %v2224
        %v2420 = vpop.f32.mrb[0].mxu0
        %v2421 = vadd.f32 0.0, %v2420
        %v2422 = vpop.f32.mrb[0].mxu0
        %2423 = vmatprep.mubr.f32.mxu0 0.0
        %2424 = vmatmul.mubr.f32.gmra.mrb[0].mxu0 %v2227
        %v2425 = vpop.f32.mrb[0].mxu0
        %v2426 = vadd.f32 0.0, %v2425
        %v2427 = vpop.f32.mrb[0].mxu0
        %2428 = vmatprep.mubr.f32.mxu0 0.0
        %2429 = vmatmul.mubr.f32.gmra.mrb[0].mxu0 %v2230
        %v2430 = vpop.f32.mrb[0].mxu0
        %v2431 = vadd.f32 0.0, %v2430
        %v2432 = vpop.f32.mrb[0].mxu0
        %2433 = vmatprep.mubr.f32.mxu0 0.0
        %2434 = vmatmul.mubr.f32.gmra.mrb[0].mxu0 %v2233
        %v2435 = vpop.f32.mrb[0].mxu0
        %v2436 = vadd.f32 0.0, %v2435
        %v2437 = vpop.f32.mrb[0].mxu0
        %2438 = vmatprep.mubr.f32.mxu0 0.0
        %2439 = vmatmul.mubr.f32.gmra.mrb[0].mxu0 %v2236
        %v2440 = vpop.f32.mrb[0].mxu0
        %v2441 = vadd.f32 0.0, %v2440
        %v2442 = vpop.f32.mrb[0].mxu0
        %2443 = vmatprep.mubr.f32.mxu0 0.0
        %2444 = vmatmul.mubr.f32.gmra.mrb[0].mxu0 %v2239
        %v2445 = vpop.f32.mrb[0].mxu0
        %v2446 = vadd.f32 0.0, %v2445
        %v2447 = vpop.f32.mrb[0].mxu0
        %2448 = vmatprep.mubr.f32.mxu0 0.0
        %2449 = vmatmul.mubr.f32.gmra.mrb[0].mxu0 %v2242
        %v2450 = vpop.f32.mrb[0].mxu0
        %v2451 = vadd.f32 0.0, %v2450
        %v2452 = vpop.f32.mrb[0].mxu0
        %2453 = vmatprep.mubr.f32.mxu0 0.0
        %2454 = vmatmul.mubr.f32.gmra.mrb[0].mxu0 %v2245
        %v2455 = vpop.f32.mrb[0].mxu0
        %v2456 = vadd.f32 0.0, %v2455
        %v2457 = vpop.f32.mrb[0].mxu0
        %2458 = vmatprep.mubr.f32.mxu0 0.0
        %2459 = vmatmul.mubr.f32.gmra.mrb[0].mxu0 %v2248
        %v2460 = vpop.f32.mrb[0].mxu0
        %v2461 = vadd.f32 0.0, %v2460
        %v2462 = vpop.f32.mrb[0].mxu0
        %2463 = vmatprep.mubr.f32.mxu0 0.0
        %2464 = vmatmul.mubr.f32.gmra.mrb[0].mxu0 %v2251
        %v2465 = vpop.f32.mrb[0].mxu0
        %v2466 = vadd.f32 0.0, %v2465
        %v2467 = vpop.f32.mrb[0].mxu0
        %2468 = vmatprep.mubr.f32.mxu0 0.0
        %2469 = vmatmul.mubr.f32.gmra.mrb[0].mxu0 %v2254
        %v2470 = vpop.f32.mrb[0].mxu0
        %v2471 = vadd.f32 0.0, %v2470
        %v2472 = vpop.f32.mrb[0].mxu0
        %2473 = vmatprep.mubr.f32.mxu0 0.0
        %2474 = vmatmul.mubr.f32.gmra.mrb[0].mxu0 %v2257
        %v2475 = vpop.f32.mrb[0].mxu0
        %v2476 = vadd.f32 0.0, %v2475
        %v2477 = vpop.f32.mrb[0].mxu0
        %2478 = vmatprep.mubr.f32.mxu0 0.0
        %2479 = vmatmul.mubr.f32.gmra.mrb[0].mxu0 %v2260
        %v2480 = vpop.f32.mrb[0].mxu0
        %v2481 = vadd.f32 0.0, %v2480
        %v2482 = vpop.f32.mrb[0].mxu0
        %2483 = vmatprep.mubr.f32.mxu0 0.0
        %2484 = vmatmul.mubr.f32.gmra.mrb[0].mxu0 %v2263
        %v2485 = vpop.f32.mrb[0].mxu0
        %v2486 = vadd.f32 0.0, %v2485
        %v2487 = vpop.f32.mrb[0].mxu0
        %2488 = vmatprep.mubr.f32.mxu0 0.0
        %2489 = vmatmul.mubr.f32.gmra.mrb[0].mxu0 %v2266
        %v2490 = vpop.f32.mrb[0].mxu0
        %v2491 = vadd.f32 0.0, %v2490
        %v2492 = vpop.f32.mrb[0].mxu0
        %2493 = vmatprep.mubr.f32.mxu0 0.0
        %2494 = vmatmul.mubr.f32.gmra.mrb[0].mxu0 %v2269
        %v2495 = vpop.f32.mrb[0].mxu0
        %v2496 = vadd.f32 0.0, %v2495
        %v2497 = vpop.f32.mrb[0].mxu0
        %2498 = vdwg.mxu0
        %v2499 = vadd.f32 %v1828, %v2341
        %v2500 = vadd.f32 %v1833, %v2346
        %v2501 = vadd.f32 %v1838, %v2351
        %v2502 = vadd.f32 %v1843, %v2356
        %v2503 = vadd.f32 %v1848, %v2361
        %v2504 = vadd.f32 %v1853, %v2366
        %v2505 = vadd.f32 %v1858, %v2371
        %v2506 = vadd.f32 %v1863, %v2376
        %v2507 = vadd.f32 %v1868, %v2381
        %v2508 = vadd.f32 %v1873, %v2386
        %v2509 = vadd.f32 %v1878, %v2391
        %v2510 = vadd.f32 %v1883, %v2396
        %v2511 = vadd.f32 %v1888, %v2401
        %v2512 = vadd.f32 %v1893, %v2406
        %v2513 = vadd.f32 %v1898, %v2411
        %v2514 = vadd.f32 %v1903, %v2416
        %v2515 = vadd.f32 %v1908, %v2421
        %v2516 = vadd.f32 %v1913, %v2426
        %v2517 = vadd.f32 %v1918, %v2431
        %v2518 = vadd.f32 %v1923, %v2436
        %v2519 = vadd.f32 %v1928, %v2441
        %v2520 = vadd.f32 %v1933, %v2446
        %v2521 = vadd.f32 %v1938, %v2451
        %v2522 = vadd.f32 %v1943, %v2456
        %v2523 = vadd.f32 %v1948, %v2461
        %v2524 = vadd.f32 %v1953, %v2466
        %v2525 = vadd.f32 %v1958, %v2471
        %v2526 = vadd.f32 %v1963, %v2476
        %v2527 = vadd.f32 %v1968, %v2481
        %v2528 = vadd.f32 %v1973, %v2486
        %v2529 = vadd.f32 %v1978, %v2491
        %v2530 = vadd.f32 %v1983, %v2496
        %v2532 = vrot.slane %v592, 7
        %v2533 = vsel %vm1187, %v1245, %v2532
        %v2534 = vrot.slane %v593, 7
        %v2535 = vsel %vm1187, %v2532, %v2534
        %v2538 = vsel %vm1310, %v1277, 0.0
        %v2539 = vsel %vm1311, %v1190, 0.0
        %v2540 = vsel %vm1312, %v1192, 0.0
        %v2541 = vsel %vm1313, %v1194, 0.0
        %v2542 = vsel %vm1314, %v1196, 0.0
        %v2543 = vsel %vm1315, %v1198, 0.0
        %v2544 = vsel %vm1316, %v1200, 0.0
        %v2545 = vsel %vm1317, %v1202, 0.0
        %v2546 = vsel %vm1318, %v1204, 0.0
        %v2547 = vsel %vm1319, %v1206, 0.0
        %v2548 = vsel %vm1320, %v1208, 0.0
        %v2549 = vsel %vm1321, %v1210, 0.0
        %v2550 = vsel %vm1322, %v1212, 0.0
        %v2551 = vsel %vm1323, %v1214, 0.0
        %v2552 = vsel %vm1324, %v1216, 0.0
        %v2553 = vsel %vm1325, %v1218, 0.0
        %v2554 = vsel %vm1326, %v1220, 0.0
        %v2555 = vsel %vm1327, %v1222, 0.0
        %v2556 = vsel %vm1328, %v1224, 0.0
        %v2557 = vsel %vm1329, %v1226, 0.0
        %v2558 = vsel %vm1330, %v1228, 0.0
        %v2559 = vsel %vm1331, %v1230, 0.0
        %v2560 = vsel %vm1332, %v1232, 0.0
        %v2561 = vsel %vm1333, %v1234, 0.0
        %v2562 = vsel %vm1334, %v1236, 0.0
        %v2563 = vsel %vm1335, %v1238, 0.0
        %v2564 = vsel %vm1336, %v1240, 0.0
        %v2565 = vsel %vm1337, %v1242, 0.0
        %v2566 = vsel %vm1338, %v1244, 0.0
        %v2567 = vsel %vm1339, %v1246, 0.0
        %v2568 = vsel %vm1340, %v2533, 0.0
        %v2569 = vsel %vm1341, %v2535, 0.0
        %s2570 = scalar_lea.vmem %s6, 12
        %v2571 = vld [vmem:[%s2570] sm:$0xf]
        %v2573 = vsel %vm1375, %v2538, 0
        %v2576 = vsel %vm1375, %v2539, 0
        %v2579 = vsel %vm1375, %v2540, 0
        %v2582 = vsel %vm1375, %v2541, 0
        %v2585 = vsel %vm1375, %v2542, 0
        %v2588 = vsel %vm1375, %v2543, 0
        %v2591 = vsel %vm1375, %v2544, 0
        %v2594 = vsel %vm1375, %v2545, 0
        %v2597 = vsel %vm1375, %v2546, 0
        %v2600 = vsel %vm1375, %v2547, 0
        %v2603 = vsel %vm1375, %v2548, 0
        %v2606 = vsel %vm1375, %v2549, 0
        %v2609 = vsel %vm1375, %v2550, 0
        %v2612 = vsel %vm1375, %v2551, 0
        %v2615 = vsel %vm1375, %v2552, 0
        %v2618 = vsel %vm1375, %v2553, 0
        %v2621 = vsel %vm1375, %v2554, 0
        %v2624 = vsel %vm1375, %v2555, 0
        %v2627 = vsel %vm1375, %v2556, 0
        %v2630 = vsel %vm1375, %v2557, 0
        %v2633 = vsel %vm1375, %v2558, 0
        %v2636 = vsel %vm1375, %v2559, 0
        %v2639 = vsel %vm1375, %v2560, 0
        %v2642 = vsel %vm1375, %v2561, 0
        %v2645 = vsel %vm1375, %v2562, 0
        %v2648 = vsel %vm1375, %v2563, 0
        %v2651 = vsel %vm1375, %v2564, 0
        %v2654 = vsel %vm1375, %v2565, 0
        %v2657 = vsel %vm1375, %v2566, 0
        %v2660 = vsel %vm1375, %v2567, 0
        %v2663 = vsel %vm1375, %v2568, 0
        %v2666 = vsel %vm1375, %v2569, 0
        %v2669 = vsel %vm1439, %v2571, 0
        %2671 = vmatprep.subr.mxu0 0.0
        %2672 = vmatpush1.msra.mxu0 %v2669
        %2673 = vmatprep.subr.mxu0 0.0
        %2674 = vmatpush1.msra.mxu0 0.0
        %2675 = vmatprep.subr.mxu0 0.0
        %2676 = vmatpush1.msra.mxu0 0.0
        %2677 = vmatprep.subr.mxu0 0.0
        %2678 = vmatpush1.msra.mxu0 0.0
        %2679 = vmatprep.subr.mxu0 0.0
        %2680 = vmatpush1.msra.mxu0 0.0
        %2681 = vmatprep.subr.mxu0 0.0
        %2682 = vmatpush1.msra.mxu0 0.0
        %2683 = vmatprep.subr.mxu0 0.0
        %2684 = vmatpush1.msra.mxu0 0.0
        %2685 = vmatprep.subr.mxu0 0.0
        %2686 = vmatpush1.msra.mxu0 0.0
        %2687 = vmatprep.subr.mxu0 0.0
        %2688 = vmatpush1.msra.mxu0 0.0
        %2689 = vmatprep.subr.mxu0 0.0
        %2690 = vmatpush1.msra.mxu0 0.0
        %2691 = vmatprep.subr.mxu0 0.0
        %2692 = vmatpush1.msra.mxu0 0.0
        %2693 = vmatprep.subr.mxu0 0.0
        %2694 = vmatpush1.msra.mxu0 0.0
        %2695 = vmatprep.subr.mxu0 0.0
        %2696 = vmatpush1.msra.mxu0 0.0
        %2697 = vmatprep.subr.mxu0 0.0
        %2698 = vmatpush1.msra.mxu0 0.0
        %2699 = vmatprep.subr.mxu0 0.0
        %2700 = vmatpush1.msra.mxu0 0.0
        %2701 = vmatprep.subr.mxu0 0.0
        %2702 = vmatpush1.msra.mxu0 0.0
        %2703 = vmatprep.subr.mxu0 0.0
        %2704 = vmatpush1.msra.mxu0 0.0
        %2705 = vmatprep.subr.mxu0 0.0
        %2706 = vmatpush1.msra.mxu0 0.0
        %2707 = vmatprep.subr.mxu0 0.0
        %2708 = vmatpush1.msra.mxu0 0.0
        %2709 = vmatprep.subr.mxu0 0.0
        %2710 = vmatpush1.msra.mxu0 0.0
        %2711 = vmatprep.subr.mxu0 0.0
        %2712 = vmatpush1.msra.mxu0 0.0
        %2713 = vmatprep.subr.mxu0 0.0
        %2714 = vmatpush1.msra.mxu0 0.0
        %2715 = vmatprep.subr.mxu0 0.0
        %2716 = vmatpush1.msra.mxu0 0.0
        %2717 = vmatprep.subr.mxu0 0.0
        %2718 = vmatpush1.msra.mxu0 0.0
        %2719 = vmatprep.subr.mxu0 0.0
        %2720 = vmatpush1.msra.mxu0 0.0
        %2721 = vmatprep.subr.mxu0 0.0
        %2722 = vmatpush1.msra.mxu0 0.0
        %2723 = vmatprep.subr.mxu0 0.0
        %2724 = vmatpush1.msra.mxu0 0.0
        %2725 = vmatprep.subr.mxu0 0.0
        %2726 = vmatpush1.msra.mxu0 0.0
        %2727 = vmatprep.subr.mxu0 0.0
        %2728 = vmatpush1.msra.mxu0 0.0
        %2729 = vmatprep.subr.mxu0 0.0
        %2730 = vmatpush1.msra.mxu0 0.0
        %2731 = vmatprep.subr.mxu0 0.0
        %2732 = vmatpush1.msra.mxu0 0.0
        %2733 = vmatprep.subr.mxu0 0.0
        %2734 = vmatpush1.msra.mxu0 0.0
        %2735 = vmatprep.mubr.f32.mxu0 0.0
        %2736 = vmatmul.mubr.f32.gmra.mrb[0].mxu0 %v2573
        %v2737 = vpop.f32.mrb[0].mxu0
        %v2738 = vadd.f32 0.0, %v2737
        %v2739 = vpop.f32.mrb[0].mxu0
        %2740 = vmatprep.mubr.f32.mxu0 0.0
        %2741 = vmatmul.mubr.f32.gmra.mrb[0].mxu0 %v2576
        %v2742 = vpop.f32.mrb[0].mxu0
        %v2743 = vadd.f32 0.0, %v2742
        %v2744 = vpop.f32.mrb[0].mxu0
        %2745 = vmatprep.mubr.f32.mxu0 0.0
        %2746 = vmatmul.mubr.f32.gmra.mrb[0].mxu0 %v2579
        %v2747 = vpop.f32.mrb[0].mxu0
        %v2748 = vadd.f32 0.0, %v2747
        %v2749 = vpop.f32.mrb[0].mxu0
        %2750 = vmatprep.mubr.f32.mxu0 0.0
        %2751 = vmatmul.mubr.f32.gmra.mrb[0].mxu0 %v2582
        %v2752 = vpop.f32.mrb[0].mxu0
        %v2753 = vadd.f32 0.0, %v2752
        %v2754 = vpop.f32.mrb[0].mxu0
        %2755 = vmatprep.mubr.f32.mxu0 0.0
        %2756 = vmatmul.mubr.f32.gmra.mrb[0].mxu0 %v2585
        %v2757 = vpop.f32.mrb[0].mxu0
        %v2758 = vadd.f32 0.0, %v2757
        %v2759 = vpop.f32.mrb[0].mxu0
        %2760 = vmatprep.mubr.f32.mxu0 0.0
        %2761 = vmatmul.mubr.f32.gmra.mrb[0].mxu0 %v2588
        %v2762 = vpop.f32.mrb[0].mxu0
        %v2763 = vadd.f32 0.0, %v2762
        %v2764 = vpop.f32.mrb[0].mxu0
        %2765 = vmatprep.mubr.f32.mxu0 0.0
        %2766 = vmatmul.mubr.f32.gmra.mrb[0].mxu0 %v2591
        %v2767 = vpop.f32.mrb[0].mxu0
        %v2768 = vadd.f32 0.0, %v2767
        %v2769 = vpop.f32.mrb[0].mxu0
        %2770 = vmatprep.mubr.f32.mxu0 0.0
        %2771 = vmatmul.mubr.f32.gmra.mrb[0].mxu0 %v2594
        %v2772 = vpop.f32.mrb[0].mxu0
        %v2773 = vadd.f32 0.0, %v2772
        %v2774 = vpop.f32.mrb[0].mxu0
        %2775 = vmatprep.mubr.f32.mxu0 0.0
        %2776 = vmatmul.mubr.f32.gmra.mrb[0].mxu0 %v2597
        %v2777 = vpop.f32.mrb[0].mxu0
        %v2778 = vadd.f32 0.0, %v2777
        %v2779 = vpop.f32.mrb[0].mxu0
        %2780 = vmatprep.mubr.f32.mxu0 0.0
        %2781 = vmatmul.mubr.f32.gmra.mrb[0].mxu0 %v2600
        %v2782 = vpop.f32.mrb[0].mxu0
        %v2783 = vadd.f32 0.0, %v2782
        %v2784 = vpop.f32.mrb[0].mxu0
        %2785 = vmatprep.mubr.f32.mxu0 0.0
        %2786 = vmatmul.mubr.f32.gmra.mrb[0].mxu0 %v2603
        %v2787 = vpop.f32.mrb[0].mxu0
        %v2788 = vadd.f32 0.0, %v2787
        %v2789 = vpop.f32.mrb[0].mxu0
        %2790 = vmatprep.mubr.f32.mxu0 0.0
        %2791 = vmatmul.mubr.f32.gmra.mrb[0].mxu0 %v2606
        %v2792 = vpop.f32.mrb[0].mxu0
        %v2793 = vadd.f32 0.0, %v2792
        %v2794 = vpop.f32.mrb[0].mxu0
        %2795 = vmatprep.mubr.f32.mxu0 0.0
        %2796 = vmatmul.mubr.f32.gmra.mrb[0].mxu0 %v2609
        %v2797 = vpop.f32.mrb[0].mxu0
        %v2798 = vadd.f32 0.0, %v2797
        %v2799 = vpop.f32.mrb[0].mxu0
        %2800 = vmatprep.mubr.f32.mxu0 0.0
        %2801 = vmatmul.mubr.f32.gmra.mrb[0].mxu0 %v2612
        %v2802 = vpop.f32.mrb[0].mxu0
        %v2803 = vadd.f32 0.0, %v2802
        %v2804 = vpop.f32.mrb[0].mxu0
        %2805 = vmatprep.mubr.f32.mxu0 0.0
        %2806 = vmatmul.mubr.f32.gmra.mrb[0].mxu0 %v2615
        %v2807 = vpop.f32.mrb[0].mxu0
        %v2808 = vadd.f32 0.0, %v2807
        %v2809 = vpop.f32.mrb[0].mxu0
        %2810 = vmatprep.mubr.f32.mxu0 0.0
        %2811 = vmatmul.mubr.f32.gmra.mrb[0].mxu0 %v2618
        %v2812 = vpop.f32.mrb[0].mxu0
        %v2813 = vadd.f32 0.0, %v2812
        %v2814 = vpop.f32.mrb[0].mxu0
        %2815 = vmatprep.mubr.f32.mxu0 0.0
        %2816 = vmatmul.mubr.f32.gmra.mrb[0].mxu0 %v2621
        %v2817 = vpop.f32.mrb[0].mxu0
        %v2818 = vadd.f32 0.0, %v2817
        %v2819 = vpop.f32.mrb[0].mxu0
        %2820 = vmatprep.mubr.f32.mxu0 0.0
        %2821 = vmatmul.mubr.f32.gmra.mrb[0].mxu0 %v2624
        %v2822 = vpop.f32.mrb[0].mxu0
        %v2823 = vadd.f32 0.0, %v2822
        %v2824 = vpop.f32.mrb[0].mxu0
        %2825 = vmatprep.mubr.f32.mxu0 0.0
        %2826 = vmatmul.mubr.f32.gmra.mrb[0].mxu0 %v2627
        %v2827 = vpop.f32.mrb[0].mxu0
        %v2828 = vadd.f32 0.0, %v2827
        %v2829 = vpop.f32.mrb[0].mxu0
        %2830 = vmatprep.mubr.f32.mxu0 0.0
        %2831 = vmatmul.mubr.f32.gmra.mrb[0].mxu0 %v2630
        %v2832 = vpop.f32.mrb[0].mxu0
        %v2833 = vadd.f32 0.0, %v2832
        %v2834 = vpop.f32.mrb[0].mxu0
        %2835 = vmatprep.mubr.f32.mxu0 0.0
        %2836 = vmatmul.mubr.f32.gmra.mrb[0].mxu0 %v2633
        %v2837 = vpop.f32.mrb[0].mxu0
        %v2838 = vadd.f32 0.0, %v2837
        %v2839 = vpop.f32.mrb[0].mxu0
        %2840 = vmatprep.mubr.f32.mxu0 0.0
        %2841 = vmatmul.mubr.f32.gmra.mrb[0].mxu0 %v2636
        %v2842 = vpop.f32.mrb[0].mxu0
        %v2843 = vadd.f32 0.0, %v2842
        %v2844 = vpop.f32.mrb[0].mxu0
        %2845 = vmatprep.mubr.f32.mxu0 0.0
        %2846 = vmatmul.mubr.f32.gmra.mrb[0].mxu0 %v2639
        %v2847 = vpop.f32.mrb[0].mxu0
        %v2848 = vadd.f32 0.0, %v2847
        %v2849 = vpop.f32.mrb[0].mxu0
        %2850 = vmatprep.mubr.f32.mxu0 0.0
        %2851 = vmatmul.mubr.f32.gmra.mrb[0].mxu0 %v2642
        %v2852 = vpop.f32.mrb[0].mxu0
        %v2853 = vadd.f32 0.0, %v2852
        %v2854 = vpop.f32.mrb[0].mxu0
        %2855 = vmatprep.mubr.f32.mxu0 0.0
        %2856 = vmatmul.mubr.f32.gmra.mrb[0].mxu0 %v2645
        %v2857 = vpop.f32.mrb[0].mxu0
        %v2858 = vadd.f32 0.0, %v2857
        %v2859 = vpop.f32.mrb[0].mxu0
        %2860 = vmatprep.mubr.f32.mxu0 0.0
        %2861 = vmatmul.mubr.f32.gmra.mrb[0].mxu0 %v2648
        %v2862 = vpop.f32.mrb[0].mxu0
        %v2863 = vadd.f32 0.0, %v2862
        %v2864 = vpop.f32.mrb[0].mxu0
        %2865 = vmatprep.mubr.f32.mxu0 0.0
        %2866 = vmatmul.mubr.f32.gmra.mrb[0].mxu0 %v2651
        %v2867 = vpop.f32.mrb[0].mxu0
        %v2868 = vadd.f32 0.0, %v2867
        %v2869 = vpop.f32.mrb[0].mxu0
        %2870 = vmatprep.mubr.f32.mxu0 0.0
        %2871 = vmatmul.mubr.f32.gmra.mrb[0].mxu0 %v2654
        %v2872 = vpop.f32.mrb[0].mxu0
        %v2873 = vadd.f32 0.0, %v2872
        %v2874 = vpop.f32.mrb[0].mxu0
        %2875 = vmatprep.mubr.f32.mxu0 0.0
        %2876 = vmatmul.mubr.f32.gmra.mrb[0].mxu0 %v2657
        %v2877 = vpop.f32.mrb[0].mxu0
        %v2878 = vadd.f32 0.0, %v2877
        %v2879 = vpop.f32.mrb[0].mxu0
        %2880 = vmatprep.mubr.f32.mxu0 0.0
        %2881 = vmatmul.mubr.f32.gmra.mrb[0].mxu0 %v2660
        %v2882 = vpop.f32.mrb[0].mxu0
        %v2883 = vadd.f32 0.0, %v2882
        %v2884 = vpop.f32.mrb[0].mxu0
        %2885 = vmatprep.mubr.f32.mxu0 0.0
        %2886 = vmatmul.mubr.f32.gmra.mrb[0].mxu0 %v2663
        %v2887 = vpop.f32.mrb[0].mxu0
        %v2888 = vadd.f32 0.0, %v2887
        %v2889 = vpop.f32.mrb[0].mxu0
        %2890 = vmatprep.mubr.f32.mxu0 0.0
        %2891 = vmatmul.mubr.f32.gmra.mrb[0].mxu0 %v2666
        %v2892 = vpop.f32.mrb[0].mxu0
        %v2893 = vadd.f32 0.0, %v2892
        %v2894 = vpop.f32.mrb[0].mxu0
        %2895 = vdwg.mxu0
        %v2896 = vadd.f32 %v2499, %v2738
        %v2897 = vadd.f32 %v2500, %v2743
        %v2898 = vadd.f32 %v2501, %v2748
        %v2899 = vadd.f32 %v2502, %v2753
        %v2900 = vadd.f32 %v2503, %v2758
        %v2901 = vadd.f32 %v2504, %v2763
        %v2902 = vadd.f32 %v2505, %v2768
        %v2903 = vadd.f32 %v2506, %v2773
        %v2904 = vadd.f32 %v2507, %v2778
        %v2905 = vadd.f32 %v2508, %v2783
        %v2906 = vadd.f32 %v2509, %v2788
        %v2907 = vadd.f32 %v2510, %v2793
        %v2908 = vadd.f32 %v2511, %v2798
        %v2909 = vadd.f32 %v2512, %v2803
        %v2910 = vadd.f32 %v2513, %v2808
        %v2911 = vadd.f32 %v2514, %v2813
        %v2912 = vadd.f32 %v2515, %v2818
        %v2913 = vadd.f32 %v2516, %v2823
        %v2914 = vadd.f32 %v2517, %v2828
        %v2915 = vadd.f32 %v2518, %v2833
        %v2916 = vadd.f32 %v2519, %v2838
        %v2917 = vadd.f32 %v2520, %v2843
        %v2918 = vadd.f32 %v2521, %v2848
        %v2919 = vadd.f32 %v2522, %v2853
        %v2920 = vadd.f32 %v2523, %v2858
        %v2921 = vadd.f32 %v2524, %v2863
        %v2922 = vadd.f32 %v2525, %v2868
        %v2923 = vadd.f32 %v2526, %v2873
        %v2924 = vadd.f32 %v2527, %v2878
        %v2925 = vadd.f32 %v2528, %v2883
        %v2926 = vadd.f32 %v2529, %v2888
        %v2927 = vadd.f32 %v2530, %v2893
        %s2928 = scalar_lea.vmem %s6, 16
        %v2929 = vld [vmem:[%s2928] sm:$0xf]
        %v2930 = vsel %vm1375, %v592, 0
        %v2932 = vsel %vm1375, %v593, 0
        %v2935 = vsel %vm1439, %v2929, 0
        %2937 = vmatprep.subr.mxu0 0.0
        %2938 = vmatpush1.msra.mxu0 %v2935
        %2939 = vmatprep.subr.mxu0 0.0
        %2940 = vmatpush1.msra.mxu0 0.0
        %2941 = vmatprep.subr.mxu0 0.0
        %2942 = vmatpush1.msra.mxu0 0.0
        %2943 = vmatprep.subr.mxu0 0.0
        %2944 = vmatpush1.msra.mxu0 0.0
        %2945 = vmatprep.subr.mxu0 0.0
        %2946 = vmatpush1.msra.mxu0 0.0
        %2947 = vmatprep.subr.mxu0 0.0
        %2948 = vmatpush1.msra.mxu0 0.0
        %2949 = vmatprep.subr.mxu0 0.0
        %2950 = vmatpush1.msra.mxu0 0.0
        %2951 = vmatprep.subr.mxu0 0.0
        %2952 = vmatpush1.msra.mxu0 0.0
        %2953 = vmatprep.subr.mxu0 0.0
        %2954 = vmatpush1.msra.mxu0 0.0
        %2955 = vmatprep.subr.mxu0 0.0
        %2956 = vmatpush1.msra.mxu0 0.0
        %2957 = vmatprep.subr.mxu0 0.0
        %2958 = vmatpush1.msra.mxu0 0.0
        %2959 = vmatprep.subr.mxu0 0.0
        %2960 = vmatpush1.msra.mxu0 0.0
        %2961 = vmatprep.subr.mxu0 0.0
        %2962 = vmatpush1.msra.mxu0 0.0
        %2963 = vmatprep.subr.mxu0 0.0
        %2964 = vmatpush1.msra.mxu0 0.0
        %2965 = vmatprep.subr.mxu0 0.0
        %2966 = vmatpush1.msra.mxu0 0.0
        %2967 = vmatprep.subr.mxu0 0.0
        %2968 = vmatpush1.msra.mxu0 0.0
        %2969 = vmatprep.subr.mxu0 0.0
        %2970 = vmatpush1.msra.mxu0 0.0
        %2971 = vmatprep.subr.mxu0 0.0
        %2972 = vmatpush1.msra.mxu0 0.0
        %2973 = vmatprep.subr.mxu0 0.0
        %2974 = vmatpush1.msra.mxu0 0.0
        %2975 = vmatprep.subr.mxu0 0.0
        %2976 = vmatpush1.msra.mxu0 0.0
        %2977 = vmatprep.subr.mxu0 0.0
        %2978 = vmatpush1.msra.mxu0 0.0
        %2979 = vmatprep.subr.mxu0 0.0
        %2980 = vmatpush1.msra.mxu0 0.0
        %2981 = vmatprep.subr.mxu0 0.0
        %2982 = vmatpush1.msra.mxu0 0.0
        %2983 = vmatprep.subr.mxu0 0.0
        %2984 = vmatpush1.msra.mxu0 0.0
        %2985 = vmatprep.subr.mxu0 0.0
        %2986 = vmatpush1.msra.mxu0 0.0
        %2987 = vmatprep.subr.mxu0 0.0
        %2988 = vmatpush1.msra.mxu0 0.0
        %2989 = vmatprep.subr.mxu0 0.0
        %2990 = vmatpush1.msra.mxu0 0.0
        %2991 = vmatprep.subr.mxu0 0.0
        %2992 = vmatpush1.msra.mxu0 0.0
        %2993 = vmatprep.subr.mxu0 0.0
        %2994 = vmatpush1.msra.mxu0 0.0
        %2995 = vmatprep.subr.mxu0 0.0
        %2996 = vmatpush1.msra.mxu0 0.0
        %2997 = vmatprep.subr.mxu0 0.0
        %2998 = vmatpush1.msra.mxu0 0.0
        %2999 = vmatprep.subr.mxu0 0.0
        %3000 = vmatpush1.msra.mxu0 0.0
        %3001 = vmatprep.mubr.f32.mxu0 0.0
        %3002 = vmatmul.mubr.f32.gmra.mrb[0].mxu0 %v1379
        %v3003 = vpop.f32.mrb[0].mxu0
        %v3004 = vadd.f32 0.0, %v3003
        %v3005 = vpop.f32.mrb[0].mxu0
        %3006 = vmatprep.mubr.f32.mxu0 0.0
        %3007 = vmatmul.mubr.f32.gmra.mrb[0].mxu0 %v1381
        %v3008 = vpop.f32.mrb[0].mxu0
        %v3009 = vadd.f32 0.0, %v3008
        %v3010 = vpop.f32.mrb[0].mxu0
        %3011 = vmatprep.mubr.f32.mxu0 0.0
        %3012 = vmatmul.mubr.f32.gmra.mrb[0].mxu0 %v1383
        %v3013 = vpop.f32.mrb[0].mxu0
        %v3014 = vadd.f32 0.0, %v3013
        %v3015 = vpop.f32.mrb[0].mxu0
        %3016 = vmatprep.mubr.f32.mxu0 0.0
        %3017 = vmatmul.mubr.f32.gmra.mrb[0].mxu0 %v1385
        %v3018 = vpop.f32.mrb[0].mxu0
        %v3019 = vadd.f32 0.0, %v3018
        %v3020 = vpop.f32.mrb[0].mxu0
        %3021 = vmatprep.mubr.f32.mxu0 0.0
        %3022 = vmatmul.mubr.f32.gmra.mrb[0].mxu0 %v1387
        %v3023 = vpop.f32.mrb[0].mxu0
        %v3024 = vadd.f32 0.0, %v3023
        %v3025 = vpop.f32.mrb[0].mxu0
        %3026 = vmatprep.mubr.f32.mxu0 0.0
        %3027 = vmatmul.mubr.f32.gmra.mrb[0].mxu0 %v1389
        %v3028 = vpop.f32.mrb[0].mxu0
        %v3029 = vadd.f32 0.0, %v3028
        %v3030 = vpop.f32.mrb[0].mxu0
        %3031 = vmatprep.mubr.f32.mxu0 0.0
        %3032 = vmatmul.mubr.f32.gmra.mrb[0].mxu0 %v1391
        %v3033 = vpop.f32.mrb[0].mxu0
        %v3034 = vadd.f32 0.0, %v3033
        %v3035 = vpop.f32.mrb[0].mxu0
        %3036 = vmatprep.mubr.f32.mxu0 0.0
        %3037 = vmatmul.mubr.f32.gmra.mrb[0].mxu0 %v1393
        %v3038 = vpop.f32.mrb[0].mxu0
        %v3039 = vadd.f32 0.0, %v3038
        %v3040 = vpop.f32.mrb[0].mxu0
        %3041 = vmatprep.mubr.f32.mxu0 0.0
        %3042 = vmatmul.mubr.f32.gmra.mrb[0].mxu0 %v1395
        %v3043 = vpop.f32.mrb[0].mxu0
        %v3044 = vadd.f32 0.0, %v3043
        %v3045 = vpop.f32.mrb[0].mxu0
        %3046 = vmatprep.mubr.f32.mxu0 0.0
        %3047 = vmatmul.mubr.f32.gmra.mrb[0].mxu0 %v1397
        %v3048 = vpop.f32.mrb[0].mxu0
        %v3049 = vadd.f32 0.0, %v3048
        %v3050 = vpop.f32.mrb[0].mxu0
        %3051 = vmatprep.mubr.f32.mxu0 0.0
        %3052 = vmatmul.mubr.f32.gmra.mrb[0].mxu0 %v1399
        %v3053 = vpop.f32.mrb[0].mxu0
        %v3054 = vadd.f32 0.0, %v3053
        %v3055 = vpop.f32.mrb[0].mxu0
        %3056 = vmatprep.mubr.f32.mxu0 0.0
        %3057 = vmatmul.mubr.f32.gmra.mrb[0].mxu0 %v1401
        %v3058 = vpop.f32.mrb[0].mxu0
        %v3059 = vadd.f32 0.0, %v3058
        %v3060 = vpop.f32.mrb[0].mxu0
        %3061 = vmatprep.mubr.f32.mxu0 0.0
        %3062 = vmatmul.mubr.f32.gmra.mrb[0].mxu0 %v1403
        %v3063 = vpop.f32.mrb[0].mxu0
        %v3064 = vadd.f32 0.0, %v3063
        %v3065 = vpop.f32.mrb[0].mxu0
        %3066 = vmatprep.mubr.f32.mxu0 0.0
        %3067 = vmatmul.mubr.f32.gmra.mrb[0].mxu0 %v1405
        %v3068 = vpop.f32.mrb[0].mxu0
        %v3069 = vadd.f32 0.0, %v3068
        %v3070 = vpop.f32.mrb[0].mxu0
        %3071 = vmatprep.mubr.f32.mxu0 0.0
        %3072 = vmatmul.mubr.f32.gmra.mrb[0].mxu0 %v1407
        %v3073 = vpop.f32.mrb[0].mxu0
        %v3074 = vadd.f32 0.0, %v3073
        %v3075 = vpop.f32.mrb[0].mxu0
        %3076 = vmatprep.mubr.f32.mxu0 0.0
        %3077 = vmatmul.mubr.f32.gmra.mrb[0].mxu0 %v1409
        %v3078 = vpop.f32.mrb[0].mxu0
        %v3079 = vadd.f32 0.0, %v3078
        %v3080 = vpop.f32.mrb[0].mxu0
        %3081 = vmatprep.mubr.f32.mxu0 0.0
        %3082 = vmatmul.mubr.f32.gmra.mrb[0].mxu0 %v1411
        %v3083 = vpop.f32.mrb[0].mxu0
        %v3084 = vadd.f32 0.0, %v3083
        %v3085 = vpop.f32.mrb[0].mxu0
        %3086 = vmatprep.mubr.f32.mxu0 0.0
        %3087 = vmatmul.mubr.f32.gmra.mrb[0].mxu0 %v1413
        %v3088 = vpop.f32.mrb[0].mxu0
        %v3089 = vadd.f32 0.0, %v3088
        %v3090 = vpop.f32.mrb[0].mxu0
        %3091 = vmatprep.mubr.f32.mxu0 0.0
        %3092 = vmatmul.mubr.f32.gmra.mrb[0].mxu0 %v1415
        %v3093 = vpop.f32.mrb[0].mxu0
        %v3094 = vadd.f32 0.0, %v3093
        %v3095 = vpop.f32.mrb[0].mxu0
        %3096 = vmatprep.mubr.f32.mxu0 0.0
        %3097 = vmatmul.mubr.f32.gmra.mrb[0].mxu0 %v1417
        %v3098 = vpop.f32.mrb[0].mxu0
        %v3099 = vadd.f32 0.0, %v3098
        %v3100 = vpop.f32.mrb[0].mxu0
        %3101 = vmatprep.mubr.f32.mxu0 0.0
        %3102 = vmatmul.mubr.f32.gmra.mrb[0].mxu0 %v1419
        %v3103 = vpop.f32.mrb[0].mxu0
        %v3104 = vadd.f32 0.0, %v3103
        %v3105 = vpop.f32.mrb[0].mxu0
        %3106 = vmatprep.mubr.f32.mxu0 0.0
        %3107 = vmatmul.mubr.f32.gmra.mrb[0].mxu0 %v1421
        %v3108 = vpop.f32.mrb[0].mxu0
        %v3109 = vadd.f32 0.0, %v3108
        %v3110 = vpop.f32.mrb[0].mxu0
        %3111 = vmatprep.mubr.f32.mxu0 0.0
        %3112 = vmatmul.mubr.f32.gmra.mrb[0].mxu0 %v1423
        %v3113 = vpop.f32.mrb[0].mxu0
        %v3114 = vadd.f32 0.0, %v3113
        %v3115 = vpop.f32.mrb[0].mxu0
        %3116 = vmatprep.mubr.f32.mxu0 0.0
        %3117 = vmatmul.mubr.f32.gmra.mrb[0].mxu0 %v1425
        %v3118 = vpop.f32.mrb[0].mxu0
        %v3119 = vadd.f32 0.0, %v3118
        %v3120 = vpop.f32.mrb[0].mxu0
        %3121 = vmatprep.mubr.f32.mxu0 0.0
        %3122 = vmatmul.mubr.f32.gmra.mrb[0].mxu0 %v1427
        %v3123 = vpop.f32.mrb[0].mxu0
        %v3124 = vadd.f32 0.0, %v3123
        %v3125 = vpop.f32.mrb[0].mxu0
        %3126 = vmatprep.mubr.f32.mxu0 0.0
        %3127 = vmatmul.mubr.f32.gmra.mrb[0].mxu0 %v1429
        %v3128 = vpop.f32.mrb[0].mxu0
        %v3129 = vadd.f32 0.0, %v3128
        %v3130 = vpop.f32.mrb[0].mxu0
        %3131 = vmatprep.mubr.f32.mxu0 0.0
        %3132 = vmatmul.mubr.f32.gmra.mrb[0].mxu0 %v1431
        %v3133 = vpop.f32.mrb[0].mxu0
        %v3134 = vadd.f32 0.0, %v3133
        %v3135 = vpop.f32.mrb[0].mxu0
        %3136 = vmatprep.mubr.f32.mxu0 0.0
        %3137 = vmatmul.mubr.f32.gmra.mrb[0].mxu0 %v1433
        %v3138 = vpop.f32.mrb[0].mxu0
        %v3139 = vadd.f32 0.0, %v3138
        %v3140 = vpop.f32.mrb[0].mxu0
        %3141 = vmatprep.mubr.f32.mxu0 0.0
        %3142 = vmatmul.mubr.f32.gmra.mrb[0].mxu0 %v1435
        %v3143 = vpop.f32.mrb[0].mxu0
        %v3144 = vadd.f32 0.0, %v3143
        %v3145 = vpop.f32.mrb[0].mxu0
        %3146 = vmatprep.mubr.f32.mxu0 0.0
        %3147 = vmatmul.mubr.f32.gmra.mrb[0].mxu0 %v1437
        %v3148 = vpop.f32.mrb[0].mxu0
        %v3149 = vadd.f32 0.0, %v3148
        %v3150 = vpop.f32.mrb[0].mxu0
        %3151 = vmatprep.mubr.f32.mxu0 0.0
        %3152 = vmatmul.mubr.f32.gmra.mrb[0].mxu0 %v2930
        %v3153 = vpop.f32.mrb[0].mxu0
        %v3154 = vadd.f32 0.0, %v3153
        %v3155 = vpop.f32.mrb[0].mxu0
        %3156 = vmatprep.mubr.f32.mxu0 0.0
        %3157 = vmatmul.mubr.f32.gmra.mrb[0].mxu0 %v2932
        %v3158 = vpop.f32.mrb[0].mxu0
        %v3159 = vadd.f32 0.0, %v3158
        %v3160 = vpop.f32.mrb[0].mxu0
        %3161 = vdwg.mxu0
        %v3162 = vadd.f32 %v2896, %v3004
        %v3163 = vadd.f32 %v2897, %v3009
        %v3164 = vadd.f32 %v2898, %v3014
        %v3165 = vadd.f32 %v2899, %v3019
        %v3166 = vadd.f32 %v2900, %v3024
        %v3167 = vadd.f32 %v2901, %v3029
        %v3168 = vadd.f32 %v2902, %v3034
        %v3169 = vadd.f32 %v2903, %v3039
        %v3170 = vadd.f32 %v2904, %v3044
        %v3171 = vadd.f32 %v2905, %v3049
        %v3172 = vadd.f32 %v2906, %v3054
        %v3173 = vadd.f32 %v2907, %v3059
        %v3174 = vadd.f32 %v2908, %v3064
        %v3175 = vadd.f32 %v2909, %v3069
        %v3176 = vadd.f32 %v2910, %v3074
        %v3177 = vadd.f32 %v2911, %v3079
        %v3178 = vadd.f32 %v2912, %v3084
        %v3179 = vadd.f32 %v2913, %v3089
        %v3180 = vadd.f32 %v2914, %v3094
        %v3181 = vadd.f32 %v2915, %v3099
        %v3182 = vadd.f32 %v2916, %v3104
        %v3183 = vadd.f32 %v2917, %v3109
        %v3184 = vadd.f32 %v2918, %v3114
        %v3185 = vadd.f32 %v2919, %v3119
        %v3186 = vadd.f32 %v2920, %v3124
        %v3187 = vadd.f32 %v2921, %v3129
        %v3188 = vadd.f32 %v2922, %v3134
        %v3189 = vadd.f32 %v2923, %v3139
        %v3190 = vadd.f32 %v2924, %v3144
        %v3191 = vadd.f32 %v2925, %v3149
        %v3192 = vadd.f32 %v2926, %v3154
        %v3193 = vadd.f32 %v2927, %v3159
        %v3194 = vrot.slane %v593, 1
        %v3195 = vsel %vm1987, %v2047, %v3194
        %v3198 = vsel %vm1987, %v3194, 0.0
        %v3199 = vsel %vm2113, %v1990, 0.0
        %v3200 = vsel %vm2114, %v1992, 0.0
        %v3201 = vsel %vm2115, %v1994, 0.0
        %v3202 = vsel %vm2116, %v1996, 0.0
        %v3203 = vsel %vm2117, %v1998, 0.0
        %v3204 = vsel %vm2118, %v2000, 0.0
        %v3205 = vsel %vm2119, %v2002, 0.0
        %v3206 = vsel %vm2120, %v2004, 0.0
        %v3207 = vsel %vm2121, %v2006, 0.0
        %v3208 = vsel %vm2122, %v2008, 0.0
        %v3209 = vsel %vm2123, %v2010, 0.0
        %v3210 = vsel %vm2124, %v2012, 0.0
        %v3211 = vsel %vm2125, %v2014, 0.0
        %v3212 = vsel %vm2126, %v2016, 0.0
        %v3213 = vsel %vm2127, %v2018, 0.0
        %v3214 = vsel %vm2128, %v2020, 0.0
        %v3215 = vsel %vm2129, %v2022, 0.0
        %v3216 = vsel %vm2130, %v2024, 0.0
        %v3217 = vsel %vm2131, %v2026, 0.0
        %v3218 = vsel %vm2132, %v2028, 0.0
        %v3219 = vsel %vm2133, %v2030, 0.0
        %v3220 = vsel %vm2134, %v2032, 0.0
        %v3221 = vsel %vm2135, %v2034, 0.0
        %v3222 = vsel %vm2136, %v2036, 0.0
        %v3223 = vsel %vm2137, %v2038, 0.0
        %v3224 = vsel %vm2138, %v2040, 0.0
        %v3225 = vsel %vm2139, %v2042, 0.0
        %v3226 = vsel %vm2140, %v2044, 0.0
        %v3227 = vsel %vm2141, %v2046, 0.0
        %v3228 = vsel %vm2142, %v2048, 0.0
        %v3229 = vsel %vm2143, %v3195, 0.0
        %v3230 = vsel %vm2144, %v3198, 0.0
        %s3231 = scalar_lea.vmem %s6, 20
        %v3232 = vld [vmem:[%s3231] sm:$0xf]
        %v3234 = vsel %vm1375, %v3199, 0
        %v3237 = vsel %vm1375, %v3200, 0
        %v3240 = vsel %vm1375, %v3201, 0
        %v3243 = vsel %vm1375, %v3202, 0
        %v3246 = vsel %vm1375, %v3203, 0
        %v3249 = vsel %vm1375, %v3204, 0
        %v3252 = vsel %vm1375, %v3205, 0
        %v3255 = vsel %vm1375, %v3206, 0
        %v3258 = vsel %vm1375, %v3207, 0
        %v3261 = vsel %vm1375, %v3208, 0
        %v3264 = vsel %vm1375, %v3209, 0
        %v3267 = vsel %vm1375, %v3210, 0
        %v3270 = vsel %vm1375, %v3211, 0
        %v3273 = vsel %vm1375, %v3212, 0
        %v3276 = vsel %vm1375, %v3213, 0
        %v3279 = vsel %vm1375, %v3214, 0
        %v3282 = vsel %vm1375, %v3215, 0
        %v3285 = vsel %vm1375, %v3216, 0
        %v3288 = vsel %vm1375, %v3217, 0
        %v3291 = vsel %vm1375, %v3218, 0
        %v3294 = vsel %vm1375, %v3219, 0
        %v3297 = vsel %vm1375, %v3220, 0
        %v3300 = vsel %vm1375, %v3221, 0
        %v3303 = vsel %vm1375, %v3222, 0
        %v3306 = vsel %vm1375, %v3223, 0
        %v3309 = vsel %vm1375, %v3224, 0
        %v3312 = vsel %vm1375, %v3225, 0
        %v3315 = vsel %vm1375, %v3226, 0
        %v3318 = vsel %vm1375, %v3227, 0
        %v3321 = vsel %vm1375, %v3228, 0
        %v3324 = vsel %vm1375, %v3229, 0
        %v3327 = vsel %vm1375, %v3230, 0
        %v3330 = vsel %vm1439, %v3232, 0
        %3332 = vmatprep.subr.mxu0 0.0
        %3333 = vmatpush1.msra.mxu0 %v3330
        %3334 = vmatprep.subr.mxu0 0.0
        %3335 = vmatpush1.msra.mxu0 0.0
        %3336 = vmatprep.subr.mxu0 0.0
        %3337 = vmatpush1.msra.mxu0 0.0
        %3338 = vmatprep.subr.mxu0 0.0
        %3339 = vmatpush1.msra.mxu0 0.0
        %3340 = vmatprep.subr.mxu0 0.0
        %3341 = vmatpush1.msra.mxu0 0.0
        %3342 = vmatprep.subr.mxu0 0.0
        %3343 = vmatpush1.msra.mxu0 0.0
        %3344 = vmatprep.subr.mxu0 0.0
        %3345 = vmatpush1.msra.mxu0 0.0
        %3346 = vmatprep.subr.mxu0 0.0
        %3347 = vmatpush1.msra.mxu0 0.0
        %3348 = vmatprep.subr.mxu0 0.0
        %3349 = vmatpush1.msra.mxu0 0.0
        %3350 = vmatprep.subr.mxu0 0.0
        %3351 = vmatpush1.msra.mxu0 0.0
        %3352 = vmatprep.subr.mxu0 0.0
        %3353 = vmatpush1.msra.mxu0 0.0
        %3354 = vmatprep.subr.mxu0 0.0
        %3355 = vmatpush1.msra.mxu0 0.0
        %3356 = vmatprep.subr.mxu0 0.0
        %3357 = vmatpush1.msra.mxu0 0.0
        %3358 = vmatprep.subr.mxu0 0.0
        %3359 = vmatpush1.msra.mxu0 0.0
        %3360 = vmatprep.subr.mxu0 0.0
        %3361 = vmatpush1.msra.mxu0 0.0
        %3362 = vmatprep.subr.mxu0 0.0
        %3363 = vmatpush1.msra.mxu0 0.0
        %3364 = vmatprep.subr.mxu0 0.0
        %3365 = vmatpush1.msra.mxu0 0.0
        %3366 = vmatprep.subr.mxu0 0.0
        %3367 = vmatpush1.msra.mxu0 0.0
        %3368 = vmatprep.subr.mxu0 0.0
        %3369 = vmatpush1.msra.mxu0 0.0
        %3370 = vmatprep.subr.mxu0 0.0
        %3371 = vmatpush1.msra.mxu0 0.0
        %3372 = vmatprep.subr.mxu0 0.0
        %3373 = vmatpush1.msra.mxu0 0.0
        %3374 = vmatprep.subr.mxu0 0.0
        %3375 = vmatpush1.msra.mxu0 0.0
        %3376 = vmatprep.subr.mxu0 0.0
        %3377 = vmatpush1.msra.mxu0 0.0
        %3378 = vmatprep.subr.mxu0 0.0
        %3379 = vmatpush1.msra.mxu0 0.0
        %3380 = vmatprep.subr.mxu0 0.0
        %3381 = vmatpush1.msra.mxu0 0.0
        %3382 = vmatprep.subr.mxu0 0.0
        %3383 = vmatpush1.msra.mxu0 0.0
        %3384 = vmatprep.subr.mxu0 0.0
        %3385 = vmatpush1.msra.mxu0 0.0
        %3386 = vmatprep.subr.mxu0 0.0
        %3387 = vmatpush1.msra.mxu0 0.0
        %3388 = vmatprep.subr.mxu0 0.0
        %3389 = vmatpush1.msra.mxu0 0.0
        %3390 = vmatprep.subr.mxu0 0.0
        %3391 = vmatpush1.msra.mxu0 0.0
        %3392 = vmatprep.subr.mxu0 0.0
        %3393 = vmatpush1.msra.mxu0 0.0
        %3394 = vmatprep.subr.mxu0 0.0
        %3395 = vmatpush1.msra.mxu0 0.0
        %3396 = vmatprep.mubr.f32.mxu0 0.0
        %3397 = vmatmul.mubr.f32.gmra.mrb[0].mxu0 %v3234
        %v3398 = vpop.f32.mrb[0].mxu0
        %v3399 = vadd.f32 0.0, %v3398
        %v3400 = vpop.f32.mrb[0].mxu0
        %3401 = vmatprep.mubr.f32.mxu0 0.0
        %3402 = vmatmul.mubr.f32.gmra.mrb[0].mxu0 %v3237
        %v3403 = vpop.f32.mrb[0].mxu0
        %v3404 = vadd.f32 0.0, %v3403
        %v3405 = vpop.f32.mrb[0].mxu0
        %3406 = vmatprep.mubr.f32.mxu0 0.0
        %3407 = vmatmul.mubr.f32.gmra.mrb[0].mxu0 %v3240
        %v3408 = vpop.f32.mrb[0].mxu0
        %v3409 = vadd.f32 0.0, %v3408
        %v3410 = vpop.f32.mrb[0].mxu0
        %3411 = vmatprep.mubr.f32.mxu0 0.0
        %3412 = vmatmul.mubr.f32.gmra.mrb[0].mxu0 %v3243
        %v3413 = vpop.f32.mrb[0].mxu0
        %v3414 = vadd.f32 0.0, %v3413
        %v3415 = vpop.f32.mrb[0].mxu0
        %3416 = vmatprep.mubr.f32.mxu0 0.0
        %3417 = vmatmul.mubr.f32.gmra.mrb[0].mxu0 %v3246
        %v3418 = vpop.f32.mrb[0].mxu0
        %v3419 = vadd.f32 0.0, %v3418
        %v3420 = vpop.f32.mrb[0].mxu0
        %3421 = vmatprep.mubr.f32.mxu0 0.0
        %3422 = vmatmul.mubr.f32.gmra.mrb[0].mxu0 %v3249
        %v3423 = vpop.f32.mrb[0].mxu0
        %v3424 = vadd.f32 0.0, %v3423
        %v3425 = vpop.f32.mrb[0].mxu0
        %3426 = vmatprep.mubr.f32.mxu0 0.0
        %3427 = vmatmul.mubr.f32.gmra.mrb[0].mxu0 %v3252
        %v3428 = vpop.f32.mrb[0].mxu0
        %v3429 = vadd.f32 0.0, %v3428
        %v3430 = vpop.f32.mrb[0].mxu0
        %3431 = vmatprep.mubr.f32.mxu0 0.0
        %3432 = vmatmul.mubr.f32.gmra.mrb[0].mxu0 %v3255
        %v3433 = vpop.f32.mrb[0].mxu0
        %v3434 = vadd.f32 0.0, %v3433
        %v3435 = vpop.f32.mrb[0].mxu0
        %3436 = vmatprep.mubr.f32.mxu0 0.0
        %3437 = vmatmul.mubr.f32.gmra.mrb[0].mxu0 %v3258
        %v3438 = vpop.f32.mrb[0].mxu0
        %v3439 = vadd.f32 0.0, %v3438
        %v3440 = vpop.f32.mrb[0].mxu0
        %3441 = vmatprep.mubr.f32.mxu0 0.0
        %3442 = vmatmul.mubr.f32.gmra.mrb[0].mxu0 %v3261
        %v3443 = vpop.f32.mrb[0].mxu0
        %v3444 = vadd.f32 0.0, %v3443
        %v3445 = vpop.f32.mrb[0].mxu0
        %3446 = vmatprep.mubr.f32.mxu0 0.0
        %3447 = vmatmul.mubr.f32.gmra.mrb[0].mxu0 %v3264
        %v3448 = vpop.f32.mrb[0].mxu0
        %v3449 = vadd.f32 0.0, %v3448
        %v3450 = vpop.f32.mrb[0].mxu0
        %3451 = vmatprep.mubr.f32.mxu0 0.0
        %3452 = vmatmul.mubr.f32.gmra.mrb[0].mxu0 %v3267
        %v3453 = vpop.f32.mrb[0].mxu0
        %v3454 = vadd.f32 0.0, %v3453
        %v3455 = vpop.f32.mrb[0].mxu0
        %3456 = vmatprep.mubr.f32.mxu0 0.0
        %3457 = vmatmul.mubr.f32.gmra.mrb[0].mxu0 %v3270
        %v3458 = vpop.f32.mrb[0].mxu0
        %v3459 = vadd.f32 0.0, %v3458
        %v3460 = vpop.f32.mrb[0].mxu0
        %3461 = vmatprep.mubr.f32.mxu0 0.0
        %3462 = vmatmul.mubr.f32.gmra.mrb[0].mxu0 %v3273
        %v3463 = vpop.f32.mrb[0].mxu0
        %v3464 = vadd.f32 0.0, %v3463
        %v3465 = vpop.f32.mrb[0].mxu0
        %3466 = vmatprep.mubr.f32.mxu0 0.0
        %3467 = vmatmul.mubr.f32.gmra.mrb[0].mxu0 %v3276
        %v3468 = vpop.f32.mrb[0].mxu0
        %v3469 = vadd.f32 0.0, %v3468
        %v3470 = vpop.f32.mrb[0].mxu0
        %3471 = vmatprep.mubr.f32.mxu0 0.0
        %3472 = vmatmul.mubr.f32.gmra.mrb[0].mxu0 %v3279
        %v3473 = vpop.f32.mrb[0].mxu0
        %v3474 = vadd.f32 0.0, %v3473
        %v3475 = vpop.f32.mrb[0].mxu0
        %3476 = vmatprep.mubr.f32.mxu0 0.0
        %3477 = vmatmul.mubr.f32.gmra.mrb[0].mxu0 %v3282
        %v3478 = vpop.f32.mrb[0].mxu0
        %v3479 = vadd.f32 0.0, %v3478
        %v3480 = vpop.f32.mrb[0].mxu0
        %3481 = vmatprep.mubr.f32.mxu0 0.0
        %3482 = vmatmul.mubr.f32.gmra.mrb[0].mxu0 %v3285
        %v3483 = vpop.f32.mrb[0].mxu0
        %v3484 = vadd.f32 0.0, %v3483
        %v3485 = vpop.f32.mrb[0].mxu0
        %3486 = vmatprep.mubr.f32.mxu0 0.0
        %3487 = vmatmul.mubr.f32.gmra.mrb[0].mxu0 %v3288
        %v3488 = vpop.f32.mrb[0].mxu0
        %v3489 = vadd.f32 0.0, %v3488
        %v3490 = vpop.f32.mrb[0].mxu0
        %3491 = vmatprep.mubr.f32.mxu0 0.0
        %3492 = vmatmul.mubr.f32.gmra.mrb[0].mxu0 %v3291
        %v3493 = vpop.f32.mrb[0].mxu0
        %v3494 = vadd.f32 0.0, %v3493
        %v3495 = vpop.f32.mrb[0].mxu0
        %3496 = vmatprep.mubr.f32.mxu0 0.0
        %3497 = vmatmul.mubr.f32.gmra.mrb[0].mxu0 %v3294
        %v3498 = vpop.f32.mrb[0].mxu0
        %v3499 = vadd.f32 0.0, %v3498
        %v3500 = vpop.f32.mrb[0].mxu0
        %3501 = vmatprep.mubr.f32.mxu0 0.0
        %3502 = vmatmul.mubr.f32.gmra.mrb[0].mxu0 %v3297
        %v3503 = vpop.f32.mrb[0].mxu0
        %v3504 = vadd.f32 0.0, %v3503
        %v3505 = vpop.f32.mrb[0].mxu0
        %3506 = vmatprep.mubr.f32.mxu0 0.0
        %3507 = vmatmul.mubr.f32.gmra.mrb[0].mxu0 %v3300
        %v3508 = vpop.f32.mrb[0].mxu0
        %v3509 = vadd.f32 0.0, %v3508
        %v3510 = vpop.f32.mrb[0].mxu0
        %3511 = vmatprep.mubr.f32.mxu0 0.0
        %3512 = vmatmul.mubr.f32.gmra.mrb[0].mxu0 %v3303
        %v3513 = vpop.f32.mrb[0].mxu0
        %v3514 = vadd.f32 0.0, %v3513
        %v3515 = vpop.f32.mrb[0].mxu0
        %3516 = vmatprep.mubr.f32.mxu0 0.0
        %3517 = vmatmul.mubr.f32.gmra.mrb[0].mxu0 %v3306
        %v3518 = vpop.f32.mrb[0].mxu0
        %v3519 = vadd.f32 0.0, %v3518
        %v3520 = vpop.f32.mrb[0].mxu0
        %3521 = vmatprep.mubr.f32.mxu0 0.0
        %3522 = vmatmul.mubr.f32.gmra.mrb[0].mxu0 %v3309
        %v3523 = vpop.f32.mrb[0].mxu0
        %v3524 = vadd.f32 0.0, %v3523
        %v3525 = vpop.f32.mrb[0].mxu0
        %3526 = vmatprep.mubr.f32.mxu0 0.0
        %3527 = vmatmul.mubr.f32.gmra.mrb[0].mxu0 %v3312
        %v3528 = vpop.f32.mrb[0].mxu0
        %v3529 = vadd.f32 0.0, %v3528
        %v3530 = vpop.f32.mrb[0].mxu0
        %3531 = vmatprep.mubr.f32.mxu0 0.0
        %3532 = vmatmul.mubr.f32.gmra.mrb[0].mxu0 %v3315
        %v3533 = vpop.f32.mrb[0].mxu0
        %v3534 = vadd.f32 0.0, %v3533
        %v3535 = vpop.f32.mrb[0].mxu0
        %3536 = vmatprep.mubr.f32.mxu0 0.0
        %3537 = vmatmul.mubr.f32.gmra.mrb[0].mxu0 %v3318
        %v3538 = vpop.f32.mrb[0].mxu0
        %v3539 = vadd.f32 0.0, %v3538
        %v3540 = vpop.f32.mrb[0].mxu0
        %3541 = vmatprep.mubr.f32.mxu0 0.0
        %3542 = vmatmul.mubr.f32.gmra.mrb[0].mxu0 %v3321
        %v3543 = vpop.f32.mrb[0].mxu0
        %v3544 = vadd.f32 0.0, %v3543
        %v3545 = vpop.f32.mrb[0].mxu0
        %3546 = vmatprep.mubr.f32.mxu0 0.0
        %3547 = vmatmul.mubr.f32.gmra.mrb[0].mxu0 %v3324
        %v3548 = vpop.f32.mrb[0].mxu0
        %v3549 = vadd.f32 0.0, %v3548
        %v3550 = vpop.f32.mrb[0].mxu0
        %3551 = vmatprep.mubr.f32.mxu0 0.0
        %3552 = vmatmul.mubr.f32.gmra.mrb[0].mxu0 %v3327
        %v3553 = vpop.f32.mrb[0].mxu0
        %v3554 = vadd.f32 0.0, %v3553
        %v3555 = vpop.f32.mrb[0].mxu0
        %3556 = vdwg.mxu0
        %v3557 = vadd.f32 %v3162, %v3399
        %v3558 = vadd.f32 %v3163, %v3404
        %v3559 = vadd.f32 %v3164, %v3409
        %v3560 = vadd.f32 %v3165, %v3414
        %v3561 = vadd.f32 %v3166, %v3419
        %v3562 = vadd.f32 %v3167, %v3424
        %v3563 = vadd.f32 %v3168, %v3429
        %v3564 = vadd.f32 %v3169, %v3434
        %v3565 = vadd.f32 %v3170, %v3439
        %v3566 = vadd.f32 %v3171, %v3444
        %v3567 = vadd.f32 %v3172, %v3449
        %v3568 = vadd.f32 %v3173, %v3454
        %v3569 = vadd.f32 %v3174, %v3459
        %v3570 = vadd.f32 %v3175, %v3464
        %v3571 = vadd.f32 %v3176, %v3469
        %v3572 = vadd.f32 %v3177, %v3474
        %v3573 = vadd.f32 %v3178, %v3479
        %v3574 = vadd.f32 %v3179, %v3484
        %v3575 = vadd.f32 %v3180, %v3489
        %v3576 = vadd.f32 %v3181, %v3494
        %v3577 = vadd.f32 %v3182, %v3499
        %v3578 = vadd.f32 %v3183, %v3504
        %v3579 = vadd.f32 %v3184, %v3509
        %v3580 = vadd.f32 %v3185, %v3514
        %v3581 = vadd.f32 %v3186, %v3519
        %v3582 = vadd.f32 %v3187, %v3524
        %v3583 = vadd.f32 %v3188, %v3529
        %v3584 = vadd.f32 %v3189, %v3534
        %v3585 = vadd.f32 %v3190, %v3539
        %v3586 = vadd.f32 %v3191, %v3544
        %v3587 = vadd.f32 %v3192, %v3549
        %v3588 = vadd.f32 %v3193, %v3554
        %v3590 = vsel %vm1187, %v2534, 0.0
        %v3591 = vsel %vm1310, %v1192, 0.0
        %v3592 = vsel %vm1311, %v1194, 0.0
        %v3593 = vsel %vm1312, %v1196, 0.0
        %v3594 = vsel %vm1313, %v1198, 0.0
        %v3595 = vsel %vm1314, %v1200, 0.0
        %v3596 = vsel %vm1315, %v1202, 0.0
        %v3597 = vsel %vm1316, %v1204, 0.0
        %v3598 = vsel %vm1317, %v1206, 0.0
        %v3599 = vsel %vm1318, %v1208, 0.0
        %v3600 = vsel %vm1319, %v1210, 0.0
        %v3601 = vsel %vm1320, %v1212, 0.0
        %v3602 = vsel %vm1321, %v1214, 0.0
        %v3603 = vsel %vm1322, %v1216, 0.0
        %v3604 = vsel %vm1323, %v1218, 0.0
        %v3605 = vsel %vm1324, %v1220, 0.0
        %v3606 = vsel %vm1325, %v1222, 0.0
        %v3607 = vsel %vm1326, %v1224, 0.0
        %v3608 = vsel %vm1327, %v1226, 0.0
        %v3609 = vsel %vm1328, %v1228, 0.0
        %v3610 = vsel %vm1329, %v1230, 0.0
        %v3611 = vsel %vm1330, %v1232, 0.0
        %v3612 = vsel %vm1331, %v1234, 0.0
        %v3613 = vsel %vm1332, %v1236, 0.0
        %v3614 = vsel %vm1333, %v1238, 0.0
        %v3615 = vsel %vm1334, %v1240, 0.0
        %v3616 = vsel %vm1335, %v1242, 0.0
        %v3617 = vsel %vm1336, %v1244, 0.0
        %v3618 = vsel %vm1337, %v1246, 0.0
        %v3619 = vsel %vm1338, %v2533, 0.0
        %v3620 = vsel %vm1339, %v2535, 0.0
        %v3621 = vsel %vm1340, %v3590, 0.0
        %s3622 = scalar_lea.vmem %s6, 24
        %v3623 = vld [vmem:[%s3622] sm:$0xf]
        %v3625 = vsel %vm1375, %v3591, 0
        %v3628 = vsel %vm1375, %v3592, 0
        %v3631 = vsel %vm1375, %v3593, 0
        %v3634 = vsel %vm1375, %v3594, 0
        %v3637 = vsel %vm1375, %v3595, 0
        %v3640 = vsel %vm1375, %v3596, 0
        %v3643 = vsel %vm1375, %v3597, 0
        %v3646 = vsel %vm1375, %v3598, 0
        %v3649 = vsel %vm1375, %v3599, 0
        %v3652 = vsel %vm1375, %v3600, 0
        %v3655 = vsel %vm1375, %v3601, 0
        %v3658 = vsel %vm1375, %v3602, 0
        %v3661 = vsel %vm1375, %v3603, 0
        %v3664 = vsel %vm1375, %v3604, 0
        %v3667 = vsel %vm1375, %v3605, 0
        %v3670 = vsel %vm1375, %v3606, 0
        %v3673 = vsel %vm1375, %v3607, 0
        %v3676 = vsel %vm1375, %v3608, 0
        %v3679 = vsel %vm1375, %v3609, 0
        %v3682 = vsel %vm1375, %v3610, 0
        %v3685 = vsel %vm1375, %v3611, 0
        %v3688 = vsel %vm1375, %v3612, 0
        %v3691 = vsel %vm1375, %v3613, 0
        %v3694 = vsel %vm1375, %v3614, 0
        %v3697 = vsel %vm1375, %v3615, 0
        %v3700 = vsel %vm1375, %v3616, 0
        %v3703 = vsel %vm1375, %v3617, 0
        %v3706 = vsel %vm1375, %v3618, 0
        %v3709 = vsel %vm1375, %v3619, 0
        %v3712 = vsel %vm1375, %v3620, 0
        %v3715 = vsel %vm1375, %v3621, 0
        %v3718 = vsel %vm1439, %v3623, 0
        %3720 = vmatprep.subr.mxu0 0.0
        %3721 = vmatpush1.msra.mxu0 %v3718
        %3722 = vmatprep.subr.mxu0 0.0
        %3723 = vmatpush1.msra.mxu0 0.0
        %3724 = vmatprep.subr.mxu0 0.0
        %3725 = vmatpush1.msra.mxu0 0.0
        %3726 = vmatprep.subr.mxu0 0.0
        %3727 = vmatpush1.msra.mxu0 0.0
        %3728 = vmatprep.subr.mxu0 0.0
        %3729 = vmatpush1.msra.mxu0 0.0
        %3730 = vmatprep.subr.mxu0 0.0
        %3731 = vmatpush1.msra.mxu0 0.0
        %3732 = vmatprep.subr.mxu0 0.0
        %3733 = vmatpush1.msra.mxu0 0.0
        %3734 = vmatprep.subr.mxu0 0.0
        %3735 = vmatpush1.msra.mxu0 0.0
        %3736 = vmatprep.subr.mxu0 0.0
        %3737 = vmatpush1.msra.mxu0 0.0
        %3738 = vmatprep.subr.mxu0 0.0
        %3739 = vmatpush1.msra.mxu0 0.0
        %3740 = vmatprep.subr.mxu0 0.0
        %3741 = vmatpush1.msra.mxu0 0.0
        %3742 = vmatprep.subr.mxu0 0.0
        %3743 = vmatpush1.msra.mxu0 0.0
        %3744 = vmatprep.subr.mxu0 0.0
        %3745 = vmatpush1.msra.mxu0 0.0
        %3746 = vmatprep.subr.mxu0 0.0
        %3747 = vmatpush1.msra.mxu0 0.0
        %3748 = vmatprep.subr.mxu0 0.0
        %3749 = vmatpush1.msra.mxu0 0.0
        %3750 = vmatprep.subr.mxu0 0.0
        %3751 = vmatpush1.msra.mxu0 0.0
        %3752 = vmatprep.subr.mxu0 0.0
        %3753 = vmatpush1.msra.mxu0 0.0
        %3754 = vmatprep.subr.mxu0 0.0
        %3755 = vmatpush1.msra.mxu0 0.0
        %3756 = vmatprep.subr.mxu0 0.0
        %3757 = vmatpush1.msra.mxu0 0.0
        %3758 = vmatprep.subr.mxu0 0.0
        %3759 = vmatpush1.msra.mxu0 0.0
        %3760 = vmatprep.subr.mxu0 0.0
        %3761 = vmatpush1.msra.mxu0 0.0
        %3762 = vmatprep.subr.mxu0 0.0
        %3763 = vmatpush1.msra.mxu0 0.0
        %3764 = vmatprep.subr.mxu0 0.0
        %3765 = vmatpush1.msra.mxu0 0.0
        %3766 = vmatprep.subr.mxu0 0.0
        %3767 = vmatpush1.msra.mxu0 0.0
        %3768 = vmatprep.subr.mxu0 0.0
        %3769 = vmatpush1.msra.mxu0 0.0
        %3770 = vmatprep.subr.mxu0 0.0
        %3771 = vmatpush1.msra.mxu0 0.0
        %3772 = vmatprep.subr.mxu0 0.0
        %3773 = vmatpush1.msra.mxu0 0.0
        %3774 = vmatprep.subr.mxu0 0.0
        %3775 = vmatpush1.msra.mxu0 0.0
        %3776 = vmatprep.subr.mxu0 0.0
        %3777 = vmatpush1.msra.mxu0 0.0
        %3778 = vmatprep.subr.mxu0 0.0
        %3779 = vmatpush1.msra.mxu0 0.0
        %3780 = vmatprep.subr.mxu0 0.0
        %3781 = vmatpush1.msra.mxu0 0.0
        %3782 = vmatprep.subr.mxu0 0.0
        %3783 = vmatpush1.msra.mxu0 0.0
        %3784 = vmatprep.mubr.f32.mxu0 0.0
        %3785 = vmatmul.mubr.f32.gmra.mrb[0].mxu0 %v3625
        %v3786 = vpop.f32.mrb[0].mxu0
        %v3787 = vadd.f32 0.0, %v3786
        %v3788 = vpop.f32.mrb[0].mxu0
        %3789 = vmatprep.mubr.f32.mxu0 0.0
        %3790 = vmatmul.mubr.f32.gmra.mrb[0].mxu0 %v3628
        %v3791 = vpop.f32.mrb[0].mxu0
        %v3792 = vadd.f32 0.0, %v3791
        %v3793 = vpop.f32.mrb[0].mxu0
        %3794 = vmatprep.mubr.f32.mxu0 0.0
        %3795 = vmatmul.mubr.f32.gmra.mrb[0].mxu0 %v3631
        %v3796 = vpop.f32.mrb[0].mxu0
        %v3797 = vadd.f32 0.0, %v3796
        %v3798 = vpop.f32.mrb[0].mxu0
        %3799 = vmatprep.mubr.f32.mxu0 0.0
        %3800 = vmatmul.mubr.f32.gmra.mrb[0].mxu0 %v3634
        %v3801 = vpop.f32.mrb[0].mxu0
        %v3802 = vadd.f32 0.0, %v3801
        %v3803 = vpop.f32.mrb[0].mxu0
        %3804 = vmatprep.mubr.f32.mxu0 0.0
        %3805 = vmatmul.mubr.f32.gmra.mrb[0].mxu0 %v3637
        %v3806 = vpop.f32.mrb[0].mxu0
        %v3807 = vadd.f32 0.0, %v3806
        %v3808 = vpop.f32.mrb[0].mxu0
        %3809 = vmatprep.mubr.f32.mxu0 0.0
        %3810 = vmatmul.mubr.f32.gmra.mrb[0].mxu0 %v3640
        %v3811 = vpop.f32.mrb[0].mxu0
        %v3812 = vadd.f32 0.0, %v3811
        %v3813 = vpop.f32.mrb[0].mxu0
        %3814 = vmatprep.mubr.f32.mxu0 0.0
        %3815 = vmatmul.mubr.f32.gmra.mrb[0].mxu0 %v3643
        %v3816 = vpop.f32.mrb[0].mxu0
        %v3817 = vadd.f32 0.0, %v3816
        %v3818 = vpop.f32.mrb[0].mxu0
        %3819 = vmatprep.mubr.f32.mxu0 0.0
        %3820 = vmatmul.mubr.f32.gmra.mrb[0].mxu0 %v3646
        %v3821 = vpop.f32.mrb[0].mxu0
        %v3822 = vadd.f32 0.0, %v3821
        %v3823 = vpop.f32.mrb[0].mxu0
        %3824 = vmatprep.mubr.f32.mxu0 0.0
        %3825 = vmatmul.mubr.f32.gmra.mrb[0].mxu0 %v3649
        %v3826 = vpop.f32.mrb[0].mxu0
        %v3827 = vadd.f32 0.0, %v3826
        %v3828 = vpop.f32.mrb[0].mxu0
        %3829 = vmatprep.mubr.f32.mxu0 0.0
        %3830 = vmatmul.mubr.f32.gmra.mrb[0].mxu0 %v3652
        %v3831 = vpop.f32.mrb[0].mxu0
        %v3832 = vadd.f32 0.0, %v3831
        %v3833 = vpop.f32.mrb[0].mxu0
        %3834 = vmatprep.mubr.f32.mxu0 0.0
        %3835 = vmatmul.mubr.f32.gmra.mrb[0].mxu0 %v3655
        %v3836 = vpop.f32.mrb[0].mxu0
        %v3837 = vadd.f32 0.0, %v3836
        %v3838 = vpop.f32.mrb[0].mxu0
        %3839 = vmatprep.mubr.f32.mxu0 0.0
        %3840 = vmatmul.mubr.f32.gmra.mrb[0].mxu0 %v3658
        %v3841 = vpop.f32.mrb[0].mxu0
        %v3842 = vadd.f32 0.0, %v3841
        %v3843 = vpop.f32.mrb[0].mxu0
        %3844 = vmatprep.mubr.f32.mxu0 0.0
        %3845 = vmatmul.mubr.f32.gmra.mrb[0].mxu0 %v3661
        %v3846 = vpop.f32.mrb[0].mxu0
        %v3847 = vadd.f32 0.0, %v3846
        %v3848 = vpop.f32.mrb[0].mxu0
        %3849 = vmatprep.mubr.f32.mxu0 0.0
        %3850 = vmatmul.mubr.f32.gmra.mrb[0].mxu0 %v3664
        %v3851 = vpop.f32.mrb[0].mxu0
        %v3852 = vadd.f32 0.0, %v3851
        %v3853 = vpop.f32.mrb[0].mxu0
        %3854 = vmatprep.mubr.f32.mxu0 0.0
        %3855 = vmatmul.mubr.f32.gmra.mrb[0].mxu0 %v3667
        %v3856 = vpop.f32.mrb[0].mxu0
        %v3857 = vadd.f32 0.0, %v3856
        %v3858 = vpop.f32.mrb[0].mxu0
        %3859 = vmatprep.mubr.f32.mxu0 0.0
        %3860 = vmatmul.mubr.f32.gmra.mrb[0].mxu0 %v3670
        %v3861 = vpop.f32.mrb[0].mxu0
        %v3862 = vadd.f32 0.0, %v3861
        %v3863 = vpop.f32.mrb[0].mxu0
        %3864 = vmatprep.mubr.f32.mxu0 0.0
        %3865 = vmatmul.mubr.f32.gmra.mrb[0].mxu0 %v3673
        %v3866 = vpop.f32.mrb[0].mxu0
        %v3867 = vadd.f32 0.0, %v3866
        %v3868 = vpop.f32.mrb[0].mxu0
        %3869 = vmatprep.mubr.f32.mxu0 0.0
        %3870 = vmatmul.mubr.f32.gmra.mrb[0].mxu0 %v3676
        %v3871 = vpop.f32.mrb[0].mxu0
        %v3872 = vadd.f32 0.0, %v3871
        %v3873 = vpop.f32.mrb[0].mxu0
        %3874 = vmatprep.mubr.f32.mxu0 0.0
        %3875 = vmatmul.mubr.f32.gmra.mrb[0].mxu0 %v3679
        %v3876 = vpop.f32.mrb[0].mxu0
        %v3877 = vadd.f32 0.0, %v3876
        %v3878 = vpop.f32.mrb[0].mxu0
        %3879 = vmatprep.mubr.f32.mxu0 0.0
        %3880 = vmatmul.mubr.f32.gmra.mrb[0].mxu0 %v3682
        %v3881 = vpop.f32.mrb[0].mxu0
        %v3882 = vadd.f32 0.0, %v3881
        %v3883 = vpop.f32.mrb[0].mxu0
        %3884 = vmatprep.mubr.f32.mxu0 0.0
        %3885 = vmatmul.mubr.f32.gmra.mrb[0].mxu0 %v3685
        %v3886 = vpop.f32.mrb[0].mxu0
        %v3887 = vadd.f32 0.0, %v3886
        %v3888 = vpop.f32.mrb[0].mxu0
        %3889 = vmatprep.mubr.f32.mxu0 0.0
        %3890 = vmatmul.mubr.f32.gmra.mrb[0].mxu0 %v3688
        %v3891 = vpop.f32.mrb[0].mxu0
        %v3892 = vadd.f32 0.0, %v3891
        %v3893 = vpop.f32.mrb[0].mxu0
        %3894 = vmatprep.mubr.f32.mxu0 0.0
        %3895 = vmatmul.mubr.f32.gmra.mrb[0].mxu0 %v3691
        %v3896 = vpop.f32.mrb[0].mxu0
        %v3897 = vadd.f32 0.0, %v3896
        %v3898 = vpop.f32.mrb[0].mxu0
        %3899 = vmatprep.mubr.f32.mxu0 0.0
        %3900 = vmatmul.mubr.f32.gmra.mrb[0].mxu0 %v3694
        %v3901 = vpop.f32.mrb[0].mxu0
        %v3902 = vadd.f32 0.0, %v3901
        %v3903 = vpop.f32.mrb[0].mxu0
        %3904 = vmatprep.mubr.f32.mxu0 0.0
        %3905 = vmatmul.mubr.f32.gmra.mrb[0].mxu0 %v3697
        %v3906 = vpop.f32.mrb[0].mxu0
        %v3907 = vadd.f32 0.0, %v3906
        %v3908 = vpop.f32.mrb[0].mxu0
        %3909 = vmatprep.mubr.f32.mxu0 0.0
        %3910 = vmatmul.mubr.f32.gmra.mrb[0].mxu0 %v3700
        %v3911 = vpop.f32.mrb[0].mxu0
        %v3912 = vadd.f32 0.0, %v3911
        %v3913 = vpop.f32.mrb[0].mxu0
        %3914 = vmatprep.mubr.f32.mxu0 0.0
        %3915 = vmatmul.mubr.f32.gmra.mrb[0].mxu0 %v3703
        %v3916 = vpop.f32.mrb[0].mxu0
        %v3917 = vadd.f32 0.0, %v3916
        %v3918 = vpop.f32.mrb[0].mxu0
        %3919 = vmatprep.mubr.f32.mxu0 0.0
        %3920 = vmatmul.mubr.f32.gmra.mrb[0].mxu0 %v3706
        %v3921 = vpop.f32.mrb[0].mxu0
        %v3922 = vadd.f32 0.0, %v3921
        %v3923 = vpop.f32.mrb[0].mxu0
        %3924 = vmatprep.mubr.f32.mxu0 0.0
        %3925 = vmatmul.mubr.f32.gmra.mrb[0].mxu0 %v3709
        %v3926 = vpop.f32.mrb[0].mxu0
        %v3927 = vadd.f32 0.0, %v3926
        %v3928 = vpop.f32.mrb[0].mxu0
        %3929 = vmatprep.mubr.f32.mxu0 0.0
        %3930 = vmatmul.mubr.f32.gmra.mrb[0].mxu0 %v3712
        %v3931 = vpop.f32.mrb[0].mxu0
        %v3932 = vadd.f32 0.0, %v3931
        %v3933 = vpop.f32.mrb[0].mxu0
        %3934 = vmatprep.mubr.f32.mxu0 0.0
        %3935 = vmatmul.mubr.f32.gmra.mrb[0].mxu0 %v3715
        %v3936 = vpop.f32.mrb[0].mxu0
        %v3937 = vadd.f32 0.0, %v3936
        %v3938 = vpop.f32.mrb[0].mxu0
        %3939 = vmatprep.mubr.f32.mxu0 0.0
        %3940 = vmatmul.mubr.f32.gmra.mrb[0].mxu0 %v1377
        %v3941 = vpop.f32.mrb[0].mxu0
        %v3942 = vadd.f32 0.0, %v3941
        %v3943 = vpop.f32.mrb[0].mxu0
        %3944 = vdwg.mxu0
        %v3945 = vadd.f32 %v3557, %v3787
        %v3946 = vadd.f32 %v3558, %v3792
        %v3947 = vadd.f32 %v3559, %v3797
        %v3948 = vadd.f32 %v3560, %v3802
        %v3949 = vadd.f32 %v3561, %v3807
        %v3950 = vadd.f32 %v3562, %v3812
        %v3951 = vadd.f32 %v3563, %v3817
        %v3952 = vadd.f32 %v3564, %v3822
        %v3953 = vadd.f32 %v3565, %v3827
        %v3954 = vadd.f32 %v3566, %v3832
        %v3955 = vadd.f32 %v3567, %v3837
        %v3956 = vadd.f32 %v3568, %v3842
        %v3957 = vadd.f32 %v3569, %v3847
        %v3958 = vadd.f32 %v3570, %v3852
        %v3959 = vadd.f32 %v3571, %v3857
        %v3960 = vadd.f32 %v3572, %v3862
        %v3961 = vadd.f32 %v3573, %v3867
        %v3962 = vadd.f32 %v3574, %v3872
        %v3963 = vadd.f32 %v3575, %v3877
        %v3964 = vadd.f32 %v3576, %v3882
        %v3965 = vadd.f32 %v3577, %v3887
        %v3966 = vadd.f32 %v3578, %v3892
        %v3967 = vadd.f32 %v3579, %v3897
        %v3968 = vadd.f32 %v3580, %v3902
        %v3969 = vadd.f32 %v3581, %v3907
        %v3970 = vadd.f32 %v3582, %v3912
        %v3971 = vadd.f32 %v3583, %v3917
        %v3972 = vadd.f32 %v3584, %v3922
        %v3973 = vadd.f32 %v3585, %v3927
        %v3974 = vadd.f32 %v3586, %v3932
        %v3975 = vadd.f32 %v3587, %v3937
        %v3976 = vadd.f32 %v3588, %v3942
        %s3977 = scalar_lea.vmem %s6, 28
        %v3978 = vld [vmem:[%s3977] sm:$0xf]
        %v3980 = vsel %vm1439, %v3978, 0
        %3982 = vmatprep.subr.mxu0 0.0
        %3983 = vmatpush1.msra.mxu0 %v3980
        %3984 = vmatprep.subr.mxu0 0.0
        %3985 = vmatpush1.msra.mxu0 0.0
        %3986 = vmatprep.subr.mxu0 0.0
        %3987 = vmatpush1.msra.mxu0 0.0
        %3988 = vmatprep.subr.mxu0 0.0
        %3989 = vmatpush1.msra.mxu0 0.0
        %3990 = vmatprep.subr.mxu0 0.0
        %3991 = vmatpush1.msra.mxu0 0.0
        %3992 = vmatprep.subr.mxu0 0.0
        %3993 = vmatpush1.msra.mxu0 0.0
        %3994 = vmatprep.subr.mxu0 0.0
        %3995 = vmatpush1.msra.mxu0 0.0
        %3996 = vmatprep.subr.mxu0 0.0
        %3997 = vmatpush1.msra.mxu0 0.0
        %3998 = vmatprep.subr.mxu0 0.0
        %3999 = vmatpush1.msra.mxu0 0.0
        %4000 = vmatprep.subr.mxu0 0.0
        %4001 = vmatpush1.msra.mxu0 0.0
        %4002 = vmatprep.subr.mxu0 0.0
        %4003 = vmatpush1.msra.mxu0 0.0
        %4004 = vmatprep.subr.mxu0 0.0
        %4005 = vmatpush1.msra.mxu0 0.0
        %4006 = vmatprep.subr.mxu0 0.0
        %4007 = vmatpush1.msra.mxu0 0.0
        %4008 = vmatprep.subr.mxu0 0.0
        %4009 = vmatpush1.msra.mxu0 0.0
        %4010 = vmatprep.subr.mxu0 0.0
        %4011 = vmatpush1.msra.mxu0 0.0
        %4012 = vmatprep.subr.mxu0 0.0
        %4013 = vmatpush1.msra.mxu0 0.0
        %4014 = vmatprep.subr.mxu0 0.0
        %4015 = vmatpush1.msra.mxu0 0.0
        %4016 = vmatprep.subr.mxu0 0.0
        %4017 = vmatpush1.msra.mxu0 0.0
        %4018 = vmatprep.subr.mxu0 0.0
        %4019 = vmatpush1.msra.mxu0 0.0
        %4020 = vmatprep.subr.mxu0 0.0
        %4021 = vmatpush1.msra.mxu0 0.0
        %4022 = vmatprep.subr.mxu0 0.0
        %4023 = vmatpush1.msra.mxu0 0.0
        %4024 = vmatprep.subr.mxu0 0.0
        %4025 = vmatpush1.msra.mxu0 0.0
        %4026 = vmatprep.subr.mxu0 0.0
        %4027 = vmatpush1.msra.mxu0 0.0
        %4028 = vmatprep.subr.mxu0 0.0
        %4029 = vmatpush1.msra.mxu0 0.0
        %4030 = vmatprep.subr.mxu0 0.0
        %4031 = vmatpush1.msra.mxu0 0.0
        %4032 = vmatprep.subr.mxu0 0.0
        %4033 = vmatpush1.msra.mxu0 0.0
        %4034 = vmatprep.subr.mxu0 0.0
        %4035 = vmatpush1.msra.mxu0 0.0
        %4036 = vmatprep.subr.mxu0 0.0
        %4037 = vmatpush1.msra.mxu0 0.0
        %4038 = vmatprep.subr.mxu0 0.0
        %4039 = vmatpush1.msra.mxu0 0.0
        %4040 = vmatprep.subr.mxu0 0.0
        %4041 = vmatpush1.msra.mxu0 0.0
        %4042 = vmatprep.subr.mxu0 0.0
        %4043 = vmatpush1.msra.mxu0 0.0
        %4044 = vmatprep.subr.mxu0 0.0
        %4045 = vmatpush1.msra.mxu0 0.0
        %4046 = vmatprep.mubr.f32.mxu0 0.0
        %4047 = vmatmul.mubr.f32.gmra.mrb[0].mxu0 %v1383
        %v4048 = vpop.f32.mrb[0].mxu0
        %v4049 = vadd.f32 0.0, %v4048
        %v4050 = vpop.f32.mrb[0].mxu0
        %4051 = vmatprep.mubr.f32.mxu0 0.0
        %4052 = vmatmul.mubr.f32.gmra.mrb[0].mxu0 %v1385
        %v4053 = vpop.f32.mrb[0].mxu0
        %v4054 = vadd.f32 0.0, %v4053
        %v4055 = vpop.f32.mrb[0].mxu0
        %4056 = vmatprep.mubr.f32.mxu0 0.0
        %4057 = vmatmul.mubr.f32.gmra.mrb[0].mxu0 %v1387
        %v4058 = vpop.f32.mrb[0].mxu0
        %v4059 = vadd.f32 0.0, %v4058
        %v4060 = vpop.f32.mrb[0].mxu0
        %4061 = vmatprep.mubr.f32.mxu0 0.0
        %4062 = vmatmul.mubr.f32.gmra.mrb[0].mxu0 %v1389
        %v4063 = vpop.f32.mrb[0].mxu0
        %v4064 = vadd.f32 0.0, %v4063
        %v4065 = vpop.f32.mrb[0].mxu0
        %4066 = vmatprep.mubr.f32.mxu0 0.0
        %4067 = vmatmul.mubr.f32.gmra.mrb[0].mxu0 %v1391
        %v4068 = vpop.f32.mrb[0].mxu0
        %v4069 = vadd.f32 0.0, %v4068
        %v4070 = vpop.f32.mrb[0].mxu0
        %4071 = vmatprep.mubr.f32.mxu0 0.0
        %4072 = vmatmul.mubr.f32.gmra.mrb[0].mxu0 %v1393
        %v4073 = vpop.f32.mrb[0].mxu0
        %v4074 = vadd.f32 0.0, %v4073
        %v4075 = vpop.f32.mrb[0].mxu0
        %4076 = vmatprep.mubr.f32.mxu0 0.0
        %4077 = vmatmul.mubr.f32.gmra.mrb[0].mxu0 %v1395
        %v4078 = vpop.f32.mrb[0].mxu0
        %v4079 = vadd.f32 0.0, %v4078
        %v4080 = vpop.f32.mrb[0].mxu0
        %4081 = vmatprep.mubr.f32.mxu0 0.0
        %4082 = vmatmul.mubr.f32.gmra.mrb[0].mxu0 %v1397
        %v4083 = vpop.f32.mrb[0].mxu0
        %v4084 = vadd.f32 0.0, %v4083
        %v4085 = vpop.f32.mrb[0].mxu0
        %4086 = vmatprep.mubr.f32.mxu0 0.0
        %4087 = vmatmul.mubr.f32.gmra.mrb[0].mxu0 %v1399
        %v4088 = vpop.f32.mrb[0].mxu0
        %v4089 = vadd.f32 0.0, %v4088
        %v4090 = vpop.f32.mrb[0].mxu0
        %4091 = vmatprep.mubr.f32.mxu0 0.0
        %4092 = vmatmul.mubr.f32.gmra.mrb[0].mxu0 %v1401
        %v4093 = vpop.f32.mrb[0].mxu0
        %v4094 = vadd.f32 0.0, %v4093
        %v4095 = vpop.f32.mrb[0].mxu0
        %4096 = vmatprep.mubr.f32.mxu0 0.0
        %4097 = vmatmul.mubr.f32.gmra.mrb[0].mxu0 %v1403
        %v4098 = vpop.f32.mrb[0].mxu0
        %v4099 = vadd.f32 0.0, %v4098
        %v4100 = vpop.f32.mrb[0].mxu0
        %4101 = vmatprep.mubr.f32.mxu0 0.0
        %4102 = vmatmul.mubr.f32.gmra.mrb[0].mxu0 %v1405
        %v4103 = vpop.f32.mrb[0].mxu0
        %v4104 = vadd.f32 0.0, %v4103
        %v4105 = vpop.f32.mrb[0].mxu0
        %4106 = vmatprep.mubr.f32.mxu0 0.0
        %4107 = vmatmul.mubr.f32.gmra.mrb[0].mxu0 %v1407
        %v4108 = vpop.f32.mrb[0].mxu0
        %v4109 = vadd.f32 0.0, %v4108
        %v4110 = vpop.f32.mrb[0].mxu0
        %4111 = vmatprep.mubr.f32.mxu0 0.0
        %4112 = vmatmul.mubr.f32.gmra.mrb[0].mxu0 %v1409
        %v4113 = vpop.f32.mrb[0].mxu0
        %v4114 = vadd.f32 0.0, %v4113
        %v4115 = vpop.f32.mrb[0].mxu0
        %4116 = vmatprep.mubr.f32.mxu0 0.0
        %4117 = vmatmul.mubr.f32.gmra.mrb[0].mxu0 %v1411
        %v4118 = vpop.f32.mrb[0].mxu0
        %v4119 = vadd.f32 0.0, %v4118
        %v4120 = vpop.f32.mrb[0].mxu0
        %4121 = vmatprep.mubr.f32.mxu0 0.0
        %4122 = vmatmul.mubr.f32.gmra.mrb[0].mxu0 %v1413
        %v4123 = vpop.f32.mrb[0].mxu0
        %v4124 = vadd.f32 0.0, %v4123
        %v4125 = vpop.f32.mrb[0].mxu0
        %4126 = vmatprep.mubr.f32.mxu0 0.0
        %4127 = vmatmul.mubr.f32.gmra.mrb[0].mxu0 %v1415
        %v4128 = vpop.f32.mrb[0].mxu0
        %v4129 = vadd.f32 0.0, %v4128
        %v4130 = vpop.f32.mrb[0].mxu0
        %4131 = vmatprep.mubr.f32.mxu0 0.0
        %4132 = vmatmul.mubr.f32.gmra.mrb[0].mxu0 %v1417
        %v4133 = vpop.f32.mrb[0].mxu0
        %v4134 = vadd.f32 0.0, %v4133
        %v4135 = vpop.f32.mrb[0].mxu0
        %4136 = vmatprep.mubr.f32.mxu0 0.0
        %4137 = vmatmul.mubr.f32.gmra.mrb[0].mxu0 %v1419
        %v4138 = vpop.f32.mrb[0].mxu0
        %v4139 = vadd.f32 0.0, %v4138
        %v4140 = vpop.f32.mrb[0].mxu0
        %4141 = vmatprep.mubr.f32.mxu0 0.0
        %4142 = vmatmul.mubr.f32.gmra.mrb[0].mxu0 %v1421
        %v4143 = vpop.f32.mrb[0].mxu0
        %v4144 = vadd.f32 0.0, %v4143
        %v4145 = vpop.f32.mrb[0].mxu0
        %4146 = vmatprep.mubr.f32.mxu0 0.0
        %4147 = vmatmul.mubr.f32.gmra.mrb[0].mxu0 %v1423
        %v4148 = vpop.f32.mrb[0].mxu0
        %v4149 = vadd.f32 0.0, %v4148
        %v4150 = vpop.f32.mrb[0].mxu0
        %4151 = vmatprep.mubr.f32.mxu0 0.0
        %4152 = vmatmul.mubr.f32.gmra.mrb[0].mxu0 %v1425
        %v4153 = vpop.f32.mrb[0].mxu0
        %v4154 = vadd.f32 0.0, %v4153
        %v4155 = vpop.f32.mrb[0].mxu0
        %4156 = vmatprep.mubr.f32.mxu0 0.0
        %4157 = vmatmul.mubr.f32.gmra.mrb[0].mxu0 %v1427
        %v4158 = vpop.f32.mrb[0].mxu0
        %v4159 = vadd.f32 0.0, %v4158
        %v4160 = vpop.f32.mrb[0].mxu0
        %4161 = vmatprep.mubr.f32.mxu0 0.0
        %4162 = vmatmul.mubr.f32.gmra.mrb[0].mxu0 %v1429
        %v4163 = vpop.f32.mrb[0].mxu0
        %v4164 = vadd.f32 0.0, %v4163
        %v4165 = vpop.f32.mrb[0].mxu0
        %4166 = vmatprep.mubr.f32.mxu0 0.0
        %4167 = vmatmul.mubr.f32.gmra.mrb[0].mxu0 %v1431
        %v4168 = vpop.f32.mrb[0].mxu0
        %v4169 = vadd.f32 0.0, %v4168
        %v4170 = vpop.f32.mrb[0].mxu0
        %4171 = vmatprep.mubr.f32.mxu0 0.0
        %4172 = vmatmul.mubr.f32.gmra.mrb[0].mxu0 %v1433
        %v4173 = vpop.f32.mrb[0].mxu0
        %v4174 = vadd.f32 0.0, %v4173
        %v4175 = vpop.f32.mrb[0].mxu0
        %4176 = vmatprep.mubr.f32.mxu0 0.0
        %4177 = vmatmul.mubr.f32.gmra.mrb[0].mxu0 %v1435
        %v4178 = vpop.f32.mrb[0].mxu0
        %v4179 = vadd.f32 0.0, %v4178
        %v4180 = vpop.f32.mrb[0].mxu0
        %4181 = vmatprep.mubr.f32.mxu0 0.0
        %4182 = vmatmul.mubr.f32.gmra.mrb[0].mxu0 %v1437
        %v4183 = vpop.f32.mrb[0].mxu0
        %v4184 = vadd.f32 0.0, %v4183
        %v4185 = vpop.f32.mrb[0].mxu0
        %4186 = vmatprep.mubr.f32.mxu0 0.0
        %4187 = vmatmul.mubr.f32.gmra.mrb[0].mxu0 %v2930
        %v4188 = vpop.f32.mrb[0].mxu0
        %v4189 = vadd.f32 0.0, %v4188
        %v4190 = vpop.f32.mrb[0].mxu0
        %4191 = vmatprep.mubr.f32.mxu0 0.0
        %4192 = vmatmul.mubr.f32.gmra.mrb[0].mxu0 %v2932
        %v4193 = vpop.f32.mrb[0].mxu0
        %v4194 = vadd.f32 0.0, %v4193
        %v4195 = vpop.f32.mrb[0].mxu0
        %4196 = vmatprep.mubr.f32.mxu0 0.0
        %4197 = vmatmul.mubr.f32.gmra.mrb[0].mxu0 %v1377
        %v4198 = vpop.f32.mrb[0].mxu0
        %v4199 = vadd.f32 0.0, %v4198
        %v4200 = vpop.f32.mrb[0].mxu0
        %4201 = vmatprep.mubr.f32.mxu0 0.0
        %4202 = vmatmul.mubr.f32.gmra.mrb[0].mxu0 %v1377
        %v4203 = vpop.f32.mrb[0].mxu0
        %v4204 = vadd.f32 0.0, %v4203
        %v4205 = vpop.f32.mrb[0].mxu0
        %4206 = vdwg.mxu0
        %v4207 = vadd.f32 %v3945, %v4049
        %v4208 = vadd.f32 %v3946, %v4054
        %v4209 = vadd.f32 %v3947, %v4059
        %v4210 = vadd.f32 %v3948, %v4064
        %v4211 = vadd.f32 %v3949, %v4069
        %v4212 = vadd.f32 %v3950, %v4074
        %v4213 = vadd.f32 %v3951, %v4079
        %v4214 = vadd.f32 %v3952, %v4084
        %v4215 = vadd.f32 %v3953, %v4089
        %v4216 = vadd.f32 %v3954, %v4094
        %v4217 = vadd.f32 %v3955, %v4099
        %v4218 = vadd.f32 %v3956, %v4104
        %v4219 = vadd.f32 %v3957, %v4109
        %v4220 = vadd.f32 %v3958, %v4114
        %v4221 = vadd.f32 %v3959, %v4119
        %v4222 = vadd.f32 %v3960, %v4124
        %v4223 = vadd.f32 %v3961, %v4129
        %v4224 = vadd.f32 %v3962, %v4134
        %v4225 = vadd.f32 %v3963, %v4139
        %v4226 = vadd.f32 %v3964, %v4144
        %v4227 = vadd.f32 %v3965, %v4149
        %v4228 = vadd.f32 %v3966, %v4154
        %v4229 = vadd.f32 %v3967, %v4159
        %v4230 = vadd.f32 %v3968, %v4164
        %v4231 = vadd.f32 %v3969, %v4169
        %v4232 = vadd.f32 %v3970, %v4174
        %v4233 = vadd.f32 %v3971, %v4179
        %v4234 = vadd.f32 %v3972, %v4184
        %v4235 = vadd.f32 %v3973, %v4189
        %v4236 = vadd.f32 %v3974, %v4194
        %v4237 = vadd.f32 %v3975, %v4199
        %v4238 = vadd.f32 %v3976, %v4204
        %v4239 = vsel %vm2113, %v1994, 0.0
        %v4240 = vsel %vm2114, %v1996, 0.0
        %v4241 = vsel %vm2115, %v1998, 0.0
        %v4242 = vsel %vm2116, %v2000, 0.0
        %v4243 = vsel %vm2117, %v2002, 0.0
        %v4244 = vsel %vm2118, %v2004, 0.0
        %v4245 = vsel %vm2119, %v2006, 0.0
        %v4246 = vsel %vm2120, %v2008, 0.0
        %v4247 = vsel %vm2121, %v2010, 0.0
        %v4248 = vsel %vm2122, %v2012, 0.0
        %v4249 = vsel %vm2123, %v2014, 0.0
        %v4250 = vsel %vm2124, %v2016, 0.0
        %v4251 = vsel %vm2125, %v2018, 0.0
        %v4252 = vsel %vm2126, %v2020, 0.0
        %v4253 = vsel %vm2127, %v2022, 0.0
        %v4254 = vsel %vm2128, %v2024, 0.0
        %v4255 = vsel %vm2129, %v2026, 0.0
        %v4256 = vsel %vm2130, %v2028, 0.0
        %v4257 = vsel %vm2131, %v2030, 0.0
        %v4258 = vsel %vm2132, %v2032, 0.0
        %v4259 = vsel %vm2133, %v2034, 0.0
        %v4260 = vsel %vm2134, %v2036, 0.0
        %v4261 = vsel %vm2135, %v2038, 0.0
        %v4262 = vsel %vm2136, %v2040, 0.0
        %v4263 = vsel %vm2137, %v2042, 0.0
        %v4264 = vsel %vm2138, %v2044, 0.0
        %v4265 = vsel %vm2139, %v2046, 0.0
        %v4266 = vsel %vm2140, %v2048, 0.0
        %v4267 = vsel %vm2141, %v3195, 0.0
        %v4268 = vsel %vm2142, %v3198, 0.0
        %s4269 = scalar_lea.vmem %s6, 32
        %v4270 = vld [vmem:[%s4269] sm:$0xf]
        %v4272 = vsel %vm1375, %v4239, 0
        %v4275 = vsel %vm1375, %v4240, 0
        %v4278 = vsel %vm1375, %v4241, 0
        %v4281 = vsel %vm1375, %v4242, 0
        %v4284 = vsel %vm1375, %v4243, 0
        %v4287 = vsel %vm1375, %v4244, 0
        %v4290 = vsel %vm1375, %v4245, 0
        %v4293 = vsel %vm1375, %v4246, 0
        %v4296 = vsel %vm1375, %v4247, 0
        %v4299 = vsel %vm1375, %v4248, 0
        %v4302 = vsel %vm1375, %v4249, 0
        %v4305 = vsel %vm1375, %v4250, 0
        %v4308 = vsel %vm1375, %v4251, 0
        %v4311 = vsel %vm1375, %v4252, 0
        %v4314 = vsel %vm1375, %v4253, 0
        %v4317 = vsel %vm1375, %v4254, 0
        %v4320 = vsel %vm1375, %v4255, 0
        %v4323 = vsel %vm1375, %v4256, 0
        %v4326 = vsel %vm1375, %v4257, 0
        %v4329 = vsel %vm1375, %v4258, 0
        %v4332 = vsel %vm1375, %v4259, 0
        %v4335 = vsel %vm1375, %v4260, 0
        %v4338 = vsel %vm1375, %v4261, 0
        %v4341 = vsel %vm1375, %v4262, 0
        %v4344 = vsel %vm1375, %v4263, 0
        %v4347 = vsel %vm1375, %v4264, 0
        %v4350 = vsel %vm1375, %v4265, 0
        %v4353 = vsel %vm1375, %v4266, 0
        %v4356 = vsel %vm1375, %v4267, 0
        %v4359 = vsel %vm1375, %v4268, 0
        %v4362 = vsel %vm1439, %v4270, 0
        %4364 = vmatprep.subr.mxu0 0.0
        %4365 = vmatpush1.msra.mxu0 %v4362
        %4366 = vmatprep.subr.mxu0 0.0
        %4367 = vmatpush1.msra.mxu0 0.0
        %4368 = vmatprep.subr.mxu0 0.0
        %4369 = vmatpush1.msra.mxu0 0.0
        %4370 = vmatprep.subr.mxu0 0.0
        %4371 = vmatpush1.msra.mxu0 0.0
        %4372 = vmatprep.subr.mxu0 0.0
        %4373 = vmatpush1.msra.mxu0 0.0
        %4374 = vmatprep.subr.mxu0 0.0
        %4375 = vmatpush1.msra.mxu0 0.0
        %4376 = vmatprep.subr.mxu0 0.0
        %4377 = vmatpush1.msra.mxu0 0.0
        %4378 = vmatprep.subr.mxu0 0.0
        %4379 = vmatpush1.msra.mxu0 0.0
        %4380 = vmatprep.subr.mxu0 0.0
        %4381 = vmatpush1.msra.mxu0 0.0
        %4382 = vmatprep.subr.mxu0 0.0
        %4383 = vmatpush1.msra.mxu0 0.0
        %4384 = vmatprep.subr.mxu0 0.0
        %4385 = vmatpush1.msra.mxu0 0.0
        %4386 = vmatprep.subr.mxu0 0.0
        %4387 = vmatpush1.msra.mxu0 0.0
        %4388 = vmatprep.subr.mxu0 0.0
        %4389 = vmatpush1.msra.mxu0 0.0
        %4390 = vmatprep.subr.mxu0 0.0
        %4391 = vmatpush1.msra.mxu0 0.0
        %4392 = vmatprep.subr.mxu0 0.0
        %4393 = vmatpush1.msra.mxu0 0.0
        %4394 = vmatprep.subr.mxu0 0.0
        %4395 = vmatpush1.msra.mxu0 0.0
        %4396 = vmatprep.subr.mxu0 0.0
        %4397 = vmatpush1.msra.mxu0 0.0
        %4398 = vmatprep.subr.mxu0 0.0
        %4399 = vmatpush1.msra.mxu0 0.0
        %4400 = vmatprep.subr.mxu0 0.0
        %4401 = vmatpush1.msra.mxu0 0.0
        %4402 = vmatprep.subr.mxu0 0.0
        %4403 = vmatpush1.msra.mxu0 0.0
        %4404 = vmatprep.subr.mxu0 0.0
        %4405 = vmatpush1.msra.mxu0 0.0
        %4406 = vmatprep.subr.mxu0 0.0
        %4407 = vmatpush1.msra.mxu0 0.0
        %4408 = vmatprep.subr.mxu0 0.0
        %4409 = vmatpush1.msra.mxu0 0.0
        %4410 = vmatprep.subr.mxu0 0.0
        %4411 = vmatpush1.msra.mxu0 0.0
        %4412 = vmatprep.subr.mxu0 0.0
        %4413 = vmatpush1.msra.mxu0 0.0
        %4414 = vmatprep.subr.mxu0 0.0
        %4415 = vmatpush1.msra.mxu0 0.0
        %4416 = vmatprep.subr.mxu0 0.0
        %4417 = vmatpush1.msra.mxu0 0.0
        %4418 = vmatprep.subr.mxu0 0.0
        %4419 = vmatpush1.msra.mxu0 0.0
        %4420 = vmatprep.subr.mxu0 0.0
        %4421 = vmatpush1.msra.mxu0 0.0
        %4422 = vmatprep.subr.mxu0 0.0
        %4423 = vmatpush1.msra.mxu0 0.0
        %4424 = vmatprep.subr.mxu0 0.0
        %4425 = vmatpush1.msra.mxu0 0.0
        %4426 = vmatprep.subr.mxu0 0.0
        %4427 = vmatpush1.msra.mxu0 0.0
        %4428 = vmatprep.mubr.f32.mxu0 0.0
        %4429 = vmatmul.mubr.f32.gmra.mrb[0].mxu0 %v4272
        %v4430 = vpop.f32.mrb[0].mxu0
        %v4431 = vadd.f32 0.0, %v4430
        %v4432 = vpop.f32.mrb[0].mxu0
        %4433 = vmatprep.mubr.f32.mxu0 0.0
        %4434 = vmatmul.mubr.f32.gmra.mrb[0].mxu0 %v4275
        %v4435 = vpop.f32.mrb[0].mxu0
        %v4436 = vadd.f32 0.0, %v4435
        %v4437 = vpop.f32.mrb[0].mxu0
        %4438 = vmatprep.mubr.f32.mxu0 0.0
        %4439 = vmatmul.mubr.f32.gmra.mrb[0].mxu0 %v4278
        %v4440 = vpop.f32.mrb[0].mxu0
        %v4441 = vadd.f32 0.0, %v4440
        %v4442 = vpop.f32.mrb[0].mxu0
        %4443 = vmatprep.mubr.f32.mxu0 0.0
        %4444 = vmatmul.mubr.f32.gmra.mrb[0].mxu0 %v4281
        %v4445 = vpop.f32.mrb[0].mxu0
        %v4446 = vadd.f32 0.0, %v4445
        %v4447 = vpop.f32.mrb[0].mxu0
        %4448 = vmatprep.mubr.f32.mxu0 0.0
        %4449 = vmatmul.mubr.f32.gmra.mrb[0].mxu0 %v4284
        %v4450 = vpop.f32.mrb[0].mxu0
        %v4451 = vadd.f32 0.0, %v4450
        %v4452 = vpop.f32.mrb[0].mxu0
        %4453 = vmatprep.mubr.f32.mxu0 0.0
        %4454 = vmatmul.mubr.f32.gmra.mrb[0].mxu0 %v4287
        %v4455 = vpop.f32.mrb[0].mxu0
        %v4456 = vadd.f32 0.0, %v4455
        %v4457 = vpop.f32.mrb[0].mxu0
        %4458 = vmatprep.mubr.f32.mxu0 0.0
        %4459 = vmatmul.mubr.f32.gmra.mrb[0].mxu0 %v4290
        %v4460 = vpop.f32.mrb[0].mxu0
        %v4461 = vadd.f32 0.0, %v4460
        %v4462 = vpop.f32.mrb[0].mxu0
        %4463 = vmatprep.mubr.f32.mxu0 0.0
        %4464 = vmatmul.mubr.f32.gmra.mrb[0].mxu0 %v4293
        %v4465 = vpop.f32.mrb[0].mxu0
        %v4466 = vadd.f32 0.0, %v4465
        %v4467 = vpop.f32.mrb[0].mxu0
        %4468 = vmatprep.mubr.f32.mxu0 0.0
        %4469 = vmatmul.mubr.f32.gmra.mrb[0].mxu0 %v4296
        %v4470 = vpop.f32.mrb[0].mxu0
        %v4471 = vadd.f32 0.0, %v4470
        %v4472 = vpop.f32.mrb[0].mxu0
        %4473 = vmatprep.mubr.f32.mxu0 0.0
        %4474 = vmatmul.mubr.f32.gmra.mrb[0].mxu0 %v4299
        %v4475 = vpop.f32.mrb[0].mxu0
        %v4476 = vadd.f32 0.0, %v4475
        %v4477 = vpop.f32.mrb[0].mxu0
        %4478 = vmatprep.mubr.f32.mxu0 0.0
        %4479 = vmatmul.mubr.f32.gmra.mrb[0].mxu0 %v4302
        %v4480 = vpop.f32.mrb[0].mxu0
        %v4481 = vadd.f32 0.0, %v4480
        %v4482 = vpop.f32.mrb[0].mxu0
        %4483 = vmatprep.mubr.f32.mxu0 0.0
        %4484 = vmatmul.mubr.f32.gmra.mrb[0].mxu0 %v4305
        %v4485 = vpop.f32.mrb[0].mxu0
        %v4486 = vadd.f32 0.0, %v4485
        %v4487 = vpop.f32.mrb[0].mxu0
        %4488 = vmatprep.mubr.f32.mxu0 0.0
        %4489 = vmatmul.mubr.f32.gmra.mrb[0].mxu0 %v4308
        %v4490 = vpop.f32.mrb[0].mxu0
        %v4491 = vadd.f32 0.0, %v4490
        %v4492 = vpop.f32.mrb[0].mxu0
        %4493 = vmatprep.mubr.f32.mxu0 0.0
        %4494 = vmatmul.mubr.f32.gmra.mrb[0].mxu0 %v4311
        %v4495 = vpop.f32.mrb[0].mxu0
        %v4496 = vadd.f32 0.0, %v4495
        %v4497 = vpop.f32.mrb[0].mxu0
        %4498 = vmatprep.mubr.f32.mxu0 0.0
        %4499 = vmatmul.mubr.f32.gmra.mrb[0].mxu0 %v4314
        %v4500 = vpop.f32.mrb[0].mxu0
        %v4501 = vadd.f32 0.0, %v4500
        %v4502 = vpop.f32.mrb[0].mxu0
        %4503 = vmatprep.mubr.f32.mxu0 0.0
        %4504 = vmatmul.mubr.f32.gmra.mrb[0].mxu0 %v4317
        %v4505 = vpop.f32.mrb[0].mxu0
        %v4506 = vadd.f32 0.0, %v4505
        %v4507 = vpop.f32.mrb[0].mxu0
        %4508 = vmatprep.mubr.f32.mxu0 0.0
        %4509 = vmatmul.mubr.f32.gmra.mrb[0].mxu0 %v4320
        %v4510 = vpop.f32.mrb[0].mxu0
        %v4511 = vadd.f32 0.0, %v4510
        %v4512 = vpop.f32.mrb[0].mxu0
        %4513 = vmatprep.mubr.f32.mxu0 0.0
        %4514 = vmatmul.mubr.f32.gmra.mrb[0].mxu0 %v4323
        %v4515 = vpop.f32.mrb[0].mxu0
        %v4516 = vadd.f32 0.0, %v4515
        %v4517 = vpop.f32.mrb[0].mxu0
        %4518 = vmatprep.mubr.f32.mxu0 0.0
        %4519 = vmatmul.mubr.f32.gmra.mrb[0].mxu0 %v4326
        %v4520 = vpop.f32.mrb[0].mxu0
        %v4521 = vadd.f32 0.0, %v4520
        %v4522 = vpop.f32.mrb[0].mxu0
        %4523 = vmatprep.mubr.f32.mxu0 0.0
        %4524 = vmatmul.mubr.f32.gmra.mrb[0].mxu0 %v4329
        %v4525 = vpop.f32.mrb[0].mxu0
        %v4526 = vadd.f32 0.0, %v4525
        %v4527 = vpop.f32.mrb[0].mxu0
        %4528 = vmatprep.mubr.f32.mxu0 0.0
        %4529 = vmatmul.mubr.f32.gmra.mrb[0].mxu0 %v4332
        %v4530 = vpop.f32.mrb[0].mxu0
        %v4531 = vadd.f32 0.0, %v4530
        %v4532 = vpop.f32.mrb[0].mxu0
        %4533 = vmatprep.mubr.f32.mxu0 0.0
        %4534 = vmatmul.mubr.f32.gmra.mrb[0].mxu0 %v4335
        %v4535 = vpop.f32.mrb[0].mxu0
        %v4536 = vadd.f32 0.0, %v4535
        %v4537 = vpop.f32.mrb[0].mxu0
        %4538 = vmatprep.mubr.f32.mxu0 0.0
        %4539 = vmatmul.mubr.f32.gmra.mrb[0].mxu0 %v4338
        %v4540 = vpop.f32.mrb[0].mxu0
        %v4541 = vadd.f32 0.0, %v4540
        %v4542 = vpop.f32.mrb[0].mxu0
        %4543 = vmatprep.mubr.f32.mxu0 0.0
        %4544 = vmatmul.mubr.f32.gmra.mrb[0].mxu0 %v4341
        %v4545 = vpop.f32.mrb[0].mxu0
        %v4546 = vadd.f32 0.0, %v4545
        %v4547 = vpop.f32.mrb[0].mxu0
        %4548 = vmatprep.mubr.f32.mxu0 0.0
        %4549 = vmatmul.mubr.f32.gmra.mrb[0].mxu0 %v4344
        %v4550 = vpop.f32.mrb[0].mxu0
        %v4551 = vadd.f32 0.0, %v4550
        %v4552 = vpop.f32.mrb[0].mxu0
        %4553 = vmatprep.mubr.f32.mxu0 0.0
        %4554 = vmatmul.mubr.f32.gmra.mrb[0].mxu0 %v4347
        %v4555 = vpop.f32.mrb[0].mxu0
        %v4556 = vadd.f32 0.0, %v4555
        %v4557 = vpop.f32.mrb[0].mxu0
        %4558 = vmatprep.mubr.f32.mxu0 0.0
        %4559 = vmatmul.mubr.f32.gmra.mrb[0].mxu0 %v4350
        %v4560 = vpop.f32.mrb[0].mxu0
        %v4561 = vadd.f32 0.0, %v4560
        %v4562 = vpop.f32.mrb[0].mxu0
        %4563 = vmatprep.mubr.f32.mxu0 0.0
        %4564 = vmatmul.mubr.f32.gmra.mrb[0].mxu0 %v4353
        %v4565 = vpop.f32.mrb[0].mxu0
        %v4566 = vadd.f32 0.0, %v4565
        %v4567 = vpop.f32.mrb[0].mxu0
        %4568 = vmatprep.mubr.f32.mxu0 0.0
        %4569 = vmatmul.mubr.f32.gmra.mrb[0].mxu0 %v4356
        %v4570 = vpop.f32.mrb[0].mxu0
        %v4571 = vadd.f32 0.0, %v4570
        %v4572 = vpop.f32.mrb[0].mxu0
        %4573 = vmatprep.mubr.f32.mxu0 0.0
        %4574 = vmatmul.mubr.f32.gmra.mrb[0].mxu0 %v4359
        %v4575 = vpop.f32.mrb[0].mxu0
        %v4576 = vadd.f32 0.0, %v4575
        %v4577 = vpop.f32.mrb[0].mxu0
        %4578 = vmatprep.mubr.f32.mxu0 0.0
        %4579 = vmatmul.mubr.f32.gmra.mrb[0].mxu0 %v1377
        %v4580 = vpop.f32.mrb[0].mxu0
        %v4581 = vadd.f32 0.0, %v4580
        %v4582 = vpop.f32.mrb[0].mxu0
        %4583 = vmatprep.mubr.f32.mxu0 0.0
        %4584 = vmatmul.mubr.f32.gmra.mrb[0].mxu0 %v1377
        %v4585 = vpop.f32.mrb[0].mxu0
        %v4586 = vadd.f32 0.0, %v4585
        %v4587 = vpop.f32.mrb[0].mxu0
        %4588 = vdwg.mxu0
        %v4589 = vadd.f32 %v4207, %v4431
        %v4590 = vadd.f32 %v4208, %v4436
        %v4591 = vadd.f32 %v4209, %v4441
        %v4592 = vadd.f32 %v4210, %v4446
        %v4593 = vadd.f32 %v4211, %v4451
        %v4594 = vadd.f32 %v4212, %v4456
        %v4595 = vadd.f32 %v4213, %v4461
        %v4596 = vadd.f32 %v4214, %v4466
        %v4597 = vadd.f32 %v4215, %v4471
        %v4598 = vadd.f32 %v4216, %v4476
        %v4599 = vadd.f32 %v4217, %v4481
        %v4600 = vadd.f32 %v4218, %v4486
        %v4601 = vadd.f32 %v4219, %v4491
        %v4602 = vadd.f32 %v4220, %v4496
        %v4603 = vadd.f32 %v4221, %v4501
        %v4604 = vadd.f32 %v4222, %v4506
        %v4605 = vadd.f32 %v4223, %v4511
        %v4606 = vadd.f32 %v4224, %v4516
        %v4607 = vadd.f32 %v4225, %v4521
        %v4608 = vadd.f32 %v4226, %v4526
        %v4609 = vadd.f32 %v4227, %v4531
        %v4610 = vadd.f32 %v4228, %v4536
        %v4611 = vadd.f32 %v4229, %v4541
        %v4612 = vadd.f32 %v4230, %v4546
        %v4613 = vadd.f32 %v4231, %v4551
        %v4614 = vadd.f32 %v4232, %v4556
        %v4615 = vadd.f32 %v4233, %v4561
        %v4616 = vadd.f32 %v4234, %v4566
        %v4617 = vadd.f32 %v4235, %v4571
        %v4618 = vadd.f32 %v4236, %v4576
        %v4619 = vadd.f32 %v4237, %v4581
        %v4620 = vadd.f32 %v4238, %v4586
        %v4621 = vld [vmem:[%s7] sm:$0x1]
        %v4623 = vlaneseq
        %v4624 = vshrl.u32 %v4623, 7
        %v4625 = vsub.s32 0, %v4624
        %v4626 = vrot.slane %v4621, %v4625
        %v4628 = vadd.f32 %v4589, %v4626
        %v4629 = vadd.f32 %v4590, %v4626
        %v4630 = vadd.f32 %v4591, %v4626
        %v4631 = vadd.f32 %v4592, %v4626
        %v4632 = vadd.f32 %v4593, %v4626
        %v4633 = vadd.f32 %v4594, %v4626
        %v4634 = vadd.f32 %v4595, %v4626
        %v4635 = vadd.f32 %v4596, %v4626
        %v4636 = vadd.f32 %v4597, %v4626
        %v4637 = vadd.f32 %v4598, %v4626
        %v4638 = vadd.f32 %v4599, %v4626
        %v4639 = vadd.f32 %v4600, %v4626
        %v4640 = vadd.f32 %v4601, %v4626
        %v4641 = vadd.f32 %v4602, %v4626
        %v4642 = vadd.f32 %v4603, %v4626
        %v4643 = vadd.f32 %v4604, %v4626
        %v4644 = vadd.f32 %v4605, %v4626
        %v4645 = vadd.f32 %v4606, %v4626
        %v4646 = vadd.f32 %v4607, %v4626
        %v4647 = vadd.f32 %v4608, %v4626
        %v4648 = vadd.f32 %v4609, %v4626
        %v4649 = vadd.f32 %v4610, %v4626
        %v4650 = vadd.f32 %v4611, %v4626
        %v4651 = vadd.f32 %v4612, %v4626
        %v4652 = vadd.f32 %v4613, %v4626
        %v4653 = vadd.f32 %v4614, %v4626
        %v4654 = vadd.f32 %v4615, %v4626
        %v4655 = vadd.f32 %v4616, %v4626
        %v4656 = vadd.f32 %v4617, %v4626
        %v4657 = vadd.f32 %v4618, %v4626
        %v4658 = vadd.f32 %v4619, %v4626
        %v4659 = vadd.f32 %v4620, %v4626
        %v4660 = vlaneseq
        %v4661 = vshrl.u32 %v4660, 7
        %v4662 = vsub.s32 0, %v4661
        %v4663 = vrot.slane %v673, %v4662
        %v4664 = vadd.f32 %v4628, %v4663
        %v4665 = vadd.f32 %v4629, %v4663
        %v4666 = vadd.f32 %v4630, %v4663
        %v4667 = vadd.f32 %v4631, %v4663
        %v4668 = vadd.f32 %v4632, %v4663
        %v4669 = vadd.f32 %v4633, %v4663
        %v4670 = vadd.f32 %v4634, %v4663
        %v4671 = vadd.f32 %v4635, %v4663
        %v4672 = vadd.f32 %v4636, %v4663
        %v4673 = vadd.f32 %v4637, %v4663
        %v4674 = vadd.f32 %v4638, %v4663
        %v4675 = vadd.f32 %v4639, %v4663
        %v4676 = vadd.f32 %v4640, %v4663
        %v4677 = vadd.f32 %v4641, %v4663
        %v4678 = vadd.f32 %v4642, %v4663
        %v4679 = vadd.f32 %v4643, %v4663
        %v4680 = vadd.f32 %v4644, %v4663
        %v4681 = vadd.f32 %v4645, %v4663
        %v4682 = vadd.f32 %v4646, %v4663
        %v4683 = vadd.f32 %v4647, %v4663
        %v4684 = vadd.f32 %v4648, %v4663
        %v4685 = vadd.f32 %v4649, %v4663
        %v4686 = vadd.f32 %v4650, %v4663
        %v4687 = vadd.f32 %v4651, %v4663
        %v4688 = vadd.f32 %v4652, %v4663
        %v4689 = vadd.f32 %v4653, %v4663
        %v4690 = vadd.f32 %v4654, %v4663
        %v4691 = vadd.f32 %v4655, %v4663
        %v4692 = vadd.f32 %v4656, %v4663
        %v4693 = vadd.f32 %v4657, %v4663
        %v4694 = vadd.f32 %v4658, %v4663
        %v4695 = vadd.f32 %v4659, %v4663
        %v4696 = vxor.u32 %v4664, 2147483648
        %v4697 = vxor.u32 %v4665, 2147483648
        %v4698 = vxor.u32 %v4666, 2147483648
        %v4699 = vxor.u32 %v4667, 2147483648
        %v4700 = vxor.u32 %v4668, 2147483648
        %v4701 = vxor.u32 %v4669, 2147483648
        %v4702 = vxor.u32 %v4670, 2147483648
        %v4703 = vxor.u32 %v4671, 2147483648
        %v4704 = vxor.u32 %v4672, 2147483648
        %v4705 = vxor.u32 %v4673, 2147483648
        %v4706 = vxor.u32 %v4674, 2147483648
        %v4707 = vxor.u32 %v4675, 2147483648
        %v4708 = vxor.u32 %v4676, 2147483648
        %v4709 = vxor.u32 %v4677, 2147483648
        %v4710 = vxor.u32 %v4678, 2147483648
        %v4711 = vxor.u32 %v4679, 2147483648
        %v4712 = vxor.u32 %v4680, 2147483648
        %v4713 = vxor.u32 %v4681, 2147483648
        %v4714 = vxor.u32 %v4682, 2147483648
        %v4715 = vxor.u32 %v4683, 2147483648
        %v4716 = vxor.u32 %v4684, 2147483648
        %v4717 = vxor.u32 %v4685, 2147483648
        %v4718 = vxor.u32 %v4686, 2147483648
        %v4719 = vxor.u32 %v4687, 2147483648
        %v4720 = vxor.u32 %v4688, 2147483648
        %v4721 = vxor.u32 %v4689, 2147483648
        %v4722 = vxor.u32 %v4690, 2147483648
        %v4723 = vxor.u32 %v4691, 2147483648
        %v4724 = vxor.u32 %v4692, 2147483648
        %v4725 = vxor.u32 %v4693, 2147483648
        %v4726 = vxor.u32 %v4694, 2147483648
        %v4727 = vxor.u32 %v4695, 2147483648
        %v4728 = vmul.f32 %v4696, 1.442695
        %v4729 = vpow.pop %v4728
        %v4730 = vmul.f32 %v4697, 1.442695
        %v4731 = vpow.pop %v4730
        %v4732 = vmul.f32 %v4698, 1.442695
        %v4733 = vpow.pop %v4732
        %v4734 = vmul.f32 %v4699, 1.442695
        %v4735 = vpow.pop %v4734
        %v4736 = vmul.f32 %v4700, 1.442695
        %v4737 = vpow.pop %v4736
        %v4738 = vmul.f32 %v4701, 1.442695
        %v4739 = vpow.pop %v4738
        %v4740 = vmul.f32 %v4702, 1.442695
        %v4741 = vpow.pop %v4740
        %v4742 = vmul.f32 %v4703, 1.442695
        %v4743 = vpow.pop %v4742
        %v4744 = vmul.f32 %v4704, 1.442695
        %v4745 = vpow.pop %v4744
        %v4746 = vmul.f32 %v4705, 1.442695
        %v4747 = vpow.pop %v4746
        %v4748 = vmul.f32 %v4706, 1.442695
        %v4749 = vpow.pop %v4748
        %v4750 = vmul.f32 %v4707, 1.442695
        %v4751 = vpow.pop %v4750
        %v4752 = vmul.f32 %v4708, 1.442695
        %v4753 = vpow.pop %v4752
        %v4754 = vmul.f32 %v4709, 1.442695
        %v4755 = vpow.pop %v4754
        %v4756 = vmul.f32 %v4710, 1.442695
        %v4757 = vpow.pop %v4756
        %v4758 = vmul.f32 %v4711, 1.442695
        %v4759 = vpow.pop %v4758
        %v4760 = vmul.f32 %v4712, 1.442695
        %v4761 = vpow.pop %v4760
        %v4762 = vmul.f32 %v4713, 1.442695
        %v4763 = vpow.pop %v4762
        %v4764 = vmul.f32 %v4714, 1.442695
        %v4765 = vpow.pop %v4764
        %v4766 = vmul.f32 %v4715, 1.442695
        %v4767 = vpow.pop %v4766
        %v4768 = vmul.f32 %v4716, 1.442695
        %v4769 = vpow.pop %v4768
        %v4770 = vmul.f32 %v4717, 1.442695
        %v4771 = vpow.pop %v4770
        %v4772 = vmul.f32 %v4718, 1.442695
        %v4773 = vpow.pop %v4772
        %v4774 = vmul.f32 %v4719, 1.442695
        %v4775 = vpow.pop %v4774
        %v4776 = vmul.f32 %v4720, 1.442695
        %v4777 = vpow.pop %v4776
        %v4778 = vmul.f32 %v4721, 1.442695
        %v4779 = vpow.pop %v4778
        %v4780 = vmul.f32 %v4722, 1.442695
        %v4781 = vpow.pop %v4780
        %v4782 = vmul.f32 %v4723, 1.442695
        %v4783 = vpow.pop %v4782
        %v4784 = vmul.f32 %v4724, 1.442695
        %v4785 = vpow.pop %v4784
        %v4786 = vmul.f32 %v4725, 1.442695
        %v4787 = vpow.pop %v4786
        %v4788 = vmul.f32 %v4726, 1.442695
        %v4789 = vpow.pop %v4788
        %v4790 = vmul.f32 %v4727, 1.442695
        %v4791 = vpow.pop %v4790
        %v4792 = vadd.f32 %v4729, 1.0
        %v4793 = vadd.f32 %v4731, 1.0
        %v4794 = vadd.f32 %v4733, 1.0
        %v4795 = vadd.f32 %v4735, 1.0
        %v4796 = vadd.f32 %v4737, 1.0
        %v4797 = vadd.f32 %v4739, 1.0
        %v4798 = vadd.f32 %v4741, 1.0
        %v4799 = vadd.f32 %v4743, 1.0
        %v4800 = vadd.f32 %v4745, 1.0
        %v4801 = vadd.f32 %v4747, 1.0
        %v4802 = vadd.f32 %v4749, 1.0
        %v4803 = vadd.f32 %v4751, 1.0
        %v4804 = vadd.f32 %v4753, 1.0
        %v4805 = vadd.f32 %v4755, 1.0
        %v4806 = vadd.f32 %v4757, 1.0
        %v4807 = vadd.f32 %v4759, 1.0
        %v4808 = vadd.f32 %v4761, 1.0
        %v4809 = vadd.f32 %v4763, 1.0
        %v4810 = vadd.f32 %v4765, 1.0
        %v4811 = vadd.f32 %v4767, 1.0
        %v4812 = vadd.f32 %v4769, 1.0
        %v4813 = vadd.f32 %v4771, 1.0
        %v4814 = vadd.f32 %v4773, 1.0
        %v4815 = vadd.f32 %v4775, 1.0
        %v4816 = vadd.f32 %v4777, 1.0
        %v4817 = vadd.f32 %v4779, 1.0
        %v4818 = vadd.f32 %v4781, 1.0
        %v4819 = vadd.f32 %v4783, 1.0
        %v4820 = vadd.f32 %v4785, 1.0
        %v4821 = vadd.f32 %v4787, 1.0
        %v4822 = vadd.f32 %v4789, 1.0
        %v4823 = vadd.f32 %v4791, 1.0
        %v4824 = vrcp.pop %v4792
        %v4825 = vmul.f32 1.0, %v4824
        %v4826 = vrcp.pop %v4793
        %v4827 = vmul.f32 1.0, %v4826
        %v4828 = vrcp.pop %v4794
        %v4829 = vmul.f32 1.0, %v4828
        %v4830 = vrcp.pop %v4795
        %v4831 = vmul.f32 1.0, %v4830
        %v4832 = vrcp.pop %v4796
        %v4833 = vmul.f32 1.0, %v4832
        %v4834 = vrcp.pop %v4797
        %v4835 = vmul.f32 1.0, %v4834
        %v4836 = vrcp.pop %v4798
        %v4837 = vmul.f32 1.0, %v4836
        %v4838 = vrcp.pop %v4799
        %v4839 = vmul.f32 1.0, %v4838
        %v4840 = vrcp.pop %v4800
        %v4841 = vmul.f32 1.0, %v4840
        %v4842 = vrcp.pop %v4801
        %v4843 = vmul.f32 1.0, %v4842
        %v4844 = vrcp.pop %v4802
        %v4845 = vmul.f32 1.0, %v4844
        %v4846 = vrcp.pop %v4803
        %v4847 = vmul.f32 1.0, %v4846
        %v4848 = vrcp.pop %v4804
        %v4849 = vmul.f32 1.0, %v4848
        %v4850 = vrcp.pop %v4805
        %v4851 = vmul.f32 1.0, %v4850
        %v4852 = vrcp.pop %v4806
        %v4853 = vmul.f32 1.0, %v4852
        %v4854 = vrcp.pop %v4807
        %v4855 = vmul.f32 1.0, %v4854
        %v4856 = vrcp.pop %v4808
        %v4857 = vmul.f32 1.0, %v4856
        %v4858 = vrcp.pop %v4809
        %v4859 = vmul.f32 1.0, %v4858
        %v4860 = vrcp.pop %v4810
        %v4861 = vmul.f32 1.0, %v4860
        %v4862 = vrcp.pop %v4811
        %v4863 = vmul.f32 1.0, %v4862
        %v4864 = vrcp.pop %v4812
        %v4865 = vmul.f32 1.0, %v4864
        %v4866 = vrcp.pop %v4813
        %v4867 = vmul.f32 1.0, %v4866
        %v4868 = vrcp.pop %v4814
        %v4869 = vmul.f32 1.0, %v4868
        %v4870 = vrcp.pop %v4815
        %v4871 = vmul.f32 1.0, %v4870
        %v4872 = vrcp.pop %v4816
        %v4873 = vmul.f32 1.0, %v4872
        %v4874 = vrcp.pop %v4817
        %v4875 = vmul.f32 1.0, %v4874
        %v4876 = vrcp.pop %v4818
        %v4877 = vmul.f32 1.0, %v4876
        %v4878 = vrcp.pop %v4819
        %v4879 = vmul.f32 1.0, %v4878
        %v4880 = vrcp.pop %v4820
        %v4881 = vmul.f32 1.0, %v4880
        %v4882 = vrcp.pop %v4821
        %v4883 = vmul.f32 1.0, %v4882
        %v4884 = vrcp.pop %v4822
        %v4885 = vmul.f32 1.0, %v4884
        %v4886 = vrcp.pop %v4823
        %v4887 = vmul.f32 1.0, %v4886
        %v4888 = vmul.f32 %v4664, %v4825
        %v4889 = vmul.f32 %v4665, %v4827
        %v4890 = vmul.f32 %v4666, %v4829
        %v4891 = vmul.f32 %v4667, %v4831
        %v4892 = vmul.f32 %v4668, %v4833
        %v4893 = vmul.f32 %v4669, %v4835
        %v4894 = vmul.f32 %v4670, %v4837
        %v4895 = vmul.f32 %v4671, %v4839
        %v4896 = vmul.f32 %v4672, %v4841
        %v4897 = vmul.f32 %v4673, %v4843
        %v4898 = vmul.f32 %v4674, %v4845
        %v4899 = vmul.f32 %v4675, %v4847
        %v4900 = vmul.f32 %v4676, %v4849
        %v4901 = vmul.f32 %v4677, %v4851
        %v4902 = vmul.f32 %v4678, %v4853
        %v4903 = vmul.f32 %v4679, %v4855
        %v4904 = vmul.f32 %v4680, %v4857
        %v4905 = vmul.f32 %v4681, %v4859
        %v4906 = vmul.f32 %v4682, %v4861
        %v4907 = vmul.f32 %v4683, %v4863
        %v4908 = vmul.f32 %v4684, %v4865
        %v4909 = vmul.f32 %v4685, %v4867
        %v4910 = vmul.f32 %v4686, %v4869
        %v4911 = vmul.f32 %v4687, %v4871
        %v4912 = vmul.f32 %v4688, %v4873
        %v4913 = vmul.f32 %v4689, %v4875
        %v4914 = vmul.f32 %v4690, %v4877
        %v4915 = vmul.f32 %v4691, %v4879
        %v4916 = vmul.f32 %v4692, %v4881
        %v4917 = vmul.f32 %v4693, %v4883
        %v4918 = vmul.f32 %v4694, %v4885
        %v4919 = vmul.f32 %v4695, %v4887
        %v4950 = vrot.slane %v4888, 7
        %v4951 = vrot.slane %v4889, 7
        %v4952 = vsel %vm1187, %v4950, %v4951
        %v4953 = vrot.slane %v4890, 7
        %v4954 = vsel %vm1187, %v4951, %v4953
        %v4955 = vrot.slane %v4891, 7
        %v4956 = vsel %vm1187, %v4953, %v4955
        %v4957 = vrot.slane %v4892, 7
        %v4958 = vsel %vm1187, %v4955, %v4957
        %v4959 = vrot.slane %v4893, 7
        %v4960 = vsel %vm1187, %v4957, %v4959
        %v4961 = vrot.slane %v4894, 7
        %v4962 = vsel %vm1187, %v4959, %v4961
        %v4963 = vrot.slane %v4895, 7
        %v4964 = vsel %vm1187, %v4961, %v4963
        %v4965 = vrot.slane %v4896, 7
        %v4966 = vsel %vm1187, %v4963, %v4965
        %v4967 = vrot.slane %v4897, 7
        %v4968 = vsel %vm1187, %v4965, %v4967
        %v4969 = vrot.slane %v4898, 7
        %v4970 = vsel %vm1187, %v4967, %v4969
        %v4971 = vrot.slane %v4899, 7
        %v4972 = vsel %vm1187, %v4969, %v4971
        %v4973 = vrot.slane %v4900, 7
        %v4974 = vsel %vm1187, %v4971, %v4973
        %v4975 = vrot.slane %v4901, 7
        %v4976 = vsel %vm1187, %v4973, %v4975
        %v4977 = vrot.slane %v4902, 7
        %v4978 = vsel %vm1187, %v4975, %v4977
        %v4979 = vrot.slane %v4903, 7
        %v4980 = vsel %vm1187, %v4977, %v4979
        %v4981 = vrot.slane %v4904, 7
        %v4982 = vsel %vm1187, %v4979, %v4981
        %v4983 = vrot.slane %v4905, 7
        %v4984 = vsel %vm1187, %v4981, %v4983
        %v4985 = vrot.slane %v4906, 7
        %v4986 = vsel %vm1187, %v4983, %v4985
        %v4987 = vrot.slane %v4907, 7
        %v4988 = vsel %vm1187, %v4985, %v4987
        %v4989 = vrot.slane %v4908, 7
        %v4990 = vsel %vm1187, %v4987, %v4989
        %v4991 = vrot.slane %v4909, 7
        %v4992 = vsel %vm1187, %v4989, %v4991
        %v4993 = vrot.slane %v4910, 7
        %v4994 = vsel %vm1187, %v4991, %v4993
        %v4995 = vrot.slane %v4911, 7
        %v4996 = vsel %vm1187, %v4993, %v4995
        %v4997 = vrot.slane %v4912, 7
        %v4998 = vsel %vm1187, %v4995, %v4997
        %v4999 = vrot.slane %v4913, 7
        %v5000 = vsel %vm1187, %v4997, %v4999
        %v5001 = vrot.slane %v4914, 7
        %v5002 = vsel %vm1187, %v4999, %v5001
        %v5003 = vrot.slane %v4915, 7
        %v5004 = vsel %vm1187, %v5001, %v5003
        %v5005 = vrot.slane %v4916, 7
        %v5006 = vsel %vm1187, %v5003, %v5005
        %v5007 = vrot.slane %v4917, 7
        %v5008 = vsel %vm1187, %v5005, %v5007
        %v5039 = vsel %vm1187, 0.0, %v4950
        %v5040 = vsel %vm1312, %v5039, 0.0
        %v5041 = vsel %vm1313, %v4952, 0.0
        %v5042 = vsel %vm1314, %v4954, 0.0
        %v5043 = vsel %vm1315, %v4956, 0.0
        %v5044 = vsel %vm1316, %v4958, 0.0
        %v5045 = vsel %vm1317, %v4960, 0.0
        %v5046 = vsel %vm1318, %v4962, 0.0
        %v5047 = vsel %vm1319, %v4964, 0.0
        %v5048 = vsel %vm1320, %v4966, 0.0
        %v5049 = vsel %vm1321, %v4968, 0.0
        %v5050 = vsel %vm1322, %v4970, 0.0
        %v5051 = vsel %vm1323, %v4972, 0.0
        %v5052 = vsel %vm1324, %v4974, 0.0
        %v5053 = vsel %vm1325, %v4976, 0.0
        %v5054 = vsel %vm1326, %v4978, 0.0
        %v5055 = vsel %vm1327, %v4980, 0.0
        %v5056 = vsel %vm1328, %v4982, 0.0
        %v5057 = vsel %vm1329, %v4984, 0.0
        %v5058 = vsel %vm1330, %v4986, 0.0
        %v5059 = vsel %vm1331, %v4988, 0.0
        %v5060 = vsel %vm1332, %v4990, 0.0
        %v5061 = vsel %vm1333, %v4992, 0.0
        %v5062 = vsel %vm1334, %v4994, 0.0
        %v5063 = vsel %vm1335, %v4996, 0.0
        %v5064 = vsel %vm1336, %v4998, 0.0
        %v5065 = vsel %vm1337, %v5000, 0.0
        %v5066 = vsel %vm1338, %v5002, 0.0
        %v5067 = vsel %vm1339, %v5004, 0.0
        %v5068 = vsel %vm1340, %v5006, 0.0
        %v5069 = vsel %vm1341, %v5008, 0.0
        %v5070 = vld [vmem:[%s9] sm:$0xff]
        %v5071 = vld [vmem:[%s9 + $0x8] sm:$0xff]
        %v5072 = vld [vmem:[%s9 + $0x10] sm:$0xff]
        %v5073 = vld [vmem:[%s9 + $0x18] sm:$0xff]
        %s5074 = scalar_lea.vmem %s9, 32
        %v5075 = vld [vmem:[%s5074] sm:$0xff]
        %v5076 = vld [vmem:[%s5074 + $0x8] sm:$0xff]
        %v5077 = vld [vmem:[%s5074 + $0x10] sm:$0xff]
        %v5078 = vld [vmem:[%s5074 + $0x18] sm:$0xff]
        %v5079 = vsel %vm602, 0.0, 0
        %v5081 = vsel %vm602, %v4888, 0
        %v5083 = vsel %vm602, %v4889, 0
        %v5085 = vsel %vm602, %v4890, 0
        %v5087 = vsel %vm602, %v4891, 0
        %v5089 = vsel %vm602, %v4892, 0
        %v5091 = vsel %vm602, %v4893, 0
        %v5093 = vsel %vm602, %v4894, 0
        %v5095 = vsel %vm602, %v4895, 0
        %v5097 = vsel %vm602, %v4896, 0
        %v5099 = vsel %vm602, %v4897, 0
        %v5101 = vsel %vm602, %v4898, 0
        %v5103 = vsel %vm602, %v4899, 0
        %v5105 = vsel %vm602, %v4900, 0
        %v5107 = vsel %vm602, %v4901, 0
        %v5109 = vsel %vm602, %v4902, 0
        %v5111 = vsel %vm602, %v4903, 0
        %v5113 = vsel %vm602, %v4904, 0
        %v5115 = vsel %vm602, %v4905, 0
        %v5117 = vsel %vm602, %v4906, 0
        %v5119 = vsel %vm602, %v4907, 0
        %v5121 = vsel %vm602, %v4908, 0
        %v5123 = vsel %vm602, %v4909, 0
        %v5125 = vsel %vm602, %v4910, 0
        %v5127 = vsel %vm602, %v4911, 0
        %v5129 = vsel %vm602, %v4912, 0
        %v5131 = vsel %vm602, %v4913, 0
        %v5133 = vsel %vm602, %v4914, 0
        %v5135 = vsel %vm602, %v4915, 0
        %v5137 = vsel %vm602, %v4916, 0
        %v5139 = vsel %vm602, %v4917, 0
        %5141 = vmatprep.subr.mxu0 0.0
        %5142 = vmatpush1.msra.mxu0 %v5075
        %5143 = vmatprep.subr.mxu0 0.0
        %5144 = vmatpush1.msra.mxu0 %v5076
        %5145 = vmatprep.subr.mxu0 0.0
        %5146 = vmatpush1.msra.mxu0 %v5077
        %5147 = vmatprep.subr.mxu0 0.0
        %5148 = vmatpush1.msra.mxu0 %v5078
        %5149 = vmatprep.subr.mxu0 0.0
        %5150 = vmatpush1.msra.mxu0 0.0
        %5151 = vmatprep.subr.mxu0 0.0
        %5152 = vmatpush1.msra.mxu0 0.0
        %5153 = vmatprep.subr.mxu0 0.0
        %5154 = vmatpush1.msra.mxu0 0.0
        %5155 = vmatprep.subr.mxu0 0.0
        %5156 = vmatpush1.msra.mxu0 0.0
        %5157 = vmatprep.subr.mxu0 0.0
        %5158 = vmatpush1.msra.mxu0 0.0
        %5159 = vmatprep.subr.mxu0 0.0
        %5160 = vmatpush1.msra.mxu0 0.0
        %5161 = vmatprep.subr.mxu0 0.0
        %5162 = vmatpush1.msra.mxu0 0.0
        %5163 = vmatprep.subr.mxu0 0.0
        %5164 = vmatpush1.msra.mxu0 0.0
        %5165 = vmatprep.subr.mxu0 0.0
        %5166 = vmatpush1.msra.mxu0 0.0
        %5167 = vmatprep.subr.mxu0 0.0
        %5168 = vmatpush1.msra.mxu0 0.0
        %5169 = vmatprep.subr.mxu0 0.0
        %5170 = vmatpush1.msra.mxu0 0.0
        %5171 = vmatprep.subr.mxu0 0.0
        %5172 = vmatpush1.msra.mxu0 0.0
        %5173 = vmatprep.subr.mxu0 0.0
        %5174 = vmatpush1.msra.mxu0 0.0
        %5175 = vmatprep.subr.mxu0 0.0
        %5176 = vmatpush1.msra.mxu0 0.0
        %5177 = vmatprep.subr.mxu0 0.0
        %5178 = vmatpush1.msra.mxu0 0.0
        %5179 = vmatprep.subr.mxu0 0.0
        %5180 = vmatpush1.msra.mxu0 0.0
        %5181 = vmatprep.subr.mxu0 0.0
        %5182 = vmatpush1.msra.mxu0 0.0
        %5183 = vmatprep.subr.mxu0 0.0
        %5184 = vmatpush1.msra.mxu0 0.0
        %5185 = vmatprep.subr.mxu0 0.0
        %5186 = vmatpush1.msra.mxu0 0.0
        %5187 = vmatprep.subr.mxu0 0.0
        %5188 = vmatpush1.msra.mxu0 0.0
        %5189 = vmatprep.subr.mxu0 0.0
        %5190 = vmatpush1.msra.mxu0 0.0
        %5191 = vmatprep.subr.mxu0 0.0
        %5192 = vmatpush1.msra.mxu0 0.0
        %5193 = vmatprep.subr.mxu0 0.0
        %5194 = vmatpush1.msra.mxu0 0.0
        %5195 = vmatprep.subr.mxu0 0.0
        %5196 = vmatpush1.msra.mxu0 0.0
        %5197 = vmatprep.subr.mxu0 0.0
        %5198 = vmatpush1.msra.mxu0 0.0
        %5199 = vmatprep.subr.mxu0 0.0
        %5200 = vmatpush1.msra.mxu0 0.0
        %5201 = vmatprep.subr.mxu0 0.0
        %5202 = vmatpush1.msra.mxu0 0.0
        %5203 = vmatprep.subr.mxu0 0.0
        %5204 = vmatpush1.msra.mxu0 0.0
        %5205 = vmatprep.mubr.f32.mxu0 0.0
        %5206 = vmatmul.mubr.f32.gmra.mrb[0].mxu0 %v5079
        %v5207 = vpop.f32.mrb[0].mxu0
        %v5208 = vadd.f32 0.0, %v5207
        %v5209 = vpop.f32.mrb[0].mxu0
        %5210 = vmatprep.mubr.f32.mxu0 0.0
        %5211 = vmatmul.mubr.f32.gmra.mrb[0].mxu0 %v5079
        %v5212 = vpop.f32.mrb[0].mxu0
        %v5213 = vadd.f32 0.0, %v5212
        %v5214 = vpop.f32.mrb[0].mxu0
        %5215 = vmatprep.mubr.f32.mxu0 0.0
        %5216 = vmatmul.mubr.f32.gmra.mrb[0].mxu0 %v5081
        %v5217 = vpop.f32.mrb[0].mxu0
        %v5218 = vadd.f32 0.0, %v5217
        %v5219 = vpop.f32.mrb[0].mxu0
        %5220 = vmatprep.mubr.f32.mxu0 0.0
        %5221 = vmatmul.mubr.f32.gmra.mrb[0].mxu0 %v5083
        %v5222 = vpop.f32.mrb[0].mxu0
        %v5223 = vadd.f32 0.0, %v5222
        %v5224 = vpop.f32.mrb[0].mxu0
        %5225 = vmatprep.mubr.f32.mxu0 0.0
        %5226 = vmatmul.mubr.f32.gmra.mrb[0].mxu0 %v5085
        %v5227 = vpop.f32.mrb[0].mxu0
        %v5228 = vadd.f32 0.0, %v5227
        %v5229 = vpop.f32.mrb[0].mxu0
        %5230 = vmatprep.mubr.f32.mxu0 0.0
        %5231 = vmatmul.mubr.f32.gmra.mrb[0].mxu0 %v5087
        %v5232 = vpop.f32.mrb[0].mxu0
        %v5233 = vadd.f32 0.0, %v5232
        %v5234 = vpop.f32.mrb[0].mxu0
        %5235 = vmatprep.mubr.f32.mxu0 0.0
        %5236 = vmatmul.mubr.f32.gmra.mrb[0].mxu0 %v5089
        %v5237 = vpop.f32.mrb[0].mxu0
        %v5238 = vadd.f32 0.0, %v5237
        %v5239 = vpop.f32.mrb[0].mxu0
        %5240 = vmatprep.mubr.f32.mxu0 0.0
        %5241 = vmatmul.mubr.f32.gmra.mrb[0].mxu0 %v5091
        %v5242 = vpop.f32.mrb[0].mxu0
        %v5243 = vadd.f32 0.0, %v5242
        %v5244 = vpop.f32.mrb[0].mxu0
        %5245 = vmatprep.mubr.f32.mxu0 0.0
        %5246 = vmatmul.mubr.f32.gmra.mrb[0].mxu0 %v5093
        %v5247 = vpop.f32.mrb[0].mxu0
        %v5248 = vadd.f32 0.0, %v5247
        %v5249 = vpop.f32.mrb[0].mxu0
        %5250 = vmatprep.mubr.f32.mxu0 0.0
        %5251 = vmatmul.mubr.f32.gmra.mrb[0].mxu0 %v5095
        %v5252 = vpop.f32.mrb[0].mxu0
        %v5253 = vadd.f32 0.0, %v5252
        %v5254 = vpop.f32.mrb[0].mxu0
        %5255 = vmatprep.mubr.f32.mxu0 0.0
        %5256 = vmatmul.mubr.f32.gmra.mrb[0].mxu0 %v5097
        %v5257 = vpop.f32.mrb[0].mxu0
        %v5258 = vadd.f32 0.0, %v5257
        %v5259 = vpop.f32.mrb[0].mxu0
        %5260 = vmatprep.mubr.f32.mxu0 0.0
        %5261 = vmatmul.mubr.f32.gmra.mrb[0].mxu0 %v5099
        %v5262 = vpop.f32.mrb[0].mxu0
        %v5263 = vadd.f32 0.0, %v5262
        %v5264 = vpop.f32.mrb[0].mxu0
        %5265 = vmatprep.mubr.f32.mxu0 0.0
        %5266 = vmatmul.mubr.f32.gmra.mrb[0].mxu0 %v5101
        %v5267 = vpop.f32.mrb[0].mxu0
        %v5268 = vadd.f32 0.0, %v5267
        %v5269 = vpop.f32.mrb[0].mxu0
        %5270 = vmatprep.mubr.f32.mxu0 0.0
        %5271 = vmatmul.mubr.f32.gmra.mrb[0].mxu0 %v5103
        %v5272 = vpop.f32.mrb[0].mxu0
        %v5273 = vadd.f32 0.0, %v5272
        %v5274 = vpop.f32.mrb[0].mxu0
        %5275 = vmatprep.mubr.f32.mxu0 0.0
        %5276 = vmatmul.mubr.f32.gmra.mrb[0].mxu0 %v5105
        %v5277 = vpop.f32.mrb[0].mxu0
        %v5278 = vadd.f32 0.0, %v5277
        %v5279 = vpop.f32.mrb[0].mxu0
        %5280 = vmatprep.mubr.f32.mxu0 0.0
        %5281 = vmatmul.mubr.f32.gmra.mrb[0].mxu0 %v5107
        %v5282 = vpop.f32.mrb[0].mxu0
        %v5283 = vadd.f32 0.0, %v5282
        %v5284 = vpop.f32.mrb[0].mxu0
        %5285 = vmatprep.mubr.f32.mxu0 0.0
        %5286 = vmatmul.mubr.f32.gmra.mrb[0].mxu0 %v5109
        %v5287 = vpop.f32.mrb[0].mxu0
        %v5288 = vadd.f32 0.0, %v5287
        %v5289 = vpop.f32.mrb[0].mxu0
        %5290 = vmatprep.mubr.f32.mxu0 0.0
        %5291 = vmatmul.mubr.f32.gmra.mrb[0].mxu0 %v5111
        %v5292 = vpop.f32.mrb[0].mxu0
        %v5293 = vadd.f32 0.0, %v5292
        %v5294 = vpop.f32.mrb[0].mxu0
        %5295 = vmatprep.mubr.f32.mxu0 0.0
        %5296 = vmatmul.mubr.f32.gmra.mrb[0].mxu0 %v5113
        %v5297 = vpop.f32.mrb[0].mxu0
        %v5298 = vadd.f32 0.0, %v5297
        %v5299 = vpop.f32.mrb[0].mxu0
        %5300 = vmatprep.mubr.f32.mxu0 0.0
        %5301 = vmatmul.mubr.f32.gmra.mrb[0].mxu0 %v5115
        %v5302 = vpop.f32.mrb[0].mxu0
        %v5303 = vadd.f32 0.0, %v5302
        %v5304 = vpop.f32.mrb[0].mxu0
        %5305 = vmatprep.mubr.f32.mxu0 0.0
        %5306 = vmatmul.mubr.f32.gmra.mrb[0].mxu0 %v5117
        %v5307 = vpop.f32.mrb[0].mxu0
        %v5308 = vadd.f32 0.0, %v5307
        %v5309 = vpop.f32.mrb[0].mxu0
        %5310 = vmatprep.mubr.f32.mxu0 0.0
        %5311 = vmatmul.mubr.f32.gmra.mrb[0].mxu0 %v5119
        %v5312 = vpop.f32.mrb[0].mxu0
        %v5313 = vadd.f32 0.0, %v5312
        %v5314 = vpop.f32.mrb[0].mxu0
        %5315 = vmatprep.mubr.f32.mxu0 0.0
        %5316 = vmatmul.mubr.f32.gmra.mrb[0].mxu0 %v5121
        %v5317 = vpop.f32.mrb[0].mxu0
        %v5318 = vadd.f32 0.0, %v5317
        %v5319 = vpop.f32.mrb[0].mxu0
        %5320 = vmatprep.mubr.f32.mxu0 0.0
        %5321 = vmatmul.mubr.f32.gmra.mrb[0].mxu0 %v5123
        %v5322 = vpop.f32.mrb[0].mxu0
        %v5323 = vadd.f32 0.0, %v5322
        %v5324 = vpop.f32.mrb[0].mxu0
        %5325 = vmatprep.mubr.f32.mxu0 0.0
        %5326 = vmatmul.mubr.f32.gmra.mrb[0].mxu0 %v5125
        %v5327 = vpop.f32.mrb[0].mxu0
        %v5328 = vadd.f32 0.0, %v5327
        %v5329 = vpop.f32.mrb[0].mxu0
        %5330 = vmatprep.mubr.f32.mxu0 0.0
        %5331 = vmatmul.mubr.f32.gmra.mrb[0].mxu0 %v5127
        %v5332 = vpop.f32.mrb[0].mxu0
        %v5333 = vadd.f32 0.0, %v5332
        %v5334 = vpop.f32.mrb[0].mxu0
        %5335 = vmatprep.mubr.f32.mxu0 0.0
        %5336 = vmatmul.mubr.f32.gmra.mrb[0].mxu0 %v5129
        %v5337 = vpop.f32.mrb[0].mxu0
        %v5338 = vadd.f32 0.0, %v5337
        %v5339 = vpop.f32.mrb[0].mxu0
        %5340 = vmatprep.mubr.f32.mxu0 0.0
        %5341 = vmatmul.mubr.f32.gmra.mrb[0].mxu0 %v5131
        %v5342 = vpop.f32.mrb[0].mxu0
        %v5343 = vadd.f32 0.0, %v5342
        %v5344 = vpop.f32.mrb[0].mxu0
        %5345 = vmatprep.mubr.f32.mxu0 0.0
        %5346 = vmatmul.mubr.f32.gmra.mrb[0].mxu0 %v5133
        %v5347 = vpop.f32.mrb[0].mxu0
        %v5348 = vadd.f32 0.0, %v5347
        %v5349 = vpop.f32.mrb[0].mxu0
        %5350 = vmatprep.mubr.f32.mxu0 0.0
        %5351 = vmatmul.mubr.f32.gmra.mrb[0].mxu0 %v5135
        %v5352 = vpop.f32.mrb[0].mxu0
        %v5353 = vadd.f32 0.0, %v5352
        %v5354 = vpop.f32.mrb[0].mxu0
        %5355 = vmatprep.mubr.f32.mxu0 0.0
        %5356 = vmatmul.mubr.f32.gmra.mrb[0].mxu0 %v5137
        %v5357 = vpop.f32.mrb[0].mxu0
        %v5358 = vadd.f32 0.0, %v5357
        %v5359 = vpop.f32.mrb[0].mxu0
        %5360 = vmatprep.mubr.f32.mxu0 0.0
        %5361 = vmatmul.mubr.f32.gmra.mrb[0].mxu0 %v5139
        %v5362 = vpop.f32.mrb[0].mxu0
        %v5363 = vadd.f32 0.0, %v5362
        %v5364 = vpop.f32.mrb[0].mxu0
        %5365 = vdwg.mxu0
        %v5367 = vsel %vm602, %v5040, 0
        %v5370 = vsel %vm602, %v5041, 0
        %v5373 = vsel %vm602, %v5042, 0
        %v5376 = vsel %vm602, %v5043, 0
        %v5379 = vsel %vm602, %v5044, 0
        %v5382 = vsel %vm602, %v5045, 0
        %v5385 = vsel %vm602, %v5046, 0
        %v5388 = vsel %vm602, %v5047, 0
        %v5391 = vsel %vm602, %v5048, 0
        %v5394 = vsel %vm602, %v5049, 0
        %v5397 = vsel %vm602, %v5050, 0
        %v5400 = vsel %vm602, %v5051, 0
        %v5403 = vsel %vm602, %v5052, 0
        %v5406 = vsel %vm602, %v5053, 0
        %v5409 = vsel %vm602, %v5054, 0
        %v5412 = vsel %vm602, %v5055, 0
        %v5415 = vsel %vm602, %v5056, 0
        %v5418 = vsel %vm602, %v5057, 0
        %v5421 = vsel %vm602, %v5058, 0
        %v5424 = vsel %vm602, %v5059, 0
        %v5427 = vsel %vm602, %v5060, 0
        %v5430 = vsel %vm602, %v5061, 0
        %v5433 = vsel %vm602, %v5062, 0
        %v5436 = vsel %vm602, %v5063, 0
        %v5439 = vsel %vm602, %v5064, 0
        %v5442 = vsel %vm602, %v5065, 0
        %v5445 = vsel %vm602, %v5066, 0
        %v5448 = vsel %vm602, %v5067, 0
        %v5451 = vsel %vm602, %v5068, 0
        %v5454 = vsel %vm602, %v5069, 0
        %5456 = vmatprep.subr.mxu0 0.0
        %5457 = vmatpush1.msra.mxu0 %v5070
        %5458 = vmatprep.subr.mxu0 0.0
        %5459 = vmatpush1.msra.mxu0 %v5071
        %5460 = vmatprep.subr.mxu0 0.0
        %5461 = vmatpush1.msra.mxu0 %v5072
        %5462 = vmatprep.subr.mxu0 0.0
        %5463 = vmatpush1.msra.mxu0 %v5073
        %5464 = vmatprep.subr.mxu0 0.0
        %5465 = vmatpush1.msra.mxu0 0.0
        %5466 = vmatprep.subr.mxu0 0.0
        %5467 = vmatpush1.msra.mxu0 0.0
        %5468 = vmatprep.subr.mxu0 0.0
        %5469 = vmatpush1.msra.mxu0 0.0
        %5470 = vmatprep.subr.mxu0 0.0
        %5471 = vmatpush1.msra.mxu0 0.0
        %5472 = vmatprep.subr.mxu0 0.0
        %5473 = vmatpush1.msra.mxu0 0.0
        %5474 = vmatprep.subr.mxu0 0.0
        %5475 = vmatpush1.msra.mxu0 0.0
        %5476 = vmatprep.subr.mxu0 0.0
        %5477 = vmatpush1.msra.mxu0 0.0
        %5478 = vmatprep.subr.mxu0 0.0
        %5479 = vmatpush1.msra.mxu0 0.0
        %5480 = vmatprep.subr.mxu0 0.0
        %5481 = vmatpush1.msra.mxu0 0.0
        %5482 = vmatprep.subr.mxu0 0.0
        %5483 = vmatpush1.msra.mxu0 0.0
        %5484 = vmatprep.subr.mxu0 0.0
        %5485 = vmatpush1.msra.mxu0 0.0
        %5486 = vmatprep.subr.mxu0 0.0
        %5487 = vmatpush1.msra.mxu0 0.0
        %5488 = vmatprep.subr.mxu0 0.0
        %5489 = vmatpush1.msra.mxu0 0.0
        %5490 = vmatprep.subr.mxu0 0.0
        %5491 = vmatpush1.msra.mxu0 0.0
        %5492 = vmatprep.subr.mxu0 0.0
        %5493 = vmatpush1.msra.mxu0 0.0
        %5494 = vmatprep.subr.mxu0 0.0
        %5495 = vmatpush1.msra.mxu0 0.0
        %5496 = vmatprep.subr.mxu0 0.0
        %5497 = vmatpush1.msra.mxu0 0.0
        %5498 = vmatprep.subr.mxu0 0.0
        %5499 = vmatpush1.msra.mxu0 0.0
        %5500 = vmatprep.subr.mxu0 0.0
        %5501 = vmatpush1.msra.mxu0 0.0
        %5502 = vmatprep.subr.mxu0 0.0
        %5503 = vmatpush1.msra.mxu0 0.0
        %5504 = vmatprep.subr.mxu0 0.0
        %5505 = vmatpush1.msra.mxu0 0.0
        %5506 = vmatprep.subr.mxu0 0.0
        %5507 = vmatpush1.msra.mxu0 0.0
        %5508 = vmatprep.subr.mxu0 0.0
        %5509 = vmatpush1.msra.mxu0 0.0
        %5510 = vmatprep.subr.mxu0 0.0
        %5511 = vmatpush1.msra.mxu0 0.0
        %5512 = vmatprep.subr.mxu0 0.0
        %5513 = vmatpush1.msra.mxu0 0.0
        %5514 = vmatprep.subr.mxu0 0.0
        %5515 = vmatpush1.msra.mxu0 0.0
        %5516 = vmatprep.subr.mxu0 0.0
        %5517 = vmatpush1.msra.mxu0 0.0
        %5518 = vmatprep.subr.mxu0 0.0
        %5519 = vmatpush1.msra.mxu0 0.0
        %5520 = vmatprep.mubr.f32.mxu0 0.0
        %5521 = vmatmul.mubr.f32.gmra.mrb[0].mxu0 %v5079
        %v5522 = vpop.f32.mrb[0].mxu0
        %v5523 = vadd.f32 %v5208, %v5522
        %v5524 = vpop.f32.mrb[0].mxu0
        %5525 = vmatprep.mubr.f32.mxu0 0.0
        %5526 = vmatmul.mubr.f32.gmra.mrb[0].mxu0 %v5079
        %v5527 = vpop.f32.mrb[0].mxu0
        %v5528 = vadd.f32 %v5213, %v5527
        %v5529 = vpop.f32.mrb[0].mxu0
        %5530 = vmatprep.mubr.f32.mxu0 0.0
        %5531 = vmatmul.mubr.f32.gmra.mrb[0].mxu0 %v5367
        %v5532 = vpop.f32.mrb[0].mxu0
        %v5533 = vadd.f32 %v5218, %v5532
        %v5534 = vpop.f32.mrb[0].mxu0
        %5535 = vmatprep.mubr.f32.mxu0 0.0
        %5536 = vmatmul.mubr.f32.gmra.mrb[0].mxu0 %v5370
        %v5537 = vpop.f32.mrb[0].mxu0
        %v5538 = vadd.f32 %v5223, %v5537
        %v5539 = vpop.f32.mrb[0].mxu0
        %5540 = vmatprep.mubr.f32.mxu0 0.0
        %5541 = vmatmul.mubr.f32.gmra.mrb[0].mxu0 %v5373
        %v5542 = vpop.f32.mrb[0].mxu0
        %v5543 = vadd.f32 %v5228, %v5542
        %v5544 = vpop.f32.mrb[0].mxu0
        %5545 = vmatprep.mubr.f32.mxu0 0.0
        %5546 = vmatmul.mubr.f32.gmra.mrb[0].mxu0 %v5376
        %v5547 = vpop.f32.mrb[0].mxu0
        %v5548 = vadd.f32 %v5233, %v5547
        %v5549 = vpop.f32.mrb[0].mxu0
        %5550 = vmatprep.mubr.f32.mxu0 0.0
        %5551 = vmatmul.mubr.f32.gmra.mrb[0].mxu0 %v5379
        %v5552 = vpop.f32.mrb[0].mxu0
        %v5553 = vadd.f32 %v5238, %v5552
        %v5554 = vpop.f32.mrb[0].mxu0
        %5555 = vmatprep.mubr.f32.mxu0 0.0
        %5556 = vmatmul.mubr.f32.gmra.mrb[0].mxu0 %v5382
        %v5557 = vpop.f32.mrb[0].mxu0
        %v5558 = vadd.f32 %v5243, %v5557
        %v5559 = vpop.f32.mrb[0].mxu0
        %5560 = vmatprep.mubr.f32.mxu0 0.0
        %5561 = vmatmul.mubr.f32.gmra.mrb[0].mxu0 %v5385
        %v5562 = vpop.f32.mrb[0].mxu0
        %v5563 = vadd.f32 %v5248, %v5562
        %v5564 = vpop.f32.mrb[0].mxu0
        %5565 = vmatprep.mubr.f32.mxu0 0.0
        %5566 = vmatmul.mubr.f32.gmra.mrb[0].mxu0 %v5388
        %v5567 = vpop.f32.mrb[0].mxu0
        %v5568 = vadd.f32 %v5253, %v5567
        %v5569 = vpop.f32.mrb[0].mxu0
        %5570 = vmatprep.mubr.f32.mxu0 0.0
        %5571 = vmatmul.mubr.f32.gmra.mrb[0].mxu0 %v5391
        %v5572 = vpop.f32.mrb[0].mxu0
        %v5573 = vadd.f32 %v5258, %v5572
        %v5574 = vpop.f32.mrb[0].mxu0
        %5575 = vmatprep.mubr.f32.mxu0 0.0
        %5576 = vmatmul.mubr.f32.gmra.mrb[0].mxu0 %v5394
        %v5577 = vpop.f32.mrb[0].mxu0
        %v5578 = vadd.f32 %v5263, %v5577
        %v5579 = vpop.f32.mrb[0].mxu0
        %5580 = vmatprep.mubr.f32.mxu0 0.0
        %5581 = vmatmul.mubr.f32.gmra.mrb[0].mxu0 %v5397
        %v5582 = vpop.f32.mrb[0].mxu0
        %v5583 = vadd.f32 %v5268, %v5582
        %v5584 = vpop.f32.mrb[0].mxu0
        %5585 = vmatprep.mubr.f32.mxu0 0.0
        %5586 = vmatmul.mubr.f32.gmra.mrb[0].mxu0 %v5400
        %v5587 = vpop.f32.mrb[0].mxu0
        %v5588 = vadd.f32 %v5273, %v5587
        %v5589 = vpop.f32.mrb[0].mxu0
        %5590 = vmatprep.mubr.f32.mxu0 0.0
        %5591 = vmatmul.mubr.f32.gmra.mrb[0].mxu0 %v5403
        %v5592 = vpop.f32.mrb[0].mxu0
        %v5593 = vadd.f32 %v5278, %v5592
        %v5594 = vpop.f32.mrb[0].mxu0
        %5595 = vmatprep.mubr.f32.mxu0 0.0
        %5596 = vmatmul.mubr.f32.gmra.mrb[0].mxu0 %v5406
        %v5597 = vpop.f32.mrb[0].mxu0
        %v5598 = vadd.f32 %v5283, %v5597
        %v5599 = vpop.f32.mrb[0].mxu0
        %5600 = vmatprep.mubr.f32.mxu0 0.0
        %5601 = vmatmul.mubr.f32.gmra.mrb[0].mxu0 %v5409
        %v5602 = vpop.f32.mrb[0].mxu0
        %v5603 = vadd.f32 %v5288, %v5602
        %v5604 = vpop.f32.mrb[0].mxu0
        %5605 = vmatprep.mubr.f32.mxu0 0.0
        %5606 = vmatmul.mubr.f32.gmra.mrb[0].mxu0 %v5412
        %v5607 = vpop.f32.mrb[0].mxu0
        %v5608 = vadd.f32 %v5293, %v5607
        %v5609 = vpop.f32.mrb[0].mxu0
        %5610 = vmatprep.mubr.f32.mxu0 0.0
        %5611 = vmatmul.mubr.f32.gmra.mrb[0].mxu0 %v5415
        %v5612 = vpop.f32.mrb[0].mxu0
        %v5613 = vadd.f32 %v5298, %v5612
        %v5614 = vpop.f32.mrb[0].mxu0
        %5615 = vmatprep.mubr.f32.mxu0 0.0
        %5616 = vmatmul.mubr.f32.gmra.mrb[0].mxu0 %v5418
        %v5617 = vpop.f32.mrb[0].mxu0
        %v5618 = vadd.f32 %v5303, %v5617
        %v5619 = vpop.f32.mrb[0].mxu0
        %5620 = vmatprep.mubr.f32.mxu0 0.0
        %5621 = vmatmul.mubr.f32.gmra.mrb[0].mxu0 %v5421
        %v5622 = vpop.f32.mrb[0].mxu0
        %v5623 = vadd.f32 %v5308, %v5622
        %v5624 = vpop.f32.mrb[0].mxu0
        %5625 = vmatprep.mubr.f32.mxu0 0.0
        %5626 = vmatmul.mubr.f32.gmra.mrb[0].mxu0 %v5424
        %v5627 = vpop.f32.mrb[0].mxu0
        %v5628 = vadd.f32 %v5313, %v5627
        %v5629 = vpop.f32.mrb[0].mxu0
        %5630 = vmatprep.mubr.f32.mxu0 0.0
        %5631 = vmatmul.mubr.f32.gmra.mrb[0].mxu0 %v5427
        %v5632 = vpop.f32.mrb[0].mxu0
        %v5633 = vadd.f32 %v5318, %v5632
        %v5634 = vpop.f32.mrb[0].mxu0
        %5635 = vmatprep.mubr.f32.mxu0 0.0
        %5636 = vmatmul.mubr.f32.gmra.mrb[0].mxu0 %v5430
        %v5637 = vpop.f32.mrb[0].mxu0
        %v5638 = vadd.f32 %v5323, %v5637
        %v5639 = vpop.f32.mrb[0].mxu0
        %5640 = vmatprep.mubr.f32.mxu0 0.0
        %5641 = vmatmul.mubr.f32.gmra.mrb[0].mxu0 %v5433
        %v5642 = vpop.f32.mrb[0].mxu0
        %v5643 = vadd.f32 %v5328, %v5642
        %v5644 = vpop.f32.mrb[0].mxu0
        %5645 = vmatprep.mubr.f32.mxu0 0.0
        %5646 = vmatmul.mubr.f32.gmra.mrb[0].mxu0 %v5436
        %v5647 = vpop.f32.mrb[0].mxu0
        %v5648 = vadd.f32 %v5333, %v5647
        %v5649 = vpop.f32.mrb[0].mxu0
        %5650 = vmatprep.mubr.f32.mxu0 0.0
        %5651 = vmatmul.mubr.f32.gmra.mrb[0].mxu0 %v5439
        %v5652 = vpop.f32.mrb[0].mxu0
        %v5653 = vadd.f32 %v5338, %v5652
        %v5654 = vpop.f32.mrb[0].mxu0
        %5655 = vmatprep.mubr.f32.mxu0 0.0
        %5656 = vmatmul.mubr.f32.gmra.mrb[0].mxu0 %v5442
        %v5657 = vpop.f32.mrb[0].mxu0
        %v5658 = vadd.f32 %v5343, %v5657
        %v5659 = vpop.f32.mrb[0].mxu0
        %5660 = vmatprep.mubr.f32.mxu0 0.0
        %5661 = vmatmul.mubr.f32.gmra.mrb[0].mxu0 %v5445
        %v5662 = vpop.f32.mrb[0].mxu0
        %v5663 = vadd.f32 %v5348, %v5662
        %v5664 = vpop.f32.mrb[0].mxu0
        %5665 = vmatprep.mubr.f32.mxu0 0.0
        %5666 = vmatmul.mubr.f32.gmra.mrb[0].mxu0 %v5448
        %v5667 = vpop.f32.mrb[0].mxu0
        %v5668 = vadd.f32 %v5353, %v5667
        %v5669 = vpop.f32.mrb[0].mxu0
        %5670 = vmatprep.mubr.f32.mxu0 0.0
        %5671 = vmatmul.mubr.f32.gmra.mrb[0].mxu0 %v5451
        %v5672 = vpop.f32.mrb[0].mxu0
        %v5673 = vadd.f32 %v5358, %v5672
        %v5674 = vpop.f32.mrb[0].mxu0
        %5675 = vmatprep.mubr.f32.mxu0 0.0
        %5676 = vmatmul.mubr.f32.gmra.mrb[0].mxu0 %v5454
        %v5677 = vpop.f32.mrb[0].mxu0
        %v5678 = vadd.f32 %v5363, %v5677
        %v5679 = vpop.f32.mrb[0].mxu0
        %5680 = vdwg.mxu0
        %v5682 = vrot.slane %v4888, 1
        %v5683 = vrot.slane %v4889, 1
        %v5684 = vsel %vm1987, %v5682, %v5683
        %v5685 = vrot.slane %v4890, 1
        %v5686 = vsel %vm1987, %v5683, %v5685
        %v5687 = vrot.slane %v4891, 1
        %v5688 = vsel %vm1987, %v5685, %v5687
        %v5689 = vrot.slane %v4892, 1
        %v5690 = vsel %vm1987, %v5687, %v5689
        %v5691 = vrot.slane %v4893, 1
        %v5692 = vsel %vm1987, %v5689, %v5691
        %v5693 = vrot.slane %v4894, 1
        %v5694 = vsel %vm1987, %v5691, %v5693
        %v5695 = vrot.slane %v4895, 1
        %v5696 = vsel %vm1987, %v5693, %v5695
        %v5697 = vrot.slane %v4896, 1
        %v5698 = vsel %vm1987, %v5695, %v5697
        %v5699 = vrot.slane %v4897, 1
        %v5700 = vsel %vm1987, %v5697, %v5699
        %v5701 = vrot.slane %v4898, 1
        %v5702 = vsel %vm1987, %v5699, %v5701
        %v5703 = vrot.slane %v4899, 1
        %v5704 = vsel %vm1987, %v5701, %v5703
        %v5705 = vrot.slane %v4900, 1
        %v5706 = vsel %vm1987, %v5703, %v5705
        %v5707 = vrot.slane %v4901, 1
        %v5708 = vsel %vm1987, %v5705, %v5707
        %v5709 = vrot.slane %v4902, 1
        %v5710 = vsel %vm1987, %v5707, %v5709
        %v5711 = vrot.slane %v4903, 1
        %v5712 = vsel %vm1987, %v5709, %v5711
        %v5713 = vrot.slane %v4904, 1
        %v5714 = vsel %vm1987, %v5711, %v5713
        %v5715 = vrot.slane %v4905, 1
        %v5716 = vsel %vm1987, %v5713, %v5715
        %v5717 = vrot.slane %v4906, 1
        %v5718 = vsel %vm1987, %v5715, %v5717
        %v5719 = vrot.slane %v4907, 1
        %v5720 = vsel %vm1987, %v5717, %v5719
        %v5721 = vrot.slane %v4908, 1
        %v5722 = vsel %vm1987, %v5719, %v5721
        %v5723 = vrot.slane %v4909, 1
        %v5724 = vsel %vm1987, %v5721, %v5723
        %v5725 = vrot.slane %v4910, 1
        %v5726 = vsel %vm1987, %v5723, %v5725
        %v5727 = vrot.slane %v4911, 1
        %v5728 = vsel %vm1987, %v5725, %v5727
        %v5729 = vrot.slane %v4912, 1
        %v5730 = vsel %vm1987, %v5727, %v5729
        %v5731 = vrot.slane %v4913, 1
        %v5732 = vsel %vm1987, %v5729, %v5731
        %v5733 = vrot.slane %v4914, 1
        %v5734 = vsel %vm1987, %v5731, %v5733
        %v5735 = vrot.slane %v4915, 1
        %v5736 = vsel %vm1987, %v5733, %v5735
        %v5737 = vrot.slane %v4916, 1
        %v5738 = vsel %vm1987, %v5735, %v5737
        %v5739 = vrot.slane %v4917, 1
        %v5740 = vsel %vm1987, %v5737, %v5739
        %v5741 = vrot.slane %v4918, 1
        %v5742 = vsel %vm1987, %v5739, %v5741
        %v5774 = vsel %vm1987, 0.0, %v5682
        %v5775 = vsel %vm2114, %v5774, 0.0
        %v5776 = vsel %vm2115, %v5684, 0.0
        %v5777 = vsel %vm2116, %v5686, 0.0
        %v5778 = vsel %vm2117, %v5688, 0.0
        %v5779 = vsel %vm2118, %v5690, 0.0
        %v5780 = vsel %vm2119, %v5692, 0.0
        %v5781 = vsel %vm2120, %v5694, 0.0
        %v5782 = vsel %vm2121, %v5696, 0.0
        %v5783 = vsel %vm2122, %v5698, 0.0
        %v5784 = vsel %vm2123, %v5700, 0.0
        %v5785 = vsel %vm2124, %v5702, 0.0
        %v5786 = vsel %vm2125, %v5704, 0.0
        %v5787 = vsel %vm2126, %v5706, 0.0
        %v5788 = vsel %vm2127, %v5708, 0.0
        %v5789 = vsel %vm2128, %v5710, 0.0
        %v5790 = vsel %vm2129, %v5712, 0.0
        %v5791 = vsel %vm2130, %v5714, 0.0
        %v5792 = vsel %vm2131, %v5716, 0.0
        %v5793 = vsel %vm2132, %v5718, 0.0
        %v5794 = vsel %vm2133, %v5720, 0.0
        %v5795 = vsel %vm2134, %v5722, 0.0
        %v5796 = vsel %vm2135, %v5724, 0.0
        %v5797 = vsel %vm2136, %v5726, 0.0
        %v5798 = vsel %vm2137, %v5728, 0.0
        %v5799 = vsel %vm2138, %v5730, 0.0
        %v5800 = vsel %vm2139, %v5732, 0.0
        %v5801 = vsel %vm2140, %v5734, 0.0
        %v5802 = vsel %vm2141, %v5736, 0.0
        %v5803 = vsel %vm2142, %v5738, 0.0
        %v5804 = vsel %vm2143, %v5740, 0.0
        %v5805 = vsel %vm2144, %v5742, 0.0
        %s5806 = scalar_lea.vmem %s9, 64
        %v5807 = vld [vmem:[%s5806] sm:$0xff]
        %v5808 = vld [vmem:[%s5806 + $0x8] sm:$0xff]
        %v5809 = vld [vmem:[%s5806 + $0x10] sm:$0xff]
        %v5810 = vld [vmem:[%s5806 + $0x18] sm:$0xff]
        %v5812 = vsel %vm602, %v5775, 0
        %v5815 = vsel %vm602, %v5776, 0
        %v5818 = vsel %vm602, %v5777, 0
        %v5821 = vsel %vm602, %v5778, 0
        %v5824 = vsel %vm602, %v5779, 0
        %v5827 = vsel %vm602, %v5780, 0
        %v5830 = vsel %vm602, %v5781, 0
        %v5833 = vsel %vm602, %v5782, 0
        %v5836 = vsel %vm602, %v5783, 0
        %v5839 = vsel %vm602, %v5784, 0
        %v5842 = vsel %vm602, %v5785, 0
        %v5845 = vsel %vm602, %v5786, 0
        %v5848 = vsel %vm602, %v5787, 0
        %v5851 = vsel %vm602, %v5788, 0
        %v5854 = vsel %vm602, %v5789, 0
        %v5857 = vsel %vm602, %v5790, 0
        %v5860 = vsel %vm602, %v5791, 0
        %v5863 = vsel %vm602, %v5792, 0
        %v5866 = vsel %vm602, %v5793, 0
        %v5869 = vsel %vm602, %v5794, 0
        %v5872 = vsel %vm602, %v5795, 0
        %v5875 = vsel %vm602, %v5796, 0
        %v5878 = vsel %vm602, %v5797, 0
        %v5881 = vsel %vm602, %v5798, 0
        %v5884 = vsel %vm602, %v5799, 0
        %v5887 = vsel %vm602, %v5800, 0
        %v5890 = vsel %vm602, %v5801, 0
        %v5893 = vsel %vm602, %v5802, 0
        %v5896 = vsel %vm602, %v5803, 0
        %v5899 = vsel %vm602, %v5804, 0
        %v5902 = vsel %vm602, %v5805, 0
        %5904 = vmatprep.subr.mxu0 0.0
        %5905 = vmatpush1.msra.mxu0 %v5807
        %5906 = vmatprep.subr.mxu0 0.0
        %5907 = vmatpush1.msra.mxu0 %v5808
        %5908 = vmatprep.subr.mxu0 0.0
        %5909 = vmatpush1.msra.mxu0 %v5809
        %5910 = vmatprep.subr.mxu0 0.0
        %5911 = vmatpush1.msra.mxu0 %v5810
        %5912 = vmatprep.subr.mxu0 0.0
        %5913 = vmatpush1.msra.mxu0 0.0
        %5914 = vmatprep.subr.mxu0 0.0
        %5915 = vmatpush1.msra.mxu0 0.0
        %5916 = vmatprep.subr.mxu0 0.0
        %5917 = vmatpush1.msra.mxu0 0.0
        %5918 = vmatprep.subr.mxu0 0.0
        %5919 = vmatpush1.msra.mxu0 0.0
        %5920 = vmatprep.subr.mxu0 0.0
        %5921 = vmatpush1.msra.mxu0 0.0
        %5922 = vmatprep.subr.mxu0 0.0
        %5923 = vmatpush1.msra.mxu0 0.0
        %5924 = vmatprep.subr.mxu0 0.0
        %5925 = vmatpush1.msra.mxu0 0.0
        %5926 = vmatprep.subr.mxu0 0.0
        %5927 = vmatpush1.msra.mxu0 0.0
        %5928 = vmatprep.subr.mxu0 0.0
        %5929 = vmatpush1.msra.mxu0 0.0
        %5930 = vmatprep.subr.mxu0 0.0
        %5931 = vmatpush1.msra.mxu0 0.0
        %5932 = vmatprep.subr.mxu0 0.0
        %5933 = vmatpush1.msra.mxu0 0.0
        %5934 = vmatprep.subr.mxu0 0.0
        %5935 = vmatpush1.msra.mxu0 0.0
        %5936 = vmatprep.subr.mxu0 0.0
        %5937 = vmatpush1.msra.mxu0 0.0
        %5938 = vmatprep.subr.mxu0 0.0
        %5939 = vmatpush1.msra.mxu0 0.0
        %5940 = vmatprep.subr.mxu0 0.0
        %5941 = vmatpush1.msra.mxu0 0.0
        %5942 = vmatprep.subr.mxu0 0.0
        %5943 = vmatpush1.msra.mxu0 0.0
        %5944 = vmatprep.subr.mxu0 0.0
        %5945 = vmatpush1.msra.mxu0 0.0
        %5946 = vmatprep.subr.mxu0 0.0
        %5947 = vmatpush1.msra.mxu0 0.0
        %5948 = vmatprep.subr.mxu0 0.0
        %5949 = vmatpush1.msra.mxu0 0.0
        %5950 = vmatprep.subr.mxu0 0.0
        %5951 = vmatpush1.msra.mxu0 0.0
        %5952 = vmatprep.subr.mxu0 0.0
        %5953 = vmatpush1.msra.mxu0 0.0
        %5954 = vmatprep.subr.mxu0 0.0
        %5955 = vmatpush1.msra.mxu0 0.0
        %5956 = vmatprep.subr.mxu0 0.0
        %5957 = vmatpush1.msra.mxu0 0.0
        %5958 = vmatprep.subr.mxu0 0.0
        %5959 = vmatpush1.msra.mxu0 0.0
        %5960 = vmatprep.subr.mxu0 0.0
        %5961 = vmatpush1.msra.mxu0 0.0
        %5962 = vmatprep.subr.mxu0 0.0
        %5963 = vmatpush1.msra.mxu0 0.0
        %5964 = vmatprep.subr.mxu0 0.0
        %5965 = vmatpush1.msra.mxu0 0.0
        %5966 = vmatprep.subr.mxu0 0.0
        %5967 = vmatpush1.msra.mxu0 0.0
        %5968 = vmatprep.mubr.f32.mxu0 0.0
        %5969 = vmatmul.mubr.f32.gmra.mrb[0].mxu0 %v5079
        %v5970 = vpop.f32.mrb[0].mxu0
        %v5971 = vadd.f32 0.0, %v5970
        %v5972 = vpop.f32.mrb[0].mxu0
        %5973 = vmatprep.mubr.f32.mxu0 0.0
        %5974 = vmatmul.mubr.f32.gmra.mrb[0].mxu0 %v5812
        %v5975 = vpop.f32.mrb[0].mxu0
        %v5976 = vadd.f32 0.0, %v5975
        %v5977 = vpop.f32.mrb[0].mxu0
        %5978 = vmatprep.mubr.f32.mxu0 0.0
        %5979 = vmatmul.mubr.f32.gmra.mrb[0].mxu0 %v5815
        %v5980 = vpop.f32.mrb[0].mxu0
        %v5981 = vadd.f32 0.0, %v5980
        %v5982 = vpop.f32.mrb[0].mxu0
        %5983 = vmatprep.mubr.f32.mxu0 0.0
        %5984 = vmatmul.mubr.f32.gmra.mrb[0].mxu0 %v5818
        %v5985 = vpop.f32.mrb[0].mxu0
        %v5986 = vadd.f32 0.0, %v5985
        %v5987 = vpop.f32.mrb[0].mxu0
        %5988 = vmatprep.mubr.f32.mxu0 0.0
        %5989 = vmatmul.mubr.f32.gmra.mrb[0].mxu0 %v5821
        %v5990 = vpop.f32.mrb[0].mxu0
        %v5991 = vadd.f32 0.0, %v5990
        %v5992 = vpop.f32.mrb[0].mxu0
        %5993 = vmatprep.mubr.f32.mxu0 0.0
        %5994 = vmatmul.mubr.f32.gmra.mrb[0].mxu0 %v5824
        %v5995 = vpop.f32.mrb[0].mxu0
        %v5996 = vadd.f32 0.0, %v5995
        %v5997 = vpop.f32.mrb[0].mxu0
        %5998 = vmatprep.mubr.f32.mxu0 0.0
        %5999 = vmatmul.mubr.f32.gmra.mrb[0].mxu0 %v5827
        %v6000 = vpop.f32.mrb[0].mxu0
        %v6001 = vadd.f32 0.0, %v6000
        %v6002 = vpop.f32.mrb[0].mxu0
        %6003 = vmatprep.mubr.f32.mxu0 0.0
        %6004 = vmatmul.mubr.f32.gmra.mrb[0].mxu0 %v5830
        %v6005 = vpop.f32.mrb[0].mxu0
        %v6006 = vadd.f32 0.0, %v6005
        %v6007 = vpop.f32.mrb[0].mxu0
        %6008 = vmatprep.mubr.f32.mxu0 0.0
        %6009 = vmatmul.mubr.f32.gmra.mrb[0].mxu0 %v5833
        %v6010 = vpop.f32.mrb[0].mxu0
        %v6011 = vadd.f32 0.0, %v6010
        %v6012 = vpop.f32.mrb[0].mxu0
        %6013 = vmatprep.mubr.f32.mxu0 0.0
        %6014 = vmatmul.mubr.f32.gmra.mrb[0].mxu0 %v5836
        %v6015 = vpop.f32.mrb[0].mxu0
        %v6016 = vadd.f32 0.0, %v6015
        %v6017 = vpop.f32.mrb[0].mxu0
        %6018 = vmatprep.mubr.f32.mxu0 0.0
        %6019 = vmatmul.mubr.f32.gmra.mrb[0].mxu0 %v5839
        %v6020 = vpop.f32.mrb[0].mxu0
        %v6021 = vadd.f32 0.0, %v6020
        %v6022 = vpop.f32.mrb[0].mxu0
        %6023 = vmatprep.mubr.f32.mxu0 0.0
        %6024 = vmatmul.mubr.f32.gmra.mrb[0].mxu0 %v5842
        %v6025 = vpop.f32.mrb[0].mxu0
        %v6026 = vadd.f32 0.0, %v6025
        %v6027 = vpop.f32.mrb[0].mxu0
        %6028 = vmatprep.mubr.f32.mxu0 0.0
        %6029 = vmatmul.mubr.f32.gmra.mrb[0].mxu0 %v5845
        %v6030 = vpop.f32.mrb[0].mxu0
        %v6031 = vadd.f32 0.0, %v6030
        %v6032 = vpop.f32.mrb[0].mxu0
        %6033 = vmatprep.mubr.f32.mxu0 0.0
        %6034 = vmatmul.mubr.f32.gmra.mrb[0].mxu0 %v5848
        %v6035 = vpop.f32.mrb[0].mxu0
        %v6036 = vadd.f32 0.0, %v6035
        %v6037 = vpop.f32.mrb[0].mxu0
        %6038 = vmatprep.mubr.f32.mxu0 0.0
        %6039 = vmatmul.mubr.f32.gmra.mrb[0].mxu0 %v5851
        %v6040 = vpop.f32.mrb[0].mxu0
        %v6041 = vadd.f32 0.0, %v6040
        %v6042 = vpop.f32.mrb[0].mxu0
        %6043 = vmatprep.mubr.f32.mxu0 0.0
        %6044 = vmatmul.mubr.f32.gmra.mrb[0].mxu0 %v5854
        %v6045 = vpop.f32.mrb[0].mxu0
        %v6046 = vadd.f32 0.0, %v6045
        %v6047 = vpop.f32.mrb[0].mxu0
        %6048 = vmatprep.mubr.f32.mxu0 0.0
        %6049 = vmatmul.mubr.f32.gmra.mrb[0].mxu0 %v5857
        %v6050 = vpop.f32.mrb[0].mxu0
        %v6051 = vadd.f32 0.0, %v6050
        %v6052 = vpop.f32.mrb[0].mxu0
        %6053 = vmatprep.mubr.f32.mxu0 0.0
        %6054 = vmatmul.mubr.f32.gmra.mrb[0].mxu0 %v5860
        %v6055 = vpop.f32.mrb[0].mxu0
        %v6056 = vadd.f32 0.0, %v6055
        %v6057 = vpop.f32.mrb[0].mxu0
        %6058 = vmatprep.mubr.f32.mxu0 0.0
        %6059 = vmatmul.mubr.f32.gmra.mrb[0].mxu0 %v5863
        %v6060 = vpop.f32.mrb[0].mxu0
        %v6061 = vadd.f32 0.0, %v6060
        %v6062 = vpop.f32.mrb[0].mxu0
        %6063 = vmatprep.mubr.f32.mxu0 0.0
        %6064 = vmatmul.mubr.f32.gmra.mrb[0].mxu0 %v5866
        %v6065 = vpop.f32.mrb[0].mxu0
        %v6066 = vadd.f32 0.0, %v6065
        %v6067 = vpop.f32.mrb[0].mxu0
        %6068 = vmatprep.mubr.f32.mxu0 0.0
        %6069 = vmatmul.mubr.f32.gmra.mrb[0].mxu0 %v5869
        %v6070 = vpop.f32.mrb[0].mxu0
        %v6071 = vadd.f32 0.0, %v6070
        %v6072 = vpop.f32.mrb[0].mxu0
        %6073 = vmatprep.mubr.f32.mxu0 0.0
        %6074 = vmatmul.mubr.f32.gmra.mrb[0].mxu0 %v5872
        %v6075 = vpop.f32.mrb[0].mxu0
        %v6076 = vadd.f32 0.0, %v6075
        %v6077 = vpop.f32.mrb[0].mxu0
        %6078 = vmatprep.mubr.f32.mxu0 0.0
        %6079 = vmatmul.mubr.f32.gmra.mrb[0].mxu0 %v5875
        %v6080 = vpop.f32.mrb[0].mxu0
        %v6081 = vadd.f32 0.0, %v6080
        %v6082 = vpop.f32.mrb[0].mxu0
        %6083 = vmatprep.mubr.f32.mxu0 0.0
        %6084 = vmatmul.mubr.f32.gmra.mrb[0].mxu0 %v5878
        %v6085 = vpop.f32.mrb[0].mxu0
        %v6086 = vadd.f32 0.0, %v6085
        %v6087 = vpop.f32.mrb[0].mxu0
        %6088 = vmatprep.mubr.f32.mxu0 0.0
        %6089 = vmatmul.mubr.f32.gmra.mrb[0].mxu0 %v5881
        %v6090 = vpop.f32.mrb[0].mxu0
        %v6091 = vadd.f32 0.0, %v6090
        %v6092 = vpop.f32.mrb[0].mxu0
        %6093 = vmatprep.mubr.f32.mxu0 0.0
        %6094 = vmatmul.mubr.f32.gmra.mrb[0].mxu0 %v5884
        %v6095 = vpop.f32.mrb[0].mxu0
        %v6096 = vadd.f32 0.0, %v6095
        %v6097 = vpop.f32.mrb[0].mxu0
        %6098 = vmatprep.mubr.f32.mxu0 0.0
        %6099 = vmatmul.mubr.f32.gmra.mrb[0].mxu0 %v5887
        %v6100 = vpop.f32.mrb[0].mxu0
        %v6101 = vadd.f32 0.0, %v6100
        %v6102 = vpop.f32.mrb[0].mxu0
        %6103 = vmatprep.mubr.f32.mxu0 0.0
        %6104 = vmatmul.mubr.f32.gmra.mrb[0].mxu0 %v5890
        %v6105 = vpop.f32.mrb[0].mxu0
        %v6106 = vadd.f32 0.0, %v6105
        %v6107 = vpop.f32.mrb[0].mxu0
        %6108 = vmatprep.mubr.f32.mxu0 0.0
        %6109 = vmatmul.mubr.f32.gmra.mrb[0].mxu0 %v5893
        %v6110 = vpop.f32.mrb[0].mxu0
        %v6111 = vadd.f32 0.0, %v6110
        %v6112 = vpop.f32.mrb[0].mxu0
        %6113 = vmatprep.mubr.f32.mxu0 0.0
        %6114 = vmatmul.mubr.f32.gmra.mrb[0].mxu0 %v5896
        %v6115 = vpop.f32.mrb[0].mxu0
        %v6116 = vadd.f32 0.0, %v6115
        %v6117 = vpop.f32.mrb[0].mxu0
        %6118 = vmatprep.mubr.f32.mxu0 0.0
        %6119 = vmatmul.mubr.f32.gmra.mrb[0].mxu0 %v5899
        %v6120 = vpop.f32.mrb[0].mxu0
        %v6121 = vadd.f32 0.0, %v6120
        %v6122 = vpop.f32.mrb[0].mxu0
        %6123 = vmatprep.mubr.f32.mxu0 0.0
        %6124 = vmatmul.mubr.f32.gmra.mrb[0].mxu0 %v5902
        %v6125 = vpop.f32.mrb[0].mxu0
        %v6126 = vadd.f32 0.0, %v6125
        %v6127 = vpop.f32.mrb[0].mxu0
        %6128 = vdwg.mxu0
        %v6129 = vadd.f32 %v5523, %v5971
        %v6130 = vadd.f32 %v5528, %v5976
        %v6131 = vadd.f32 %v5533, %v5981
        %v6132 = vadd.f32 %v5538, %v5986
        %v6133 = vadd.f32 %v5543, %v5991
        %v6134 = vadd.f32 %v5548, %v5996
        %v6135 = vadd.f32 %v5553, %v6001
        %v6136 = vadd.f32 %v5558, %v6006
        %v6137 = vadd.f32 %v5563, %v6011
        %v6138 = vadd.f32 %v5568, %v6016
        %v6139 = vadd.f32 %v5573, %v6021
        %v6140 = vadd.f32 %v5578, %v6026
        %v6141 = vadd.f32 %v5583, %v6031
        %v6142 = vadd.f32 %v5588, %v6036
        %v6143 = vadd.f32 %v5593, %v6041
        %v6144 = vadd.f32 %v5598, %v6046
        %v6145 = vadd.f32 %v5603, %v6051
        %v6146 = vadd.f32 %v5608, %v6056
        %v6147 = vadd.f32 %v5613, %v6061
        %v6148 = vadd.f32 %v5618, %v6066
        %v6149 = vadd.f32 %v5623, %v6071
        %v6150 = vadd.f32 %v5628, %v6076
        %v6151 = vadd.f32 %v5633, %v6081
        %v6152 = vadd.f32 %v5638, %v6086
        %v6153 = vadd.f32 %v5643, %v6091
        %v6154 = vadd.f32 %v5648, %v6096
        %v6155 = vadd.f32 %v5653, %v6101
        %v6156 = vadd.f32 %v5658, %v6106
        %v6157 = vadd.f32 %v5663, %v6111
        %v6158 = vadd.f32 %v5668, %v6116
        %v6159 = vadd.f32 %v5673, %v6121
        %v6160 = vadd.f32 %v5678, %v6126
        %v6162 = vrot.slane %v4918, 7
        %v6163 = vsel %vm1187, %v5007, %v6162
        %v6164 = vrot.slane %v4919, 7
        %v6165 = vsel %vm1187, %v6162, %v6164
        %v6168 = vsel %vm1310, %v5039, 0.0
        %v6169 = vsel %vm1311, %v4952, 0.0
        %v6170 = vsel %vm1312, %v4954, 0.0
        %v6171 = vsel %vm1313, %v4956, 0.0
        %v6172 = vsel %vm1314, %v4958, 0.0
        %v6173 = vsel %vm1315, %v4960, 0.0
        %v6174 = vsel %vm1316, %v4962, 0.0
        %v6175 = vsel %vm1317, %v4964, 0.0
        %v6176 = vsel %vm1318, %v4966, 0.0
        %v6177 = vsel %vm1319, %v4968, 0.0
        %v6178 = vsel %vm1320, %v4970, 0.0
        %v6179 = vsel %vm1321, %v4972, 0.0
        %v6180 = vsel %vm1322, %v4974, 0.0
        %v6181 = vsel %vm1323, %v4976, 0.0
        %v6182 = vsel %vm1324, %v4978, 0.0
        %v6183 = vsel %vm1325, %v4980, 0.0
        %v6184 = vsel %vm1326, %v4982, 0.0
        %v6185 = vsel %vm1327, %v4984, 0.0
        %v6186 = vsel %vm1328, %v4986, 0.0
        %v6187 = vsel %vm1329, %v4988, 0.0
        %v6188 = vsel %vm1330, %v4990, 0.0
        %v6189 = vsel %vm1331, %v4992, 0.0
        %v6190 = vsel %vm1332, %v4994, 0.0
        %v6191 = vsel %vm1333, %v4996, 0.0
        %v6192 = vsel %vm1334, %v4998, 0.0
        %v6193 = vsel %vm1335, %v5000, 0.0
        %v6194 = vsel %vm1336, %v5002, 0.0
        %v6195 = vsel %vm1337, %v5004, 0.0
        %v6196 = vsel %vm1338, %v5006, 0.0
        %v6197 = vsel %vm1339, %v5008, 0.0
        %v6198 = vsel %vm1340, %v6163, 0.0
        %v6199 = vsel %vm1341, %v6165, 0.0
        %s6200 = scalar_lea.vmem %s9, 96
        %v6201 = vld [vmem:[%s6200] sm:$0xff]
        %v6202 = vld [vmem:[%s6200 + $0x8] sm:$0xff]
        %v6203 = vld [vmem:[%s6200 + $0x10] sm:$0xff]
        %v6204 = vld [vmem:[%s6200 + $0x18] sm:$0xff]
        %v6206 = vsel %vm602, %v6168, 0
        %v6209 = vsel %vm602, %v6169, 0
        %v6212 = vsel %vm602, %v6170, 0
        %v6215 = vsel %vm602, %v6171, 0
        %v6218 = vsel %vm602, %v6172, 0
        %v6221 = vsel %vm602, %v6173, 0
        %v6224 = vsel %vm602, %v6174, 0
        %v6227 = vsel %vm602, %v6175, 0
        %v6230 = vsel %vm602, %v6176, 0
        %v6233 = vsel %vm602, %v6177, 0
        %v6236 = vsel %vm602, %v6178, 0
        %v6239 = vsel %vm602, %v6179, 0
        %v6242 = vsel %vm602, %v6180, 0
        %v6245 = vsel %vm602, %v6181, 0
        %v6248 = vsel %vm602, %v6182, 0
        %v6251 = vsel %vm602, %v6183, 0
        %v6254 = vsel %vm602, %v6184, 0
        %v6257 = vsel %vm602, %v6185, 0
        %v6260 = vsel %vm602, %v6186, 0
        %v6263 = vsel %vm602, %v6187, 0
        %v6266 = vsel %vm602, %v6188, 0
        %v6269 = vsel %vm602, %v6189, 0
        %v6272 = vsel %vm602, %v6190, 0
        %v6275 = vsel %vm602, %v6191, 0
        %v6278 = vsel %vm602, %v6192, 0
        %v6281 = vsel %vm602, %v6193, 0
        %v6284 = vsel %vm602, %v6194, 0
        %v6287 = vsel %vm602, %v6195, 0
        %v6290 = vsel %vm602, %v6196, 0
        %v6293 = vsel %vm602, %v6197, 0
        %v6296 = vsel %vm602, %v6198, 0
        %v6299 = vsel %vm602, %v6199, 0
        %6301 = vmatprep.subr.mxu0 0.0
        %6302 = vmatpush1.msra.mxu0 %v6201
        %6303 = vmatprep.subr.mxu0 0.0
        %6304 = vmatpush1.msra.mxu0 %v6202
        %6305 = vmatprep.subr.mxu0 0.0
        %6306 = vmatpush1.msra.mxu0 %v6203
        %6307 = vmatprep.subr.mxu0 0.0
        %6308 = vmatpush1.msra.mxu0 %v6204
        %6309 = vmatprep.subr.mxu0 0.0
        %6310 = vmatpush1.msra.mxu0 0.0
        %6311 = vmatprep.subr.mxu0 0.0
        %6312 = vmatpush1.msra.mxu0 0.0
        %6313 = vmatprep.subr.mxu0 0.0
        %6314 = vmatpush1.msra.mxu0 0.0
        %6315 = vmatprep.subr.mxu0 0.0
        %6316 = vmatpush1.msra.mxu0 0.0
        %6317 = vmatprep.subr.mxu0 0.0
        %6318 = vmatpush1.msra.mxu0 0.0
        %6319 = vmatprep.subr.mxu0 0.0
        %6320 = vmatpush1.msra.mxu0 0.0
        %6321 = vmatprep.subr.mxu0 0.0
        %6322 = vmatpush1.msra.mxu0 0.0
        %6323 = vmatprep.subr.mxu0 0.0
        %6324 = vmatpush1.msra.mxu0 0.0
        %6325 = vmatprep.subr.mxu0 0.0
        %6326 = vmatpush1.msra.mxu0 0.0
        %6327 = vmatprep.subr.mxu0 0.0
        %6328 = vmatpush1.msra.mxu0 0.0
        %6329 = vmatprep.subr.mxu0 0.0
        %6330 = vmatpush1.msra.mxu0 0.0
        %6331 = vmatprep.subr.mxu0 0.0
        %6332 = vmatpush1.msra.mxu0 0.0
        %6333 = vmatprep.subr.mxu0 0.0
        %6334 = vmatpush1.msra.mxu0 0.0
        %6335 = vmatprep.subr.mxu0 0.0
        %6336 = vmatpush1.msra.mxu0 0.0
        %6337 = vmatprep.subr.mxu0 0.0
        %6338 = vmatpush1.msra.mxu0 0.0
        %6339 = vmatprep.subr.mxu0 0.0
        %6340 = vmatpush1.msra.mxu0 0.0
        %6341 = vmatprep.subr.mxu0 0.0
        %6342 = vmatpush1.msra.mxu0 0.0
        %6343 = vmatprep.subr.mxu0 0.0
        %6344 = vmatpush1.msra.mxu0 0.0
        %6345 = vmatprep.subr.mxu0 0.0
        %6346 = vmatpush1.msra.mxu0 0.0
        %6347 = vmatprep.subr.mxu0 0.0
        %6348 = vmatpush1.msra.mxu0 0.0
        %6349 = vmatprep.subr.mxu0 0.0
        %6350 = vmatpush1.msra.mxu0 0.0
        %6351 = vmatprep.subr.mxu0 0.0
        %6352 = vmatpush1.msra.mxu0 0.0
        %6353 = vmatprep.subr.mxu0 0.0
        %6354 = vmatpush1.msra.mxu0 0.0
        %6355 = vmatprep.subr.mxu0 0.0
        %6356 = vmatpush1.msra.mxu0 0.0
        %6357 = vmatprep.subr.mxu0 0.0
        %6358 = vmatpush1.msra.mxu0 0.0
        %6359 = vmatprep.subr.mxu0 0.0
        %6360 = vmatpush1.msra.mxu0 0.0
        %6361 = vmatprep.subr.mxu0 0.0
        %6362 = vmatpush1.msra.mxu0 0.0
        %6363 = vmatprep.subr.mxu0 0.0
        %6364 = vmatpush1.msra.mxu0 0.0
        %6365 = vmatprep.mubr.f32.mxu0 0.0
        %6366 = vmatmul.mubr.f32.gmra.mrb[0].mxu0 %v6206
        %v6367 = vpop.f32.mrb[0].mxu0
        %v6368 = vadd.f32 0.0, %v6367
        %v6369 = vpop.f32.mrb[0].mxu0
        %6370 = vmatprep.mubr.f32.mxu0 0.0
        %6371 = vmatmul.mubr.f32.gmra.mrb[0].mxu0 %v6209
        %v6372 = vpop.f32.mrb[0].mxu0
        %v6373 = vadd.f32 0.0, %v6372
        %v6374 = vpop.f32.mrb[0].mxu0
        %6375 = vmatprep.mubr.f32.mxu0 0.0
        %6376 = vmatmul.mubr.f32.gmra.mrb[0].mxu0 %v6212
        %v6377 = vpop.f32.mrb[0].mxu0
        %v6378 = vadd.f32 0.0, %v6377
        %v6379 = vpop.f32.mrb[0].mxu0
        %6380 = vmatprep.mubr.f32.mxu0 0.0
        %6381 = vmatmul.mubr.f32.gmra.mrb[0].mxu0 %v6215
        %v6382 = vpop.f32.mrb[0].mxu0
        %v6383 = vadd.f32 0.0, %v6382
        %v6384 = vpop.f32.mrb[0].mxu0
        %6385 = vmatprep.mubr.f32.mxu0 0.0
        %6386 = vmatmul.mubr.f32.gmra.mrb[0].mxu0 %v6218
        %v6387 = vpop.f32.mrb[0].mxu0
        %v6388 = vadd.f32 0.0, %v6387
        %v6389 = vpop.f32.mrb[0].mxu0
        %6390 = vmatprep.mubr.f32.mxu0 0.0
        %6391 = vmatmul.mubr.f32.gmra.mrb[0].mxu0 %v6221
        %v6392 = vpop.f32.mrb[0].mxu0
        %v6393 = vadd.f32 0.0, %v6392
        %v6394 = vpop.f32.mrb[0].mxu0
        %6395 = vmatprep.mubr.f32.mxu0 0.0
        %6396 = vmatmul.mubr.f32.gmra.mrb[0].mxu0 %v6224
        %v6397 = vpop.f32.mrb[0].mxu0
        %v6398 = vadd.f32 0.0, %v6397
        %v6399 = vpop.f32.mrb[0].mxu0
        %6400 = vmatprep.mubr.f32.mxu0 0.0
        %6401 = vmatmul.mubr.f32.gmra.mrb[0].mxu0 %v6227
        %v6402 = vpop.f32.mrb[0].mxu0
        %v6403 = vadd.f32 0.0, %v6402
        %v6404 = vpop.f32.mrb[0].mxu0
        %6405 = vmatprep.mubr.f32.mxu0 0.0
        %6406 = vmatmul.mubr.f32.gmra.mrb[0].mxu0 %v6230
        %v6407 = vpop.f32.mrb[0].mxu0
        %v6408 = vadd.f32 0.0, %v6407
        %v6409 = vpop.f32.mrb[0].mxu0
        %6410 = vmatprep.mubr.f32.mxu0 0.0
        %6411 = vmatmul.mubr.f32.gmra.mrb[0].mxu0 %v6233
        %v6412 = vpop.f32.mrb[0].mxu0
        %v6413 = vadd.f32 0.0, %v6412
        %v6414 = vpop.f32.mrb[0].mxu0
        %6415 = vmatprep.mubr.f32.mxu0 0.0
        %6416 = vmatmul.mubr.f32.gmra.mrb[0].mxu0 %v6236
        %v6417 = vpop.f32.mrb[0].mxu0
        %v6418 = vadd.f32 0.0, %v6417
        %v6419 = vpop.f32.mrb[0].mxu0
        %6420 = vmatprep.mubr.f32.mxu0 0.0
        %6421 = vmatmul.mubr.f32.gmra.mrb[0].mxu0 %v6239
        %v6422 = vpop.f32.mrb[0].mxu0
        %v6423 = vadd.f32 0.0, %v6422
        %v6424 = vpop.f32.mrb[0].mxu0
        %6425 = vmatprep.mubr.f32.mxu0 0.0
        %6426 = vmatmul.mubr.f32.gmra.mrb[0].mxu0 %v6242
        %v6427 = vpop.f32.mrb[0].mxu0
        %v6428 = vadd.f32 0.0, %v6427
        %v6429 = vpop.f32.mrb[0].mxu0
        %6430 = vmatprep.mubr.f32.mxu0 0.0
        %6431 = vmatmul.mubr.f32.gmra.mrb[0].mxu0 %v6245
        %v6432 = vpop.f32.mrb[0].mxu0
        %v6433 = vadd.f32 0.0, %v6432
        %v6434 = vpop.f32.mrb[0].mxu0
        %6435 = vmatprep.mubr.f32.mxu0 0.0
        %6436 = vmatmul.mubr.f32.gmra.mrb[0].mxu0 %v6248
        %v6437 = vpop.f32.mrb[0].mxu0
        %v6438 = vadd.f32 0.0, %v6437
        %v6439 = vpop.f32.mrb[0].mxu0
        %6440 = vmatprep.mubr.f32.mxu0 0.0
        %6441 = vmatmul.mubr.f32.gmra.mrb[0].mxu0 %v6251
        %v6442 = vpop.f32.mrb[0].mxu0
        %v6443 = vadd.f32 0.0, %v6442
        %v6444 = vpop.f32.mrb[0].mxu0
        %6445 = vmatprep.mubr.f32.mxu0 0.0
        %6446 = vmatmul.mubr.f32.gmra.mrb[0].mxu0 %v6254
        %v6447 = vpop.f32.mrb[0].mxu0
        %v6448 = vadd.f32 0.0, %v6447
        %v6449 = vpop.f32.mrb[0].mxu0
        %6450 = vmatprep.mubr.f32.mxu0 0.0
        %6451 = vmatmul.mubr.f32.gmra.mrb[0].mxu0 %v6257
        %v6452 = vpop.f32.mrb[0].mxu0
        %v6453 = vadd.f32 0.0, %v6452
        %v6454 = vpop.f32.mrb[0].mxu0
        %6455 = vmatprep.mubr.f32.mxu0 0.0
        %6456 = vmatmul.mubr.f32.gmra.mrb[0].mxu0 %v6260
        %v6457 = vpop.f32.mrb[0].mxu0
        %v6458 = vadd.f32 0.0, %v6457
        %v6459 = vpop.f32.mrb[0].mxu0
        %6460 = vmatprep.mubr.f32.mxu0 0.0
        %6461 = vmatmul.mubr.f32.gmra.mrb[0].mxu0 %v6263
        %v6462 = vpop.f32.mrb[0].mxu0
        %v6463 = vadd.f32 0.0, %v6462
        %v6464 = vpop.f32.mrb[0].mxu0
        %6465 = vmatprep.mubr.f32.mxu0 0.0
        %6466 = vmatmul.mubr.f32.gmra.mrb[0].mxu0 %v6266
        %v6467 = vpop.f32.mrb[0].mxu0
        %v6468 = vadd.f32 0.0, %v6467
        %v6469 = vpop.f32.mrb[0].mxu0
        %6470 = vmatprep.mubr.f32.mxu0 0.0
        %6471 = vmatmul.mubr.f32.gmra.mrb[0].mxu0 %v6269
        %v6472 = vpop.f32.mrb[0].mxu0
        %v6473 = vadd.f32 0.0, %v6472
        %v6474 = vpop.f32.mrb[0].mxu0
        %6475 = vmatprep.mubr.f32.mxu0 0.0
        %6476 = vmatmul.mubr.f32.gmra.mrb[0].mxu0 %v6272
        %v6477 = vpop.f32.mrb[0].mxu0
        %v6478 = vadd.f32 0.0, %v6477
        %v6479 = vpop.f32.mrb[0].mxu0
        %6480 = vmatprep.mubr.f32.mxu0 0.0
        %6481 = vmatmul.mubr.f32.gmra.mrb[0].mxu0 %v6275
        %v6482 = vpop.f32.mrb[0].mxu0
        %v6483 = vadd.f32 0.0, %v6482
        %v6484 = vpop.f32.mrb[0].mxu0
        %6485 = vmatprep.mubr.f32.mxu0 0.0
        %6486 = vmatmul.mubr.f32.gmra.mrb[0].mxu0 %v6278
        %v6487 = vpop.f32.mrb[0].mxu0
        %v6488 = vadd.f32 0.0, %v6487
        %v6489 = vpop.f32.mrb[0].mxu0
        %6490 = vmatprep.mubr.f32.mxu0 0.0
        %6491 = vmatmul.mubr.f32.gmra.mrb[0].mxu0 %v6281
        %v6492 = vpop.f32.mrb[0].mxu0
        %v6493 = vadd.f32 0.0, %v6492
        %v6494 = vpop.f32.mrb[0].mxu0
        %6495 = vmatprep.mubr.f32.mxu0 0.0
        %6496 = vmatmul.mubr.f32.gmra.mrb[0].mxu0 %v6284
        %v6497 = vpop.f32.mrb[0].mxu0
        %v6498 = vadd.f32 0.0, %v6497
        %v6499 = vpop.f32.mrb[0].mxu0
        %6500 = vmatprep.mubr.f32.mxu0 0.0
        %6501 = vmatmul.mubr.f32.gmra.mrb[0].mxu0 %v6287
        %v6502 = vpop.f32.mrb[0].mxu0
        %v6503 = vadd.f32 0.0, %v6502
        %v6504 = vpop.f32.mrb[0].mxu0
        %6505 = vmatprep.mubr.f32.mxu0 0.0
        %6506 = vmatmul.mubr.f32.gmra.mrb[0].mxu0 %v6290
        %v6507 = vpop.f32.mrb[0].mxu0
        %v6508 = vadd.f32 0.0, %v6507
        %v6509 = vpop.f32.mrb[0].mxu0
        %6510 = vmatprep.mubr.f32.mxu0 0.0
        %6511 = vmatmul.mubr.f32.gmra.mrb[0].mxu0 %v6293
        %v6512 = vpop.f32.mrb[0].mxu0
        %v6513 = vadd.f32 0.0, %v6512
        %v6514 = vpop.f32.mrb[0].mxu0
        %6515 = vmatprep.mubr.f32.mxu0 0.0
        %6516 = vmatmul.mubr.f32.gmra.mrb[0].mxu0 %v6296
        %v6517 = vpop.f32.mrb[0].mxu0
        %v6518 = vadd.f32 0.0, %v6517
        %v6519 = vpop.f32.mrb[0].mxu0
        %6520 = vmatprep.mubr.f32.mxu0 0.0
        %6521 = vmatmul.mubr.f32.gmra.mrb[0].mxu0 %v6299
        %v6522 = vpop.f32.mrb[0].mxu0
        %v6523 = vadd.f32 0.0, %v6522
        %v6524 = vpop.f32.mrb[0].mxu0
        %6525 = vdwg.mxu0
        %v6526 = vadd.f32 %v6129, %v6368
        %v6527 = vadd.f32 %v6130, %v6373
        %v6528 = vadd.f32 %v6131, %v6378
        %v6529 = vadd.f32 %v6132, %v6383
        %v6530 = vadd.f32 %v6133, %v6388
        %v6531 = vadd.f32 %v6134, %v6393
        %v6532 = vadd.f32 %v6135, %v6398
        %v6533 = vadd.f32 %v6136, %v6403
        %v6534 = vadd.f32 %v6137, %v6408
        %v6535 = vadd.f32 %v6138, %v6413
        %v6536 = vadd.f32 %v6139, %v6418
        %v6537 = vadd.f32 %v6140, %v6423
        %v6538 = vadd.f32 %v6141, %v6428
        %v6539 = vadd.f32 %v6142, %v6433
        %v6540 = vadd.f32 %v6143, %v6438
        %v6541 = vadd.f32 %v6144, %v6443
        %v6542 = vadd.f32 %v6145, %v6448
        %v6543 = vadd.f32 %v6146, %v6453
        %v6544 = vadd.f32 %v6147, %v6458
        %v6545 = vadd.f32 %v6148, %v6463
        %v6546 = vadd.f32 %v6149, %v6468
        %v6547 = vadd.f32 %v6150, %v6473
        %v6548 = vadd.f32 %v6151, %v6478
        %v6549 = vadd.f32 %v6152, %v6483
        %v6550 = vadd.f32 %v6153, %v6488
        %v6551 = vadd.f32 %v6154, %v6493
        %v6552 = vadd.f32 %v6155, %v6498
        %v6553 = vadd.f32 %v6156, %v6503
        %v6554 = vadd.f32 %v6157, %v6508
        %v6555 = vadd.f32 %v6158, %v6513
        %v6556 = vadd.f32 %v6159, %v6518
        %v6557 = vadd.f32 %v6160, %v6523
        %s6558 = scalar_lea.vmem %s9, 128
        %v6559 = vld [vmem:[%s6558] sm:$0xff]
        %v6560 = vld [vmem:[%s6558 + $0x8] sm:$0xff]
        %v6561 = vld [vmem:[%s6558 + $0x10] sm:$0xff]
        %v6562 = vld [vmem:[%s6558 + $0x18] sm:$0xff]
        %v6563 = vsel %vm602, %v4918, 0
        %v6565 = vsel %vm602, %v4919, 0
        %6567 = vmatprep.subr.mxu0 0.0
        %6568 = vmatpush1.msra.mxu0 %v6559
        %6569 = vmatprep.subr.mxu0 0.0
        %6570 = vmatpush1.msra.mxu0 %v6560
        %6571 = vmatprep.subr.mxu0 0.0
        %6572 = vmatpush1.msra.mxu0 %v6561
        %6573 = vmatprep.subr.mxu0 0.0
        %6574 = vmatpush1.msra.mxu0 %v6562
        %6575 = vmatprep.subr.mxu0 0.0
        %6576 = vmatpush1.msra.mxu0 0.0
        %6577 = vmatprep.subr.mxu0 0.0
        %6578 = vmatpush1.msra.mxu0 0.0
        %6579 = vmatprep.subr.mxu0 0.0
        %6580 = vmatpush1.msra.mxu0 0.0
        %6581 = vmatprep.subr.mxu0 0.0
        %6582 = vmatpush1.msra.mxu0 0.0
        %6583 = vmatprep.subr.mxu0 0.0
        %6584 = vmatpush1.msra.mxu0 0.0
        %6585 = vmatprep.subr.mxu0 0.0
        %6586 = vmatpush1.msra.mxu0 0.0
        %6587 = vmatprep.subr.mxu0 0.0
        %6588 = vmatpush1.msra.mxu0 0.0
        %6589 = vmatprep.subr.mxu0 0.0
        %6590 = vmatpush1.msra.mxu0 0.0
        %6591 = vmatprep.subr.mxu0 0.0
        %6592 = vmatpush1.msra.mxu0 0.0
        %6593 = vmatprep.subr.mxu0 0.0
        %6594 = vmatpush1.msra.mxu0 0.0
        %6595 = vmatprep.subr.mxu0 0.0
        %6596 = vmatpush1.msra.mxu0 0.0
        %6597 = vmatprep.subr.mxu0 0.0
        %6598 = vmatpush1.msra.mxu0 0.0
        %6599 = vmatprep.subr.mxu0 0.0
        %6600 = vmatpush1.msra.mxu0 0.0
        %6601 = vmatprep.subr.mxu0 0.0
        %6602 = vmatpush1.msra.mxu0 0.0
        %6603 = vmatprep.subr.mxu0 0.0
        %6604 = vmatpush1.msra.mxu0 0.0
        %6605 = vmatprep.subr.mxu0 0.0
        %6606 = vmatpush1.msra.mxu0 0.0
        %6607 = vmatprep.subr.mxu0 0.0
        %6608 = vmatpush1.msra.mxu0 0.0
        %6609 = vmatprep.subr.mxu0 0.0
        %6610 = vmatpush1.msra.mxu0 0.0
        %6611 = vmatprep.subr.mxu0 0.0
        %6612 = vmatpush1.msra.mxu0 0.0
        %6613 = vmatprep.subr.mxu0 0.0
        %6614 = vmatpush1.msra.mxu0 0.0
        %6615 = vmatprep.subr.mxu0 0.0
        %6616 = vmatpush1.msra.mxu0 0.0
        %6617 = vmatprep.subr.mxu0 0.0
        %6618 = vmatpush1.msra.mxu0 0.0
        %6619 = vmatprep.subr.mxu0 0.0
        %6620 = vmatpush1.msra.mxu0 0.0
        %6621 = vmatprep.subr.mxu0 0.0
        %6622 = vmatpush1.msra.mxu0 0.0
        %6623 = vmatprep.subr.mxu0 0.0
        %6624 = vmatpush1.msra.mxu0 0.0
        %6625 = vmatprep.subr.mxu0 0.0
        %6626 = vmatpush1.msra.mxu0 0.0
        %6627 = vmatprep.subr.mxu0 0.0
        %6628 = vmatpush1.msra.mxu0 0.0
        %6629 = vmatprep.subr.mxu0 0.0
        %6630 = vmatpush1.msra.mxu0 0.0
        %6631 = vmatprep.mubr.f32.mxu0 0.0
        %6632 = vmatmul.mubr.f32.gmra.mrb[0].mxu0 %v5081
        %v6633 = vpop.f32.mrb[0].mxu0
        %v6634 = vadd.f32 0.0, %v6633
        %v6635 = vpop.f32.mrb[0].mxu0
        %6636 = vmatprep.mubr.f32.mxu0 0.0
        %6637 = vmatmul.mubr.f32.gmra.mrb[0].mxu0 %v5083
        %v6638 = vpop.f32.mrb[0].mxu0
        %v6639 = vadd.f32 0.0, %v6638
        %v6640 = vpop.f32.mrb[0].mxu0
        %6641 = vmatprep.mubr.f32.mxu0 0.0
        %6642 = vmatmul.mubr.f32.gmra.mrb[0].mxu0 %v5085
        %v6643 = vpop.f32.mrb[0].mxu0
        %v6644 = vadd.f32 0.0, %v6643
        %v6645 = vpop.f32.mrb[0].mxu0
        %6646 = vmatprep.mubr.f32.mxu0 0.0
        %6647 = vmatmul.mubr.f32.gmra.mrb[0].mxu0 %v5087
        %v6648 = vpop.f32.mrb[0].mxu0
        %v6649 = vadd.f32 0.0, %v6648
        %v6650 = vpop.f32.mrb[0].mxu0
        %6651 = vmatprep.mubr.f32.mxu0 0.0
        %6652 = vmatmul.mubr.f32.gmra.mrb[0].mxu0 %v5089
        %v6653 = vpop.f32.mrb[0].mxu0
        %v6654 = vadd.f32 0.0, %v6653
        %v6655 = vpop.f32.mrb[0].mxu0
        %6656 = vmatprep.mubr.f32.mxu0 0.0
        %6657 = vmatmul.mubr.f32.gmra.mrb[0].mxu0 %v5091
        %v6658 = vpop.f32.mrb[0].mxu0
        %v6659 = vadd.f32 0.0, %v6658
        %v6660 = vpop.f32.mrb[0].mxu0
        %6661 = vmatprep.mubr.f32.mxu0 0.0
        %6662 = vmatmul.mubr.f32.gmra.mrb[0].mxu0 %v5093
        %v6663 = vpop.f32.mrb[0].mxu0
        %v6664 = vadd.f32 0.0, %v6663
        %v6665 = vpop.f32.mrb[0].mxu0
        %6666 = vmatprep.mubr.f32.mxu0 0.0
        %6667 = vmatmul.mubr.f32.gmra.mrb[0].mxu0 %v5095
        %v6668 = vpop.f32.mrb[0].mxu0
        %v6669 = vadd.f32 0.0, %v6668
        %v6670 = vpop.f32.mrb[0].mxu0
        %6671 = vmatprep.mubr.f32.mxu0 0.0
        %6672 = vmatmul.mubr.f32.gmra.mrb[0].mxu0 %v5097
        %v6673 = vpop.f32.mrb[0].mxu0
        %v6674 = vadd.f32 0.0, %v6673
        %v6675 = vpop.f32.mrb[0].mxu0
        %6676 = vmatprep.mubr.f32.mxu0 0.0
        %6677 = vmatmul.mubr.f32.gmra.mrb[0].mxu0 %v5099
        %v6678 = vpop.f32.mrb[0].mxu0
        %v6679 = vadd.f32 0.0, %v6678
        %v6680 = vpop.f32.mrb[0].mxu0
        %6681 = vmatprep.mubr.f32.mxu0 0.0
        %6682 = vmatmul.mubr.f32.gmra.mrb[0].mxu0 %v5101
        %v6683 = vpop.f32.mrb[0].mxu0
        %v6684 = vadd.f32 0.0, %v6683
        %v6685 = vpop.f32.mrb[0].mxu0
        %6686 = vmatprep.mubr.f32.mxu0 0.0
        %6687 = vmatmul.mubr.f32.gmra.mrb[0].mxu0 %v5103
        %v6688 = vpop.f32.mrb[0].mxu0
        %v6689 = vadd.f32 0.0, %v6688
        %v6690 = vpop.f32.mrb[0].mxu0
        %6691 = vmatprep.mubr.f32.mxu0 0.0
        %6692 = vmatmul.mubr.f32.gmra.mrb[0].mxu0 %v5105
        %v6693 = vpop.f32.mrb[0].mxu0
        %v6694 = vadd.f32 0.0, %v6693
        %v6695 = vpop.f32.mrb[0].mxu0
        %6696 = vmatprep.mubr.f32.mxu0 0.0
        %6697 = vmatmul.mubr.f32.gmra.mrb[0].mxu0 %v5107
        %v6698 = vpop.f32.mrb[0].mxu0
        %v6699 = vadd.f32 0.0, %v6698
        %v6700 = vpop.f32.mrb[0].mxu0
        %6701 = vmatprep.mubr.f32.mxu0 0.0
        %6702 = vmatmul.mubr.f32.gmra.mrb[0].mxu0 %v5109
        %v6703 = vpop.f32.mrb[0].mxu0
        %v6704 = vadd.f32 0.0, %v6703
        %v6705 = vpop.f32.mrb[0].mxu0
        %6706 = vmatprep.mubr.f32.mxu0 0.0
        %6707 = vmatmul.mubr.f32.gmra.mrb[0].mxu0 %v5111
        %v6708 = vpop.f32.mrb[0].mxu0
        %v6709 = vadd.f32 0.0, %v6708
        %v6710 = vpop.f32.mrb[0].mxu0
        %6711 = vmatprep.mubr.f32.mxu0 0.0
        %6712 = vmatmul.mubr.f32.gmra.mrb[0].mxu0 %v5113
        %v6713 = vpop.f32.mrb[0].mxu0
        %v6714 = vadd.f32 0.0, %v6713
        %v6715 = vpop.f32.mrb[0].mxu0
        %6716 = vmatprep.mubr.f32.mxu0 0.0
        %6717 = vmatmul.mubr.f32.gmra.mrb[0].mxu0 %v5115
        %v6718 = vpop.f32.mrb[0].mxu0
        %v6719 = vadd.f32 0.0, %v6718
        %v6720 = vpop.f32.mrb[0].mxu0
        %6721 = vmatprep.mubr.f32.mxu0 0.0
        %6722 = vmatmul.mubr.f32.gmra.mrb[0].mxu0 %v5117
        %v6723 = vpop.f32.mrb[0].mxu0
        %v6724 = vadd.f32 0.0, %v6723
        %v6725 = vpop.f32.mrb[0].mxu0
        %6726 = vmatprep.mubr.f32.mxu0 0.0
        %6727 = vmatmul.mubr.f32.gmra.mrb[0].mxu0 %v5119
        %v6728 = vpop.f32.mrb[0].mxu0
        %v6729 = vadd.f32 0.0, %v6728
        %v6730 = vpop.f32.mrb[0].mxu0
        %6731 = vmatprep.mubr.f32.mxu0 0.0
        %6732 = vmatmul.mubr.f32.gmra.mrb[0].mxu0 %v5121
        %v6733 = vpop.f32.mrb[0].mxu0
        %v6734 = vadd.f32 0.0, %v6733
        %v6735 = vpop.f32.mrb[0].mxu0
        %6736 = vmatprep.mubr.f32.mxu0 0.0
        %6737 = vmatmul.mubr.f32.gmra.mrb[0].mxu0 %v5123
        %v6738 = vpop.f32.mrb[0].mxu0
        %v6739 = vadd.f32 0.0, %v6738
        %v6740 = vpop.f32.mrb[0].mxu0
        %6741 = vmatprep.mubr.f32.mxu0 0.0
        %6742 = vmatmul.mubr.f32.gmra.mrb[0].mxu0 %v5125
        %v6743 = vpop.f32.mrb[0].mxu0
        %v6744 = vadd.f32 0.0, %v6743
        %v6745 = vpop.f32.mrb[0].mxu0
        %6746 = vmatprep.mubr.f32.mxu0 0.0
        %6747 = vmatmul.mubr.f32.gmra.mrb[0].mxu0 %v5127
        %v6748 = vpop.f32.mrb[0].mxu0
        %v6749 = vadd.f32 0.0, %v6748
        %v6750 = vpop.f32.mrb[0].mxu0
        %6751 = vmatprep.mubr.f32.mxu0 0.0
        %6752 = vmatmul.mubr.f32.gmra.mrb[0].mxu0 %v5129
        %v6753 = vpop.f32.mrb[0].mxu0
        %v6754 = vadd.f32 0.0, %v6753
        %v6755 = vpop.f32.mrb[0].mxu0
        %6756 = vmatprep.mubr.f32.mxu0 0.0
        %6757 = vmatmul.mubr.f32.gmra.mrb[0].mxu0 %v5131
        %v6758 = vpop.f32.mrb[0].mxu0
        %v6759 = vadd.f32 0.0, %v6758
        %v6760 = vpop.f32.mrb[0].mxu0
        %6761 = vmatprep.mubr.f32.mxu0 0.0
        %6762 = vmatmul.mubr.f32.gmra.mrb[0].mxu0 %v5133
        %v6763 = vpop.f32.mrb[0].mxu0
        %v6764 = vadd.f32 0.0, %v6763
        %v6765 = vpop.f32.mrb[0].mxu0
        %6766 = vmatprep.mubr.f32.mxu0 0.0
        %6767 = vmatmul.mubr.f32.gmra.mrb[0].mxu0 %v5135
        %v6768 = vpop.f32.mrb[0].mxu0
        %v6769 = vadd.f32 0.0, %v6768
        %v6770 = vpop.f32.mrb[0].mxu0
        %6771 = vmatprep.mubr.f32.mxu0 0.0
        %6772 = vmatmul.mubr.f32.gmra.mrb[0].mxu0 %v5137
        %v6773 = vpop.f32.mrb[0].mxu0
        %v6774 = vadd.f32 0.0, %v6773
        %v6775 = vpop.f32.mrb[0].mxu0
        %6776 = vmatprep.mubr.f32.mxu0 0.0
        %6777 = vmatmul.mubr.f32.gmra.mrb[0].mxu0 %v5139
        %v6778 = vpop.f32.mrb[0].mxu0
        %v6779 = vadd.f32 0.0, %v6778
        %v6780 = vpop.f32.mrb[0].mxu0
        %6781 = vmatprep.mubr.f32.mxu0 0.0
        %6782 = vmatmul.mubr.f32.gmra.mrb[0].mxu0 %v6563
        %v6783 = vpop.f32.mrb[0].mxu0
        %v6784 = vadd.f32 0.0, %v6783
        %v6785 = vpop.f32.mrb[0].mxu0
        %6786 = vmatprep.mubr.f32.mxu0 0.0
        %6787 = vmatmul.mubr.f32.gmra.mrb[0].mxu0 %v6565
        %v6788 = vpop.f32.mrb[0].mxu0
        %v6789 = vadd.f32 0.0, %v6788
        %v6790 = vpop.f32.mrb[0].mxu0
        %6791 = vdwg.mxu0
        %v6792 = vadd.f32 %v6526, %v6634
        %v6793 = vadd.f32 %v6527, %v6639
        %v6794 = vadd.f32 %v6528, %v6644
        %v6795 = vadd.f32 %v6529, %v6649
        %v6796 = vadd.f32 %v6530, %v6654
        %v6797 = vadd.f32 %v6531, %v6659
        %v6798 = vadd.f32 %v6532, %v6664
        %v6799 = vadd.f32 %v6533, %v6669
        %v6800 = vadd.f32 %v6534, %v6674
        %v6801 = vadd.f32 %v6535, %v6679
        %v6802 = vadd.f32 %v6536, %v6684
        %v6803 = vadd.f32 %v6537, %v6689
        %v6804 = vadd.f32 %v6538, %v6694
        %v6805 = vadd.f32 %v6539, %v6699
        %v6806 = vadd.f32 %v6540, %v6704
        %v6807 = vadd.f32 %v6541, %v6709
        %v6808 = vadd.f32 %v6542, %v6714
        %v6809 = vadd.f32 %v6543, %v6719
        %v6810 = vadd.f32 %v6544, %v6724
        %v6811 = vadd.f32 %v6545, %v6729
        %v6812 = vadd.f32 %v6546, %v6734
        %v6813 = vadd.f32 %v6547, %v6739
        %v6814 = vadd.f32 %v6548, %v6744
        %v6815 = vadd.f32 %v6549, %v6749
        %v6816 = vadd.f32 %v6550, %v6754
        %v6817 = vadd.f32 %v6551, %v6759
        %v6818 = vadd.f32 %v6552, %v6764
        %v6819 = vadd.f32 %v6553, %v6769
        %v6820 = vadd.f32 %v6554, %v6774
        %v6821 = vadd.f32 %v6555, %v6779
        %v6822 = vadd.f32 %v6556, %v6784
        %v6823 = vadd.f32 %v6557, %v6789
        %v6824 = vrot.slane %v4919, 1
        %v6825 = vsel %vm1987, %v5741, %v6824
        %v6828 = vsel %vm1987, %v6824, 0.0
        %v6829 = vsel %vm2113, %v5684, 0.0
        %v6830 = vsel %vm2114, %v5686, 0.0
        %v6831 = vsel %vm2115, %v5688, 0.0
        %v6832 = vsel %vm2116, %v5690, 0.0
        %v6833 = vsel %vm2117, %v5692, 0.0
        %v6834 = vsel %vm2118, %v5694, 0.0
        %v6835 = vsel %vm2119, %v5696, 0.0
        %v6836 = vsel %vm2120, %v5698, 0.0
        %v6837 = vsel %vm2121, %v5700, 0.0
        %v6838 = vsel %vm2122, %v5702, 0.0
        %v6839 = vsel %vm2123, %v5704, 0.0
        %v6840 = vsel %vm2124, %v5706, 0.0
        %v6841 = vsel %vm2125, %v5708, 0.0
        %v6842 = vsel %vm2126, %v5710, 0.0
        %v6843 = vsel %vm2127, %v5712, 0.0
        %v6844 = vsel %vm2128, %v5714, 0.0
        %v6845 = vsel %vm2129, %v5716, 0.0
        %v6846 = vsel %vm2130, %v5718, 0.0
        %v6847 = vsel %vm2131, %v5720, 0.0
        %v6848 = vsel %vm2132, %v5722, 0.0
        %v6849 = vsel %vm2133, %v5724, 0.0
        %v6850 = vsel %vm2134, %v5726, 0.0
        %v6851 = vsel %vm2135, %v5728, 0.0
        %v6852 = vsel %vm2136, %v5730, 0.0
        %v6853 = vsel %vm2137, %v5732, 0.0
        %v6854 = vsel %vm2138, %v5734, 0.0
        %v6855 = vsel %vm2139, %v5736, 0.0
        %v6856 = vsel %vm2140, %v5738, 0.0
        %v6857 = vsel %vm2141, %v5740, 0.0
        %v6858 = vsel %vm2142, %v5742, 0.0
        %v6859 = vsel %vm2143, %v6825, 0.0
        %v6860 = vsel %vm2144, %v6828, 0.0
        %s6861 = scalar_lea.vmem %s9, 160
        %v6862 = vld [vmem:[%s6861] sm:$0xff]
        %v6863 = vld [vmem:[%s6861 + $0x8] sm:$0xff]
        %v6864 = vld [vmem:[%s6861 + $0x10] sm:$0xff]
        %v6865 = vld [vmem:[%s6861 + $0x18] sm:$0xff]
        %v6867 = vsel %vm602, %v6829, 0
        %v6870 = vsel %vm602, %v6830, 0
        %v6873 = vsel %vm602, %v6831, 0
        %v6876 = vsel %vm602, %v6832, 0
        %v6879 = vsel %vm602, %v6833, 0
        %v6882 = vsel %vm602, %v6834, 0
        %v6885 = vsel %vm602, %v6835, 0
        %v6888 = vsel %vm602, %v6836, 0
        %v6891 = vsel %vm602, %v6837, 0
        %v6894 = vsel %vm602, %v6838, 0
        %v6897 = vsel %vm602, %v6839, 0
        %v6900 = vsel %vm602, %v6840, 0
        %v6903 = vsel %vm602, %v6841, 0
        %v6906 = vsel %vm602, %v6842, 0
        %v6909 = vsel %vm602, %v6843, 0
        %v6912 = vsel %vm602, %v6844, 0
        %v6915 = vsel %vm602, %v6845, 0
        %v6918 = vsel %vm602, %v6846, 0
        %v6921 = vsel %vm602, %v6847, 0
        %v6924 = vsel %vm602, %v6848, 0
        %v6927 = vsel %vm602, %v6849, 0
        %v6930 = vsel %vm602, %v6850, 0
        %v6933 = vsel %vm602, %v6851, 0
        %v6936 = vsel %vm602, %v6852, 0
        %v6939 = vsel %vm602, %v6853, 0
        %v6942 = vsel %vm602, %v6854, 0
        %v6945 = vsel %vm602, %v6855, 0
        %v6948 = vsel %vm602, %v6856, 0
        %v6951 = vsel %vm602, %v6857, 0
        %v6954 = vsel %vm602, %v6858, 0
        %v6957 = vsel %vm602, %v6859, 0
        %v6960 = vsel %vm602, %v6860, 0
        %6962 = vmatprep.subr.mxu0 0.0
        %6963 = vmatpush1.msra.mxu0 %v6862
        %6964 = vmatprep.subr.mxu0 0.0
        %6965 = vmatpush1.msra.mxu0 %v6863
        %6966 = vmatprep.subr.mxu0 0.0
        %6967 = vmatpush1.msra.mxu0 %v6864
        %6968 = vmatprep.subr.mxu0 0.0
        %6969 = vmatpush1.msra.mxu0 %v6865
        %6970 = vmatprep.subr.mxu0 0.0
        %6971 = vmatpush1.msra.mxu0 0.0
        %6972 = vmatprep.subr.mxu0 0.0
        %6973 = vmatpush1.msra.mxu0 0.0
        %6974 = vmatprep.subr.mxu0 0.0
        %6975 = vmatpush1.msra.mxu0 0.0
        %6976 = vmatprep.subr.mxu0 0.0
        %6977 = vmatpush1.msra.mxu0 0.0
        %6978 = vmatprep.subr.mxu0 0.0
        %6979 = vmatpush1.msra.mxu0 0.0
        %6980 = vmatprep.subr.mxu0 0.0
        %6981 = vmatpush1.msra.mxu0 0.0
        %6982 = vmatprep.subr.mxu0 0.0
        %6983 = vmatpush1.msra.mxu0 0.0
        %6984 = vmatprep.subr.mxu0 0.0
        %6985 = vmatpush1.msra.mxu0 0.0
        %6986 = vmatprep.subr.mxu0 0.0
        %6987 = vmatpush1.msra.mxu0 0.0
        %6988 = vmatprep.subr.mxu0 0.0
        %6989 = vmatpush1.msra.mxu0 0.0
        %6990 = vmatprep.subr.mxu0 0.0
        %6991 = vmatpush1.msra.mxu0 0.0
        %6992 = vmatprep.subr.mxu0 0.0
        %6993 = vmatpush1.msra.mxu0 0.0
        %6994 = vmatprep.subr.mxu0 0.0
        %6995 = vmatpush1.msra.mxu0 0.0
        %6996 = vmatprep.subr.mxu0 0.0
        %6997 = vmatpush1.msra.mxu0 0.0
        %6998 = vmatprep.subr.mxu0 0.0
        %6999 = vmatpush1.msra.mxu0 0.0
        %7000 = vmatprep.subr.mxu0 0.0
        %7001 = vmatpush1.msra.mxu0 0.0
        %7002 = vmatprep.subr.mxu0 0.0
        %7003 = vmatpush1.msra.mxu0 0.0
        %7004 = vmatprep.subr.mxu0 0.0
        %7005 = vmatpush1.msra.mxu0 0.0
        %7006 = vmatprep.subr.mxu0 0.0
        %7007 = vmatpush1.msra.mxu0 0.0
        %7008 = vmatprep.subr.mxu0 0.0
        %7009 = vmatpush1.msra.mxu0 0.0
        %7010 = vmatprep.subr.mxu0 0.0
        %7011 = vmatpush1.msra.mxu0 0.0
        %7012 = vmatprep.subr.mxu0 0.0
        %7013 = vmatpush1.msra.mxu0 0.0
        %7014 = vmatprep.subr.mxu0 0.0
        %7015 = vmatpush1.msra.mxu0 0.0
        %7016 = vmatprep.subr.mxu0 0.0
        %7017 = vmatpush1.msra.mxu0 0.0
        %7018 = vmatprep.subr.mxu0 0.0
        %7019 = vmatpush1.msra.mxu0 0.0
        %7020 = vmatprep.subr.mxu0 0.0
        %7021 = vmatpush1.msra.mxu0 0.0
        %7022 = vmatprep.subr.mxu0 0.0
        %7023 = vmatpush1.msra.mxu0 0.0
        %7024 = vmatprep.subr.mxu0 0.0
        %7025 = vmatpush1.msra.mxu0 0.0
        %7026 = vmatprep.mubr.f32.mxu0 0.0
        %7027 = vmatmul.mubr.f32.gmra.mrb[0].mxu0 %v6867
        %v7028 = vpop.f32.mrb[0].mxu0
        %v7029 = vadd.f32 0.0, %v7028
        %v7030 = vpop.f32.mrb[0].mxu0
        %7031 = vmatprep.mubr.f32.mxu0 0.0
        %7032 = vmatmul.mubr.f32.gmra.mrb[0].mxu0 %v6870
        %v7033 = vpop.f32.mrb[0].mxu0
        %v7034 = vadd.f32 0.0, %v7033
        %v7035 = vpop.f32.mrb[0].mxu0
        %7036 = vmatprep.mubr.f32.mxu0 0.0
        %7037 = vmatmul.mubr.f32.gmra.mrb[0].mxu0 %v6873
        %v7038 = vpop.f32.mrb[0].mxu0
        %v7039 = vadd.f32 0.0, %v7038
        %v7040 = vpop.f32.mrb[0].mxu0
        %7041 = vmatprep.mubr.f32.mxu0 0.0
        %7042 = vmatmul.mubr.f32.gmra.mrb[0].mxu0 %v6876
        %v7043 = vpop.f32.mrb[0].mxu0
        %v7044 = vadd.f32 0.0, %v7043
        %v7045 = vpop.f32.mrb[0].mxu0
        %7046 = vmatprep.mubr.f32.mxu0 0.0
        %7047 = vmatmul.mubr.f32.gmra.mrb[0].mxu0 %v6879
        %v7048 = vpop.f32.mrb[0].mxu0
        %v7049 = vadd.f32 0.0, %v7048
        %v7050 = vpop.f32.mrb[0].mxu0
        %7051 = vmatprep.mubr.f32.mxu0 0.0
        %7052 = vmatmul.mubr.f32.gmra.mrb[0].mxu0 %v6882
        %v7053 = vpop.f32.mrb[0].mxu0
        %v7054 = vadd.f32 0.0, %v7053
        %v7055 = vpop.f32.mrb[0].mxu0
        %7056 = vmatprep.mubr.f32.mxu0 0.0
        %7057 = vmatmul.mubr.f32.gmra.mrb[0].mxu0 %v6885
        %v7058 = vpop.f32.mrb[0].mxu0
        %v7059 = vadd.f32 0.0, %v7058
        %v7060 = vpop.f32.mrb[0].mxu0
        %7061 = vmatprep.mubr.f32.mxu0 0.0
        %7062 = vmatmul.mubr.f32.gmra.mrb[0].mxu0 %v6888
        %v7063 = vpop.f32.mrb[0].mxu0
        %v7064 = vadd.f32 0.0, %v7063
        %v7065 = vpop.f32.mrb[0].mxu0
        %7066 = vmatprep.mubr.f32.mxu0 0.0
        %7067 = vmatmul.mubr.f32.gmra.mrb[0].mxu0 %v6891
        %v7068 = vpop.f32.mrb[0].mxu0
        %v7069 = vadd.f32 0.0, %v7068
        %v7070 = vpop.f32.mrb[0].mxu0
        %7071 = vmatprep.mubr.f32.mxu0 0.0
        %7072 = vmatmul.mubr.f32.gmra.mrb[0].mxu0 %v6894
        %v7073 = vpop.f32.mrb[0].mxu0
        %v7074 = vadd.f32 0.0, %v7073
        %v7075 = vpop.f32.mrb[0].mxu0
        %7076 = vmatprep.mubr.f32.mxu0 0.0
        %7077 = vmatmul.mubr.f32.gmra.mrb[0].mxu0 %v6897
        %v7078 = vpop.f32.mrb[0].mxu0
        %v7079 = vadd.f32 0.0, %v7078
        %v7080 = vpop.f32.mrb[0].mxu0
        %7081 = vmatprep.mubr.f32.mxu0 0.0
        %7082 = vmatmul.mubr.f32.gmra.mrb[0].mxu0 %v6900
        %v7083 = vpop.f32.mrb[0].mxu0
        %v7084 = vadd.f32 0.0, %v7083
        %v7085 = vpop.f32.mrb[0].mxu0
        %7086 = vmatprep.mubr.f32.mxu0 0.0
        %7087 = vmatmul.mubr.f32.gmra.mrb[0].mxu0 %v6903
        %v7088 = vpop.f32.mrb[0].mxu0
        %v7089 = vadd.f32 0.0, %v7088
        %v7090 = vpop.f32.mrb[0].mxu0
        %7091 = vmatprep.mubr.f32.mxu0 0.0
        %7092 = vmatmul.mubr.f32.gmra.mrb[0].mxu0 %v6906
        %v7093 = vpop.f32.mrb[0].mxu0
        %v7094 = vadd.f32 0.0, %v7093
        %v7095 = vpop.f32.mrb[0].mxu0
        %7096 = vmatprep.mubr.f32.mxu0 0.0
        %7097 = vmatmul.mubr.f32.gmra.mrb[0].mxu0 %v6909
        %v7098 = vpop.f32.mrb[0].mxu0
        %v7099 = vadd.f32 0.0, %v7098
        %v7100 = vpop.f32.mrb[0].mxu0
        %7101 = vmatprep.mubr.f32.mxu0 0.0
        %7102 = vmatmul.mubr.f32.gmra.mrb[0].mxu0 %v6912
        %v7103 = vpop.f32.mrb[0].mxu0
        %v7104 = vadd.f32 0.0, %v7103
        %v7105 = vpop.f32.mrb[0].mxu0
        %7106 = vmatprep.mubr.f32.mxu0 0.0
        %7107 = vmatmul.mubr.f32.gmra.mrb[0].mxu0 %v6915
        %v7108 = vpop.f32.mrb[0].mxu0
        %v7109 = vadd.f32 0.0, %v7108
        %v7110 = vpop.f32.mrb[0].mxu0
        %7111 = vmatprep.mubr.f32.mxu0 0.0
        %7112 = vmatmul.mubr.f32.gmra.mrb[0].mxu0 %v6918
        %v7113 = vpop.f32.mrb[0].mxu0
        %v7114 = vadd.f32 0.0, %v7113
        %v7115 = vpop.f32.mrb[0].mxu0
        %7116 = vmatprep.mubr.f32.mxu0 0.0
        %7117 = vmatmul.mubr.f32.gmra.mrb[0].mxu0 %v6921
        %v7118 = vpop.f32.mrb[0].mxu0
        %v7119 = vadd.f32 0.0, %v7118
        %v7120 = vpop.f32.mrb[0].mxu0
        %7121 = vmatprep.mubr.f32.mxu0 0.0
        %7122 = vmatmul.mubr.f32.gmra.mrb[0].mxu0 %v6924
        %v7123 = vpop.f32.mrb[0].mxu0
        %v7124 = vadd.f32 0.0, %v7123
        %v7125 = vpop.f32.mrb[0].mxu0
        %7126 = vmatprep.mubr.f32.mxu0 0.0
        %7127 = vmatmul.mubr.f32.gmra.mrb[0].mxu0 %v6927
        %v7128 = vpop.f32.mrb[0].mxu0
        %v7129 = vadd.f32 0.0, %v7128
        %v7130 = vpop.f32.mrb[0].mxu0
        %7131 = vmatprep.mubr.f32.mxu0 0.0
        %7132 = vmatmul.mubr.f32.gmra.mrb[0].mxu0 %v6930
        %v7133 = vpop.f32.mrb[0].mxu0
        %v7134 = vadd.f32 0.0, %v7133
        %v7135 = vpop.f32.mrb[0].mxu0
        %7136 = vmatprep.mubr.f32.mxu0 0.0
        %7137 = vmatmul.mubr.f32.gmra.mrb[0].mxu0 %v6933
        %v7138 = vpop.f32.mrb[0].mxu0
        %v7139 = vadd.f32 0.0, %v7138
        %v7140 = vpop.f32.mrb[0].mxu0
        %7141 = vmatprep.mubr.f32.mxu0 0.0
        %7142 = vmatmul.mubr.f32.gmra.mrb[0].mxu0 %v6936
        %v7143 = vpop.f32.mrb[0].mxu0
        %v7144 = vadd.f32 0.0, %v7143
        %v7145 = vpop.f32.mrb[0].mxu0
        %7146 = vmatprep.mubr.f32.mxu0 0.0
        %7147 = vmatmul.mubr.f32.gmra.mrb[0].mxu0 %v6939
        %v7148 = vpop.f32.mrb[0].mxu0
        %v7149 = vadd.f32 0.0, %v7148
        %v7150 = vpop.f32.mrb[0].mxu0
        %7151 = vmatprep.mubr.f32.mxu0 0.0
        %7152 = vmatmul.mubr.f32.gmra.mrb[0].mxu0 %v6942
        %v7153 = vpop.f32.mrb[0].mxu0
        %v7154 = vadd.f32 0.0, %v7153
        %v7155 = vpop.f32.mrb[0].mxu0
        %7156 = vmatprep.mubr.f32.mxu0 0.0
        %7157 = vmatmul.mubr.f32.gmra.mrb[0].mxu0 %v6945
        %v7158 = vpop.f32.mrb[0].mxu0
        %v7159 = vadd.f32 0.0, %v7158
        %v7160 = vpop.f32.mrb[0].mxu0
        %7161 = vmatprep.mubr.f32.mxu0 0.0
        %7162 = vmatmul.mubr.f32.gmra.mrb[0].mxu0 %v6948
        %v7163 = vpop.f32.mrb[0].mxu0
        %v7164 = vadd.f32 0.0, %v7163
        %v7165 = vpop.f32.mrb[0].mxu0
        %7166 = vmatprep.mubr.f32.mxu0 0.0
        %7167 = vmatmul.mubr.f32.gmra.mrb[0].mxu0 %v6951
        %v7168 = vpop.f32.mrb[0].mxu0
        %v7169 = vadd.f32 0.0, %v7168
        %v7170 = vpop.f32.mrb[0].mxu0
        %7171 = vmatprep.mubr.f32.mxu0 0.0
        %7172 = vmatmul.mubr.f32.gmra.mrb[0].mxu0 %v6954
        %v7173 = vpop.f32.mrb[0].mxu0
        %v7174 = vadd.f32 0.0, %v7173
        %v7175 = vpop.f32.mrb[0].mxu0
        %7176 = vmatprep.mubr.f32.mxu0 0.0
        %7177 = vmatmul.mubr.f32.gmra.mrb[0].mxu0 %v6957
        %v7178 = vpop.f32.mrb[0].mxu0
        %v7179 = vadd.f32 0.0, %v7178
        %v7180 = vpop.f32.mrb[0].mxu0
        %7181 = vmatprep.mubr.f32.mxu0 0.0
        %7182 = vmatmul.mubr.f32.gmra.mrb[0].mxu0 %v6960
        %v7183 = vpop.f32.mrb[0].mxu0
        %v7184 = vadd.f32 0.0, %v7183
        %v7185 = vpop.f32.mrb[0].mxu0
        %7186 = vdwg.mxu0
        %v7187 = vadd.f32 %v6792, %v7029
        %v7188 = vadd.f32 %v6793, %v7034
        %v7189 = vadd.f32 %v6794, %v7039
        %v7190 = vadd.f32 %v6795, %v7044
        %v7191 = vadd.f32 %v6796, %v7049
        %v7192 = vadd.f32 %v6797, %v7054
        %v7193 = vadd.f32 %v6798, %v7059
        %v7194 = vadd.f32 %v6799, %v7064
        %v7195 = vadd.f32 %v6800, %v7069
        %v7196 = vadd.f32 %v6801, %v7074
        %v7197 = vadd.f32 %v6802, %v7079
        %v7198 = vadd.f32 %v6803, %v7084
        %v7199 = vadd.f32 %v6804, %v7089
        %v7200 = vadd.f32 %v6805, %v7094
        %v7201 = vadd.f32 %v6806, %v7099
        %v7202 = vadd.f32 %v6807, %v7104
        %v7203 = vadd.f32 %v6808, %v7109
        %v7204 = vadd.f32 %v6809, %v7114
        %v7205 = vadd.f32 %v6810, %v7119
        %v7206 = vadd.f32 %v6811, %v7124
        %v7207 = vadd.f32 %v6812, %v7129
        %v7208 = vadd.f32 %v6813, %v7134
        %v7209 = vadd.f32 %v6814, %v7139
        %v7210 = vadd.f32 %v6815, %v7144
        %v7211 = vadd.f32 %v6816, %v7149
        %v7212 = vadd.f32 %v6817, %v7154
        %v7213 = vadd.f32 %v6818, %v7159
        %v7214 = vadd.f32 %v6819, %v7164
        %v7215 = vadd.f32 %v6820, %v7169
        %v7216 = vadd.f32 %v6821, %v7174
        %v7217 = vadd.f32 %v6822, %v7179
        %v7218 = vadd.f32 %v6823, %v7184
        %v7220 = vsel %vm1187, %v6164, 0.0
        %v7221 = vsel %vm1310, %v4954, 0.0
        %v7222 = vsel %vm1311, %v4956, 0.0
        %v7223 = vsel %vm1312, %v4958, 0.0
        %v7224 = vsel %vm1313, %v4960, 0.0
        %v7225 = vsel %vm1314, %v4962, 0.0
        %v7226 = vsel %vm1315, %v4964, 0.0
        %v7227 = vsel %vm1316, %v4966, 0.0
        %v7228 = vsel %vm1317, %v4968, 0.0
        %v7229 = vsel %vm1318, %v4970, 0.0
        %v7230 = vsel %vm1319, %v4972, 0.0
        %v7231 = vsel %vm1320, %v4974, 0.0
        %v7232 = vsel %vm1321, %v4976, 0.0
        %v7233 = vsel %vm1322, %v4978, 0.0
        %v7234 = vsel %vm1323, %v4980, 0.0
        %v7235 = vsel %vm1324, %v4982, 0.0
        %v7236 = vsel %vm1325, %v4984, 0.0
        %v7237 = vsel %vm1326, %v4986, 0.0
        %v7238 = vsel %vm1327, %v4988, 0.0
        %v7239 = vsel %vm1328, %v4990, 0.0
        %v7240 = vsel %vm1329, %v4992, 0.0
        %v7241 = vsel %vm1330, %v4994, 0.0
        %v7242 = vsel %vm1331, %v4996, 0.0
        %v7243 = vsel %vm1332, %v4998, 0.0
        %v7244 = vsel %vm1333, %v5000, 0.0
        %v7245 = vsel %vm1334, %v5002, 0.0
        %v7246 = vsel %vm1335, %v5004, 0.0
        %v7247 = vsel %vm1336, %v5006, 0.0
        %v7248 = vsel %vm1337, %v5008, 0.0
        %v7249 = vsel %vm1338, %v6163, 0.0
        %v7250 = vsel %vm1339, %v6165, 0.0
        %v7251 = vsel %vm1340, %v7220, 0.0
        %s7252 = scalar_lea.vmem %s9, 192
        %v7253 = vld [vmem:[%s7252] sm:$0xff]
        %v7254 = vld [vmem:[%s7252 + $0x8] sm:$0xff]
        %v7255 = vld [vmem:[%s7252 + $0x10] sm:$0xff]
        %v7256 = vld [vmem:[%s7252 + $0x18] sm:$0xff]
        %v7258 = vsel %vm602, %v7221, 0
        %v7261 = vsel %vm602, %v7222, 0
        %v7264 = vsel %vm602, %v7223, 0
        %v7267 = vsel %vm602, %v7224, 0
        %v7270 = vsel %vm602, %v7225, 0
        %v7273 = vsel %vm602, %v7226, 0
        %v7276 = vsel %vm602, %v7227, 0
        %v7279 = vsel %vm602, %v7228, 0
        %v7282 = vsel %vm602, %v7229, 0
        %v7285 = vsel %vm602, %v7230, 0
        %v7288 = vsel %vm602, %v7231, 0
        %v7291 = vsel %vm602, %v7232, 0
        %v7294 = vsel %vm602, %v7233, 0
        %v7297 = vsel %vm602, %v7234, 0
        %v7300 = vsel %vm602, %v7235, 0
        %v7303 = vsel %vm602, %v7236, 0
        %v7306 = vsel %vm602, %v7237, 0
        %v7309 = vsel %vm602, %v7238, 0
        %v7312 = vsel %vm602, %v7239, 0
        %v7315 = vsel %vm602, %v7240, 0
        %v7318 = vsel %vm602, %v7241, 0
        %v7321 = vsel %vm602, %v7242, 0
        %v7324 = vsel %vm602, %v7243, 0
        %v7327 = vsel %vm602, %v7244, 0
        %v7330 = vsel %vm602, %v7245, 0
        %v7333 = vsel %vm602, %v7246, 0
        %v7336 = vsel %vm602, %v7247, 0
        %v7339 = vsel %vm602, %v7248, 0
        %v7342 = vsel %vm602, %v7249, 0
        %v7345 = vsel %vm602, %v7250, 0
        %v7348 = vsel %vm602, %v7251, 0
        %7350 = vmatprep.subr.mxu0 0.0
        %7351 = vmatpush1.msra.mxu0 %v7253
        %7352 = vmatprep.subr.mxu0 0.0
        %7353 = vmatpush1.msra.mxu0 %v7254
        %7354 = vmatprep.subr.mxu0 0.0
        %7355 = vmatpush1.msra.mxu0 %v7255
        %7356 = vmatprep.subr.mxu0 0.0
        %7357 = vmatpush1.msra.mxu0 %v7256
        %7358 = vmatprep.subr.mxu0 0.0
        %7359 = vmatpush1.msra.mxu0 0.0
        %7360 = vmatprep.subr.mxu0 0.0
        %7361 = vmatpush1.msra.mxu0 0.0
        %7362 = vmatprep.subr.mxu0 0.0
        %7363 = vmatpush1.msra.mxu0 0.0
        %7364 = vmatprep.subr.mxu0 0.0
        %7365 = vmatpush1.msra.mxu0 0.0
        %7366 = vmatprep.subr.mxu0 0.0
        %7367 = vmatpush1.msra.mxu0 0.0
        %7368 = vmatprep.subr.mxu0 0.0
        %7369 = vmatpush1.msra.mxu0 0.0
        %7370 = vmatprep.subr.mxu0 0.0
        %7371 = vmatpush1.msra.mxu0 0.0
        %7372 = vmatprep.subr.mxu0 0.0
        %7373 = vmatpush1.msra.mxu0 0.0
        %7374 = vmatprep.subr.mxu0 0.0
        %7375 = vmatpush1.msra.mxu0 0.0
        %7376 = vmatprep.subr.mxu0 0.0
        %7377 = vmatpush1.msra.mxu0 0.0
        %7378 = vmatprep.subr.mxu0 0.0
        %7379 = vmatpush1.msra.mxu0 0.0
        %7380 = vmatprep.subr.mxu0 0.0
        %7381 = vmatpush1.msra.mxu0 0.0
        %7382 = vmatprep.subr.mxu0 0.0
        %7383 = vmatpush1.msra.mxu0 0.0
        %7384 = vmatprep.subr.mxu0 0.0
        %7385 = vmatpush1.msra.mxu0 0.0
        %7386 = vmatprep.subr.mxu0 0.0
        %7387 = vmatpush1.msra.mxu0 0.0
        %7388 = vmatprep.subr.mxu0 0.0
        %7389 = vmatpush1.msra.mxu0 0.0
        %7390 = vmatprep.subr.mxu0 0.0
        %7391 = vmatpush1.msra.mxu0 0.0
        %7392 = vmatprep.subr.mxu0 0.0
        %7393 = vmatpush1.msra.mxu0 0.0
        %7394 = vmatprep.subr.mxu0 0.0
        %7395 = vmatpush1.msra.mxu0 0.0
        %7396 = vmatprep.subr.mxu0 0.0
        %7397 = vmatpush1.msra.mxu0 0.0
        %7398 = vmatprep.subr.mxu0 0.0
        %7399 = vmatpush1.msra.mxu0 0.0
        %7400 = vmatprep.subr.mxu0 0.0
        %7401 = vmatpush1.msra.mxu0 0.0
        %7402 = vmatprep.subr.mxu0 0.0
        %7403 = vmatpush1.msra.mxu0 0.0
        %7404 = vmatprep.subr.mxu0 0.0
        %7405 = vmatpush1.msra.mxu0 0.0
        %7406 = vmatprep.subr.mxu0 0.0
        %7407 = vmatpush1.msra.mxu0 0.0
        %7408 = vmatprep.subr.mxu0 0.0
        %7409 = vmatpush1.msra.mxu0 0.0
        %7410 = vmatprep.subr.mxu0 0.0
        %7411 = vmatpush1.msra.mxu0 0.0
        %7412 = vmatprep.subr.mxu0 0.0
        %7413 = vmatpush1.msra.mxu0 0.0
        %7414 = vmatprep.mubr.f32.mxu0 0.0
        %7415 = vmatmul.mubr.f32.gmra.mrb[0].mxu0 %v7258
        %v7416 = vpop.f32.mrb[0].mxu0
        %v7417 = vadd.f32 0.0, %v7416
        %v7418 = vpop.f32.mrb[0].mxu0
        %7419 = vmatprep.mubr.f32.mxu0 0.0
        %7420 = vmatmul.mubr.f32.gmra.mrb[0].mxu0 %v7261
        %v7421 = vpop.f32.mrb[0].mxu0
        %v7422 = vadd.f32 0.0, %v7421
        %v7423 = vpop.f32.mrb[0].mxu0
        %7424 = vmatprep.mubr.f32.mxu0 0.0
        %7425 = vmatmul.mubr.f32.gmra.mrb[0].mxu0 %v7264
        %v7426 = vpop.f32.mrb[0].mxu0
        %v7427 = vadd.f32 0.0, %v7426
        %v7428 = vpop.f32.mrb[0].mxu0
        %7429 = vmatprep.mubr.f32.mxu0 0.0
        %7430 = vmatmul.mubr.f32.gmra.mrb[0].mxu0 %v7267
        %v7431 = vpop.f32.mrb[0].mxu0
        %v7432 = vadd.f32 0.0, %v7431
        %v7433 = vpop.f32.mrb[0].mxu0
        %7434 = vmatprep.mubr.f32.mxu0 0.0
        %7435 = vmatmul.mubr.f32.gmra.mrb[0].mxu0 %v7270
        %v7436 = vpop.f32.mrb[0].mxu0
        %v7437 = vadd.f32 0.0, %v7436
        %v7438 = vpop.f32.mrb[0].mxu0
        %7439 = vmatprep.mubr.f32.mxu0 0.0
        %7440 = vmatmul.mubr.f32.gmra.mrb[0].mxu0 %v7273
        %v7441 = vpop.f32.mrb[0].mxu0
        %v7442 = vadd.f32 0.0, %v7441
        %v7443 = vpop.f32.mrb[0].mxu0
        %7444 = vmatprep.mubr.f32.mxu0 0.0
        %7445 = vmatmul.mubr.f32.gmra.mrb[0].mxu0 %v7276
        %v7446 = vpop.f32.mrb[0].mxu0
        %v7447 = vadd.f32 0.0, %v7446
        %v7448 = vpop.f32.mrb[0].mxu0
        %7449 = vmatprep.mubr.f32.mxu0 0.0
        %7450 = vmatmul.mubr.f32.gmra.mrb[0].mxu0 %v7279
        %v7451 = vpop.f32.mrb[0].mxu0
        %v7452 = vadd.f32 0.0, %v7451
        %v7453 = vpop.f32.mrb[0].mxu0
        %7454 = vmatprep.mubr.f32.mxu0 0.0
        %7455 = vmatmul.mubr.f32.gmra.mrb[0].mxu0 %v7282
        %v7456 = vpop.f32.mrb[0].mxu0
        %v7457 = vadd.f32 0.0, %v7456
        %v7458 = vpop.f32.mrb[0].mxu0
        %7459 = vmatprep.mubr.f32.mxu0 0.0
        %7460 = vmatmul.mubr.f32.gmra.mrb[0].mxu0 %v7285
        %v7461 = vpop.f32.mrb[0].mxu0
        %v7462 = vadd.f32 0.0, %v7461
        %v7463 = vpop.f32.mrb[0].mxu0
        %7464 = vmatprep.mubr.f32.mxu0 0.0
        %7465 = vmatmul.mubr.f32.gmra.mrb[0].mxu0 %v7288
        %v7466 = vpop.f32.mrb[0].mxu0
        %v7467 = vadd.f32 0.0, %v7466
        %v7468 = vpop.f32.mrb[0].mxu0
        %7469 = vmatprep.mubr.f32.mxu0 0.0
        %7470 = vmatmul.mubr.f32.gmra.mrb[0].mxu0 %v7291
        %v7471 = vpop.f32.mrb[0].mxu0
        %v7472 = vadd.f32 0.0, %v7471
        %v7473 = vpop.f32.mrb[0].mxu0
        %7474 = vmatprep.mubr.f32.mxu0 0.0
        %7475 = vmatmul.mubr.f32.gmra.mrb[0].mxu0 %v7294
        %v7476 = vpop.f32.mrb[0].mxu0
        %v7477 = vadd.f32 0.0, %v7476
        %v7478 = vpop.f32.mrb[0].mxu0
        %7479 = vmatprep.mubr.f32.mxu0 0.0
        %7480 = vmatmul.mubr.f32.gmra.mrb[0].mxu0 %v7297
        %v7481 = vpop.f32.mrb[0].mxu0
        %v7482 = vadd.f32 0.0, %v7481
        %v7483 = vpop.f32.mrb[0].mxu0
        %7484 = vmatprep.mubr.f32.mxu0 0.0
        %7485 = vmatmul.mubr.f32.gmra.mrb[0].mxu0 %v7300
        %v7486 = vpop.f32.mrb[0].mxu0
        %v7487 = vadd.f32 0.0, %v7486
        %v7488 = vpop.f32.mrb[0].mxu0
        %7489 = vmatprep.mubr.f32.mxu0 0.0
        %7490 = vmatmul.mubr.f32.gmra.mrb[0].mxu0 %v7303
        %v7491 = vpop.f32.mrb[0].mxu0
        %v7492 = vadd.f32 0.0, %v7491
        %v7493 = vpop.f32.mrb[0].mxu0
        %7494 = vmatprep.mubr.f32.mxu0 0.0
        %7495 = vmatmul.mubr.f32.gmra.mrb[0].mxu0 %v7306
        %v7496 = vpop.f32.mrb[0].mxu0
        %v7497 = vadd.f32 0.0, %v7496
        %v7498 = vpop.f32.mrb[0].mxu0
        %7499 = vmatprep.mubr.f32.mxu0 0.0
        %7500 = vmatmul.mubr.f32.gmra.mrb[0].mxu0 %v7309
        %v7501 = vpop.f32.mrb[0].mxu0
        %v7502 = vadd.f32 0.0, %v7501
        %v7503 = vpop.f32.mrb[0].mxu0
        %7504 = vmatprep.mubr.f32.mxu0 0.0
        %7505 = vmatmul.mubr.f32.gmra.mrb[0].mxu0 %v7312
        %v7506 = vpop.f32.mrb[0].mxu0
        %v7507 = vadd.f32 0.0, %v7506
        %v7508 = vpop.f32.mrb[0].mxu0
        %7509 = vmatprep.mubr.f32.mxu0 0.0
        %7510 = vmatmul.mubr.f32.gmra.mrb[0].mxu0 %v7315
        %v7511 = vpop.f32.mrb[0].mxu0
        %v7512 = vadd.f32 0.0, %v7511
        %v7513 = vpop.f32.mrb[0].mxu0
        %7514 = vmatprep.mubr.f32.mxu0 0.0
        %7515 = vmatmul.mubr.f32.gmra.mrb[0].mxu0 %v7318
        %v7516 = vpop.f32.mrb[0].mxu0
        %v7517 = vadd.f32 0.0, %v7516
        %v7518 = vpop.f32.mrb[0].mxu0
        %7519 = vmatprep.mubr.f32.mxu0 0.0
        %7520 = vmatmul.mubr.f32.gmra.mrb[0].mxu0 %v7321
        %v7521 = vpop.f32.mrb[0].mxu0
        %v7522 = vadd.f32 0.0, %v7521
        %v7523 = vpop.f32.mrb[0].mxu0
        %7524 = vmatprep.mubr.f32.mxu0 0.0
        %7525 = vmatmul.mubr.f32.gmra.mrb[0].mxu0 %v7324
        %v7526 = vpop.f32.mrb[0].mxu0
        %v7527 = vadd.f32 0.0, %v7526
        %v7528 = vpop.f32.mrb[0].mxu0
        %7529 = vmatprep.mubr.f32.mxu0 0.0
        %7530 = vmatmul.mubr.f32.gmra.mrb[0].mxu0 %v7327
        %v7531 = vpop.f32.mrb[0].mxu0
        %v7532 = vadd.f32 0.0, %v7531
        %v7533 = vpop.f32.mrb[0].mxu0
        %7534 = vmatprep.mubr.f32.mxu0 0.0
        %7535 = vmatmul.mubr.f32.gmra.mrb[0].mxu0 %v7330
        %v7536 = vpop.f32.mrb[0].mxu0
        %v7537 = vadd.f32 0.0, %v7536
        %v7538 = vpop.f32.mrb[0].mxu0
        %7539 = vmatprep.mubr.f32.mxu0 0.0
        %7540 = vmatmul.mubr.f32.gmra.mrb[0].mxu0 %v7333
        %v7541 = vpop.f32.mrb[0].mxu0
        %v7542 = vadd.f32 0.0, %v7541
        %v7543 = vpop.f32.mrb[0].mxu0
        %7544 = vmatprep.mubr.f32.mxu0 0.0
        %7545 = vmatmul.mubr.f32.gmra.mrb[0].mxu0 %v7336
        %v7546 = vpop.f32.mrb[0].mxu0
        %v7547 = vadd.f32 0.0, %v7546
        %v7548 = vpop.f32.mrb[0].mxu0
        %7549 = vmatprep.mubr.f32.mxu0 0.0
        %7550 = vmatmul.mubr.f32.gmra.mrb[0].mxu0 %v7339
        %v7551 = vpop.f32.mrb[0].mxu0
        %v7552 = vadd.f32 0.0, %v7551
        %v7553 = vpop.f32.mrb[0].mxu0
        %7554 = vmatprep.mubr.f32.mxu0 0.0
        %7555 = vmatmul.mubr.f32.gmra.mrb[0].mxu0 %v7342
        %v7556 = vpop.f32.mrb[0].mxu0
        %v7557 = vadd.f32 0.0, %v7556
        %v7558 = vpop.f32.mrb[0].mxu0
        %7559 = vmatprep.mubr.f32.mxu0 0.0
        %7560 = vmatmul.mubr.f32.gmra.mrb[0].mxu0 %v7345
        %v7561 = vpop.f32.mrb[0].mxu0
        %v7562 = vadd.f32 0.0, %v7561
        %v7563 = vpop.f32.mrb[0].mxu0
        %7564 = vmatprep.mubr.f32.mxu0 0.0
        %7565 = vmatmul.mubr.f32.gmra.mrb[0].mxu0 %v7348
        %v7566 = vpop.f32.mrb[0].mxu0
        %v7567 = vadd.f32 0.0, %v7566
        %v7568 = vpop.f32.mrb[0].mxu0
        %7569 = vmatprep.mubr.f32.mxu0 0.0
        %7570 = vmatmul.mubr.f32.gmra.mrb[0].mxu0 %v5079
        %v7571 = vpop.f32.mrb[0].mxu0
        %v7572 = vadd.f32 0.0, %v7571
        %v7573 = vpop.f32.mrb[0].mxu0
        %7574 = vdwg.mxu0
        %v7575 = vadd.f32 %v7187, %v7417
        %v7576 = vadd.f32 %v7188, %v7422
        %v7577 = vadd.f32 %v7189, %v7427
        %v7578 = vadd.f32 %v7190, %v7432
        %v7579 = vadd.f32 %v7191, %v7437
        %v7580 = vadd.f32 %v7192, %v7442
        %v7581 = vadd.f32 %v7193, %v7447
        %v7582 = vadd.f32 %v7194, %v7452
        %v7583 = vadd.f32 %v7195, %v7457
        %v7584 = vadd.f32 %v7196, %v7462
        %v7585 = vadd.f32 %v7197, %v7467
        %v7586 = vadd.f32 %v7198, %v7472
        %v7587 = vadd.f32 %v7199, %v7477
        %v7588 = vadd.f32 %v7200, %v7482
        %v7589 = vadd.f32 %v7201, %v7487
        %v7590 = vadd.f32 %v7202, %v7492
        %v7591 = vadd.f32 %v7203, %v7497
        %v7592 = vadd.f32 %v7204, %v7502
        %v7593 = vadd.f32 %v7205, %v7507
        %v7594 = vadd.f32 %v7206, %v7512
        %v7595 = vadd.f32 %v7207, %v7517
        %v7596 = vadd.f32 %v7208, %v7522
        %v7597 = vadd.f32 %v7209, %v7527
        %v7598 = vadd.f32 %v7210, %v7532
        %v7599 = vadd.f32 %v7211, %v7537
        %v7600 = vadd.f32 %v7212, %v7542
        %v7601 = vadd.f32 %v7213, %v7547
        %v7602 = vadd.f32 %v7214, %v7552
        %v7603 = vadd.f32 %v7215, %v7557
        %v7604 = vadd.f32 %v7216, %v7562
        %v7605 = vadd.f32 %v7217, %v7567
        %v7606 = vadd.f32 %v7218, %v7572
        %s7607 = scalar_lea.vmem %s9, 224
        %v7608 = vld [vmem:[%s7607] sm:$0xff]
        %v7609 = vld [vmem:[%s7607 + $0x8] sm:$0xff]
        %v7610 = vld [vmem:[%s7607 + $0x10] sm:$0xff]
        %v7611 = vld [vmem:[%s7607 + $0x18] sm:$0xff]
        %7612 = vmatprep.subr.mxu0 0.0
        %7613 = vmatpush1.msra.mxu0 %v7608
        %7614 = vmatprep.subr.mxu0 0.0
        %7615 = vmatpush1.msra.mxu0 %v7609
        %7616 = vmatprep.subr.mxu0 0.0
        %7617 = vmatpush1.msra.mxu0 %v7610
        %7618 = vmatprep.subr.mxu0 0.0
        %7619 = vmatpush1.msra.mxu0 %v7611
        %7620 = vmatprep.subr.mxu0 0.0
        %7621 = vmatpush1.msra.mxu0 0.0
        %7622 = vmatprep.subr.mxu0 0.0
        %7623 = vmatpush1.msra.mxu0 0.0
        %7624 = vmatprep.subr.mxu0 0.0
        %7625 = vmatpush1.msra.mxu0 0.0
        %7626 = vmatprep.subr.mxu0 0.0
        %7627 = vmatpush1.msra.mxu0 0.0
        %7628 = vmatprep.subr.mxu0 0.0
        %7629 = vmatpush1.msra.mxu0 0.0
        %7630 = vmatprep.subr.mxu0 0.0
        %7631 = vmatpush1.msra.mxu0 0.0
        %7632 = vmatprep.subr.mxu0 0.0
        %7633 = vmatpush1.msra.mxu0 0.0
        %7634 = vmatprep.subr.mxu0 0.0
        %7635 = vmatpush1.msra.mxu0 0.0
        %7636 = vmatprep.subr.mxu0 0.0
        %7637 = vmatpush1.msra.mxu0 0.0
        %7638 = vmatprep.subr.mxu0 0.0
        %7639 = vmatpush1.msra.mxu0 0.0
        %7640 = vmatprep.subr.mxu0 0.0
        %7641 = vmatpush1.msra.mxu0 0.0
        %7642 = vmatprep.subr.mxu0 0.0
        %7643 = vmatpush1.msra.mxu0 0.0
        %7644 = vmatprep.subr.mxu0 0.0
        %7645 = vmatpush1.msra.mxu0 0.0
        %7646 = vmatprep.subr.mxu0 0.0
        %7647 = vmatpush1.msra.mxu0 0.0
        %7648 = vmatprep.subr.mxu0 0.0
        %7649 = vmatpush1.msra.mxu0 0.0
        %7650 = vmatprep.subr.mxu0 0.0
        %7651 = vmatpush1.msra.mxu0 0.0
        %7652 = vmatprep.subr.mxu0 0.0
        %7653 = vmatpush1.msra.mxu0 0.0
        %7654 = vmatprep.subr.mxu0 0.0
        %7655 = vmatpush1.msra.mxu0 0.0
        %7656 = vmatprep.subr.mxu0 0.0
        %7657 = vmatpush1.msra.mxu0 0.0
        %7658 = vmatprep.subr.mxu0 0.0
        %7659 = vmatpush1.msra.mxu0 0.0
        %7660 = vmatprep.subr.mxu0 0.0
        %7661 = vmatpush1.msra.mxu0 0.0
        %7662 = vmatprep.subr.mxu0 0.0
        %7663 = vmatpush1.msra.mxu0 0.0
        %7664 = vmatprep.subr.mxu0 0.0
        %7665 = vmatpush1.msra.mxu0 0.0
        %7666 = vmatprep.subr.mxu0 0.0
        %7667 = vmatpush1.msra.mxu0 0.0
        %7668 = vmatprep.subr.mxu0 0.0
        %7669 = vmatpush1.msra.mxu0 0.0
        %7670 = vmatprep.subr.mxu0 0.0
        %7671 = vmatpush1.msra.mxu0 0.0
        %7672 = vmatprep.subr.mxu0 0.0
        %7673 = vmatpush1.msra.mxu0 0.0
        %7674 = vmatprep.subr.mxu0 0.0
        %7675 = vmatpush1.msra.mxu0 0.0
        %7676 = vmatprep.mubr.f32.mxu0 0.0
        %7677 = vmatmul.mubr.f32.gmra.mrb[0].mxu0 %v5085
        %v7678 = vpop.f32.mrb[0].mxu0
        %v7679 = vadd.f32 0.0, %v7678
        %v7680 = vpop.f32.mrb[0].mxu0
        %7681 = vmatprep.mubr.f32.mxu0 0.0
        %7682 = vmatmul.mubr.f32.gmra.mrb[0].mxu0 %v5087
        %v7683 = vpop.f32.mrb[0].mxu0
        %v7684 = vadd.f32 0.0, %v7683
        %v7685 = vpop.f32.mrb[0].mxu0
        %7686 = vmatprep.mubr.f32.mxu0 0.0
        %7687 = vmatmul.mubr.f32.gmra.mrb[0].mxu0 %v5089
        %v7688 = vpop.f32.mrb[0].mxu0
        %v7689 = vadd.f32 0.0, %v7688
        %v7690 = vpop.f32.mrb[0].mxu0
        %7691 = vmatprep.mubr.f32.mxu0 0.0
        %7692 = vmatmul.mubr.f32.gmra.mrb[0].mxu0 %v5091
        %v7693 = vpop.f32.mrb[0].mxu0
        %v7694 = vadd.f32 0.0, %v7693
        %v7695 = vpop.f32.mrb[0].mxu0
        %7696 = vmatprep.mubr.f32.mxu0 0.0
        %7697 = vmatmul.mubr.f32.gmra.mrb[0].mxu0 %v5093
        %v7698 = vpop.f32.mrb[0].mxu0
        %v7699 = vadd.f32 0.0, %v7698
        %v7700 = vpop.f32.mrb[0].mxu0
        %7701 = vmatprep.mubr.f32.mxu0 0.0
        %7702 = vmatmul.mubr.f32.gmra.mrb[0].mxu0 %v5095
        %v7703 = vpop.f32.mrb[0].mxu0
        %v7704 = vadd.f32 0.0, %v7703
        %v7705 = vpop.f32.mrb[0].mxu0
        %7706 = vmatprep.mubr.f32.mxu0 0.0
        %7707 = vmatmul.mubr.f32.gmra.mrb[0].mxu0 %v5097
        %v7708 = vpop.f32.mrb[0].mxu0
        %v7709 = vadd.f32 0.0, %v7708
        %v7710 = vpop.f32.mrb[0].mxu0
        %7711 = vmatprep.mubr.f32.mxu0 0.0
        %7712 = vmatmul.mubr.f32.gmra.mrb[0].mxu0 %v5099
        %v7713 = vpop.f32.mrb[0].mxu0
        %v7714 = vadd.f32 0.0, %v7713
        %v7715 = vpop.f32.mrb[0].mxu0
        %7716 = vmatprep.mubr.f32.mxu0 0.0
        %7717 = vmatmul.mubr.f32.gmra.mrb[0].mxu0 %v5101
        %v7718 = vpop.f32.mrb[0].mxu0
        %v7719 = vadd.f32 0.0, %v7718
        %v7720 = vpop.f32.mrb[0].mxu0
        %7721 = vmatprep.mubr.f32.mxu0 0.0
        %7722 = vmatmul.mubr.f32.gmra.mrb[0].mxu0 %v5103
        %v7723 = vpop.f32.mrb[0].mxu0
        %v7724 = vadd.f32 0.0, %v7723
        %v7725 = vpop.f32.mrb[0].mxu0
        %7726 = vmatprep.mubr.f32.mxu0 0.0
        %7727 = vmatmul.mubr.f32.gmra.mrb[0].mxu0 %v5105
        %v7728 = vpop.f32.mrb[0].mxu0
        %v7729 = vadd.f32 0.0, %v7728
        %v7730 = vpop.f32.mrb[0].mxu0
        %7731 = vmatprep.mubr.f32.mxu0 0.0
        %7732 = vmatmul.mubr.f32.gmra.mrb[0].mxu0 %v5107
        %v7733 = vpop.f32.mrb[0].mxu0
        %v7734 = vadd.f32 0.0, %v7733
        %v7735 = vpop.f32.mrb[0].mxu0
        %7736 = vmatprep.mubr.f32.mxu0 0.0
        %7737 = vmatmul.mubr.f32.gmra.mrb[0].mxu0 %v5109
        %v7738 = vpop.f32.mrb[0].mxu0
        %v7739 = vadd.f32 0.0, %v7738
        %v7740 = vpop.f32.mrb[0].mxu0
        %7741 = vmatprep.mubr.f32.mxu0 0.0
        %7742 = vmatmul.mubr.f32.gmra.mrb[0].mxu0 %v5111
        %v7743 = vpop.f32.mrb[0].mxu0
        %v7744 = vadd.f32 0.0, %v7743
        %v7745 = vpop.f32.mrb[0].mxu0
        %7746 = vmatprep.mubr.f32.mxu0 0.0
        %7747 = vmatmul.mubr.f32.gmra.mrb[0].mxu0 %v5113
        %v7748 = vpop.f32.mrb[0].mxu0
        %v7749 = vadd.f32 0.0, %v7748
        %v7750 = vpop.f32.mrb[0].mxu0
        %7751 = vmatprep.mubr.f32.mxu0 0.0
        %7752 = vmatmul.mubr.f32.gmra.mrb[0].mxu0 %v5115
        %v7753 = vpop.f32.mrb[0].mxu0
        %v7754 = vadd.f32 0.0, %v7753
        %v7755 = vpop.f32.mrb[0].mxu0
        %7756 = vmatprep.mubr.f32.mxu0 0.0
        %7757 = vmatmul.mubr.f32.gmra.mrb[0].mxu0 %v5117
        %v7758 = vpop.f32.mrb[0].mxu0
        %v7759 = vadd.f32 0.0, %v7758
        %v7760 = vpop.f32.mrb[0].mxu0
        %7761 = vmatprep.mubr.f32.mxu0 0.0
        %7762 = vmatmul.mubr.f32.gmra.mrb[0].mxu0 %v5119
        %v7763 = vpop.f32.mrb[0].mxu0
        %v7764 = vadd.f32 0.0, %v7763
        %v7765 = vpop.f32.mrb[0].mxu0
        %7766 = vmatprep.mubr.f32.mxu0 0.0
        %7767 = vmatmul.mubr.f32.gmra.mrb[0].mxu0 %v5121
        %v7768 = vpop.f32.mrb[0].mxu0
        %v7769 = vadd.f32 0.0, %v7768
        %v7770 = vpop.f32.mrb[0].mxu0
        %7771 = vmatprep.mubr.f32.mxu0 0.0
        %7772 = vmatmul.mubr.f32.gmra.mrb[0].mxu0 %v5123
        %v7773 = vpop.f32.mrb[0].mxu0
        %v7774 = vadd.f32 0.0, %v7773
        %v7775 = vpop.f32.mrb[0].mxu0
        %7776 = vmatprep.mubr.f32.mxu0 0.0
        %7777 = vmatmul.mubr.f32.gmra.mrb[0].mxu0 %v5125
        %v7778 = vpop.f32.mrb[0].mxu0
        %v7779 = vadd.f32 0.0, %v7778
        %v7780 = vpop.f32.mrb[0].mxu0
        %7781 = vmatprep.mubr.f32.mxu0 0.0
        %7782 = vmatmul.mubr.f32.gmra.mrb[0].mxu0 %v5127
        %v7783 = vpop.f32.mrb[0].mxu0
        %v7784 = vadd.f32 0.0, %v7783
        %v7785 = vpop.f32.mrb[0].mxu0
        %7786 = vmatprep.mubr.f32.mxu0 0.0
        %7787 = vmatmul.mubr.f32.gmra.mrb[0].mxu0 %v5129
        %v7788 = vpop.f32.mrb[0].mxu0
        %v7789 = vadd.f32 0.0, %v7788
        %v7790 = vpop.f32.mrb[0].mxu0
        %7791 = vmatprep.mubr.f32.mxu0 0.0
        %7792 = vmatmul.mubr.f32.gmra.mrb[0].mxu0 %v5131
        %v7793 = vpop.f32.mrb[0].mxu0
        %v7794 = vadd.f32 0.0, %v7793
        %v7795 = vpop.f32.mrb[0].mxu0
        %7796 = vmatprep.mubr.f32.mxu0 0.0
        %7797 = vmatmul.mubr.f32.gmra.mrb[0].mxu0 %v5133
        %v7798 = vpop.f32.mrb[0].mxu0
        %v7799 = vadd.f32 0.0, %v7798
        %v7800 = vpop.f32.mrb[0].mxu0
        %7801 = vmatprep.mubr.f32.mxu0 0.0
        %7802 = vmatmul.mubr.f32.gmra.mrb[0].mxu0 %v5135
        %v7803 = vpop.f32.mrb[0].mxu0
        %v7804 = vadd.f32 0.0, %v7803
        %v7805 = vpop.f32.mrb[0].mxu0
        %7806 = vmatprep.mubr.f32.mxu0 0.0
        %7807 = vmatmul.mubr.f32.gmra.mrb[0].mxu0 %v5137
        %v7808 = vpop.f32.mrb[0].mxu0
        %v7809 = vadd.f32 0.0, %v7808
        %v7810 = vpop.f32.mrb[0].mxu0
        %7811 = vmatprep.mubr.f32.mxu0 0.0
        %7812 = vmatmul.mubr.f32.gmra.mrb[0].mxu0 %v5139
        %v7813 = vpop.f32.mrb[0].mxu0
        %v7814 = vadd.f32 0.0, %v7813
        %v7815 = vpop.f32.mrb[0].mxu0
        %7816 = vmatprep.mubr.f32.mxu0 0.0
        %7817 = vmatmul.mubr.f32.gmra.mrb[0].mxu0 %v6563
        %v7818 = vpop.f32.mrb[0].mxu0
        %v7819 = vadd.f32 0.0, %v7818
        %v7820 = vpop.f32.mrb[0].mxu0
        %7821 = vmatprep.mubr.f32.mxu0 0.0
        %7822 = vmatmul.mubr.f32.gmra.mrb[0].mxu0 %v6565
        %v7823 = vpop.f32.mrb[0].mxu0
        %v7824 = vadd.f32 0.0, %v7823
        %v7825 = vpop.f32.mrb[0].mxu0
        %7826 = vmatprep.mubr.f32.mxu0 0.0
        %7827 = vmatmul.mubr.f32.gmra.mrb[0].mxu0 %v5079
        %v7828 = vpop.f32.mrb[0].mxu0
        %v7829 = vadd.f32 0.0, %v7828
        %v7830 = vpop.f32.mrb[0].mxu0
        %7831 = vmatprep.mubr.f32.mxu0 0.0
        %7832 = vmatmul.mubr.f32.gmra.mrb[0].mxu0 %v5079
        %v7833 = vpop.f32.mrb[0].mxu0
        %v7834 = vadd.f32 0.0, %v7833
        %v7835 = vpop.f32.mrb[0].mxu0
        %7836 = vdwg.mxu0
        %v7837 = vadd.f32 %v7575, %v7679
        %v7838 = vadd.f32 %v7576, %v7684
        %v7839 = vadd.f32 %v7577, %v7689
        %v7840 = vadd.f32 %v7578, %v7694
        %v7841 = vadd.f32 %v7579, %v7699
        %v7842 = vadd.f32 %v7580, %v7704
        %v7843 = vadd.f32 %v7581, %v7709
        %v7844 = vadd.f32 %v7582, %v7714
        %v7845 = vadd.f32 %v7583, %v7719
        %v7846 = vadd.f32 %v7584, %v7724
        %v7847 = vadd.f32 %v7585, %v7729
        %v7848 = vadd.f32 %v7586, %v7734
        %v7849 = vadd.f32 %v7587, %v7739
        %v7850 = vadd.f32 %v7588, %v7744
        %v7851 = vadd.f32 %v7589, %v7749
        %v7852 = vadd.f32 %v7590, %v7754
        %v7853 = vadd.f32 %v7591, %v7759
        %v7854 = vadd.f32 %v7592, %v7764
        %v7855 = vadd.f32 %v7593, %v7769
        %v7856 = vadd.f32 %v7594, %v7774
        %v7857 = vadd.f32 %v7595, %v7779
        %v7858 = vadd.f32 %v7596, %v7784
        %v7859 = vadd.f32 %v7597, %v7789
        %v7860 = vadd.f32 %v7598, %v7794
        %v7861 = vadd.f32 %v7599, %v7799
        %v7862 = vadd.f32 %v7600, %v7804
        %v7863 = vadd.f32 %v7601, %v7809
        %v7864 = vadd.f32 %v7602, %v7814
        %v7865 = vadd.f32 %v7603, %v7819
        %v7866 = vadd.f32 %v7604, %v7824
        %v7867 = vadd.f32 %v7605, %v7829
        %v7868 = vadd.f32 %v7606, %v7834
        %v7869 = vsel %vm2113, %v5688, 0.0
        %v7870 = vsel %vm2114, %v5690, 0.0
        %v7871 = vsel %vm2115, %v5692, 0.0
        %v7872 = vsel %vm2116, %v5694, 0.0
        %v7873 = vsel %vm2117, %v5696, 0.0
        %v7874 = vsel %vm2118, %v5698, 0.0
        %v7875 = vsel %vm2119, %v5700, 0.0
        %v7876 = vsel %vm2120, %v5702, 0.0
        %v7877 = vsel %vm2121, %v5704, 0.0
        %v7878 = vsel %vm2122, %v5706, 0.0
        %v7879 = vsel %vm2123, %v5708, 0.0
        %v7880 = vsel %vm2124, %v5710, 0.0
        %v7881 = vsel %vm2125, %v5712, 0.0
        %v7882 = vsel %vm2126, %v5714, 0.0
        %v7883 = vsel %vm2127, %v5716, 0.0
        %v7884 = vsel %vm2128, %v5718, 0.0
        %v7885 = vsel %vm2129, %v5720, 0.0
        %v7886 = vsel %vm2130, %v5722, 0.0
        %v7887 = vsel %vm2131, %v5724, 0.0
        %v7888 = vsel %vm2132, %v5726, 0.0
        %v7889 = vsel %vm2133, %v5728, 0.0
        %v7890 = vsel %vm2134, %v5730, 0.0
        %v7891 = vsel %vm2135, %v5732, 0.0
        %v7892 = vsel %vm2136, %v5734, 0.0
        %v7893 = vsel %vm2137, %v5736, 0.0
        %v7894 = vsel %vm2138, %v5738, 0.0
        %v7895 = vsel %vm2139, %v5740, 0.0
        %v7896 = vsel %vm2140, %v5742, 0.0
        %v7897 = vsel %vm2141, %v6825, 0.0
        %v7898 = vsel %vm2142, %v6828, 0.0
        %s7899 = scalar_lea.vmem %s9, 256
        %v7900 = vld [vmem:[%s7899] sm:$0xff]
        %v7901 = vld [vmem:[%s7899 + $0x8] sm:$0xff]
        %v7902 = vld [vmem:[%s7899 + $0x10] sm:$0xff]
        %v7903 = vld [vmem:[%s7899 + $0x18] sm:$0xff]
        %v7905 = vsel %vm602, %v7869, 0
        %v7908 = vsel %vm602, %v7870, 0
        %v7911 = vsel %vm602, %v7871, 0
        %v7914 = vsel %vm602, %v7872, 0
        %v7917 = vsel %vm602, %v7873, 0
        %v7920 = vsel %vm602, %v7874, 0
        %v7923 = vsel %vm602, %v7875, 0
        %v7926 = vsel %vm602, %v7876, 0
        %v7929 = vsel %vm602, %v7877, 0
        %v7932 = vsel %vm602, %v7878, 0
        %v7935 = vsel %vm602, %v7879, 0
        %v7938 = vsel %vm602, %v7880, 0
        %v7941 = vsel %vm602, %v7881, 0
        %v7944 = vsel %vm602, %v7882, 0
        %v7947 = vsel %vm602, %v7883, 0
        %v7950 = vsel %vm602, %v7884, 0
        %v7953 = vsel %vm602, %v7885, 0
        %v7956 = vsel %vm602, %v7886, 0
        %v7959 = vsel %vm602, %v7887, 0
        %v7962 = vsel %vm602, %v7888, 0
        %v7965 = vsel %vm602, %v7889, 0
        %v7968 = vsel %vm602, %v7890, 0
        %v7971 = vsel %vm602, %v7891, 0
        %v7974 = vsel %vm602, %v7892, 0
        %v7977 = vsel %vm602, %v7893, 0
        %v7980 = vsel %vm602, %v7894, 0
        %v7983 = vsel %vm602, %v7895, 0
        %v7986 = vsel %vm602, %v7896, 0
        %v7989 = vsel %vm602, %v7897, 0
        %v7992 = vsel %vm602, %v7898, 0
        %7994 = vmatprep.subr.mxu0 0.0
        %7995 = vmatpush1.msra.mxu0 %v7900
        %7996 = vmatprep.subr.mxu0 0.0
        %7997 = vmatpush1.msra.mxu0 %v7901
        %7998 = vmatprep.subr.mxu0 0.0
        %7999 = vmatpush1.msra.mxu0 %v7902
        %8000 = vmatprep.subr.mxu0 0.0
        %8001 = vmatpush1.msra.mxu0 %v7903
        %8002 = vmatprep.subr.mxu0 0.0
        %8003 = vmatpush1.msra.mxu0 0.0
        %8004 = vmatprep.subr.mxu0 0.0
        %8005 = vmatpush1.msra.mxu0 0.0
        %8006 = vmatprep.subr.mxu0 0.0
        %8007 = vmatpush1.msra.mxu0 0.0
        %8008 = vmatprep.subr.mxu0 0.0
        %8009 = vmatpush1.msra.mxu0 0.0
        %8010 = vmatprep.subr.mxu0 0.0
        %8011 = vmatpush1.msra.mxu0 0.0
        %8012 = vmatprep.subr.mxu0 0.0
        %8013 = vmatpush1.msra.mxu0 0.0
        %8014 = vmatprep.subr.mxu0 0.0
        %8015 = vmatpush1.msra.mxu0 0.0
        %8016 = vmatprep.subr.mxu0 0.0
        %8017 = vmatpush1.msra.mxu0 0.0
        %8018 = vmatprep.subr.mxu0 0.0
        %8019 = vmatpush1.msra.mxu0 0.0
        %8020 = vmatprep.subr.mxu0 0.0
        %8021 = vmatpush1.msra.mxu0 0.0
        %8022 = vmatprep.subr.mxu0 0.0
        %8023 = vmatpush1.msra.mxu0 0.0
        %8024 = vmatprep.subr.mxu0 0.0
        %8025 = vmatpush1.msra.mxu0 0.0
        %8026 = vmatprep.subr.mxu0 0.0
        %8027 = vmatpush1.msra.mxu0 0.0
        %8028 = vmatprep.subr.mxu0 0.0
        %8029 = vmatpush1.msra.mxu0 0.0
        %8030 = vmatprep.subr.mxu0 0.0
        %8031 = vmatpush1.msra.mxu0 0.0
        %8032 = vmatprep.subr.mxu0 0.0
        %8033 = vmatpush1.msra.mxu0 0.0
        %8034 = vmatprep.subr.mxu0 0.0
        %8035 = vmatpush1.msra.mxu0 0.0
        %8036 = vmatprep.subr.mxu0 0.0
        %8037 = vmatpush1.msra.mxu0 0.0
        %8038 = vmatprep.subr.mxu0 0.0
        %8039 = vmatpush1.msra.mxu0 0.0
        %8040 = vmatprep.subr.mxu0 0.0
        %8041 = vmatpush1.msra.mxu0 0.0
        %8042 = vmatprep.subr.mxu0 0.0
        %8043 = vmatpush1.msra.mxu0 0.0
        %8044 = vmatprep.subr.mxu0 0.0
        %8045 = vmatpush1.msra.mxu0 0.0
        %8046 = vmatprep.subr.mxu0 0.0
        %8047 = vmatpush1.msra.mxu0 0.0
        %8048 = vmatprep.subr.mxu0 0.0
        %8049 = vmatpush1.msra.mxu0 0.0
        %8050 = vmatprep.subr.mxu0 0.0
        %8051 = vmatpush1.msra.mxu0 0.0
        %8052 = vmatprep.subr.mxu0 0.0
        %8053 = vmatpush1.msra.mxu0 0.0
        %8054 = vmatprep.subr.mxu0 0.0
        %8055 = vmatpush1.msra.mxu0 0.0
        %8056 = vmatprep.subr.mxu0 0.0
        %8057 = vmatpush1.msra.mxu0 0.0
        %8058 = vmatprep.mubr.f32.mxu0 0.0
        %8059 = vmatmul.mubr.f32.gmra.mrb[0].mxu0 %v7905
        %v8060 = vpop.f32.mrb[0].mxu0
        %v8061 = vadd.f32 0.0, %v8060
        %v8062 = vpop.f32.mrb[0].mxu0
        %8063 = vmatprep.mubr.f32.mxu0 0.0
        %8064 = vmatmul.mubr.f32.gmra.mrb[0].mxu0 %v7908
        %v8065 = vpop.f32.mrb[0].mxu0
        %v8066 = vadd.f32 0.0, %v8065
        %v8067 = vpop.f32.mrb[0].mxu0
        %8068 = vmatprep.mubr.f32.mxu0 0.0
        %8069 = vmatmul.mubr.f32.gmra.mrb[0].mxu0 %v7911
        %v8070 = vpop.f32.mrb[0].mxu0
        %v8071 = vadd.f32 0.0, %v8070
        %v8072 = vpop.f32.mrb[0].mxu0
        %8073 = vmatprep.mubr.f32.mxu0 0.0
        %8074 = vmatmul.mubr.f32.gmra.mrb[0].mxu0 %v7914
        %v8075 = vpop.f32.mrb[0].mxu0
        %v8076 = vadd.f32 0.0, %v8075
        %v8077 = vpop.f32.mrb[0].mxu0
        %8078 = vmatprep.mubr.f32.mxu0 0.0
        %8079 = vmatmul.mubr.f32.gmra.mrb[0].mxu0 %v7917
        %v8080 = vpop.f32.mrb[0].mxu0
        %v8081 = vadd.f32 0.0, %v8080
        %v8082 = vpop.f32.mrb[0].mxu0
        %8083 = vmatprep.mubr.f32.mxu0 0.0
        %8084 = vmatmul.mubr.f32.gmra.mrb[0].mxu0 %v7920
        %v8085 = vpop.f32.mrb[0].mxu0
        %v8086 = vadd.f32 0.0, %v8085
        %v8087 = vpop.f32.mrb[0].mxu0
        %8088 = vmatprep.mubr.f32.mxu0 0.0
        %8089 = vmatmul.mubr.f32.gmra.mrb[0].mxu0 %v7923
        %v8090 = vpop.f32.mrb[0].mxu0
        %v8091 = vadd.f32 0.0, %v8090
        %v8092 = vpop.f32.mrb[0].mxu0
        %8093 = vmatprep.mubr.f32.mxu0 0.0
        %8094 = vmatmul.mubr.f32.gmra.mrb[0].mxu0 %v7926
        %v8095 = vpop.f32.mrb[0].mxu0
        %v8096 = vadd.f32 0.0, %v8095
        %v8097 = vpop.f32.mrb[0].mxu0
        %8098 = vmatprep.mubr.f32.mxu0 0.0
        %8099 = vmatmul.mubr.f32.gmra.mrb[0].mxu0 %v7929
        %v8100 = vpop.f32.mrb[0].mxu0
        %v8101 = vadd.f32 0.0, %v8100
        %v8102 = vpop.f32.mrb[0].mxu0
        %8103 = vmatprep.mubr.f32.mxu0 0.0
        %8104 = vmatmul.mubr.f32.gmra.mrb[0].mxu0 %v7932
        %v8105 = vpop.f32.mrb[0].mxu0
        %v8106 = vadd.f32 0.0, %v8105
        %v8107 = vpop.f32.mrb[0].mxu0
        %8108 = vmatprep.mubr.f32.mxu0 0.0
        %8109 = vmatmul.mubr.f32.gmra.mrb[0].mxu0 %v7935
        %v8110 = vpop.f32.mrb[0].mxu0
        %v8111 = vadd.f32 0.0, %v8110
        %v8112 = vpop.f32.mrb[0].mxu0
        %8113 = vmatprep.mubr.f32.mxu0 0.0
        %8114 = vmatmul.mubr.f32.gmra.mrb[0].mxu0 %v7938
        %v8115 = vpop.f32.mrb[0].mxu0
        %v8116 = vadd.f32 0.0, %v8115
        %v8117 = vpop.f32.mrb[0].mxu0
        %8118 = vmatprep.mubr.f32.mxu0 0.0
        %8119 = vmatmul.mubr.f32.gmra.mrb[0].mxu0 %v7941
        %v8120 = vpop.f32.mrb[0].mxu0
        %v8121 = vadd.f32 0.0, %v8120
        %v8122 = vpop.f32.mrb[0].mxu0
        %8123 = vmatprep.mubr.f32.mxu0 0.0
        %8124 = vmatmul.mubr.f32.gmra.mrb[0].mxu0 %v7944
        %v8125 = vpop.f32.mrb[0].mxu0
        %v8126 = vadd.f32 0.0, %v8125
        %v8127 = vpop.f32.mrb[0].mxu0
        %8128 = vmatprep.mubr.f32.mxu0 0.0
        %8129 = vmatmul.mubr.f32.gmra.mrb[0].mxu0 %v7947
        %v8130 = vpop.f32.mrb[0].mxu0
        %v8131 = vadd.f32 0.0, %v8130
        %v8132 = vpop.f32.mrb[0].mxu0
        %8133 = vmatprep.mubr.f32.mxu0 0.0
        %8134 = vmatmul.mubr.f32.gmra.mrb[0].mxu0 %v7950
        %v8135 = vpop.f32.mrb[0].mxu0
        %v8136 = vadd.f32 0.0, %v8135
        %v8137 = vpop.f32.mrb[0].mxu0
        %8138 = vmatprep.mubr.f32.mxu0 0.0
        %8139 = vmatmul.mubr.f32.gmra.mrb[0].mxu0 %v7953
        %v8140 = vpop.f32.mrb[0].mxu0
        %v8141 = vadd.f32 0.0, %v8140
        %v8142 = vpop.f32.mrb[0].mxu0
        %8143 = vmatprep.mubr.f32.mxu0 0.0
        %8144 = vmatmul.mubr.f32.gmra.mrb[0].mxu0 %v7956
        %v8145 = vpop.f32.mrb[0].mxu0
        %v8146 = vadd.f32 0.0, %v8145
        %v8147 = vpop.f32.mrb[0].mxu0
        %8148 = vmatprep.mubr.f32.mxu0 0.0
        %8149 = vmatmul.mubr.f32.gmra.mrb[0].mxu0 %v7959
        %v8150 = vpop.f32.mrb[0].mxu0
        %v8151 = vadd.f32 0.0, %v8150
        %v8152 = vpop.f32.mrb[0].mxu0
        %8153 = vmatprep.mubr.f32.mxu0 0.0
        %8154 = vmatmul.mubr.f32.gmra.mrb[0].mxu0 %v7962
        %v8155 = vpop.f32.mrb[0].mxu0
        %v8156 = vadd.f32 0.0, %v8155
        %v8157 = vpop.f32.mrb[0].mxu0
        %8158 = vmatprep.mubr.f32.mxu0 0.0
        %8159 = vmatmul.mubr.f32.gmra.mrb[0].mxu0 %v7965
        %v8160 = vpop.f32.mrb[0].mxu0
        %v8161 = vadd.f32 0.0, %v8160
        %v8162 = vpop.f32.mrb[0].mxu0
        %8163 = vmatprep.mubr.f32.mxu0 0.0
        %8164 = vmatmul.mubr.f32.gmra.mrb[0].mxu0 %v7968
        %v8165 = vpop.f32.mrb[0].mxu0
        %v8166 = vadd.f32 0.0, %v8165
        %v8167 = vpop.f32.mrb[0].mxu0
        %8168 = vmatprep.mubr.f32.mxu0 0.0
        %8169 = vmatmul.mubr.f32.gmra.mrb[0].mxu0 %v7971
        %v8170 = vpop.f32.mrb[0].mxu0
        %v8171 = vadd.f32 0.0, %v8170
        %v8172 = vpop.f32.mrb[0].mxu0
        %8173 = vmatprep.mubr.f32.mxu0 0.0
        %8174 = vmatmul.mubr.f32.gmra.mrb[0].mxu0 %v7974
        %v8175 = vpop.f32.mrb[0].mxu0
        %v8176 = vadd.f32 0.0, %v8175
        %v8177 = vpop.f32.mrb[0].mxu0
        %8178 = vmatprep.mubr.f32.mxu0 0.0
        %8179 = vmatmul.mubr.f32.gmra.mrb[0].mxu0 %v7977
        %v8180 = vpop.f32.mrb[0].mxu0
        %v8181 = vadd.f32 0.0, %v8180
        %v8182 = vpop.f32.mrb[0].mxu0
        %8183 = vmatprep.mubr.f32.mxu0 0.0
        %8184 = vmatmul.mubr.f32.gmra.mrb[0].mxu0 %v7980
        %v8185 = vpop.f32.mrb[0].mxu0
        %v8186 = vadd.f32 0.0, %v8185
        %v8187 = vpop.f32.mrb[0].mxu0
        %8188 = vmatprep.mubr.f32.mxu0 0.0
        %8189 = vmatmul.mubr.f32.gmra.mrb[0].mxu0 %v7983
        %v8190 = vpop.f32.mrb[0].mxu0
        %v8191 = vadd.f32 0.0, %v8190
        %v8192 = vpop.f32.mrb[0].mxu0
        %8193 = vmatprep.mubr.f32.mxu0 0.0
        %8194 = vmatmul.mubr.f32.gmra.mrb[0].mxu0 %v7986
        %v8195 = vpop.f32.mrb[0].mxu0
        %v8196 = vadd.f32 0.0, %v8195
        %v8197 = vpop.f32.mrb[0].mxu0
        %8198 = vmatprep.mubr.f32.mxu0 0.0
        %8199 = vmatmul.mubr.f32.gmra.mrb[0].mxu0 %v7989
        %v8200 = vpop.f32.mrb[0].mxu0
        %v8201 = vadd.f32 0.0, %v8200
        %v8202 = vpop.f32.mrb[0].mxu0
        %8203 = vmatprep.mubr.f32.mxu0 0.0
        %8204 = vmatmul.mubr.f32.gmra.mrb[0].mxu0 %v7992
        %v8205 = vpop.f32.mrb[0].mxu0
        %v8206 = vadd.f32 0.0, %v8205
        %v8207 = vpop.f32.mrb[0].mxu0
        %8208 = vmatprep.mubr.f32.mxu0 0.0
        %8209 = vmatmul.mubr.f32.gmra.mrb[0].mxu0 %v5079
        %v8210 = vpop.f32.mrb[0].mxu0
        %v8211 = vadd.f32 0.0, %v8210
        %v8212 = vpop.f32.mrb[0].mxu0
        %8213 = vmatprep.mubr.f32.mxu0 0.0
        %8214 = vmatmul.mubr.f32.gmra.mrb[0].mxu0 %v5079
        %v8215 = vpop.f32.mrb[0].mxu0
        %v8216 = vadd.f32 0.0, %v8215
        %v8217 = vpop.f32.mrb[0].mxu0
        %8218 = vdwg.mxu0
        %v8219 = vadd.f32 %v7837, %v8061
        %v8220 = vadd.f32 %v7838, %v8066
        %v8221 = vadd.f32 %v7839, %v8071
        %v8222 = vadd.f32 %v7840, %v8076
        %v8223 = vadd.f32 %v7841, %v8081
        %v8224 = vadd.f32 %v7842, %v8086
        %v8225 = vadd.f32 %v7843, %v8091
        %v8226 = vadd.f32 %v7844, %v8096
        %v8227 = vadd.f32 %v7845, %v8101
        %v8228 = vadd.f32 %v7846, %v8106
        %v8229 = vadd.f32 %v7847, %v8111
        %v8230 = vadd.f32 %v7848, %v8116
        %v8231 = vadd.f32 %v7849, %v8121
        %v8232 = vadd.f32 %v7850, %v8126
        %v8233 = vadd.f32 %v7851, %v8131
        %v8234 = vadd.f32 %v7852, %v8136
        %v8235 = vadd.f32 %v7853, %v8141
        %v8236 = vadd.f32 %v7854, %v8146
        %v8237 = vadd.f32 %v7855, %v8151
        %v8238 = vadd.f32 %v7856, %v8156
        %v8239 = vadd.f32 %v7857, %v8161
        %v8240 = vadd.f32 %v7858, %v8166
        %v8241 = vadd.f32 %v7859, %v8171
        %v8242 = vadd.f32 %v7860, %v8176
        %v8243 = vadd.f32 %v7861, %v8181
        %v8244 = vadd.f32 %v7862, %v8186
        %v8245 = vadd.f32 %v7863, %v8191
        %v8246 = vadd.f32 %v7864, %v8196
        %v8247 = vadd.f32 %v7865, %v8201
        %v8248 = vadd.f32 %v7866, %v8206
        %v8249 = vadd.f32 %v7867, %v8211
        %v8250 = vadd.f32 %v7868, %v8216
        %v8251 = vld [vmem:[%s10] sm:$0x1]
        %v8253 = vlaneseq
        %v8254 = vshrl.u32 %v8253, 7
        %v8255 = vsub.s32 0, %v8254
        %v8256 = vrot.slane %v8251, %v8255
        %v8258 = vadd.f32 %v8219, %v8256
        %v8259 = vadd.f32 %v8220, %v8256
        %v8260 = vadd.f32 %v8221, %v8256
        %v8261 = vadd.f32 %v8222, %v8256
        %v8262 = vadd.f32 %v8223, %v8256
        %v8263 = vadd.f32 %v8224, %v8256
        %v8264 = vadd.f32 %v8225, %v8256
        %v8265 = vadd.f32 %v8226, %v8256
        %v8266 = vadd.f32 %v8227, %v8256
        %v8267 = vadd.f32 %v8228, %v8256
        %v8268 = vadd.f32 %v8229, %v8256
        %v8269 = vadd.f32 %v8230, %v8256
        %v8270 = vadd.f32 %v8231, %v8256
        %v8271 = vadd.f32 %v8232, %v8256
        %v8272 = vadd.f32 %v8233, %v8256
        %v8273 = vadd.f32 %v8234, %v8256
        %v8274 = vadd.f32 %v8235, %v8256
        %v8275 = vadd.f32 %v8236, %v8256
        %v8276 = vadd.f32 %v8237, %v8256
        %v8277 = vadd.f32 %v8238, %v8256
        %v8278 = vadd.f32 %v8239, %v8256
        %v8279 = vadd.f32 %v8240, %v8256
        %v8280 = vadd.f32 %v8241, %v8256
        %v8281 = vadd.f32 %v8242, %v8256
        %v8282 = vadd.f32 %v8243, %v8256
        %v8283 = vadd.f32 %v8244, %v8256
        %v8284 = vadd.f32 %v8245, %v8256
        %v8285 = vadd.f32 %v8246, %v8256
        %v8286 = vadd.f32 %v8247, %v8256
        %v8287 = vadd.f32 %v8248, %v8256
        %v8288 = vadd.f32 %v8249, %v8256
        %v8289 = vadd.f32 %v8250, %v8256
        %v8290 = vsub.f32 %v8258, %v497
        %v8291 = vsub.f32 %v8259, %v498
        %v8292 = vsub.f32 %v8260, %v499
        %v8293 = vsub.f32 %v8261, %v500
        %v8294 = vsub.f32 %v8262, %v501
        %v8295 = vsub.f32 %v8263, %v502
        %v8296 = vsub.f32 %v8264, %v503
        %v8297 = vsub.f32 %v8265, %v504
        %v8298 = vsub.f32 %v8266, %v505
        %v8299 = vsub.f32 %v8267, %v506
        %v8300 = vsub.f32 %v8268, %v507
        %v8301 = vsub.f32 %v8269, %v508
        %v8302 = vsub.f32 %v8270, %v509
        %v8303 = vsub.f32 %v8271, %v510
        %v8304 = vsub.f32 %v8272, %v511
        %v8305 = vsub.f32 %v8273, %v512
        %v8306 = vsub.f32 %v8274, %v513
        %v8307 = vsub.f32 %v8275, %v514
        %v8308 = vsub.f32 %v8276, %v515
        %v8309 = vsub.f32 %v8277, %v516
        %v8310 = vsub.f32 %v8278, %v517
        %v8311 = vsub.f32 %v8279, %v518
        %v8312 = vsub.f32 %v8280, %v519
        %v8313 = vsub.f32 %v8281, %v520
        %v8314 = vsub.f32 %v8282, %v521
        %v8315 = vsub.f32 %v8283, %v522
        %v8316 = vsub.f32 %v8284, %v523
        %v8317 = vsub.f32 %v8285, %v524
        %v8318 = vsub.f32 %v8286, %v525
        %v8319 = vsub.f32 %v8287, %v526
        %v8320 = vsub.f32 %v8288, %v527
        %v8321 = vsub.f32 %v8289, %v528
        %v8322 = vand.u32 2147483647, %v8290
        %v8323 = vand.u32 2147483647, %v8291
        %v8324 = vand.u32 2147483647, %v8292
        %v8325 = vand.u32 2147483647, %v8293
        %v8326 = vand.u32 2147483647, %v8294
        %v8327 = vand.u32 2147483647, %v8295
        %v8328 = vand.u32 2147483647, %v8296
        %v8329 = vand.u32 2147483647, %v8297
        %v8330 = vand.u32 2147483647, %v8298
        %v8331 = vand.u32 2147483647, %v8299
        %v8332 = vand.u32 2147483647, %v8300
        %v8333 = vand.u32 2147483647, %v8301
        %v8334 = vand.u32 2147483647, %v8302
        %v8335 = vand.u32 2147483647, %v8303
        %v8336 = vand.u32 2147483647, %v8304
        %v8337 = vand.u32 2147483647, %v8305
        %v8338 = vand.u32 2147483647, %v8306
        %v8339 = vand.u32 2147483647, %v8307
        %v8340 = vand.u32 2147483647, %v8308
        %v8341 = vand.u32 2147483647, %v8309
        %v8342 = vand.u32 2147483647, %v8310
        %v8343 = vand.u32 2147483647, %v8311
        %v8344 = vand.u32 2147483647, %v8312
        %v8345 = vand.u32 2147483647, %v8313
        %v8346 = vand.u32 2147483647, %v8314
        %v8347 = vand.u32 2147483647, %v8315
        %v8348 = vand.u32 2147483647, %v8316
        %v8349 = vand.u32 2147483647, %v8317
        %v8350 = vand.u32 2147483647, %v8318
        %v8351 = vand.u32 2147483647, %v8319
        %v8352 = vand.u32 2147483647, %v8320
        %v8353 = vand.u32 2147483647, %v8321
        %v8354 = vsel %vm1375, %v8322, 0.0
        %v8355 = vsel %vm1375, %v8323, 0.0
        %v8356 = vadd.f32 %v8354, %v8355
        %v8357 = vsel %vm1375, %v8324, 0.0
        %v8358 = vadd.f32 %v8356, %v8357
        %v8359 = vsel %vm1375, %v8325, 0.0
        %v8360 = vadd.f32 %v8358, %v8359
        %v8361 = vsel %vm1375, %v8326, 0.0
        %v8362 = vadd.f32 %v8360, %v8361
        %v8363 = vsel %vm1375, %v8327, 0.0
        %v8364 = vadd.f32 %v8362, %v8363
        %v8365 = vsel %vm1375, %v8328, 0.0
        %v8366 = vadd.f32 %v8364, %v8365
        %v8367 = vsel %vm1375, %v8329, 0.0
        %v8368 = vadd.f32 %v8366, %v8367
        %v8369 = vsel %vm1375, %v8330, 0.0
        %v8370 = vadd.f32 %v8368, %v8369
        %v8371 = vsel %vm1375, %v8331, 0.0
        %v8372 = vadd.f32 %v8370, %v8371
        %v8373 = vsel %vm1375, %v8332, 0.0
        %v8374 = vadd.f32 %v8372, %v8373
        %v8375 = vsel %vm1375, %v8333, 0.0
        %v8376 = vadd.f32 %v8374, %v8375
        %v8377 = vsel %vm1375, %v8334, 0.0
        %v8378 = vadd.f32 %v8376, %v8377
        %v8379 = vsel %vm1375, %v8335, 0.0
        %v8380 = vadd.f32 %v8378, %v8379
        %v8381 = vsel %vm1375, %v8336, 0.0
        %v8382 = vadd.f32 %v8380, %v8381
        %v8383 = vsel %vm1375, %v8337, 0.0
        %v8384 = vadd.f32 %v8382, %v8383
        %v8385 = vsel %vm1375, %v8338, 0.0
        %v8386 = vadd.f32 %v8384, %v8385
        %v8387 = vsel %vm1375, %v8339, 0.0
        %v8388 = vadd.f32 %v8386, %v8387
        %v8389 = vsel %vm1375, %v8340, 0.0
        %v8390 = vadd.f32 %v8388, %v8389
        %v8391 = vsel %vm1375, %v8341, 0.0
        %v8392 = vadd.f32 %v8390, %v8391
        %v8393 = vsel %vm1375, %v8342, 0.0
        %v8394 = vadd.f32 %v8392, %v8393
        %v8395 = vsel %vm1375, %v8343, 0.0
        %v8396 = vadd.f32 %v8394, %v8395
        %v8397 = vsel %vm1375, %v8344, 0.0
        %v8398 = vadd.f32 %v8396, %v8397
        %v8399 = vsel %vm1375, %v8345, 0.0
        %v8400 = vadd.f32 %v8398, %v8399
        %v8401 = vsel %vm1375, %v8346, 0.0
        %v8402 = vadd.f32 %v8400, %v8401
        %v8403 = vsel %vm1375, %v8347, 0.0
        %v8404 = vadd.f32 %v8402, %v8403
        %v8405 = vsel %vm1375, %v8348, 0.0
        %v8406 = vadd.f32 %v8404, %v8405
        %v8407 = vsel %vm1375, %v8349, 0.0
        %v8408 = vadd.f32 %v8406, %v8407
        %v8409 = vsel %vm1375, %v8350, 0.0
        %v8410 = vadd.f32 %v8408, %v8409
        %v8411 = vsel %vm1375, %v8351, 0.0
        %v8412 = vadd.f32 %v8410, %v8411
        %v8413 = vsel %vm1375, %v8352, 0.0
        %v8414 = vadd.f32 %v8412, %v8413
        %v8415 = vsel %vm1375, %v8353, 0.0
        %v8416 = vadd.f32 %v8414, %v8415
        %8417 = vadd.xlane.f32.xlu0 %v8416
        %v8418 = vpop.xlane.xlu0 %8417
        %v8419 = vrot.slane %v8418, 4
        %v8420 = vadd.f32 %v8418, %v8419
        %v8421 = vrot.slane %v8420, 2
        %v8422 = vadd.f32 %v8420, %v8421
        %v8423 = vrot.slane %v8422, 1
        %v8424 = vadd.f32 %v8422, %v8423
        %s8425 = vtos %v8424
        %v8426 = vstv %s8425
        %8427 = vst [vmem:[%s429] sm:$0x1] %v8426
        %p8428 = scmp.lt.s32.totalorder %s24, 1
        %s8429 = scalar_select %p8428, %s24, 1
        %s8430 = scalar_lea.vmem %s11, %s8429
        // Predicated region
        $region73: #{ddpm_forward.1} parent=63 // pred_check
          %p8431 = pneg %p283
        $region74: #{ddpm_forward.1} parent=63 // pred_check_branch
          %8433 = sbr.rel (%p8431) target = $region76
        $region75: #{ddpm_forward.1} parent=63 // pred_region
          _
        $region76: #{ddpm_forward.1} parent=63 // pred_fallthru
          _
      $region64: #{ddpm_forward.1} parent=5 // pred_fallthru
        _
      %p8434 = scmp.le.s32.totalorder 2, %s19
      // Predicated region
      $region77: #{ddpm_forward.1} parent=5 // pred_check
        %p8435 = pneg %p8434
      $region78: #{ddpm_forward.1} parent=5 // pred_check_branch
        %8437 = sbr.rel (%p8435) target = $region80
      $region79: #{ddpm_forward.1} parent=5 // pred_region
        %s8438 = ssub.s32 %s19, 2
        // Predicated region
        $region81: #{ddpm_forward.1} parent=79 // pred_check
          %p8439 = pneg %p289
        $region82: #{ddpm_forward.1} parent=79 // pred_check_branch
          %8441 = sbr.rel (%p8439) target = $region84
        $region83: #{ddpm_forward.1} parent=79 // pred_region
          %p8442 = scmp.lt.s32.totalorder %s25, 1
          %s8443 = scalar_select %p8442, %s25, 1
          %s8444 = scalar_lea.vmem %s11, %s8443
        $region84: #{ddpm_forward.1} parent=79 // pred_fallthru
          _
      $region80: #{ddpm_forward.1} parent=5 // pred_fallthru
        _
    $region6: #{ddpm_forward.1} parent=1 // loop_footer
      %s23 = sadd.s32 1, %s19
    $region7: #{ddpm_forward.1} parent=1 // loop_footer_branch
      %18 = sbr.rel target = $region3
    $region8: #{ddpm_forward.1} parent=1 // loop_exit
      _
    %8445 = vsyncpa [#allocation3], 1
    %s8446 = scalar_lea.sflag [#allocation3], 1
    %8447 = vsyncpa %s8446, 1
    %8448 = vsyncpa [#allocation5], 1

</llo_original>
